<compile_context>
chip_gen: v7x
topology: tpu7x:2x2x1
jax: 0.10.0
libtpu: 0.0.40
codegen_flags: <defaults>
</compile_context>

<pallas_src>
import functools

import jax
import jax.numpy as jnp
import numpy as np
from jax.experimental import pallas as pl
from jax.experimental.pallas import tpu as pltpu

EMB = 64          # emb_dim
MLP_DIM = 256
NODE_DIM = 3
EDGE_DIM = 2
OUT_DIM = 1
OUT_PAD = 128     # pad fc5 output so the only HBM store is lane-dense
ENC_IN_PAD = 8    # pad tiny encoder input feature dims (zero-pad is exact)
MP_LAYERS = 7

# ---- packed W64 buffer layout (row offsets; all widths = EMB) ----
_OFF_FC1 = 0
_OFF_FC2 = _OFF_FC1 + ENC_IN_PAD            # 8
_OFF_EFC1 = _OFF_FC2 + EMB                  # 72
_OFF_EFC2 = _OFF_EFC1 + ENC_IN_PAD          # 80
_OFF_WE1 = _OFF_EFC2 + EMB                  # 144
_OFF_WE2 = _OFF_WE1 + 6 * EMB               # 528
_OFF_WN11 = _OFF_WE2 + EMB                  # 592
_OFF_WN12 = _OFF_WN11 + 3 * EMB             # 784
_OFF_WN21 = _OFF_WN12 + EMB                 # 848
_OFF_WN22 = _OFF_WN21 + 3 * EMB             # 1040
_W64_ROWS = _OFF_WN22 + EMB                 # 1104

# ---- packed bias buffer rows ([16, 256]) ----
(_B_FC1, _B_FC2, _B_EFC1, _B_EFC2, _B_E1, _B_E2,
 _B_N11, _B_N12, _B_N21, _B_N22, _B_FC3, _B_FC4, _B_FC5) = range(13)
_B_ROWS = 16


def _vmem_limit_bytes():
    """Per-generation VMEM limit: ~7/8 of physical (112 MiB v5e/v6e, 56 MiB v7x)."""
    try:
        cap = int(getattr(pltpu.get_tpu_info(), "vmem_capacity_bytes",
                          64 * 1024 * 1024))
    except Exception:  # pragma: no cover - conservative fallback
        cap = 64 * 1024 * 1024
    return max(32 * 1024 * 1024, (cap * 7) // 8)


# ----------------------------------------------------------------------------
# The single fused kernel: encoders -> 7 MetaLayer steps -> decoder
# ----------------------------------------------------------------------------
def _gnn_kernel(x_in_ref, e_in_ref, sr_hbm_ref, w64_ref, w256_ref, w128_ref,
                b_ref, out_ref, sr_vmem, sr_sem):
    f32 = jnp.float32
    bf16 = jnp.bfloat16
    dot = functools.partial(jnp.dot, preferred_element_type=f32)
    relu = lambda v: jnp.maximum(v, 0.0)

    n_pad = x_in_ref.shape[0]
    e_pad = e_in_ref.shape[0]

    # Kick off the dominant DMA (stacked bf16 one-hot gather operators) and
    # overlap it with the encoder / loop-invariant work below.
    cp = pltpu.make_async_copy(sr_hbm_ref, sr_vmem, sr_sem.at[0])
    cp.start()

    # ---------------- static, sublane-aligned ref slices (no value copies) ----
    fc1_w = w64_ref[_OFF_FC1:_OFF_FC1 + ENC_IN_PAD, :]
    fc2_w = w64_ref[_OFF_FC2:_OFF_FC2 + EMB, :]
    efc1_w = w64_ref[_OFF_EFC1:_OFF_EFC1 + ENC_IN_PAD, :]
    efc2_w = w64_ref[_OFF_EFC2:_OFF_EFC2 + EMB, :]
    # edge_mlp layer-1 rows: [x_s, save_x_s, x_r, save_x_r, e, save_e]
    we1_sxs = w64_ref[_OFF_WE1 + 1 * EMB:_OFF_WE1 + 2 * EMB, :]
    we1_xr = w64_ref[_OFF_WE1 + 2 * EMB:_OFF_WE1 + 3 * EMB, :]
    we1_sxr = w64_ref[_OFF_WE1 + 3 * EMB:_OFF_WE1 + 4 * EMB, :]
    we1_e = w64_ref[_OFF_WE1 + 4 * EMB:_OFF_WE1 + 5 * EMB, :]
    we1_se = w64_ref[_OFF_WE1 + 5 * EMB:_OFF_WE1 + 6 * EMB, :]
    we2 = w64_ref[_OFF_WE2:_OFF_WE2 + EMB, :]
    # node_mlp1 layer-1 rows: [x_s, save_x_s, e_new]
    wn11_sxs = w64_ref[_OFF_WN11 + 1 * EMB:_OFF_WN11 + 2 * EMB, :]
    wn11_e = w64_ref[_OFF_WN11 + 2 * EMB:_OFF_WN11 + 3 * EMB, :]
    wn12 = w64_ref[_OFF_WN12:_OFF_WN12 + EMB, :]
    # node_mlp2 layer-1 rows: [x, save_x, agg]
    wn21_x = w64_ref[_OFF_WN21 + 0 * EMB:_OFF_WN21 + 1 * EMB, :]
    wn21_sx = w64_ref[_OFF_WN21 + 1 * EMB:_OFF_WN21 + 2 * EMB, :]
    wn21_agg = w64_ref[_OFF_WN21 + 2 * EMB:_OFF_WN21 + 3 * EMB, :]
    wn22 = w64_ref[_OFF_WN22:_OFF_WN22 + EMB, :]
    fc3_w = w256_ref[0:EMB, :]
    fc4_w = w256_ref[EMB:EMB + MLP_DIM, :]
    xs_pack = w128_ref[0:EMB, :]                      # [64,128] = [we1_xs | wn11_xs]
    fc5_w = w128_ref[EMB:EMB + MLP_DIM, :]            # [256,128] (only col 0 real)

    def brow(i, width):
        return b_ref[i:i + 1, 0:width]

    fc1_b, fc2_b = brow(_B_FC1, EMB), brow(_B_FC2, EMB)
    efc1_b, efc2_b = brow(_B_EFC1, EMB), brow(_B_EFC2, EMB)
    be1, be2 = brow(_B_E1, EMB), brow(_B_E2, EMB)
    bn11, bn12 = brow(_B_N11, EMB), brow(_B_N12, EMB)
    bn21, bn22 = brow(_B_N21, EMB), brow(_B_N22, EMB)
    fc3_b, fc4_b = brow(_B_FC3, MLP_DIM), brow(_B_FC4, MLP_DIM)
    fc5_b = brow(_B_FC5, OUT_PAD)

    # ---------------- encoders (independent of the one-hot operators) --------
    x = relu(dot(x_in_ref[...], fc1_w) + fc1_b)
    x = relu(dot(x, fc2_w) + fc2_b)
    e = relu(dot(e_in_ref[...], efc1_w) + efc1_b)
    e = relu(dot(e, efc2_w) + efc2_b)
    save_x, save_e = x, e

    # loop-invariant node_mlp2 contribution + hoisted bias broadcasts
    node2_const = dot(save_x, wn21_sx) + bn21                    # [N, 64]
    be2_b = jnp.broadcast_to(be2, (e_pad, EMB))
    bn12_b = jnp.broadcast_to(bn12, (e_pad, EMB))
    bn22_b = jnp.broadcast_to(bn22, (n_pad, EMB))

    # ---------------- gather/scatter operators now needed: wait on the DMA ---
    cp.wait()
    sr = sr_vmem[...]                                            # bf16 [2E, N]
    r = sr_vmem[e_pad:2 * e_pad, :]                              # bf16 [E, N]

    # loop-invariant save_x / save_e contributions (hoisted out of the loop)
    save_sr = dot(sr, save_x.astype(bf16))                       # [2E, 64] f32
    save_src = save_sr[0:e_pad]                                  # save_x[senders]
    save_dst = save_sr[e_pad:2 * e_pad]                          # save_x[receivers]
    edge_const = (dot(save_src, we1_sxs) + dot(save_dst, we1_sxr)
                  + dot(save_e, we1_se) + be1)                   # [E, 64]
    node1_const = dot(save_src, wn11_sxs) + bn11                 # [E, 64]

    # ---------------- 7 message-passing layers, fully resident ---------------
    for _ in range(MP_LAYERS):
        x_sr = dot(sr, x.astype(bf16))            # both gathers in one bf16 matmul
        x_s, x_r = x_sr[0:e_pad], x_sr[e_pad:2 * e_pad]
        t = dot(x_s, xs_pack)                     # [E,128]: edge-xs | node1-xs

        # EdgeModel: edge_mlp(cat([src, dst, ec])) via accumulating dots
        h = relu(t[:, 0:EMB] + dot(x_r, we1_xr) + dot(e, we1_e) + edge_const)
        e = relu(dot(h, we2) + be2_b)             # new edge_attr [E, 64]

        # NodeModel mlp1 on cat([xc[senders], e_new])
        m = relu(t[:, EMB:2 * EMB] + dot(e, wn11_e) + node1_const)
        m = relu(dot(m, wn12) + bn12_b)

        # scatter_add(m, receivers) == contract R's edge axis (f32 accumulation)
        agg = jax.lax.dot_general(r, m.astype(bf16),
                                  (((0,), (0,)), ((), ())),
                                  preferred_element_type=f32)    # [N, 64]

        # NodeModel mlp2 on cat([xc, agg])
        n = relu(dot(x, wn21_x) + dot(agg, wn21_agg) + node2_const)
        x = relu(dot(n, wn22) + bn22_b)           # new node feats [N, 64]

    # ---------------- decoder (f32; single lane-dense store) -----------------
    y = relu(dot(x, fc3_w) + fc3_b)               # [N, 256]
    y = relu(dot(y, fc4_w) + fc4_b)               # [N, 256]
    y = dot(y, fc5_w) + fc5_b                     # [N, OUT_PAD]
    out_ref[...] = y.astype(out_ref.dtype)


# ----------------------------------------------------------------------------
# Wrapper: packs weights, builds stacked bf16 one-hots, single pallas_call
# ----------------------------------------------------------------------------
def _round_up(v, m):
    return ((v + m - 1) // m) * m


def _pack_params(p):
    f32 = jnp.float32

    def pad_rows(a, to):
        return jnp.pad(a.astype(f32), ((0, to - a.shape[0]), (0, 0)))

    w64 = jnp.concatenate([
        pad_rows(p["fc1_w"], ENC_IN_PAD), p["fc2_w"].astype(f32),
        pad_rows(p["edgefc1_w"], ENC_IN_PAD), p["edgefc2_w"].astype(f32),
        p["edge_mlp_w1"].astype(f32), p["edge_mlp_w2"].astype(f32),
        p["node_mlp1_w1"].astype(f32), p["node_mlp1_w2"].astype(f32),
        p["node_mlp2_w1"].astype(f32), p["node_mlp2_w2"].astype(f32),
    ], axis=0)                                                     # [1104, 64]

    w256 = jnp.concatenate([p["fc3_w"], p["fc4_w"]], axis=0).astype(f32)  # [320,256]

    xs_pack = jnp.concatenate([p["edge_mlp_w1"][0:EMB, :],
                               p["node_mlp1_w1"][0:EMB, :]], axis=1)       # [64,128]
    fc5_pad = jnp.pad(p["fc5_w"], ((0, 0), (0, OUT_PAD - OUT_DIM)))        # [256,128]
    w128 = jnp.concatenate([xs_pack, fc5_pad], axis=0).astype(f32)         # [320,128]

    def row(b):
        v = jnp.zeros((1, MLP_DIM), f32)
        return v.at[0, :b.shape[0]].set(b.astype(f32))

    bias = jnp.concatenate(
        [row(p["fc1_b"]), row(p["fc2_b"]), row(p["edgefc1_b"]), row(p["edgefc2_b"]),
         row(p["edge_mlp_b1"]), row(p["edge_mlp_b2"]),
         row(p["node_mlp1_b1"]), row(p["node_mlp1_b2"]),
         row(p["node_mlp2_b1"]), row(p["node_mlp2_b2"]),
         row(p["fc3_b"]), row(p["fc4_b"]), row(p["fc5_b"]),
         jnp.zeros((_B_ROWS - 13, MLP_DIM), f32)], axis=0)                 # [16,256]
    return w64, w256, w128, bias


def interaction_network_forward(params, x, edge_index, edge_attr):
    n_nodes, n_edges = x.shape[0], edge_attr.shape[0]
    n_pad = _round_up(n_nodes, 8)
    e_pad = _round_up(n_edges, 16)
    senders, receivers = edge_index[0], edge_index[1]

    # Stacked bf16 one-hots [senders ; receivers], zero-padded rows (exact).
    s_oh = jnp.pad(jax.nn.one_hot(senders, n_pad, dtype=jnp.bfloat16),
                   ((0, e_pad - n_edges), (0, 0)))
    r_oh = jnp.pad(jax.nn.one_hot(receivers, n_pad, dtype=jnp.bfloat16),
                   ((0, e_pad - n_edges), (0, 0)))
    sr = jnp.concatenate([s_oh, r_oh], axis=0)                    # [2*E_pad, N_pad]

    x_in = jnp.zeros((n_pad, ENC_IN_PAD), jnp.float32).at[:n_nodes, :NODE_DIM].set(x)
    e_in = jnp.zeros((e_pad, ENC_IN_PAD), jnp.float32).at[:n_edges, :EDGE_DIM].set(edge_attr)

    w64, w256, w128, bias = _pack_params(params)

    vmem = pl.BlockSpec(memory_space=pltpu.MemorySpace.VMEM)
    any_spec = pl.BlockSpec(memory_space=pl.ANY)      # DMA'd manually in-kernel
    out = pl.pallas_call(
        _gnn_kernel,
        out_shape=jax.ShapeDtypeStruct((n_pad, OUT_PAD), jnp.float32),
        in_specs=[vmem, vmem, any_spec, vmem, vmem, vmem, vmem],
        out_specs=vmem,
        scratch_shapes=[
            pltpu.VMEM((2 * e_pad, n_pad), jnp.bfloat16),
            pltpu.SemaphoreType.DMA((1,)),
        ],
        compiler_params=pltpu.CompilerParams(vmem_limit_bytes=_vmem_limit_bytes()),
    )(x_in, e_in, sr, w64, w256, w128, bias)
    return out[:n_nodes, :OUT_DIM]


# ----------------------------------------------------------------------------
# Parameter init (deterministic; mimics torch.nn.Linear default init)
# ----------------------------------------------------------------------------
def _init_linear(key, fan_in, fan_out):
    kw, kb = jax.random.split(key)
    bound = 1.0 / np.sqrt(fan_in)
    w = jax.random.uniform(kw, (fan_in, fan_out), jnp.float32, -bound, bound)
    b = jax.random.uniform(kb, (fan_out,), jnp.float32, -bound, bound)
    return w, b


def init_params(key):
    names_shapes = [
        ("fc1", NODE_DIM, EMB), ("fc2", EMB, EMB),
        ("fc3", EMB, MLP_DIM), ("fc4", MLP_DIM, MLP_DIM), ("fc5", MLP_DIM, OUT_DIM),
        ("edgefc1", EDGE_DIM, EMB), ("edgefc2", EMB, EMB),
        ("edge_mlp_1", 2 * (2 * EMB + EMB), EMB), ("edge_mlp_2", EMB, EMB),
        ("node_mlp1_1", 2 * EMB + EMB, EMB), ("node_mlp1_2", EMB, EMB),
        ("node_mlp2_1", 2 * EMB + EMB, EMB), ("node_mlp2_2", EMB, EMB),
    ]
    p = {}
    keys = jax.random.split(key, len(names_shapes))
    for k, (name, fi, fo) in zip(keys, names_shapes):
        w, b = _init_linear(k, fi, fo)
        p[name + "_w"] = w
        p[name + "_b"] = b
    p["edge_mlp_w1"], p["edge_mlp_b1"] = p.pop("edge_mlp_1_w"), p.pop("edge_mlp_1_b")
    p["edge_mlp_w2"], p["edge_mlp_b2"] = p.pop("edge_mlp_2_w"), p.pop("edge_mlp_2_b")
    p["node_mlp1_w1"], p["node_mlp1_b1"] = p.pop("node_mlp1_1_w"), p.pop("node_mlp1_1_b")
    p["node_mlp1_w2"], p["node_mlp1_b2"] = p.pop("node_mlp1_2_w"), p.pop("node_mlp1_2_b")
    p["node_mlp2_w1"], p["node_mlp2_b1"] = p.pop("node_mlp2_1_w"), p.pop("node_mlp2_1_b")
    p["node_mlp2_w2"], p["node_mlp2_b2"] = p.pop("node_mlp2_2_w"), p.pop("node_mlp2_2_b")
    return p


# ----------------------------------------------------------------------------
# Pure-JAX reference (correctness check only)
# ----------------------------------------------------------------------------
def reference_forward(p, x, edge_index, edge_attr):
    def lin(a, w, b, act=True):
        y = a @ w + b
        return jnp.maximum(y, 0.0) if act else y

    n_nodes = x.shape[0]
    senders, receivers = edge_index[0], edge_index[1]
    x = lin(x, p["fc1_w"], p["fc1_b"])
    x = lin(x, p["fc2_w"], p["fc2_b"])
    e = lin(edge_attr, p["edgefc1_w"], p["edgefc1_b"])
    e = lin(e, p["edgefc2_w"], p["edgefc2_b"])
    save_x, save_e = x, e
    for _ in range(MP_LAYERS):
        xc = jnp.concatenate([x, save_x], axis=1)
        ec = jnp.concatenate([e, save_e], axis=1)
        src, dst = xc[senders], xc[receivers]
        h = lin(jnp.concatenate([src, dst, ec], axis=1),
                p["edge_mlp_w1"], p["edge_mlp_b1"])
        e = lin(h, p["edge_mlp_w2"], p["edge_mlp_b2"])
        m = lin(jnp.concatenate([src, e], axis=1),
                p["node_mlp1_w1"], p["node_mlp1_b1"])
        m = lin(m, p["node_mlp1_w2"], p["node_mlp1_b2"])
        agg = jax.ops.segment_sum(m, receivers, num_segments=n_nodes)
        n = lin(jnp.concatenate([xc, agg], axis=1),
                p["node_mlp2_w1"], p["node_mlp2_b1"])
        x = lin(n, p["node_mlp2_w2"], p["node_mlp2_b2"])
    x = lin(x, p["fc3_w"], p["fc3_b"])
    x = lin(x, p["fc4_w"], p["fc4_b"])
    x = lin(x, p["fc5_w"], p["fc5_b"], act=False)
    return x


# ----------------------------------------------------------------------------
if __name__ == "__main__":
    key = jax.random.PRNGKey(0)
    k_params, k_x, k_e, k_s, k_r = jax.random.split(key, 5)

    N_NODES, N_EDGES = 8, 16
    params = init_params(k_params)
    x = jax.random.normal(k_x, (N_NODES, NODE_DIM), jnp.float32)
    edge_attr = jax.random.normal(k_e, (N_EDGES, EDGE_DIM), jnp.float32)
    senders = jax.random.randint(k_s, (N_EDGES,), 0, N_NODES, jnp.int32)
    receivers = jax.random.randint(k_r, (N_EDGES,), 0, N_NODES, jnp.int32)
    edge_index = jnp.stack([senders, receivers], axis=0)

    fwd = jax.jit(interaction_network_forward)
    out = fwd(params, x, edge_index, edge_attr)
    out = jax.block_until_ready(out)

    ref = reference_forward(params, x, edge_index, edge_attr)
    assert out.shape == (N_NODES, OUT_DIM)
    # Gather/scatter operators run in bf16 (by design, for MXU rate + VMEM);
    # all MLP math and accumulation stays f32 -> small tolerance is sufficient.
    np.testing.assert_allclose(np.asarray(out), np.asarray(ref),
                               rtol=2e-2, atol=2e-2)
    print("KERNEL_OK")
</pallas_src>

<mosaic_0001>
module attributes {stable_mosaic.version = 11 : i64} {
  func.func @_gnn_kernel(%arg0: memref<8x8xf32, #tpu.memory_space<vmem>>, %arg1: memref<16x8xf32, #tpu.memory_space<vmem>>, %arg2: memref<32x8xbf16, #tpu.memory_space<any>>, %arg3: memref<1104x64xf32, #tpu.memory_space<vmem>>, %arg4: memref<320x256xf32, #tpu.memory_space<vmem>>, %arg5: memref<320x128xf32, #tpu.memory_space<vmem>>, %arg6: memref<16x256xf32, #tpu.memory_space<vmem>>, %arg7: memref<8x128xf32, #tpu.memory_space<vmem>>, %arg8: memref<32x8xbf16, #tpu.memory_space<vmem>>, %arg9: memref<1x!tpu.dma_semaphore, #tpu.memory_space<semaphore_mem>>) attributes {dimension_semantics = [], scalar_prefetch = 0 : i64, scratch_operands = 2 : i64, tpu.core_type = #tpu.core_type<tc>} {
    %c0_i32 = arith.constant 0 : i32
    %0 = tpu.memref_slice %arg9[%c0_i32] : memref<1x!tpu.dma_semaphore, #tpu.memory_space<semaphore_mem>> -> memref<1x!tpu.dma_semaphore, #tpu.memory_space<semaphore_mem>>
    %1 = tpu.memref_squeeze %0 : memref<1x!tpu.dma_semaphore, #tpu.memory_space<semaphore_mem>> -> memref<!tpu.dma_semaphore, #tpu.memory_space<semaphore_mem>>
    tpu.enqueue_dma source(%arg2 : memref<32x8xbf16, #tpu.memory_space<any>>) target(%arg8 : memref<32x8xbf16, #tpu.memory_space<vmem>>) target_semaphore(%1 : memref<!tpu.dma_semaphore, #tpu.memory_space<semaphore_mem>>)
    %c0 = arith.constant 0 : index
    %c0_0 = arith.constant 0 : index
    %2 = vector.load %arg3[%c0, %c0_0] : memref<1104x64xf32, #tpu.memory_space<vmem>>, vector<8x64xf32>
    %c8 = arith.constant 8 : index
    %c0_1 = arith.constant 0 : index
    %3 = vector.load %arg3[%c8, %c0_1] : memref<1104x64xf32, #tpu.memory_space<vmem>>, vector<64x64xf32>
    %c72 = arith.constant 72 : index
    %c0_2 = arith.constant 0 : index
    %4 = vector.load %arg3[%c72, %c0_2] : memref<1104x64xf32, #tpu.memory_space<vmem>>, vector<8x64xf32>
    %c80 = arith.constant 80 : index
    %c0_3 = arith.constant 0 : index
    %5 = vector.load %arg3[%c80, %c0_3] : memref<1104x64xf32, #tpu.memory_space<vmem>>, vector<64x64xf32>
    %c208 = arith.constant 208 : index
    %c0_4 = arith.constant 0 : index
    %6 = vector.load %arg3[%c208, %c0_4] : memref<1104x64xf32, #tpu.memory_space<vmem>>, vector<64x64xf32>
    %c272 = arith.constant 272 : index
    %c0_5 = arith.constant 0 : index
    %7 = vector.load %arg3[%c272, %c0_5] : memref<1104x64xf32, #tpu.memory_space<vmem>>, vector<64x64xf32>
    %c336 = arith.constant 336 : index
    %c0_6 = arith.constant 0 : index
    %8 = vector.load %arg3[%c336, %c0_6] : memref<1104x64xf32, #tpu.memory_space<vmem>>, vector<64x64xf32>
    %c400 = arith.constant 400 : index
    %c0_7 = arith.constant 0 : index
    %9 = vector.load %arg3[%c400, %c0_7] : memref<1104x64xf32, #tpu.memory_space<vmem>>, vector<64x64xf32>
    %c464 = arith.constant 464 : index
    %c0_8 = arith.constant 0 : index
    %10 = vector.load %arg3[%c464, %c0_8] : memref<1104x64xf32, #tpu.memory_space<vmem>>, vector<64x64xf32>
    %c528 = arith.constant 528 : index
    %c0_9 = arith.constant 0 : index
    %11 = vector.load %arg3[%c528, %c0_9] : memref<1104x64xf32, #tpu.memory_space<vmem>>, vector<64x64xf32>
    %c656 = arith.constant 656 : index
    %c0_10 = arith.constant 0 : index
    %12 = vector.load %arg3[%c656, %c0_10] : memref<1104x64xf32, #tpu.memory_space<vmem>>, vector<64x64xf32>
    %c720 = arith.constant 720 : index
    %c0_11 = arith.constant 0 : index
    %13 = vector.load %arg3[%c720, %c0_11] : memref<1104x64xf32, #tpu.memory_space<vmem>>, vector<64x64xf32>
    %c784 = arith.constant 784 : index
    %c0_12 = arith.constant 0 : index
    %14 = vector.load %arg3[%c784, %c0_12] : memref<1104x64xf32, #tpu.memory_space<vmem>>, vector<64x64xf32>
    %c848 = arith.constant 848 : index
    %c0_13 = arith.constant 0 : index
    %15 = vector.load %arg3[%c848, %c0_13] : memref<1104x64xf32, #tpu.memory_space<vmem>>, vector<64x64xf32>
    %c912 = arith.constant 912 : index
    %c0_14 = arith.constant 0 : index
    %16 = vector.load %arg3[%c912, %c0_14] : memref<1104x64xf32, #tpu.memory_space<vmem>>, vector<64x64xf32>
    %c976 = arith.constant 976 : index
    %c0_15 = arith.constant 0 : index
    %17 = vector.load %arg3[%c976, %c0_15] : memref<1104x64xf32, #tpu.memory_space<vmem>>, vector<64x64xf32>
    %c1040 = arith.constant 1040 : index
    %c0_16 = arith.constant 0 : index
    %18 = vector.load %arg3[%c1040, %c0_16] : memref<1104x64xf32, #tpu.memory_space<vmem>>, vector<64x64xf32>
    %c0_17 = arith.constant 0 : index
    %c0_18 = arith.constant 0 : index
    %19 = vector.load %arg4[%c0_17, %c0_18] : memref<320x256xf32, #tpu.memory_space<vmem>>, vector<64x256xf32>
    %c64 = arith.constant 64 : index
    %c0_19 = arith.constant 0 : index
    %20 = vector.load %arg4[%c64, %c0_19] : memref<320x256xf32, #tpu.memory_space<vmem>>, vector<256x256xf32>
    %c0_20 = arith.constant 0 : index
    %c0_21 = arith.constant 0 : index
    %21 = vector.load %arg5[%c0_20, %c0_21] : memref<320x128xf32, #tpu.memory_space<vmem>>, vector<64x128xf32>
    %c64_22 = arith.constant 64 : index
    %c0_23 = arith.constant 0 : index
    %22 = vector.load %arg5[%c64_22, %c0_23] : memref<320x128xf32, #tpu.memory_space<vmem>>, vector<256x128xf32>
    %c0_24 = arith.constant 0 : index
    %c0_25 = arith.constant 0 : index
    %23 = vector.load %arg6[%c0_24, %c0_25] : memref<16x256xf32, #tpu.memory_space<vmem>>, vector<1x64xf32>
    %c1 = arith.constant 1 : index
    %c0_26 = arith.constant 0 : index
    %24 = vector.load %arg6[%c1, %c0_26] : memref<16x256xf32, #tpu.memory_space<vmem>>, vector<1x64xf32>
    %c2 = arith.constant 2 : index
    %c0_27 = arith.constant 0 : index
    %25 = vector.load %arg6[%c2, %c0_27] : memref<16x256xf32, #tpu.memory_space<vmem>>, vector<1x64xf32>
    %c3 = arith.constant 3 : index
    %c0_28 = arith.constant 0 : index
    %26 = vector.load %arg6[%c3, %c0_28] : memref<16x256xf32, #tpu.memory_space<vmem>>, vector<1x64xf32>
    %c4 = arith.constant 4 : index
    %c0_29 = arith.constant 0 : index
    %27 = vector.load %arg6[%c4, %c0_29] : memref<16x256xf32, #tpu.memory_space<vmem>>, vector<1x64xf32>
    %c5 = arith.constant 5 : index
    %c0_30 = arith.constant 0 : index
    %28 = vector.load %arg6[%c5, %c0_30] : memref<16x256xf32, #tpu.memory_space<vmem>>, vector<1x64xf32>
    %c6 = arith.constant 6 : index
    %c0_31 = arith.constant 0 : index
    %29 = vector.load %arg6[%c6, %c0_31] : memref<16x256xf32, #tpu.memory_space<vmem>>, vector<1x64xf32>
    %c7 = arith.constant 7 : index
    %c0_32 = arith.constant 0 : index
    %30 = vector.load %arg6[%c7, %c0_32] : memref<16x256xf32, #tpu.memory_space<vmem>>, vector<1x64xf32>
    %c8_33 = arith.constant 8 : index
    %c0_34 = arith.constant 0 : index
    %31 = vector.load %arg6[%c8_33, %c0_34] : memref<16x256xf32, #tpu.memory_space<vmem>>, vector<1x64xf32>
    %c9 = arith.constant 9 : index
    %c0_35 = arith.constant 0 : index
    %32 = vector.load %arg6[%c9, %c0_35] : memref<16x256xf32, #tpu.memory_space<vmem>>, vector<1x64xf32>
    %c10 = arith.constant 10 : index
    %c0_36 = arith.constant 0 : index
    %33 = vector.load %arg6[%c10, %c0_36] : memref<16x256xf32, #tpu.memory_space<vmem>>, vector<1x256xf32>
    %c11 = arith.constant 11 : index
    %c0_37 = arith.constant 0 : index
    %34 = vector.load %arg6[%c11, %c0_37] : memref<16x256xf32, #tpu.memory_space<vmem>>, vector<1x256xf32>
    %c12 = arith.constant 12 : index
    %c0_38 = arith.constant 0 : index
    %35 = vector.load %arg6[%c12, %c0_38] : memref<16x256xf32, #tpu.memory_space<vmem>>, vector<1x128xf32>
    %c0_39 = arith.constant 0 : index
    %c0_40 = arith.constant 0 : index
    %36 = vector.load %arg0[%c0_39, %c0_40] : memref<8x8xf32, #tpu.memory_space<vmem>>, vector<8x8xf32>
    %cst = arith.constant dense<0.000000e+00> : vector<8x64xf32>
    %37 = tpu.matmul %36, %2, %cst {dimension_numbers = #tpu.dot_dimension_numbers<[1], [0], [0], [1], [0, 0, 1, 1], [], []>} : vector<8x8xf32>, vector<8x64xf32>, vector<8x64xf32> -> vector<8x64xf32>
    %38 = vector.broadcast %23 : vector<1x64xf32> to vector<8x64xf32>
    %39 = arith.addf %37, %38 : vector<8x64xf32>
    %cst_41 = arith.constant 0.000000e+00 : f32
    %40 = vector.broadcast %cst_41 : f32 to vector<8x64xf32>
    %41 = arith.maximumf %39, %40 : vector<8x64xf32>
    %cst_42 = arith.constant dense<0.000000e+00> : vector<8x64xf32>
    %42 = tpu.matmul %41, %3, %cst_42 {dimension_numbers = #tpu.dot_dimension_numbers<[1], [0], [0], [1], [0, 0, 1, 1], [], []>} : vector<8x64xf32>, vector<64x64xf32>, vector<8x64xf32> -> vector<8x64xf32>
    %43 = vector.broadcast %24 : vector<1x64xf32> to vector<8x64xf32>
    %44 = arith.addf %42, %43 : vector<8x64xf32>
    %cst_43 = arith.constant 0.000000e+00 : f32
    %45 = vector.broadcast %cst_43 : f32 to vector<8x64xf32>
    %46 = arith.maximumf %44, %45 : vector<8x64xf32>
    %c0_44 = arith.constant 0 : index
    %c0_45 = arith.constant 0 : index
    %47 = vector.load %arg1[%c0_44, %c0_45] : memref<16x8xf32, #tpu.memory_space<vmem>>, vector<16x8xf32>
    %cst_46 = arith.constant dense<0.000000e+00> : vector<16x64xf32>
    %48 = tpu.matmul %47, %4, %cst_46 {dimension_numbers = #tpu.dot_dimension_numbers<[1], [0], [0], [1], [0, 0, 1, 1], [], []>} : vector<16x8xf32>, vector<8x64xf32>, vector<16x64xf32> -> vector<16x64xf32>
    %49 = vector.broadcast %25 : vector<1x64xf32> to vector<16x64xf32>
    %50 = arith.addf %48, %49 : vector<16x64xf32>
    %cst_47 = arith.constant 0.000000e+00 : f32
    %51 = vector.broadcast %cst_47 : f32 to vector<16x64xf32>
    %52 = arith.maximumf %50, %51 : vector<16x64xf32>
    %cst_48 = arith.constant dense<0.000000e+00> : vector<16x64xf32>
    %53 = tpu.matmul %52, %5, %cst_48 {dimension_numbers = #tpu.dot_dimension_numbers<[1], [0], [0], [1], [0, 0, 1, 1], [], []>} : vector<16x64xf32>, vector<64x64xf32>, vector<16x64xf32> -> vector<16x64xf32>
    %54 = vector.broadcast %26 : vector<1x64xf32> to vector<16x64xf32>
    %55 = arith.addf %53, %54 : vector<16x64xf32>
    %cst_49 = arith.constant 0.000000e+00 : f32
    %56 = vector.broadcast %cst_49 : f32 to vector<16x64xf32>
    %57 = arith.maximumf %55, %56 : vector<16x64xf32>
    %cst_50 = arith.constant dense<0.000000e+00> : vector<8x64xf32>
    %58 = tpu.matmul %46, %16, %cst_50 {dimension_numbers = #tpu.dot_dimension_numbers<[1], [0], [0], [1], [0, 0, 1, 1], [], []>} : vector<8x64xf32>, vector<64x64xf32>, vector<8x64xf32> -> vector<8x64xf32>
    %59 = vector.broadcast %31 : vector<1x64xf32> to vector<8x64xf32>
    %60 = arith.addf %58, %59 : vector<8x64xf32>
    %61 = vector.shape_cast %28 : vector<1x64xf32> to vector<1x64xf32>
    %62 = vector.broadcast %61 : vector<1x64xf32> to vector<16x64xf32>
    %63 = vector.shape_cast %30 : vector<1x64xf32> to vector<1x64xf32>
    %64 = vector.broadcast %63 : vector<1x64xf32> to vector<16x64xf32>
    %65 = vector.shape_cast %32 : vector<1x64xf32> to vector<1x64xf32>
    %66 = vector.broadcast %65 : vector<1x64xf32> to vector<8x64xf32>
    %c0_i32_51 = arith.constant 0 : i32
    %67 = tpu.memref_slice %arg9[%c0_i32_51] : memref<1x!tpu.dma_semaphore, #tpu.memory_space<semaphore_mem>> -> memref<1x!tpu.dma_semaphore, #tpu.memory_space<semaphore_mem>>
    %68 = tpu.memref_squeeze %67 : memref<1x!tpu.dma_semaphore, #tpu.memory_space<semaphore_mem>> -> memref<!tpu.dma_semaphore, #tpu.memory_space<semaphore_mem>>
    tpu.wait_dma2 semaphore(%68 : memref<!tpu.dma_semaphore, #tpu.memory_space<semaphore_mem>>) src(%arg2 : memref<32x8xbf16, #tpu.memory_space<any>>) dst(%arg8 : memref<32x8xbf16, #tpu.memory_space<vmem>>)
    %c0_52 = arith.constant 0 : index
    %c0_53 = arith.constant 0 : index
    %69 = vector.load %arg8[%c0_52, %c0_53] : memref<32x8xbf16, #tpu.memory_space<vmem>>, vector<32x8xbf16>
    %c16 = arith.constant 16 : index
    %c0_54 = arith.constant 0 : index
    %70 = vector.load %arg8[%c16, %c0_54] : memref<32x8xbf16, #tpu.memory_space<vmem>>, vector<16x8xbf16>
    %71 = arith.truncf %46 : vector<8x64xf32> to vector<8x64xbf16>
    %cst_55 = arith.constant dense<0.000000e+00> : vector<32x64xf32>
    %72 = tpu.matmul %69, %71, %cst_55 {dimension_numbers = #tpu.dot_dimension_numbers<[1], [0], [0], [1], [0, 0, 1, 1], [], []>} : vector<32x8xbf16>, vector<8x64xbf16>, vector<32x64xf32> -> vector<32x64xf32>
    %73 = vector.extract_strided_slice %72 {offsets = [0, 0], sizes = [16, 64], strides = [1, 1]} : vector<32x64xf32> to vector<16x64xf32>
    %74 = vector.extract_strided_slice %72 {offsets = [16, 0], sizes = [16, 64], strides = [1, 1]} : vector<32x64xf32> to vector<16x64xf32>
    %cst_56 = arith.constant dense<0.000000e+00> : vector<16x64xf32>
    %75 = tpu.matmul %73, %6, %cst_56 {dimension_numbers = #tpu.dot_dimension_numbers<[1], [0], [0], [1], [0, 0, 1, 1], [], []>} : vector<16x64xf32>, vector<64x64xf32>, vector<16x64xf32> -> vector<16x64xf32>
    %cst_57 = arith.constant dense<0.000000e+00> : vector<16x64xf32>
    %76 = tpu.matmul %74, %8, %cst_57 {dimension_numbers = #tpu.dot_dimension_numbers<[1], [0], [0], [1], [0, 0, 1, 1], [], []>} : vector<16x64xf32>, vector<64x64xf32>, vector<16x64xf32> -> vector<16x64xf32>
    %77 = arith.addf %75, %76 : vector<16x64xf32>
    %cst_58 = arith.constant dense<0.000000e+00> : vector<16x64xf32>
    %78 = tpu.matmul %57, %10, %cst_58 {dimension_numbers = #tpu.dot_dimension_numbers<[1], [0], [0], [1], [0, 0, 1, 1], [], []>} : vector<16x64xf32>, vector<64x64xf32>, vector<16x64xf32> -> vector<16x64xf32>
    %79 = arith.addf %77, %78 : vector<16x64xf32>
    %80 = vector.broadcast %27 : vector<1x64xf32> to vector<16x64xf32>
    %81 = arith.addf %79, %80 : vector<16x64xf32>
    %cst_59 = arith.constant dense<0.000000e+00> : vector<16x64xf32>
    %82 = tpu.matmul %73, %12, %cst_59 {dimension_numbers = #tpu.dot_dimension_numbers<[1], [0], [0], [1], [0, 0, 1, 1], [], []>} : vector<16x64xf32>, vector<64x64xf32>, vector<16x64xf32> -> vector<16x64xf32>
    %83 = vector.broadcast %29 : vector<1x64xf32> to vector<16x64xf32>
    %84 = arith.addf %82, %83 : vector<16x64xf32>
    %85 = arith.truncf %46 : vector<8x64xf32> to vector<8x64xbf16>
    %cst_60 = arith.constant dense<0.000000e+00> : vector<32x64xf32>
    %86 = tpu.matmul %69, %85, %cst_60 {dimension_numbers = #tpu.dot_dimension_numbers<[1], [0], [0], [1], [0, 0, 1, 1], [], []>} : vector<32x8xbf16>, vector<8x64xbf16>, vector<32x64xf32> -> vector<32x64xf32>
    %87 = vector.extract_strided_slice %86 {offsets = [0, 0], sizes = [16, 64], strides = [1, 1]} : vector<32x64xf32> to vector<16x64xf32>
    %88 = vector.extract_strided_slice %86 {offsets = [16, 0], sizes = [16, 64], strides = [1, 1]} : vector<32x64xf32> to vector<16x64xf32>
    %cst_61 = arith.constant dense<0.000000e+00> : vector<16x128xf32>
    %89 = tpu.matmul %87, %21, %cst_61 {dimension_numbers = #tpu.dot_dimension_numbers<[1], [0], [0], [1], [0, 0, 1, 1], [], []>} : vector<16x64xf32>, vector<64x128xf32>, vector<16x128xf32> -> vector<16x128xf32>
    %90 = vector.extract_strided_slice %89 {offsets = [0, 0], sizes = [16, 64], strides = [1, 1]} : vector<16x128xf32> to vector<16x64xf32>
    %cst_62 = arith.constant dense<0.000000e+00> : vector<16x64xf32>
    %91 = tpu.matmul %88, %7, %cst_62 {dimension_numbers = #tpu.dot_dimension_numbers<[1], [0], [0], [1], [0, 0, 1, 1], [], []>} : vector<16x64xf32>, vector<64x64xf32>, vector<16x64xf32> -> vector<16x64xf32>
    %92 = arith.addf %90, %91 : vector<16x64xf32>
    %cst_63 = arith.constant dense<0.000000e+00> : vector<16x64xf32>
    %93 = tpu.matmul %57, %9, %cst_63 {dimension_numbers = #tpu.dot_dimension_numbers<[1], [0], [0], [1], [0, 0, 1, 1], [], []>} : vector<16x64xf32>, vector<64x64xf32>, vector<16x64xf32> -> vector<16x64xf32>
    %94 = arith.addf %92, %93 : vector<16x64xf32>
    %95 = arith.addf %94, %81 : vector<16x64xf32>
    %cst_64 = arith.constant 0.000000e+00 : f32
    %96 = vector.broadcast %cst_64 : f32 to vector<16x64xf32>
    %97 = arith.maximumf %95, %96 : vector<16x64xf32>
    %cst_65 = arith.constant dense<0.000000e+00> : vector<16x64xf32>
    %98 = tpu.matmul %97, %11, %cst_65 {dimension_numbers = #tpu.dot_dimension_numbers<[1], [0], [0], [1], [0, 0, 1, 1], [], []>} : vector<16x64xf32>, vector<64x64xf32>, vector<16x64xf32> -> vector<16x64xf32>
    %99 = arith.addf %98, %62 : vector<16x64xf32>
    %cst_66 = arith.constant 0.000000e+00 : f32
    %100 = vector.broadcast %cst_66 : f32 to vector<16x64xf32>
    %101 = arith.maximumf %99, %100 : vector<16x64xf32>
    %102 = vector.extract_strided_slice %89 {offsets = [0, 64], sizes = [16, 64], strides = [1, 1]} : vector<16x128xf32> to vector<16x64xf32>
    %cst_67 = arith.constant dense<0.000000e+00> : vector<16x64xf32>
    %103 = tpu.matmul %101, %13, %cst_67 {dimension_numbers = #tpu.dot_dimension_numbers<[1], [0], [0], [1], [0, 0, 1, 1], [], []>} : vector<16x64xf32>, vector<64x64xf32>, vector<16x64xf32> -> vector<16x64xf32>
    %104 = arith.addf %102, %103 : vector<16x64xf32>
    %105 = arith.addf %104, %84 : vector<16x64xf32>
    %cst_68 = arith.constant 0.000000e+00 : f32
    %106 = vector.broadcast %cst_68 : f32 to vector<16x64xf32>
    %107 = arith.maximumf %105, %106 : vector<16x64xf32>
    %cst_69 = arith.constant dense<0.000000e+00> : vector<16x64xf32>
    %108 = tpu.matmul %107, %14, %cst_69 {dimension_numbers = #tpu.dot_dimension_numbers<[1], [0], [0], [1], [0, 0, 1, 1], [], []>} : vector<16x64xf32>, vector<64x64xf32>, vector<16x64xf32> -> vector<16x64xf32>
    %109 = arith.addf %108, %64 : vector<16x64xf32>
    %cst_70 = arith.constant 0.000000e+00 : f32
    %110 = vector.broadcast %cst_70 : f32 to vector<16x64xf32>
    %111 = arith.maximumf %109, %110 : vector<16x64xf32>
    %112 = arith.truncf %111 : vector<16x64xf32> to vector<16x64xbf16>
    %cst_71 = arith.constant dense<0.000000e+00> : vector<8x64xf32>
    %113 = tpu.matmul %70, %112, %cst_71 {dimension_numbers = #tpu.dot_dimension_numbers<[0], [0], [1], [1], [0, 1, 1, 1], [], []>} : vector<16x8xbf16>, vector<16x64xbf16>, vector<8x64xf32> -> vector<8x64xf32>
    %cst_72 = arith.constant dense<0.000000e+00> : vector<8x64xf32>
    %114 = tpu.matmul %46, %15, %cst_72 {dimension_numbers = #tpu.dot_dimension_numbers<[1], [0], [0], [1], [0, 0, 1, 1], [], []>} : vector<8x64xf32>, vector<64x64xf32>, vector<8x64xf32> -> vector<8x64xf32>
    %cst_73 = arith.constant dense<0.000000e+00> : vector<8x64xf32>
    %115 = tpu.matmul %113, %17, %cst_73 {dimension_numbers = #tpu.dot_dimension_numbers<[1], [0], [0], [1], [0, 0, 1, 1], [], []>} : vector<8x64xf32>, vector<64x64xf32>, vector<8x64xf32> -> vector<8x64xf32>
    %116 = arith.addf %114, %115 : vector<8x64xf32>
    %117 = arith.addf %116, %60 : vector<8x64xf32>
    %cst_74 = arith.constant 0.000000e+00 : f32
    %118 = vector.broadcast %cst_74 : f32 to vector<8x64xf32>
    %119 = arith.maximumf %117, %118 : vector<8x64xf32>
    %cst_75 = arith.constant dense<0.000000e+00> : vector<8x64xf32>
    %120 = tpu.matmul %119, %18, %cst_75 {dimension_numbers = #tpu.dot_dimension_numbers<[1], [0], [0], [1], [0, 0, 1, 1], [], []>} : vector<8x64xf32>, vector<64x64xf32>, vector<8x64xf32> -> vector<8x64xf32>
    %121 = arith.addf %120, %66 : vector<8x64xf32>
    %cst_76 = arith.constant 0.000000e+00 : f32
    %122 = vector.broadcast %cst_76 : f32 to vector<8x64xf32>
    %123 = arith.maximumf %121, %122 : vector<8x64xf32>
    %124 = arith.truncf %123 : vector<8x64xf32> to vector<8x64xbf16>
    %cst_77 = arith.constant dense<0.000000e+00> : vector<32x64xf32>
    %125 = tpu.matmul %69, %124, %cst_77 {dimension_numbers = #tpu.dot_dimension_numbers<[1], [0], [0], [1], [0, 0, 1, 1], [], []>} : vector<32x8xbf16>, vector<8x64xbf16>, vector<32x64xf32> -> vector<32x64xf32>
    %126 = vector.extract_strided_slice %125 {offsets = [0, 0], sizes = [16, 64], strides = [1, 1]} : vector<32x64xf32> to vector<16x64xf32>
    %127 = vector.extract_strided_slice %125 {offsets = [16, 0], sizes = [16, 64], strides = [1, 1]} : vector<32x64xf32> to vector<16x64xf32>
    %cst_78 = arith.constant dense<0.000000e+00> : vector<16x128xf32>
    %128 = tpu.matmul %126, %21, %cst_78 {dimension_numbers = #tpu.dot_dimension_numbers<[1], [0], [0], [1], [0, 0, 1, 1], [], []>} : vector<16x64xf32>, vector<64x128xf32>, vector<16x128xf32> -> vector<16x128xf32>
    %129 = vector.extract_strided_slice %128 {offsets = [0, 0], sizes = [16, 64], strides = [1, 1]} : vector<16x128xf32> to vector<16x64xf32>
    %cst_79 = arith.constant dense<0.000000e+00> : vector<16x64xf32>
    %130 = tpu.matmul %127, %7, %cst_79 {dimension_numbers = #tpu.dot_dimension_numbers<[1], [0], [0], [1], [0, 0, 1, 1], [], []>} : vector<16x64xf32>, vector<64x64xf32>, vector<16x64xf32> -> vector<16x64xf32>
    %131 = arith.addf %129, %130 : vector<16x64xf32>
    %cst_80 = arith.constant dense<0.000000e+00> : vector<16x64xf32>
    %132 = tpu.matmul %101, %9, %cst_80 {dimension_numbers = #tpu.dot_dimension_numbers<[1], [0], [0], [1], [0, 0, 1, 1], [], []>} : vector<16x64xf32>, vector<64x64xf32>, vector<16x64xf32> -> vector<16x64xf32>
    %133 = arith.addf %131, %132 : vector<16x64xf32>
    %134 = arith.addf %133, %81 : vector<16x64xf32>
    %cst_81 = arith.constant 0.000000e+00 : f32
    %135 = vector.broadcast %cst_81 : f32 to vector<16x64xf32>
    %136 = arith.maximumf %134, %135 : vector<16x64xf32>
    %cst_82 = arith.constant dense<0.000000e+00> : vector<16x64xf32>
    %137 = tpu.matmul %136, %11, %cst_82 {dimension_numbers = #tpu.dot_dimension_numbers<[1], [0], [0], [1], [0, 0, 1, 1], [], []>} : vector<16x64xf32>, vector<64x64xf32>, vector<16x64xf32> -> vector<16x64xf32>
    %138 = arith.addf %137, %62 : vector<16x64xf32>
    %cst_83 = arith.constant 0.000000e+00 : f32
    %139 = vector.broadcast %cst_83 : f32 to vector<16x64xf32>
    %140 = arith.maximumf %138, %139 : vector<16x64xf32>
    %141 = vector.extract_strided_slice %128 {offsets = [0, 64], sizes = [16, 64], strides = [1, 1]} : vector<16x128xf32> to vector<16x64xf32>
    %cst_84 = arith.constant dense<0.000000e+00> : vector<16x64xf32>
    %142 = tpu.matmul %140, %13, %cst_84 {dimension_numbers = #tpu.dot_dimension_numbers<[1], [0], [0], [1], [0, 0, 1, 1], [], []>} : vector<16x64xf32>, vector<64x64xf32>, vector<16x64xf32> -> vector<16x64xf32>
    %143 = arith.addf %141, %142 : vector<16x64xf32>
    %144 = arith.addf %143, %84 : vector<16x64xf32>
    %cst_85 = arith.constant 0.000000e+00 : f32
    %145 = vector.broadcast %cst_85 : f32 to vector<16x64xf32>
    %146 = arith.maximumf %144, %145 : vector<16x64xf32>
    %cst_86 = arith.constant dense<0.000000e+00> : vector<16x64xf32>
    %147 = tpu.matmul %146, %14, %cst_86 {dimension_numbers = #tpu.dot_dimension_numbers<[1], [0], [0], [1], [0, 0, 1, 1], [], []>} : vector<16x64xf32>, vector<64x64xf32>, vector<16x64xf32> -> vector<16x64xf32>
    %148 = arith.addf %147, %64 : vector<16x64xf32>
    %cst_87 = arith.constant 0.000000e+00 : f32
    %149 = vector.broadcast %cst_87 : f32 to vector<16x64xf32>
    %150 = arith.maximumf %148, %149 : vector<16x64xf32>
    %151 = arith.truncf %150 : vector<16x64xf32> to vector<16x64xbf16>
    %cst_88 = arith.constant dense<0.000000e+00> : vector<8x64xf32>
    %152 = tpu.matmul %70, %151, %cst_88 {dimension_numbers = #tpu.dot_dimension_numbers<[0], [0], [1], [1], [0, 1, 1, 1], [], []>} : vector<16x8xbf16>, vector<16x64xbf16>, vector<8x64xf32> -> vector<8x64xf32>
    %cst_89 = arith.constant dense<0.000000e+00> : vector<8x64xf32>
    %153 = tpu.matmul %123, %15, %cst_89 {dimension_numbers = #tpu.dot_dimension_numbers<[1], [0], [0], [1], [0, 0, 1, 1], [], []>} : vector<8x64xf32>, vector<64x64xf32>, vector<8x64xf32> -> vector<8x64xf32>
    %cst_90 = arith.constant dense<0.000000e+00> : vector<8x64xf32>
    %154 = tpu.matmul %152, %17, %cst_90 {dimension_numbers = #tpu.dot_dimension_numbers<[1], [0], [0], [1], [0, 0, 1, 1], [], []>} : vector<8x64xf32>, vector<64x64xf32>, vector<8x64xf32> -> vector<8x64xf32>
    %155 = arith.addf %153, %154 : vector<8x64xf32>
    %156 = arith.addf %155, %60 : vector<8x64xf32>
    %cst_91 = arith.constant 0.000000e+00 : f32
    %157 = vector.broadcast %cst_91 : f32 to vector<8x64xf32>
    %158 = arith.maximumf %156, %157 : vector<8x64xf32>
    %cst_92 = arith.constant dense<0.000000e+00> : vector<8x64xf32>
    %159 = tpu.matmul %158, %18, %cst_92 {dimension_numbers = #tpu.dot_dimension_numbers<[1], [0], [0], [1], [0, 0, 1, 1], [], []>} : vector<8x64xf32>, vector<64x64xf32>, vector<8x64xf32> -> vector<8x64xf32>
    %160 = arith.addf %159, %66 : vector<8x64xf32>
    %cst_93 = arith.constant 0.000000e+00 : f32
    %161 = vector.broadcast %cst_93 : f32 to vector<8x64xf32>
    %162 = arith.maximumf %160, %161 : vector<8x64xf32>
    %163 = arith.truncf %162 : vector<8x64xf32> to vector<8x64xbf16>
    %cst_94 = arith.constant dense<0.000000e+00> : vector<32x64xf32>
    %164 = tpu.matmul %69, %163, %cst_94 {dimension_numbers = #tpu.dot_dimension_numbers<[1], [0], [0], [1], [0, 0, 1, 1], [], []>} : vector<32x8xbf16>, vector<8x64xbf16>, vector<32x64xf32> -> vector<32x64xf32>
    %165 = vector.extract_strided_slice %164 {offsets = [0, 0], sizes = [16, 64], strides = [1, 1]} : vector<32x64xf32> to vector<16x64xf32>
    %166 = vector.extract_strided_slice %164 {offsets = [16, 0], sizes = [16, 64], strides = [1, 1]} : vector<32x64xf32> to vector<16x64xf32>
    %cst_95 = arith.constant dense<0.000000e+00> : vector<16x128xf32>
    %167 = tpu.matmul %165, %21, %cst_95 {dimension_numbers = #tpu.dot_dimension_numbers<[1], [0], [0], [1], [0, 0, 1, 1], [], []>} : vector<16x64xf32>, vector<64x128xf32>, vector<16x128xf32> -> vector<16x128xf32>
    %168 = vector.extract_strided_slice %167 {offsets = [0, 0], sizes = [16, 64], strides = [1, 1]} : vector<16x128xf32> to vector<16x64xf32>
    %cst_96 = arith.constant dense<0.000000e+00> : vector<16x64xf32>
    %169 = tpu.matmul %166, %7, %cst_96 {dimension_numbers = #tpu.dot_dimension_numbers<[1], [0], [0], [1], [0, 0, 1, 1], [], []>} : vector<16x64xf32>, vector<64x64xf32>, vector<16x64xf32> -> vector<16x64xf32>
    %170 = arith.addf %168, %169 : vector<16x64xf32>
    %cst_97 = arith.constant dense<0.000000e+00> : vector<16x64xf32>
    %171 = tpu.matmul %140, %9, %cst_97 {dimension_numbers = #tpu.dot_dimension_numbers<[1], [0], [0], [1], [0, 0, 1, 1], [], []>} : vector<16x64xf32>, vector<64x64xf32>, vector<16x64xf32> -> vector<16x64xf32>
    %172 = arith.addf %170, %171 : vector<16x64xf32>
    %173 = arith.addf %172, %81 : vector<16x64xf32>
    %cst_98 = arith.constant 0.000000e+00 : f32
    %174 = vector.broadcast %cst_98 : f32 to vector<16x64xf32>
    %175 = arith.maximumf %173, %174 : vector<16x64xf32>
    %cst_99 = arith.constant dense<0.000000e+00> : vector<16x64xf32>
    %176 = tpu.matmul %175, %11, %cst_99 {dimension_numbers = #tpu.dot_dimension_numbers<[1], [0], [0], [1], [0, 0, 1, 1], [], []>} : vector<16x64xf32>, vector<64x64xf32>, vector<16x64xf32> -> vector<16x64xf32>
    %177 = arith.addf %176, %62 : vector<16x64xf32>
    %cst_100 = arith.constant 0.000000e+00 : f32
    %178 = vector.broadcast %cst_100 : f32 to vector<16x64xf32>
    %179 = arith.maximumf %177, %178 : vector<16x64xf32>
    %180 = vector.extract_strided_slice %167 {offsets = [0, 64], sizes = [16, 64], strides = [1, 1]} : vector<16x128xf32> to vector<16x64xf32>
    %cst_101 = arith.constant dense<0.000000e+00> : vector<16x64xf32>
    %181 = tpu.matmul %179, %13, %cst_101 {dimension_numbers = #tpu.dot_dimension_numbers<[1], [0], [0], [1], [0, 0, 1, 1], [], []>} : vector<16x64xf32>, vector<64x64xf32>, vector<16x64xf32> -> vector<16x64xf32>
    %182 = arith.addf %180, %181 : vector<16x64xf32>
    %183 = arith.addf %182, %84 : vector<16x64xf32>
    %cst_102 = arith.constant 0.000000e+00 : f32
    %184 = vector.broadcast %cst_102 : f32 to vector<16x64xf32>
    %185 = arith.maximumf %183, %184 : vector<16x64xf32>
    %cst_103 = arith.constant dense<0.000000e+00> : vector<16x64xf32>
    %186 = tpu.matmul %185, %14, %cst_103 {dimension_numbers = #tpu.dot_dimension_numbers<[1], [0], [0], [1], [0, 0, 1, 1], [], []>} : vector<16x64xf32>, vector<64x64xf32>, vector<16x64xf32> -> vector<16x64xf32>
    %187 = arith.addf %186, %64 : vector<16x64xf32>
    %cst_104 = arith.constant 0.000000e+00 : f32
    %188 = vector.broadcast %cst_104 : f32 to vector<16x64xf32>
    %189 = arith.maximumf %187, %188 : vector<16x64xf32>
    %190 = arith.truncf %189 : vector<16x64xf32> to vector<16x64xbf16>
    %cst_105 = arith.constant dense<0.000000e+00> : vector<8x64xf32>
    %191 = tpu.matmul %70, %190, %cst_105 {dimension_numbers = #tpu.dot_dimension_numbers<[0], [0], [1], [1], [0, 1, 1, 1], [], []>} : vector<16x8xbf16>, vector<16x64xbf16>, vector<8x64xf32> -> vector<8x64xf32>
    %cst_106 = arith.constant dense<0.000000e+00> : vector<8x64xf32>
    %192 = tpu.matmul %162, %15, %cst_106 {dimension_numbers = #tpu.dot_dimension_numbers<[1], [0], [0], [1], [0, 0, 1, 1], [], []>} : vector<8x64xf32>, vector<64x64xf32>, vector<8x64xf32> -> vector<8x64xf32>
    %cst_107 = arith.constant dense<0.000000e+00> : vector<8x64xf32>
    %193 = tpu.matmul %191, %17, %cst_107 {dimension_numbers = #tpu.dot_dimension_numbers<[1], [0], [0], [1], [0, 0, 1, 1], [], []>} : vector<8x64xf32>, vector<64x64xf32>, vector<8x64xf32> -> vector<8x64xf32>
    %194 = arith.addf %192, %193 : vector<8x64xf32>
    %195 = arith.addf %194, %60 : vector<8x64xf32>
    %cst_108 = arith.constant 0.000000e+00 : f32
    %196 = vector.broadcast %cst_108 : f32 to vector<8x64xf32>
    %197 = arith.maximumf %195, %196 : vector<8x64xf32>
    %cst_109 = arith.constant dense<0.000000e+00> : vector<8x64xf32>
    %198 = tpu.matmul %197, %18, %cst_109 {dimension_numbers = #tpu.dot_dimension_numbers<[1], [0], [0], [1], [0, 0, 1, 1], [], []>} : vector<8x64xf32>, vector<64x64xf32>, vector<8x64xf32> -> vector<8x64xf32>
    %199 = arith.addf %198, %66 : vector<8x64xf32>
    %cst_110 = arith.constant 0.000000e+00 : f32
    %200 = vector.broadcast %cst_110 : f32 to vector<8x64xf32>
    %201 = arith.maximumf %199, %200 : vector<8x64xf32>
    %202 = arith.truncf %201 : vector<8x64xf32> to vector<8x64xbf16>
    %cst_111 = arith.constant dense<0.000000e+00> : vector<32x64xf32>
    %203 = tpu.matmul %69, %202, %cst_111 {dimension_numbers = #tpu.dot_dimension_numbers<[1], [0], [0], [1], [0, 0, 1, 1], [], []>} : vector<32x8xbf16>, vector<8x64xbf16>, vector<32x64xf32> -> vector<32x64xf32>
    %204 = vector.extract_strided_slice %203 {offsets = [0, 0], sizes = [16, 64], strides = [1, 1]} : vector<32x64xf32> to vector<16x64xf32>
    %205 = vector.extract_strided_slice %203 {offsets = [16, 0], sizes = [16, 64], strides = [1, 1]} : vector<32x64xf32> to vector<16x64xf32>
    %cst_112 = arith.constant dense<0.000000e+00> : vector<16x128xf32>
    %206 = tpu.matmul %204, %21, %cst_112 {dimension_numbers = #tpu.dot_dimension_numbers<[1], [0], [0], [1], [0, 0, 1, 1], [], []>} : vector<16x64xf32>, vector<64x128xf32>, vector<16x128xf32> -> vector<16x128xf32>
    %207 = vector.extract_strided_slice %206 {offsets = [0, 0], sizes = [16, 64], strides = [1, 1]} : vector<16x128xf32> to vector<16x64xf32>
    %cst_113 = arith.constant dense<0.000000e+00> : vector<16x64xf32>
    %208 = tpu.matmul %205, %7, %cst_113 {dimension_numbers = #tpu.dot_dimension_numbers<[1], [0], [0], [1], [0, 0, 1, 1], [], []>} : vector<16x64xf32>, vector<64x64xf32>, vector<16x64xf32> -> vector<16x64xf32>
    %209 = arith.addf %207, %208 : vector<16x64xf32>
    %cst_114 = arith.constant dense<0.000000e+00> : vector<16x64xf32>
    %210 = tpu.matmul %179, %9, %cst_114 {dimension_numbers = #tpu.dot_dimension_numbers<[1], [0], [0], [1], [0, 0, 1, 1], [], []>} : vector<16x64xf32>, vector<64x64xf32>, vector<16x64xf32> -> vector<16x64xf32>
    %211 = arith.addf %209, %210 : vector<16x64xf32>
    %212 = arith.addf %211, %81 : vector<16x64xf32>
    %cst_115 = arith.constant 0.000000e+00 : f32
    %213 = vector.broadcast %cst_115 : f32 to vector<16x64xf32>
    %214 = arith.maximumf %212, %213 : vector<16x64xf32>
    %cst_116 = arith.constant dense<0.000000e+00> : vector<16x64xf32>
    %215 = tpu.matmul %214, %11, %cst_116 {dimension_numbers = #tpu.dot_dimension_numbers<[1], [0], [0], [1], [0, 0, 1, 1], [], []>} : vector<16x64xf32>, vector<64x64xf32>, vector<16x64xf32> -> vector<16x64xf32>
    %216 = arith.addf %215, %62 : vector<16x64xf32>
    %cst_117 = arith.constant 0.000000e+00 : f32
    %217 = vector.broadcast %cst_117 : f32 to vector<16x64xf32>
    %218 = arith.maximumf %216, %217 : vector<16x64xf32>
    %219 = vector.extract_strided_slice %206 {offsets = [0, 64], sizes = [16, 64], strides = [1, 1]} : vector<16x128xf32> to vector<16x64xf32>
    %cst_118 = arith.constant dense<0.000000e+00> : vector<16x64xf32>
    %220 = tpu.matmul %218, %13, %cst_118 {dimension_numbers = #tpu.dot_dimension_numbers<[1], [0], [0], [1], [0, 0, 1, 1], [], []>} : vector<16x64xf32>, vector<64x64xf32>, vector<16x64xf32> -> vector<16x64xf32>
    %221 = arith.addf %219, %220 : vector<16x64xf32>
    %222 = arith.addf %221, %84 : vector<16x64xf32>
    %cst_119 = arith.constant 0.000000e+00 : f32
    %223 = vector.broadcast %cst_119 : f32 to vector<16x64xf32>
    %224 = arith.maximumf %222, %223 : vector<16x64xf32>
    %cst_120 = arith.constant dense<0.000000e+00> : vector<16x64xf32>
    %225 = tpu.matmul %224, %14, %cst_120 {dimension_numbers = #tpu.dot_dimension_numbers<[1], [0], [0], [1], [0, 0, 1, 1], [], []>} : vector<16x64xf32>, vector<64x64xf32>, vector<16x64xf32> -> vector<16x64xf32>
    %226 = arith.addf %225, %64 : vector<16x64xf32>
    %cst_121 = arith.constant 0.000000e+00 : f32
    %227 = vector.broadcast %cst_121 : f32 to vector<16x64xf32>
    %228 = arith.maximumf %226, %227 : vector<16x64xf32>
    %229 = arith.truncf %228 : vector<16x64xf32> to vector<16x64xbf16>
    %cst_122 = arith.constant dense<0.000000e+00> : vector<8x64xf32>
    %230 = tpu.matmul %70, %229, %cst_122 {dimension_numbers = #tpu.dot_dimension_numbers<[0], [0], [1], [1], [0, 1, 1, 1], [], []>} : vector<16x8xbf16>, vector<16x64xbf16>, vector<8x64xf32> -> vector<8x64xf32>
    %cst_123 = arith.constant dense<0.000000e+00> : vector<8x64xf32>
    %231 = tpu.matmul %201, %15, %cst_123 {dimension_numbers = #tpu.dot_dimension_numbers<[1], [0], [0], [1], [0, 0, 1, 1], [], []>} : vector<8x64xf32>, vector<64x64xf32>, vector<8x64xf32> -> vector<8x64xf32>
    %cst_124 = arith.constant dense<0.000000e+00> : vector<8x64xf32>
    %232 = tpu.matmul %230, %17, %cst_124 {dimension_numbers = #tpu.dot_dimension_numbers<[1], [0], [0], [1], [0, 0, 1, 1], [], []>} : vector<8x64xf32>, vector<64x64xf32>, vector<8x64xf32> -> vector<8x64xf32>
    %233 = arith.addf %231, %232 : vector<8x64xf32>
    %234 = arith.addf %233, %60 : vector<8x64xf32>
    %cst_125 = arith.constant 0.000000e+00 : f32
    %235 = vector.broadcast %cst_125 : f32 to vector<8x64xf32>
    %236 = arith.maximumf %234, %235 : vector<8x64xf32>
    %cst_126 = arith.constant dense<0.000000e+00> : vector<8x64xf32>
    %237 = tpu.matmul %236, %18, %cst_126 {dimension_numbers = #tpu.dot_dimension_numbers<[1], [0], [0], [1], [0, 0, 1, 1], [], []>} : vector<8x64xf32>, vector<64x64xf32>, vector<8x64xf32> -> vector<8x64xf32>
    %238 = arith.addf %237, %66 : vector<8x64xf32>
    %cst_127 = arith.constant 0.000000e+00 : f32
    %239 = vector.broadcast %cst_127 : f32 to vector<8x64xf32>
    %240 = arith.maximumf %238, %239 : vector<8x64xf32>
    %241 = arith.truncf %240 : vector<8x64xf32> to vector<8x64xbf16>
    %cst_128 = arith.constant dense<0.000000e+00> : vector<32x64xf32>
    %242 = tpu.matmul %69, %241, %cst_128 {dimension_numbers = #tpu.dot_dimension_numbers<[1], [0], [0], [1], [0, 0, 1, 1], [], []>} : vector<32x8xbf16>, vector<8x64xbf16>, vector<32x64xf32> -> vector<32x64xf32>
    %243 = vector.extract_strided_slice %242 {offsets = [0, 0], sizes = [16, 64], strides = [1, 1]} : vector<32x64xf32> to vector<16x64xf32>
    %244 = vector.extract_strided_slice %242 {offsets = [16, 0], sizes = [16, 64], strides = [1, 1]} : vector<32x64xf32> to vector<16x64xf32>
    %cst_129 = arith.constant dense<0.000000e+00> : vector<16x128xf32>
    %245 = tpu.matmul %243, %21, %cst_129 {dimension_numbers = #tpu.dot_dimension_numbers<[1], [0], [0], [1], [0, 0, 1, 1], [], []>} : vector<16x64xf32>, vector<64x128xf32>, vector<16x128xf32> -> vector<16x128xf32>
    %246 = vector.extract_strided_slice %245 {offsets = [0, 0], sizes = [16, 64], strides = [1, 1]} : vector<16x128xf32> to vector<16x64xf32>
    %cst_130 = arith.constant dense<0.000000e+00> : vector<16x64xf32>
    %247 = tpu.matmul %244, %7, %cst_130 {dimension_numbers = #tpu.dot_dimension_numbers<[1], [0], [0], [1], [0, 0, 1, 1], [], []>} : vector<16x64xf32>, vector<64x64xf32>, vector<16x64xf32> -> vector<16x64xf32>
    %248 = arith.addf %246, %247 : vector<16x64xf32>
    %cst_131 = arith.constant dense<0.000000e+00> : vector<16x64xf32>
    %249 = tpu.matmul %218, %9, %cst_131 {dimension_numbers = #tpu.dot_dimension_numbers<[1], [0], [0], [1], [0, 0, 1, 1], [], []>} : vector<16x64xf32>, vector<64x64xf32>, vector<16x64xf32> -> vector<16x64xf32>
    %250 = arith.addf %248, %249 : vector<16x64xf32>
    %251 = arith.addf %250, %81 : vector<16x64xf32>
    %cst_132 = arith.constant 0.000000e+00 : f32
    %252 = vector.broadcast %cst_132 : f32 to vector<16x64xf32>
    %253 = arith.maximumf %251, %252 : vector<16x64xf32>
    %cst_133 = arith.constant dense<0.000000e+00> : vector<16x64xf32>
    %254 = tpu.matmul %253, %11, %cst_133 {dimension_numbers = #tpu.dot_dimension_numbers<[1], [0], [0], [1], [0, 0, 1, 1], [], []>} : vector<16x64xf32>, vector<64x64xf32>, vector<16x64xf32> -> vector<16x64xf32>
    %255 = arith.addf %254, %62 : vector<16x64xf32>
    %cst_134 = arith.constant 0.000000e+00 : f32
    %256 = vector.broadcast %cst_134 : f32 to vector<16x64xf32>
    %257 = arith.maximumf %255, %256 : vector<16x64xf32>
    %258 = vector.extract_strided_slice %245 {offsets = [0, 64], sizes = [16, 64], strides = [1, 1]} : vector<16x128xf32> to vector<16x64xf32>
    %cst_135 = arith.constant dense<0.000000e+00> : vector<16x64xf32>
    %259 = tpu.matmul %257, %13, %cst_135 {dimension_numbers = #tpu.dot_dimension_numbers<[1], [0], [0], [1], [0, 0, 1, 1], [], []>} : vector<16x64xf32>, vector<64x64xf32>, vector<16x64xf32> -> vector<16x64xf32>
    %260 = arith.addf %258, %259 : vector<16x64xf32>
    %261 = arith.addf %260, %84 : vector<16x64xf32>
    %cst_136 = arith.constant 0.000000e+00 : f32
    %262 = vector.broadcast %cst_136 : f32 to vector<16x64xf32>
    %263 = arith.maximumf %261, %262 : vector<16x64xf32>
    %cst_137 = arith.constant dense<0.000000e+00> : vector<16x64xf32>
    %264 = tpu.matmul %263, %14, %cst_137 {dimension_numbers = #tpu.dot_dimension_numbers<[1], [0], [0], [1], [0, 0, 1, 1], [], []>} : vector<16x64xf32>, vector<64x64xf32>, vector<16x64xf32> -> vector<16x64xf32>
    %265 = arith.addf %264, %64 : vector<16x64xf32>
    %cst_138 = arith.constant 0.000000e+00 : f32
    %266 = vector.broadcast %cst_138 : f32 to vector<16x64xf32>
    %267 = arith.maximumf %265, %266 : vector<16x64xf32>
    %268 = arith.truncf %267 : vector<16x64xf32> to vector<16x64xbf16>
    %cst_139 = arith.constant dense<0.000000e+00> : vector<8x64xf32>
    %269 = tpu.matmul %70, %268, %cst_139 {dimension_numbers = #tpu.dot_dimension_numbers<[0], [0], [1], [1], [0, 1, 1, 1], [], []>} : vector<16x8xbf16>, vector<16x64xbf16>, vector<8x64xf32> -> vector<8x64xf32>
    %cst_140 = arith.constant dense<0.000000e+00> : vector<8x64xf32>
    %270 = tpu.matmul %240, %15, %cst_140 {dimension_numbers = #tpu.dot_dimension_numbers<[1], [0], [0], [1], [0, 0, 1, 1], [], []>} : vector<8x64xf32>, vector<64x64xf32>, vector<8x64xf32> -> vector<8x64xf32>
    %cst_141 = arith.constant dense<0.000000e+00> : vector<8x64xf32>
    %271 = tpu.matmul %269, %17, %cst_141 {dimension_numbers = #tpu.dot_dimension_numbers<[1], [0], [0], [1], [0, 0, 1, 1], [], []>} : vector<8x64xf32>, vector<64x64xf32>, vector<8x64xf32> -> vector<8x64xf32>
    %272 = arith.addf %270, %271 : vector<8x64xf32>
    %273 = arith.addf %272, %60 : vector<8x64xf32>
    %cst_142 = arith.constant 0.000000e+00 : f32
    %274 = vector.broadcast %cst_142 : f32 to vector<8x64xf32>
    %275 = arith.maximumf %273, %274 : vector<8x64xf32>
    %cst_143 = arith.constant dense<0.000000e+00> : vector<8x64xf32>
    %276 = tpu.matmul %275, %18, %cst_143 {dimension_numbers = #tpu.dot_dimension_numbers<[1], [0], [0], [1], [0, 0, 1, 1], [], []>} : vector<8x64xf32>, vector<64x64xf32>, vector<8x64xf32> -> vector<8x64xf32>
    %277 = arith.addf %276, %66 : vector<8x64xf32>
    %cst_144 = arith.constant 0.000000e+00 : f32
    %278 = vector.broadcast %cst_144 : f32 to vector<8x64xf32>
    %279 = arith.maximumf %277, %278 : vector<8x64xf32>
    %280 = arith.truncf %279 : vector<8x64xf32> to vector<8x64xbf16>
    %cst_145 = arith.constant dense<0.000000e+00> : vector<32x64xf32>
    %281 = tpu.matmul %69, %280, %cst_145 {dimension_numbers = #tpu.dot_dimension_numbers<[1], [0], [0], [1], [0, 0, 1, 1], [], []>} : vector<32x8xbf16>, vector<8x64xbf16>, vector<32x64xf32> -> vector<32x64xf32>
    %282 = vector.extract_strided_slice %281 {offsets = [0, 0], sizes = [16, 64], strides = [1, 1]} : vector<32x64xf32> to vector<16x64xf32>
    %283 = vector.extract_strided_slice %281 {offsets = [16, 0], sizes = [16, 64], strides = [1, 1]} : vector<32x64xf32> to vector<16x64xf32>
    %cst_146 = arith.constant dense<0.000000e+00> : vector<16x128xf32>
    %284 = tpu.matmul %282, %21, %cst_146 {dimension_numbers = #tpu.dot_dimension_numbers<[1], [0], [0], [1], [0, 0, 1, 1], [], []>} : vector<16x64xf32>, vector<64x128xf32>, vector<16x128xf32> -> vector<16x128xf32>
    %285 = vector.extract_strided_slice %284 {offsets = [0, 0], sizes = [16, 64], strides = [1, 1]} : vector<16x128xf32> to vector<16x64xf32>
    %cst_147 = arith.constant dense<0.000000e+00> : vector<16x64xf32>
    %286 = tpu.matmul %283, %7, %cst_147 {dimension_numbers = #tpu.dot_dimension_numbers<[1], [0], [0], [1], [0, 0, 1, 1], [], []>} : vector<16x64xf32>, vector<64x64xf32>, vector<16x64xf32> -> vector<16x64xf32>
    %287 = arith.addf %285, %286 : vector<16x64xf32>
    %cst_148 = arith.constant dense<0.000000e+00> : vector<16x64xf32>
    %288 = tpu.matmul %257, %9, %cst_148 {dimension_numbers = #tpu.dot_dimension_numbers<[1], [0], [0], [1], [0, 0, 1, 1], [], []>} : vector<16x64xf32>, vector<64x64xf32>, vector<16x64xf32> -> vector<16x64xf32>
    %289 = arith.addf %287, %288 : vector<16x64xf32>
    %290 = arith.addf %289, %81 : vector<16x64xf32>
    %cst_149 = arith.constant 0.000000e+00 : f32
    %291 = vector.broadcast %cst_149 : f32 to vector<16x64xf32>
    %292 = arith.maximumf %290, %291 : vector<16x64xf32>
    %cst_150 = arith.constant dense<0.000000e+00> : vector<16x64xf32>
    %293 = tpu.matmul %292, %11, %cst_150 {dimension_numbers = #tpu.dot_dimension_numbers<[1], [0], [0], [1], [0, 0, 1, 1], [], []>} : vector<16x64xf32>, vector<64x64xf32>, vector<16x64xf32> -> vector<16x64xf32>
    %294 = arith.addf %293, %62 : vector<16x64xf32>
    %cst_151 = arith.constant 0.000000e+00 : f32
    %295 = vector.broadcast %cst_151 : f32 to vector<16x64xf32>
    %296 = arith.maximumf %294, %295 : vector<16x64xf32>
    %297 = vector.extract_strided_slice %284 {offsets = [0, 64], sizes = [16, 64], strides = [1, 1]} : vector<16x128xf32> to vector<16x64xf32>
    %cst_152 = arith.constant dense<0.000000e+00> : vector<16x64xf32>
    %298 = tpu.matmul %296, %13, %cst_152 {dimension_numbers = #tpu.dot_dimension_numbers<[1], [0], [0], [1], [0, 0, 1, 1], [], []>} : vector<16x64xf32>, vector<64x64xf32>, vector<16x64xf32> -> vector<16x64xf32>
    %299 = arith.addf %297, %298 : vector<16x64xf32>
    %300 = arith.addf %299, %84 : vector<16x64xf32>
    %cst_153 = arith.constant 0.000000e+00 : f32
    %301 = vector.broadcast %cst_153 : f32 to vector<16x64xf32>
    %302 = arith.maximumf %300, %301 : vector<16x64xf32>
    %cst_154 = arith.constant dense<0.000000e+00> : vector<16x64xf32>
    %303 = tpu.matmul %302, %14, %cst_154 {dimension_numbers = #tpu.dot_dimension_numbers<[1], [0], [0], [1], [0, 0, 1, 1], [], []>} : vector<16x64xf32>, vector<64x64xf32>, vector<16x64xf32> -> vector<16x64xf32>
    %304 = arith.addf %303, %64 : vector<16x64xf32>
    %cst_155 = arith.constant 0.000000e+00 : f32
    %305 = vector.broadcast %cst_155 : f32 to vector<16x64xf32>
    %306 = arith.maximumf %304, %305 : vector<16x64xf32>
    %307 = arith.truncf %306 : vector<16x64xf32> to vector<16x64xbf16>
    %cst_156 = arith.constant dense<0.000000e+00> : vector<8x64xf32>
    %308 = tpu.matmul %70, %307, %cst_156 {dimension_numbers = #tpu.dot_dimension_numbers<[0], [0], [1], [1], [0, 1, 1, 1], [], []>} : vector<16x8xbf16>, vector<16x64xbf16>, vector<8x64xf32> -> vector<8x64xf32>
    %cst_157 = arith.constant dense<0.000000e+00> : vector<8x64xf32>
    %309 = tpu.matmul %279, %15, %cst_157 {dimension_numbers = #tpu.dot_dimension_numbers<[1], [0], [0], [1], [0, 0, 1, 1], [], []>} : vector<8x64xf32>, vector<64x64xf32>, vector<8x64xf32> -> vector<8x64xf32>
    %cst_158 = arith.constant dense<0.000000e+00> : vector<8x64xf32>
    %310 = tpu.matmul %308, %17, %cst_158 {dimension_numbers = #tpu.dot_dimension_numbers<[1], [0], [0], [1], [0, 0, 1, 1], [], []>} : vector<8x64xf32>, vector<64x64xf32>, vector<8x64xf32> -> vector<8x64xf32>
    %311 = arith.addf %309, %310 : vector<8x64xf32>
    %312 = arith.addf %311, %60 : vector<8x64xf32>
    %cst_159 = arith.constant 0.000000e+00 : f32
    %313 = vector.broadcast %cst_159 : f32 to vector<8x64xf32>
    %314 = arith.maximumf %312, %313 : vector<8x64xf32>
    %cst_160 = arith.constant dense<0.000000e+00> : vector<8x64xf32>
    %315 = tpu.matmul %314, %18, %cst_160 {dimension_numbers = #tpu.dot_dimension_numbers<[1], [0], [0], [1], [0, 0, 1, 1], [], []>} : vector<8x64xf32>, vector<64x64xf32>, vector<8x64xf32> -> vector<8x64xf32>
    %316 = arith.addf %315, %66 : vector<8x64xf32>
    %cst_161 = arith.constant 0.000000e+00 : f32
    %317 = vector.broadcast %cst_161 : f32 to vector<8x64xf32>
    %318 = arith.maximumf %316, %317 : vector<8x64xf32>
    %319 = arith.truncf %318 : vector<8x64xf32> to vector<8x64xbf16>
    %cst_162 = arith.constant dense<0.000000e+00> : vector<32x64xf32>
    %320 = tpu.matmul %69, %319, %cst_162 {dimension_numbers = #tpu.dot_dimension_numbers<[1], [0], [0], [1], [0, 0, 1, 1], [], []>} : vector<32x8xbf16>, vector<8x64xbf16>, vector<32x64xf32> -> vector<32x64xf32>
    %321 = vector.extract_strided_slice %320 {offsets = [0, 0], sizes = [16, 64], strides = [1, 1]} : vector<32x64xf32> to vector<16x64xf32>
    %322 = vector.extract_strided_slice %320 {offsets = [16, 0], sizes = [16, 64], strides = [1, 1]} : vector<32x64xf32> to vector<16x64xf32>
    %cst_163 = arith.constant dense<0.000000e+00> : vector<16x128xf32>
    %323 = tpu.matmul %321, %21, %cst_163 {dimension_numbers = #tpu.dot_dimension_numbers<[1], [0], [0], [1], [0, 0, 1, 1], [], []>} : vector<16x64xf32>, vector<64x128xf32>, vector<16x128xf32> -> vector<16x128xf32>
    %324 = vector.extract_strided_slice %323 {offsets = [0, 0], sizes = [16, 64], strides = [1, 1]} : vector<16x128xf32> to vector<16x64xf32>
    %cst_164 = arith.constant dense<0.000000e+00> : vector<16x64xf32>
    %325 = tpu.matmul %322, %7, %cst_164 {dimension_numbers = #tpu.dot_dimension_numbers<[1], [0], [0], [1], [0, 0, 1, 1], [], []>} : vector<16x64xf32>, vector<64x64xf32>, vector<16x64xf32> -> vector<16x64xf32>
    %326 = arith.addf %324, %325 : vector<16x64xf32>
    %cst_165 = arith.constant dense<0.000000e+00> : vector<16x64xf32>
    %327 = tpu.matmul %296, %9, %cst_165 {dimension_numbers = #tpu.dot_dimension_numbers<[1], [0], [0], [1], [0, 0, 1, 1], [], []>} : vector<16x64xf32>, vector<64x64xf32>, vector<16x64xf32> -> vector<16x64xf32>
    %328 = arith.addf %326, %327 : vector<16x64xf32>
    %329 = arith.addf %328, %81 : vector<16x64xf32>
    %cst_166 = arith.constant 0.000000e+00 : f32
    %330 = vector.broadcast %cst_166 : f32 to vector<16x64xf32>
    %331 = arith.maximumf %329, %330 : vector<16x64xf32>
    %cst_167 = arith.constant dense<0.000000e+00> : vector<16x64xf32>
    %332 = tpu.matmul %331, %11, %cst_167 {dimension_numbers = #tpu.dot_dimension_numbers<[1], [0], [0], [1], [0, 0, 1, 1], [], []>} : vector<16x64xf32>, vector<64x64xf32>, vector<16x64xf32> -> vector<16x64xf32>
    %333 = arith.addf %332, %62 : vector<16x64xf32>
    %cst_168 = arith.constant 0.000000e+00 : f32
    %334 = vector.broadcast %cst_168 : f32 to vector<16x64xf32>
    %335 = arith.maximumf %333, %334 : vector<16x64xf32>
    %336 = vector.extract_strided_slice %323 {offsets = [0, 64], sizes = [16, 64], strides = [1, 1]} : vector<16x128xf32> to vector<16x64xf32>
    %cst_169 = arith.constant dense<0.000000e+00> : vector<16x64xf32>
    %337 = tpu.matmul %335, %13, %cst_169 {dimension_numbers = #tpu.dot_dimension_numbers<[1], [0], [0], [1], [0, 0, 1, 1], [], []>} : vector<16x64xf32>, vector<64x64xf32>, vector<16x64xf32> -> vector<16x64xf32>
    %338 = arith.addf %336, %337 : vector<16x64xf32>
    %339 = arith.addf %338, %84 : vector<16x64xf32>
    %cst_170 = arith.constant 0.000000e+00 : f32
    %340 = vector.broadcast %cst_170 : f32 to vector<16x64xf32>
    %341 = arith.maximumf %339, %340 : vector<16x64xf32>
    %cst_171 = arith.constant dense<0.000000e+00> : vector<16x64xf32>
    %342 = tpu.matmul %341, %14, %cst_171 {dimension_numbers = #tpu.dot_dimension_numbers<[1], [0], [0], [1], [0, 0, 1, 1], [], []>} : vector<16x64xf32>, vector<64x64xf32>, vector<16x64xf32> -> vector<16x64xf32>
    %343 = arith.addf %342, %64 : vector<16x64xf32>
    %cst_172 = arith.constant 0.000000e+00 : f32
    %344 = vector.broadcast %cst_172 : f32 to vector<16x64xf32>
    %345 = arith.maximumf %343, %344 : vector<16x64xf32>
    %346 = arith.truncf %345 : vector<16x64xf32> to vector<16x64xbf16>
    %cst_173 = arith.constant dense<0.000000e+00> : vector<8x64xf32>
    %347 = tpu.matmul %70, %346, %cst_173 {dimension_numbers = #tpu.dot_dimension_numbers<[0], [0], [1], [1], [0, 1, 1, 1], [], []>} : vector<16x8xbf16>, vector<16x64xbf16>, vector<8x64xf32> -> vector<8x64xf32>
    %cst_174 = arith.constant dense<0.000000e+00> : vector<8x64xf32>
    %348 = tpu.matmul %318, %15, %cst_174 {dimension_numbers = #tpu.dot_dimension_numbers<[1], [0], [0], [1], [0, 0, 1, 1], [], []>} : vector<8x64xf32>, vector<64x64xf32>, vector<8x64xf32> -> vector<8x64xf32>
    %cst_175 = arith.constant dense<0.000000e+00> : vector<8x64xf32>
    %349 = tpu.matmul %347, %17, %cst_175 {dimension_numbers = #tpu.dot_dimension_numbers<[1], [0], [0], [1], [0, 0, 1, 1], [], []>} : vector<8x64xf32>, vector<64x64xf32>, vector<8x64xf32> -> vector<8x64xf32>
    %350 = arith.addf %348, %349 : vector<8x64xf32>
    %351 = arith.addf %350, %60 : vector<8x64xf32>
    %cst_176 = arith.constant 0.000000e+00 : f32
    %352 = vector.broadcast %cst_176 : f32 to vector<8x64xf32>
    %353 = arith.maximumf %351, %352 : vector<8x64xf32>
    %cst_177 = arith.constant dense<0.000000e+00> : vector<8x64xf32>
    %354 = tpu.matmul %353, %18, %cst_177 {dimension_numbers = #tpu.dot_dimension_numbers<[1], [0], [0], [1], [0, 0, 1, 1], [], []>} : vector<8x64xf32>, vector<64x64xf32>, vector<8x64xf32> -> vector<8x64xf32>
    %355 = arith.addf %354, %66 : vector<8x64xf32>
    %cst_178 = arith.constant 0.000000e+00 : f32
    %356 = vector.broadcast %cst_178 : f32 to vector<8x64xf32>
    %357 = arith.maximumf %355, %356 : vector<8x64xf32>
    %cst_179 = arith.constant dense<0.000000e+00> : vector<8x256xf32>
    %358 = tpu.matmul %357, %19, %cst_179 {dimension_numbers = #tpu.dot_dimension_numbers<[1], [0], [0], [1], [0, 0, 1, 1], [], []>} : vector<8x64xf32>, vector<64x256xf32>, vector<8x256xf32> -> vector<8x256xf32>
    %359 = vector.broadcast %33 : vector<1x256xf32> to vector<8x256xf32>
    %360 = arith.addf %358, %359 : vector<8x256xf32>
    %cst_180 = arith.constant 0.000000e+00 : f32
    %361 = vector.broadcast %cst_180 : f32 to vector<8x256xf32>
    %362 = arith.maximumf %360, %361 : vector<8x256xf32>
    %cst_181 = arith.constant dense<0.000000e+00> : vector<8x256xf32>
    %363 = tpu.matmul %362, %20, %cst_181 {dimension_numbers = #tpu.dot_dimension_numbers<[1], [0], [0], [1], [0, 0, 1, 1], [], []>} : vector<8x256xf32>, vector<256x256xf32>, vector<8x256xf32> -> vector<8x256xf32>
    %364 = vector.broadcast %34 : vector<1x256xf32> to vector<8x256xf32>
    %365 = arith.addf %363, %364 : vector<8x256xf32>
    %cst_182 = arith.constant 0.000000e+00 : f32
    %366 = vector.broadcast %cst_182 : f32 to vector<8x256xf32>
    %367 = arith.maximumf %365, %366 : vector<8x256xf32>
    %cst_183 = arith.constant dense<0.000000e+00> : vector<8x128xf32>
    %368 = tpu.matmul %367, %22, %cst_183 {dimension_numbers = #tpu.dot_dimension_numbers<[1], [0], [0], [1], [0, 0, 1, 1], [], []>} : vector<8x256xf32>, vector<256x128xf32>, vector<8x128xf32> -> vector<8x128xf32>
    %369 = vector.broadcast %35 : vector<1x128xf32> to vector<8x128xf32>
    %370 = arith.addf %368, %369 : vector<8x128xf32>
    %c0_184 = arith.constant 0 : index
    %c0_185 = arith.constant 0 : index
    %371 = vector.load %arg7[%c0_184, %c0_185] : memref<8x128xf32, #tpu.memory_space<vmem>>, vector<8x128xf32>
    tpu.vector_store %arg7[%c0_184, %c0_185], %370 {strides = array<i32>} : memref<8x128xf32, #tpu.memory_space<vmem>>, vector<8x128xf32>,
    return
  }
}

</mosaic_0001>

<llo_original>
// kernel: interaction_network_forward.1
$region0: #{interaction_network_forward.1}
  #allocation0 [shape = 'u32[]', space=smem, size = 0x4, offset = 0x4, fixed_abs, tag = 'smem constant byte address 0x4 - core index']
  #allocation1 [shape = 'u32[144,128]{1,0:T(1,128)}', space=vmem, size = 0x12000, scoped, tag = 'internal scratch']
  #allocation2 [shape = 'bf16[32,8]{1,0:T(16,128)(2,1)}', space=vmem, size = 0x2000, scoped, tag = 'scratch operand']
  #allocation3 [shape = 's32[1]{0}', space=sflag, size = 0x4, scoped, tag = 'scratch operand']
  #allocation4 [shape = 's32[]', space=sflag, size = 0x4, offset = 0, fixed_abs, tag = 'sflag constant byte address 0x0 - dummy sync flag']
  %s0 = inlined_call_operand.vmem [shape: f32[8,8], index: 0, kind: input, shape index: {}]
  %s1 = inlined_call_operand.vmem [shape: f32[16,8], index: 1, kind: input, shape index: {}]
  %s2 = inlined_call_operand.vmem [shape: bf16[32,8], index: 2, kind: input, shape index: {}]
  %s3 = inlined_call_operand.vmem [shape: f32[1104,64], index: 3, kind: input, shape index: {}]
  %s4 = inlined_call_operand.vmem [shape: f32[320,256], index: 4, kind: input, shape index: {}]
  %s5 = inlined_call_operand.vmem [shape: f32[320,128], index: 5, kind: input, shape index: {}]
  %s6 = inlined_call_operand.vmem [shape: f32[16,256], index: 6, kind: input, shape index: {}]
  %s7 = inlined_call_operand.vmem [shape: f32[8,128], index: 7, kind: output, shape index: {}]
  %s8 = sld [smem:[#allocation0]]
  $region68: #{interaction_network_forward.1} parent=0
    _
  %s10 = ssub.s32 1, %s8
  %s11 = scalar_select 0, %s10, %s8
  // Predicated region
  $region2: #{interaction_network_forward.1} parent=0 // pred_check
    _
  $region3: #{interaction_network_forward.1} parent=0 // pred_check_branch
    %13 = sbr.rel (0) target = $region5
  $region4: #{interaction_network_forward.1} parent=0 // pred_region
    _
  $region5: #{interaction_network_forward.1} parent=0 // pred_fallthru
    _
  // Predicated region
  $region6: #{interaction_network_forward.1} parent=0 // pred_check
    _
  $region7: #{interaction_network_forward.1} parent=0 // pred_check_branch
    %15 = sbr.rel (0) target = $region9
  $region8: #{interaction_network_forward.1} parent=0 // pred_region
    _
  $region9: #{interaction_network_forward.1} parent=0 // pred_fallthru
    _
  // Predicated region
  $region10: #{interaction_network_forward.1} parent=0 // pred_check
    _
  $region11: #{interaction_network_forward.1} parent=0 // pred_check_branch
    %17 = sbr.rel (0) target = $region13
  $region12: #{interaction_network_forward.1} parent=0 // pred_region
    _
  $region13: #{interaction_network_forward.1} parent=0 // pred_fallthru
    _
  // Predicated region
  $region14: #{interaction_network_forward.1} parent=0 // pred_check
    _
  $region15: #{interaction_network_forward.1} parent=0 // pred_check_branch
    %19 = sbr.rel (0) target = $region17
  $region16: #{interaction_network_forward.1} parent=0 // pred_region
    _
  $region17: #{interaction_network_forward.1} parent=0 // pred_fallthru
    _
  // Predicated region
  $region18: #{interaction_network_forward.1} parent=0 // pred_check
    _
  $region19: #{interaction_network_forward.1} parent=0 // pred_check_branch
    %21 = sbr.rel (0) target = $region21
  $region20: #{interaction_network_forward.1} parent=0 // pred_region
    _
  $region21: #{interaction_network_forward.1} parent=0 // pred_fallthru
    _
  // Predicated region
  $region22: #{interaction_network_forward.1} parent=0 // pred_check
    _
  $region23: #{interaction_network_forward.1} parent=0 // pred_check_branch
    %23 = sbr.rel (0) target = $region25
  $region24: #{interaction_network_forward.1} parent=0 // pred_region
    _
  $region25: #{interaction_network_forward.1} parent=0 // pred_fallthru
    _
  %p26 = scmp.lt.u32.totalorder 16, 8
  %p27 = pneg %p26
  // Predicated region
  $region26: #{interaction_network_forward.1} parent=0 // pred_check
    _
  $region27: #{interaction_network_forward.1} parent=0 // pred_check_branch
    %29 = sbr.rel (%p26) target = $region29
  $region28: #{interaction_network_forward.1} parent=0 // pred_region
    %s44 = sand.u32 16, 7
    %p45 = scmp.eq.s32.totalorder %s44, 0
    // Predicated region
    $region41: #{interaction_network_forward.1} parent=28 // pred_check
      %p46 = pneg %p45
    $region42: #{interaction_network_forward.1} parent=28 // pred_check_branch
      %48 = sbr.rel (%p46) target = $region44
    $region43: #{interaction_network_forward.1} parent=28 // pred_region
      loop: start=0, step=1, limit=1
      $region45: #{interaction_network_forward.1} parent=43 // loop_pre_header
        _
      $region46: #{interaction_network_forward.1} parent=43 // loop_header
        %s50 = sphi 0, %s54
        %p51 = scmp.ge.s32.totalorder %s50, 1
        %s55 = sphi %s2, %s2
        %s56 = sphi [#allocation2], [#allocation2]
      $region47: #{interaction_network_forward.1} parent=43 // loop_header_branch
        %53 = sbr.rel (%p51) target = $region51
      $region48: #{interaction_network_forward.1} parent=43 // loop_body
        %v57 = vld [vmem:[%s55] sm:$0xff]
        %58 = vst [vmem:[%s56] sm:$0xff] %v57
        %v59 = vld [vmem:[%s55 + $0x8] sm:$0xff]
        %60 = vst [vmem:[%s56 + $0x8] sm:$0xff] %v59
      $region49: #{interaction_network_forward.1} parent=43 // loop_footer
        %s54 = sadd.s32 1, %s50
      $region50: #{interaction_network_forward.1} parent=43 // loop_footer_branch
        %49 = sbr.rel target = $region46
      $region51: #{interaction_network_forward.1} parent=43 // loop_exit
        _
    $region44: #{interaction_network_forward.1} parent=28 // pred_fallthru
      _
    %p61 = pneg %p45
    // Predicated region
    $region52: #{interaction_network_forward.1} parent=28 // pred_check
      _
    $region53: #{interaction_network_forward.1} parent=28 // pred_check_branch
      %63 = sbr.rel (%p45) target = $region55
    $region54: #{interaction_network_forward.1} parent=28 // pred_region
      %s64 = sand.u32 16, 7
    $region55: #{interaction_network_forward.1} parent=28 // pred_fallthru
      _
  $region29: #{interaction_network_forward.1} parent=0 // pred_fallthru
    _
  // Predicated region
  $region30: #{interaction_network_forward.1} parent=0 // pred_check
    %p30 = pneg %p26
  $region31: #{interaction_network_forward.1} parent=0 // pred_check_branch
    %32 = sbr.rel (%p30) target = $region33
  $region32: #{interaction_network_forward.1} parent=0 // pred_region
    %s33 = sshllo.u32 0, 16
    loop: start=0, step=1, limit=1
    $region34: #{interaction_network_forward.1} parent=32 // loop_pre_header
      _
    $region35: #{interaction_network_forward.1} parent=32 // loop_header
      %s35 = sphi 0, %s39
      %p36 = scmp.ge.s32.totalorder %s35, 1
      %s40 = sphi %s2, %s2
      %s41 = sphi [#allocation2], [#allocation2]
    $region36: #{interaction_network_forward.1} parent=32 // loop_header_branch
      %38 = sbr.rel (%p36) target = $region40
    $region37: #{interaction_network_forward.1} parent=32 // loop_body
      %v42 = vld [vmem:[%s40] sm:%s33]
      %43 = vst [vmem:[%s41] sm:%s33] %v42
    $region38: #{interaction_network_forward.1} parent=32 // loop_footer
      %s39 = sadd.s32 1, %s35
    $region39: #{interaction_network_forward.1} parent=32 // loop_footer_branch
      %34 = sbr.rel target = $region35
    $region40: #{interaction_network_forward.1} parent=32 // loop_exit
      _
  $region33: #{interaction_network_forward.1} parent=0 // pred_fallthru
    _
  // Predicated region
  $region56: #{interaction_network_forward.1} parent=0 // pred_check
    _
  $region57: #{interaction_network_forward.1} parent=0 // pred_check_branch
    %67 = sbr.rel (0) target = $region59
  $region58: #{interaction_network_forward.1} parent=0 // pred_region
    %68 = vsyncadd [#allocation3], 256
  $region59: #{interaction_network_forward.1} parent=0 // pred_fallthru
    _
  %v69 = vld [vmem:[%s3] sm:$0xff]
  %v70 = vld [vmem:[%s3 + $0x8] sm:$0xff]
  %v71 = vld [vmem:[%s3 + $0x10] sm:$0xff]
  %v72 = vld [vmem:[%s3 + $0x18] sm:$0xff]
  %v73 = vld [vmem:[%s3 + $0x20] sm:$0xff]
  %v74 = vld [vmem:[%s3 + $0x28] sm:$0xff]
  %v75 = vld [vmem:[%s3 + $0x30] sm:$0xff]
  %v76 = vld [vmem:[%s3 + $0x38] sm:$0xff]
  %v77 = vld [vmem:[%s3 + $0x40] sm:$0xff]
  %v78 = vld [vmem:[%s3 + $0x48] sm:$0xff]
  %v79 = vld [vmem:[%s3 + $0x50] sm:$0xff]
  %v80 = vld [vmem:[%s3 + $0x58] sm:$0xff]
  %v81 = vld [vmem:[%s3 + $0x60] sm:$0xff]
  %v82 = vld [vmem:[%s3 + $0x68] sm:$0xff]
  %v83 = vld [vmem:[%s3 + $0x70] sm:$0xff]
  %v84 = vld [vmem:[%s3 + $0x78] sm:$0xff]
  %v85 = vld [vmem:[%s3 + $0x80] sm:$0xff]
  %v86 = vld [vmem:[%s3 + $0x88] sm:$0xff]
  %v87 = vld [vmem:[%s3 + $0xd0] sm:$0xff]
  %v88 = vld [vmem:[%s3 + $0xd8] sm:$0xff]
  %v89 = vld [vmem:[%s3 + $0xe0] sm:$0xff]
  %v90 = vld [vmem:[%s3 + $0xe8] sm:$0xff]
  %v91 = vld [vmem:[%s3 + $0xf0] sm:$0xff]
  %v92 = vld [vmem:[%s3 + $0xf8] sm:$0xff]
  %v93 = vld [vmem:[%s3 + $0x100] sm:$0xff]
  %v94 = vld [vmem:[%s3 + $0x108] sm:$0xff]
  %v95 = vld [vmem:[%s3 + $0x110] sm:$0xff]
  %v96 = vld [vmem:[%s3 + $0x118] sm:$0xff]
  %v97 = vld [vmem:[%s3 + $0x120] sm:$0xff]
  %v98 = vld [vmem:[%s3 + $0x128] sm:$0xff]
  %v99 = vld [vmem:[%s3 + $0x130] sm:$0xff]
  %v100 = vld [vmem:[%s3 + $0x138] sm:$0xff]
  %v101 = vld [vmem:[%s3 + $0x140] sm:$0xff]
  %v102 = vld [vmem:[%s3 + $0x148] sm:$0xff]
  %v103 = vld [vmem:[%s3 + $0x150] sm:$0xff]
  %v104 = vld [vmem:[%s3 + $0x158] sm:$0xff]
  %v105 = vld [vmem:[%s3 + $0x160] sm:$0xff]
  %v106 = vld [vmem:[%s3 + $0x168] sm:$0xff]
  %v107 = vld [vmem:[%s3 + $0x170] sm:$0xff]
  %v108 = vld [vmem:[%s3 + $0x178] sm:$0xff]
  %v109 = vld [vmem:[%s3 + $0x180] sm:$0xff]
  %v110 = vld [vmem:[%s3 + $0x188] sm:$0xff]
  %v111 = vld [vmem:[%s3 + $0x190] sm:$0xff]
  %v112 = vld [vmem:[%s3 + $0x198] sm:$0xff]
  %v113 = vld [vmem:[%s3 + $0x1a0] sm:$0xff]
  %v114 = vld [vmem:[%s3 + $0x1a8] sm:$0xff]
  %v115 = vld [vmem:[%s3 + $0x1b0] sm:$0xff]
  %v116 = vld [vmem:[%s3 + $0x1b8] sm:$0xff]
  %v117 = vld [vmem:[%s3 + $0x1c0] sm:$0xff]
  %v118 = vld [vmem:[%s3 + $0x1c8] sm:$0xff]
  %v119 = vld [vmem:[%s3 + $0x1d0] sm:$0xff]
  %v120 = vld [vmem:[%s3 + $0x1d8] sm:$0xff]
  %v121 = vld [vmem:[%s3 + $0x1e0] sm:$0xff]
  %v122 = vld [vmem:[%s3 + $0x1e8] sm:$0xff]
  %v123 = vld [vmem:[%s3 + $0x1f0] sm:$0xff]
  %v124 = vld [vmem:[%s3 + $0x1f8] sm:$0xff]
  %v125 = vld [vmem:[%s3 + $0x200] sm:$0xff]
  %v126 = vld [vmem:[%s3 + $0x208] sm:$0xff]
  %v127 = vld [vmem:[%s3 + $0x210] sm:$0xff]
  %v128 = vld [vmem:[%s3 + $0x218] sm:$0xff]
  %v129 = vld [vmem:[%s3 + $0x220] sm:$0xff]
  %v130 = vld [vmem:[%s3 + $0x228] sm:$0xff]
  %v131 = vld [vmem:[%s3 + $0x230] sm:$0xff]
  %v132 = vld [vmem:[%s3 + $0x238] sm:$0xff]
  %v133 = vld [vmem:[%s3 + $0x240] sm:$0xff]
  %v134 = vld [vmem:[%s3 + $0x248] sm:$0xff]
  %v135 = vld [vmem:[%s3 + $0x290] sm:$0xff]
  %v136 = vld [vmem:[%s3 + $0x298] sm:$0xff]
  %v137 = vld [vmem:[%s3 + $0x2a0] sm:$0xff]
  %v138 = vld [vmem:[%s3 + $0x2a8] sm:$0xff]
  %v139 = vld [vmem:[%s3 + $0x2b0] sm:$0xff]
  %v140 = vld [vmem:[%s3 + $0x2b8] sm:$0xff]
  %v141 = vld [vmem:[%s3 + $0x2c0] sm:$0xff]
  %v142 = vld [vmem:[%s3 + $0x2c8] sm:$0xff]
  %v143 = vld [vmem:[%s3 + $0x2d0] sm:$0xff]
  %v144 = vld [vmem:[%s3 + $0x2d8] sm:$0xff]
  %v145 = vld [vmem:[%s3 + $0x2e0] sm:$0xff]
  %v146 = vld [vmem:[%s3 + $0x2e8] sm:$0xff]
  %v147 = vld [vmem:[%s3 + $0x2f0] sm:$0xff]
  %v148 = vld [vmem:[%s3 + $0x2f8] sm:$0xff]
  %v149 = vld [vmem:[%s3 + $0x300] sm:$0xff]
  %v150 = vld [vmem:[%s3 + $0x308] sm:$0xff]
  %v151 = vld [vmem:[%s3 + $0x310] sm:$0xff]
  %v152 = vld [vmem:[%s3 + $0x318] sm:$0xff]
  %v153 = vld [vmem:[%s3 + $0x320] sm:$0xff]
  %v154 = vld [vmem:[%s3 + $0x328] sm:$0xff]
  %v155 = vld [vmem:[%s3 + $0x330] sm:$0xff]
  %v156 = vld [vmem:[%s3 + $0x338] sm:$0xff]
  %v157 = vld [vmem:[%s3 + $0x340] sm:$0xff]
  %v158 = vld [vmem:[%s3 + $0x348] sm:$0xff]
  %v159 = vld [vmem:[%s3 + $0x350] sm:$0xff]
  %v160 = vld [vmem:[%s3 + $0x358] sm:$0xff]
  %v161 = vld [vmem:[%s3 + $0x360] sm:$0xff]
  %v162 = vld [vmem:[%s3 + $0x368] sm:$0xff]
  %v163 = vld [vmem:[%s3 + $0x370] sm:$0xff]
  %v164 = vld [vmem:[%s3 + $0x378] sm:$0xff]
  %v165 = vld [vmem:[%s3 + $0x380] sm:$0xff]
  %v166 = vld [vmem:[%s3 + $0x388] sm:$0xff]
  %v167 = vld [vmem:[%s3 + $0x390] sm:$0xff]
  %v168 = vld [vmem:[%s3 + $0x398] sm:$0xff]
  %v169 = vld [vmem:[%s3 + $0x3a0] sm:$0xff]
  %v170 = vld [vmem:[%s3 + $0x3a8] sm:$0xff]
  %v171 = vld [vmem:[%s3 + $0x3b0] sm:$0xff]
  %v172 = vld [vmem:[%s3 + $0x3b8] sm:$0xff]
  %v173 = vld [vmem:[%s3 + $0x3c0] sm:$0xff]
  %v174 = vld [vmem:[%s3 + $0x3c8] sm:$0xff]
  %v175 = vld [vmem:[%s3 + $0x3d0] sm:$0xff]
  %v176 = vld [vmem:[%s3 + $0x3d8] sm:$0xff]
  %v177 = vld [vmem:[%s3 + $0x3e0] sm:$0xff]
  %v178 = vld [vmem:[%s3 + $0x3e8] sm:$0xff]
  %v179 = vld [vmem:[%s3 + $0x3f0] sm:$0xff]
  %v180 = vld [vmem:[%s3 + $0x3f8] sm:$0xff]
  %v181 = vld [vmem:[%s3 + $0x400] sm:$0xff]
  %v182 = vld [vmem:[%s3 + $0x408] sm:$0xff]
  %v183 = vld [vmem:[%s3 + $0x410] sm:$0xff]
  %v184 = vld [vmem:[%s3 + $0x418] sm:$0xff]
  %v185 = vld [vmem:[%s3 + $0x420] sm:$0xff]
  %v186 = vld [vmem:[%s3 + $0x428] sm:$0xff]
  %v187 = vld [vmem:[%s3 + $0x430] sm:$0xff]
  %v188 = vld [vmem:[%s3 + $0x438] sm:$0xff]
  %v189 = vld [vmem:[%s3 + $0x440] sm:$0xff]
  %v190 = vld [vmem:[%s3 + $0x448] sm:$0xff]
  %v191 = vld [vmem:[%s4] sm:$0xff]
  %v192 = vld [vmem:[%s4 + $0x8] sm:$0xff]
  %v193 = vld [vmem:[%s4 + $0x10] sm:$0xff]
  %v194 = vld [vmem:[%s4 + $0x18] sm:$0xff]
  %v195 = vld [vmem:[%s4 + $0x20] sm:$0xff]
  %v196 = vld [vmem:[%s4 + $0x28] sm:$0xff]
  %v197 = vld [vmem:[%s4 + $0x30] sm:$0xff]
  %v198 = vld [vmem:[%s4 + $0x38] sm:$0xff]
  %v199 = vld [vmem:[%s4 + $0x40] sm:$0xff]
  %v200 = vld [vmem:[%s4 + $0x48] sm:$0xff]
  %v201 = vld [vmem:[%s4 + $0x50] sm:$0xff]
  %v202 = vld [vmem:[%s4 + $0x58] sm:$0xff]
  %v203 = vld [vmem:[%s4 + $0x60] sm:$0xff]
  %v204 = vld [vmem:[%s4 + $0x68] sm:$0xff]
  %v205 = vld [vmem:[%s4 + $0x70] sm:$0xff]
  %v206 = vld [vmem:[%s4 + $0x78] sm:$0xff]
  %v207 = vld [vmem:[%s4 + $0x80] sm:$0xff]
  %v208 = vld [vmem:[%s4 + $0x88] sm:$0xff]
  %v209 = vld [vmem:[%s4 + $0x90] sm:$0xff]
  %v210 = vld [vmem:[%s4 + $0x98] sm:$0xff]
  %v211 = vld [vmem:[%s4 + $0xa0] sm:$0xff]
  %v212 = vld [vmem:[%s4 + $0xa8] sm:$0xff]
  %v213 = vld [vmem:[%s4 + $0xb0] sm:$0xff]
  %v214 = vld [vmem:[%s4 + $0xb8] sm:$0xff]
  %v215 = vld [vmem:[%s4 + $0xc0] sm:$0xff]
  %v216 = vld [vmem:[%s4 + $0xc8] sm:$0xff]
  %v217 = vld [vmem:[%s4 + $0xd0] sm:$0xff]
  %v218 = vld [vmem:[%s4 + $0xd8] sm:$0xff]
  %v219 = vld [vmem:[%s4 + $0xe0] sm:$0xff]
  %v220 = vld [vmem:[%s4 + $0xe8] sm:$0xff]
  %v221 = vld [vmem:[%s4 + $0xf0] sm:$0xff]
  %v222 = vld [vmem:[%s4 + $0xf8] sm:$0xff]
  %v223 = vld [vmem:[%s4 + $0x100] sm:$0xff]
  %v224 = vld [vmem:[%s4 + $0x108] sm:$0xff]
  %v225 = vld [vmem:[%s4 + $0x110] sm:$0xff]
  %v226 = vld [vmem:[%s4 + $0x118] sm:$0xff]
  %v227 = vld [vmem:[%s4 + $0x120] sm:$0xff]
  %v228 = vld [vmem:[%s4 + $0x128] sm:$0xff]
  %v229 = vld [vmem:[%s4 + $0x130] sm:$0xff]
  %v230 = vld [vmem:[%s4 + $0x138] sm:$0xff]
  %v231 = vld [vmem:[%s4 + $0x140] sm:$0xff]
  %v232 = vld [vmem:[%s4 + $0x148] sm:$0xff]
  %v233 = vld [vmem:[%s4 + $0x150] sm:$0xff]
  %v234 = vld [vmem:[%s4 + $0x158] sm:$0xff]
  %v235 = vld [vmem:[%s4 + $0x160] sm:$0xff]
  %v236 = vld [vmem:[%s4 + $0x168] sm:$0xff]
  %v237 = vld [vmem:[%s4 + $0x170] sm:$0xff]
  %v238 = vld [vmem:[%s4 + $0x178] sm:$0xff]
  %v239 = vld [vmem:[%s4 + $0x180] sm:$0xff]
  %v240 = vld [vmem:[%s4 + $0x188] sm:$0xff]
  %v241 = vld [vmem:[%s4 + $0x190] sm:$0xff]
  %v242 = vld [vmem:[%s4 + $0x198] sm:$0xff]
  %v243 = vld [vmem:[%s4 + $0x1a0] sm:$0xff]
  %v244 = vld [vmem:[%s4 + $0x1a8] sm:$0xff]
  %v245 = vld [vmem:[%s4 + $0x1b0] sm:$0xff]
  %v246 = vld [vmem:[%s4 + $0x1b8] sm:$0xff]
  %v247 = vld [vmem:[%s4 + $0x1c0] sm:$0xff]
  %v248 = vld [vmem:[%s4 + $0x1c8] sm:$0xff]
  %v249 = vld [vmem:[%s4 + $0x1d0] sm:$0xff]
  %v250 = vld [vmem:[%s4 + $0x1d8] sm:$0xff]
  %v251 = vld [vmem:[%s4 + $0x1e0] sm:$0xff]
  %v252 = vld [vmem:[%s4 + $0x1e8] sm:$0xff]
  %v253 = vld [vmem:[%s4 + $0x1f0] sm:$0xff]
  %v254 = vld [vmem:[%s4 + $0x1f8] sm:$0xff]
  %v255 = vld [vmem:[%s4 + $0x200] sm:$0xff]
  %v256 = vld [vmem:[%s4 + $0x208] sm:$0xff]
  %v257 = vld [vmem:[%s4 + $0x210] sm:$0xff]
  %v258 = vld [vmem:[%s4 + $0x218] sm:$0xff]
  %v259 = vld [vmem:[%s4 + $0x220] sm:$0xff]
  %v260 = vld [vmem:[%s4 + $0x228] sm:$0xff]
  %v261 = vld [vmem:[%s4 + $0x230] sm:$0xff]
  %v262 = vld [vmem:[%s4 + $0x238] sm:$0xff]
  %v263 = vld [vmem:[%s4 + $0x240] sm:$0xff]
  %v264 = vld [vmem:[%s4 + $0x248] sm:$0xff]
  %v265 = vld [vmem:[%s4 + $0x250] sm:$0xff]
  %v266 = vld [vmem:[%s4 + $0x258] sm:$0xff]
  %v267 = vld [vmem:[%s4 + $0x260] sm:$0xff]
  %v268 = vld [vmem:[%s4 + $0x268] sm:$0xff]
  %v269 = vld [vmem:[%s4 + $0x270] sm:$0xff]
  %v270 = vld [vmem:[%s4 + $0x278] sm:$0xff]
  %v271 = vld [vmem:[%s5] sm:$0xff]
  %v272 = vld [vmem:[%s5 + $0x8] sm:$0xff]
  %v273 = vld [vmem:[%s5 + $0x10] sm:$0xff]
  %v274 = vld [vmem:[%s5 + $0x18] sm:$0xff]
  %v275 = vld [vmem:[%s5 + $0x20] sm:$0xff]
  %v276 = vld [vmem:[%s5 + $0x28] sm:$0xff]
  %v277 = vld [vmem:[%s5 + $0x30] sm:$0xff]
  %v278 = vld [vmem:[%s5 + $0x38] sm:$0xff]
  %v279 = vld [vmem:[%s5 + $0x40] sm:$0xff]
  %v280 = vld [vmem:[%s5 + $0x48] sm:$0xff]
  %v281 = vld [vmem:[%s5 + $0x50] sm:$0xff]
  %v282 = vld [vmem:[%s5 + $0x58] sm:$0xff]
  %v283 = vld [vmem:[%s5 + $0x60] sm:$0xff]
  %v284 = vld [vmem:[%s5 + $0x68] sm:$0xff]
  %v285 = vld [vmem:[%s5 + $0x70] sm:$0xff]
  %v286 = vld [vmem:[%s5 + $0x78] sm:$0xff]
  %v287 = vld [vmem:[%s5 + $0x80] sm:$0xff]
  %v288 = vld [vmem:[%s5 + $0x88] sm:$0xff]
  %v289 = vld [vmem:[%s5 + $0x90] sm:$0xff]
  %v290 = vld [vmem:[%s5 + $0x98] sm:$0xff]
  %v291 = vld [vmem:[%s5 + $0xa0] sm:$0xff]
  %v292 = vld [vmem:[%s5 + $0xa8] sm:$0xff]
  %v293 = vld [vmem:[%s5 + $0xb0] sm:$0xff]
  %v294 = vld [vmem:[%s5 + $0xb8] sm:$0xff]
  %v295 = vld [vmem:[%s5 + $0xc0] sm:$0xff]
  %v296 = vld [vmem:[%s5 + $0xc8] sm:$0xff]
  %v297 = vld [vmem:[%s5 + $0xd0] sm:$0xff]
  %v298 = vld [vmem:[%s5 + $0xd8] sm:$0xff]
  %v299 = vld [vmem:[%s5 + $0xe0] sm:$0xff]
  %v300 = vld [vmem:[%s5 + $0xe8] sm:$0xff]
  %v301 = vld [vmem:[%s5 + $0xf0] sm:$0xff]
  %v302 = vld [vmem:[%s5 + $0xf8] sm:$0xff]
  %v303 = vld [vmem:[%s5 + $0x100] sm:$0xff]
  %v304 = vld [vmem:[%s5 + $0x108] sm:$0xff]
  %v305 = vld [vmem:[%s5 + $0x110] sm:$0xff]
  %v306 = vld [vmem:[%s5 + $0x118] sm:$0xff]
  %v307 = vld [vmem:[%s5 + $0x120] sm:$0xff]
  %v308 = vld [vmem:[%s5 + $0x128] sm:$0xff]
  %v309 = vld [vmem:[%s5 + $0x130] sm:$0xff]
  %v310 = vld [vmem:[%s5 + $0x138] sm:$0xff]
  %v311 = vld [vmem:[%s6] ss:$0 sm:$0xff]
  %v312 = vld [vmem:[%s6 + $0x1] ss:$0 sm:$0xff]
  %v313 = vld [vmem:[%s6 + $0x2] ss:$0 sm:$0xff]
  %v314 = vld [vmem:[%s6 + $0x3] ss:$0 sm:$0xff]
  %v315 = vld [vmem:[%s6 + $0x4] ss:$0 sm:$0xff]
  %v316 = vld [vmem:[%s6 + $0x5] ss:$0 sm:$0xff]
  %v317 = vld [vmem:[%s6 + $0x6] ss:$0 sm:$0xff]
  %v318 = vld [vmem:[%s6 + $0x7] ss:$0 sm:$0xff]
  %v319 = vld [vmem:[%s6 + $0x10] ss:$0 sm:$0xff]
  %v320 = vld [vmem:[%s6 + $0x11] ss:$0 sm:$0xff]
  %s321 = scalar_lea.vmem %s6, 18
  %v322 = vld [vmem:[%s321] ss:$8 sm:$0x3]
  %s323 = scalar_lea.vmem %s6, 19
  %v324 = vld [vmem:[%s323] ss:$8 sm:$0x3]
  %v325 = vld [vmem:[%s6 + $0x14] ss:$0 sm:$0xff]
  %v326 = vld [vmem:[%s0] sm:$0xff]
  %vm327 = vcmask 64512
  %v329 = vsel %vm327, %v326, 0
  %331 = vmatprep.subr.mxu0 0.0
  %332 = vmatpush1.msra.mxu0 %v69
  %333 = vmatprep.subr.mxu0 0.0
  %334 = vmatpush1.msra.mxu0 0.0
  %335 = vmatprep.subr.mxu0 0.0
  %336 = vmatpush1.msra.mxu0 0.0
  %337 = vmatprep.subr.mxu0 0.0
  %338 = vmatpush1.msra.mxu0 0.0
  %339 = vmatprep.subr.mxu0 0.0
  %340 = vmatpush1.msra.mxu0 0.0
  %341 = vmatprep.subr.mxu0 0.0
  %342 = vmatpush1.msra.mxu0 0.0
  %343 = vmatprep.subr.mxu0 0.0
  %344 = vmatpush1.msra.mxu0 0.0
  %345 = vmatprep.subr.mxu0 0.0
  %346 = vmatpush1.msra.mxu0 0.0
  %347 = vmatprep.subr.mxu0 0.0
  %348 = vmatpush1.msra.mxu0 0.0
  %349 = vmatprep.subr.mxu0 0.0
  %350 = vmatpush1.msra.mxu0 0.0
  %351 = vmatprep.subr.mxu0 0.0
  %352 = vmatpush1.msra.mxu0 0.0
  %353 = vmatprep.subr.mxu0 0.0
  %354 = vmatpush1.msra.mxu0 0.0
  %355 = vmatprep.subr.mxu0 0.0
  %356 = vmatpush1.msra.mxu0 0.0
  %357 = vmatprep.subr.mxu0 0.0
  %358 = vmatpush1.msra.mxu0 0.0
  %359 = vmatprep.subr.mxu0 0.0
  %360 = vmatpush1.msra.mxu0 0.0
  %361 = vmatprep.subr.mxu0 0.0
  %362 = vmatpush1.msra.mxu0 0.0
  %363 = vmatprep.subr.mxu0 0.0
  %364 = vmatpush1.msra.mxu0 0.0
  %365 = vmatprep.subr.mxu0 0.0
  %366 = vmatpush1.msra.mxu0 0.0
  %367 = vmatprep.subr.mxu0 0.0
  %368 = vmatpush1.msra.mxu0 0.0
  %369 = vmatprep.subr.mxu0 0.0
  %370 = vmatpush1.msra.mxu0 0.0
  %371 = vmatprep.subr.mxu0 0.0
  %372 = vmatpush1.msra.mxu0 0.0
  %373 = vmatprep.subr.mxu0 0.0
  %374 = vmatpush1.msra.mxu0 0.0
  %375 = vmatprep.subr.mxu0 0.0
  %376 = vmatpush1.msra.mxu0 0.0
  %377 = vmatprep.subr.mxu0 0.0
  %378 = vmatpush1.msra.mxu0 0.0
  %379 = vmatprep.subr.mxu0 0.0
  %380 = vmatpush1.msra.mxu0 0.0
  %381 = vmatprep.subr.mxu0 0.0
  %382 = vmatpush1.msra.mxu0 0.0
  %383 = vmatprep.subr.mxu0 0.0
  %384 = vmatpush1.msra.mxu0 0.0
  %385 = vmatprep.subr.mxu0 0.0
  %386 = vmatpush1.msra.mxu0 0.0
  %387 = vmatprep.subr.mxu0 0.0
  %388 = vmatpush1.msra.mxu0 0.0
  %389 = vmatprep.subr.mxu0 0.0
  %390 = vmatpush1.msra.mxu0 0.0
  %391 = vmatprep.subr.mxu0 0.0
  %392 = vmatpush1.msra.mxu0 0.0
  %393 = vmatprep.subr.mxu0 0.0
  %394 = vmatpush1.msra.mxu0 0.0
  %395 = vmatprep.mubr.f32.mxu0 0.0
  %396 = vmatmul.mubr.f32.gmra.mrb[0].mxu0 %v329
  %v397 = vpop.f32.mrb[0].mxu0
  %v398 = vadd.f32 %v311, %v397
  %v399 = vpop.f32.mrb[0].mxu0
  %400 = vdwg.mxu0
  %v401 = vmax.f32 %v398, 0.0
  %vm402 = vcmask 523264
  %v404 = vsel %vm402, %v401, 0
  %406 = vmatprep.subr.mxu0 0.0
  %407 = vmatpush1.msra.mxu0 %v70
  %408 = vmatprep.subr.mxu0 0.0
  %409 = vmatpush1.msra.mxu0 %v71
  %410 = vmatprep.subr.mxu0 0.0
  %411 = vmatpush1.msra.mxu0 %v72
  %412 = vmatprep.subr.mxu0 0.0
  %413 = vmatpush1.msra.mxu0 %v73
  %414 = vmatprep.subr.mxu0 0.0
  %415 = vmatpush1.msra.mxu0 %v74
  %416 = vmatprep.subr.mxu0 0.0
  %417 = vmatpush1.msra.mxu0 %v75
  %418 = vmatprep.subr.mxu0 0.0
  %419 = vmatpush1.msra.mxu0 %v76
  %420 = vmatprep.subr.mxu0 0.0
  %421 = vmatpush1.msra.mxu0 %v77
  %422 = vmatprep.subr.mxu0 0.0
  %423 = vmatpush1.msra.mxu0 0.0
  %424 = vmatprep.subr.mxu0 0.0
  %425 = vmatpush1.msra.mxu0 0.0
  %426 = vmatprep.subr.mxu0 0.0
  %427 = vmatpush1.msra.mxu0 0.0
  %428 = vmatprep.subr.mxu0 0.0
  %429 = vmatpush1.msra.mxu0 0.0
  %430 = vmatprep.subr.mxu0 0.0
  %431 = vmatpush1.msra.mxu0 0.0
  %432 = vmatprep.subr.mxu0 0.0
  %433 = vmatpush1.msra.mxu0 0.0
  %434 = vmatprep.subr.mxu0 0.0
  %435 = vmatpush1.msra.mxu0 0.0
  %436 = vmatprep.subr.mxu0 0.0
  %437 = vmatpush1.msra.mxu0 0.0
  %438 = vmatprep.subr.mxu0 0.0
  %439 = vmatpush1.msra.mxu0 0.0
  %440 = vmatprep.subr.mxu0 0.0
  %441 = vmatpush1.msra.mxu0 0.0
  %442 = vmatprep.subr.mxu0 0.0
  %443 = vmatpush1.msra.mxu0 0.0
  %444 = vmatprep.subr.mxu0 0.0
  %445 = vmatpush1.msra.mxu0 0.0
  %446 = vmatprep.subr.mxu0 0.0
  %447 = vmatpush1.msra.mxu0 0.0
  %448 = vmatprep.subr.mxu0 0.0
  %449 = vmatpush1.msra.mxu0 0.0
  %450 = vmatprep.subr.mxu0 0.0
  %451 = vmatpush1.msra.mxu0 0.0
  %452 = vmatprep.subr.mxu0 0.0
  %453 = vmatpush1.msra.mxu0 0.0
  %454 = vmatprep.subr.mxu0 0.0
  %455 = vmatpush1.msra.mxu0 0.0
  %456 = vmatprep.subr.mxu0 0.0
  %457 = vmatpush1.msra.mxu0 0.0
  %458 = vmatprep.subr.mxu0 0.0
  %459 = vmatpush1.msra.mxu0 0.0
  %460 = vmatprep.subr.mxu0 0.0
  %461 = vmatpush1.msra.mxu0 0.0
  %462 = vmatprep.subr.mxu0 0.0
  %463 = vmatpush1.msra.mxu0 0.0
  %464 = vmatprep.subr.mxu0 0.0
  %465 = vmatpush1.msra.mxu0 0.0
  %466 = vmatprep.subr.mxu0 0.0
  %467 = vmatpush1.msra.mxu0 0.0
  %468 = vmatprep.subr.mxu0 0.0
  %469 = vmatpush1.msra.mxu0 0.0
  %470 = vmatprep.mubr.f32.mxu0 0.0
  %471 = vmatmul.mubr.f32.gmra.mrb[0].mxu0 %v404
  %v472 = vpop.f32.mrb[0].mxu0
  %v473 = vadd.f32 %v312, %v472
  %v474 = vpop.f32.mrb[0].mxu0
  %475 = vdwg.mxu0
  %v476 = vmax.f32 %v473, 0.0
  %v477 = vld [vmem:[%s1] sm:$0xff]
  %v478 = vld [vmem:[%s1 + $0x8] sm:$0xff]
  %v480 = vsel %vm327, %v477, 0
  %v483 = vsel %vm327, %v478, 0
  %485 = vmatprep.subr.mxu0 0.0
  %486 = vmatpush1.msra.mxu0 %v78
  %487 = vmatprep.subr.mxu0 0.0
  %488 = vmatpush1.msra.mxu0 0.0
  %489 = vmatprep.subr.mxu0 0.0
  %490 = vmatpush1.msra.mxu0 0.0
  %491 = vmatprep.subr.mxu0 0.0
  %492 = vmatpush1.msra.mxu0 0.0
  %493 = vmatprep.subr.mxu0 0.0
  %494 = vmatpush1.msra.mxu0 0.0
  %495 = vmatprep.subr.mxu0 0.0
  %496 = vmatpush1.msra.mxu0 0.0
  %497 = vmatprep.subr.mxu0 0.0
  %498 = vmatpush1.msra.mxu0 0.0
  %499 = vmatprep.subr.mxu0 0.0
  %500 = vmatpush1.msra.mxu0 0.0
  %501 = vmatprep.subr.mxu0 0.0
  %502 = vmatpush1.msra.mxu0 0.0
  %503 = vmatprep.subr.mxu0 0.0
  %504 = vmatpush1.msra.mxu0 0.0
  %505 = vmatprep.subr.mxu0 0.0
  %506 = vmatpush1.msra.mxu0 0.0
  %507 = vmatprep.subr.mxu0 0.0
  %508 = vmatpush1.msra.mxu0 0.0
  %509 = vmatprep.subr.mxu0 0.0
  %510 = vmatpush1.msra.mxu0 0.0
  %511 = vmatprep.subr.mxu0 0.0
  %512 = vmatpush1.msra.mxu0 0.0
  %513 = vmatprep.subr.mxu0 0.0
  %514 = vmatpush1.msra.mxu0 0.0
  %515 = vmatprep.subr.mxu0 0.0
  %516 = vmatpush1.msra.mxu0 0.0
  %517 = vmatprep.subr.mxu0 0.0
  %518 = vmatpush1.msra.mxu0 0.0
  %519 = vmatprep.subr.mxu0 0.0
  %520 = vmatpush1.msra.mxu0 0.0
  %521 = vmatprep.subr.mxu0 0.0
  %522 = vmatpush1.msra.mxu0 0.0
  %523 = vmatprep.subr.mxu0 0.0
  %524 = vmatpush1.msra.mxu0 0.0
  %525 = vmatprep.subr.mxu0 0.0
  %526 = vmatpush1.msra.mxu0 0.0
  %527 = vmatprep.subr.mxu0 0.0
  %528 = vmatpush1.msra.mxu0 0.0
  %529 = vmatprep.subr.mxu0 0.0
  %530 = vmatpush1.msra.mxu0 0.0
  %531 = vmatprep.subr.mxu0 0.0
  %532 = vmatpush1.msra.mxu0 0.0
  %533 = vmatprep.subr.mxu0 0.0
  %534 = vmatpush1.msra.mxu0 0.0
  %535 = vmatprep.subr.mxu0 0.0
  %536 = vmatpush1.msra.mxu0 0.0
  %537 = vmatprep.subr.mxu0 0.0
  %538 = vmatpush1.msra.mxu0 0.0
  %539 = vmatprep.subr.mxu0 0.0
  %540 = vmatpush1.msra.mxu0 0.0
  %541 = vmatprep.subr.mxu0 0.0
  %542 = vmatpush1.msra.mxu0 0.0
  %543 = vmatprep.subr.mxu0 0.0
  %544 = vmatpush1.msra.mxu0 0.0
  %545 = vmatprep.subr.mxu0 0.0
  %546 = vmatpush1.msra.mxu0 0.0
  %547 = vmatprep.subr.mxu0 0.0
  %548 = vmatpush1.msra.mxu0 0.0
  %549 = vmatprep.mubr.f32.mxu0 0.0
  %550 = vmatmul.mubr.f32.gmra.mrb[0].mxu0 %v480
  %v551 = vpop.f32.mrb[0].mxu0
  %v552 = vadd.f32 %v313, %v551
  %v553 = vpop.f32.mrb[0].mxu0
  %554 = vmatprep.mubr.f32.mxu0 0.0
  %555 = vmatmul.mubr.f32.gmra.mrb[0].mxu0 %v483
  %v556 = vpop.f32.mrb[0].mxu0
  %v557 = vadd.f32 %v313, %v556
  %v558 = vpop.f32.mrb[0].mxu0
  %559 = vdwg.mxu0
  %v560 = vmax.f32 %v552, 0.0
  %v561 = vmax.f32 %v557, 0.0
  %v563 = vsel %vm402, %v560, 0
  %v566 = vsel %vm402, %v561, 0
  %568 = vmatprep.subr.mxu0 0.0
  %569 = vmatpush1.msra.mxu0 %v79
  %570 = vmatprep.subr.mxu0 0.0
  %571 = vmatpush1.msra.mxu0 %v80
  %572 = vmatprep.subr.mxu0 0.0
  %573 = vmatpush1.msra.mxu0 %v81
  %574 = vmatprep.subr.mxu0 0.0
  %575 = vmatpush1.msra.mxu0 %v82
  %576 = vmatprep.subr.mxu0 0.0
  %577 = vmatpush1.msra.mxu0 %v83
  %578 = vmatprep.subr.mxu0 0.0
  %579 = vmatpush1.msra.mxu0 %v84
  %580 = vmatprep.subr.mxu0 0.0
  %581 = vmatpush1.msra.mxu0 %v85
  %582 = vmatprep.subr.mxu0 0.0
  %583 = vmatpush1.msra.mxu0 %v86
  %584 = vmatprep.subr.mxu0 0.0
  %585 = vmatpush1.msra.mxu0 0.0
  %586 = vmatprep.subr.mxu0 0.0
  %587 = vmatpush1.msra.mxu0 0.0
  %588 = vmatprep.subr.mxu0 0.0
  %589 = vmatpush1.msra.mxu0 0.0
  %590 = vmatprep.subr.mxu0 0.0
  %591 = vmatpush1.msra.mxu0 0.0
  %592 = vmatprep.subr.mxu0 0.0
  %593 = vmatpush1.msra.mxu0 0.0
  %594 = vmatprep.subr.mxu0 0.0
  %595 = vmatpush1.msra.mxu0 0.0
  %596 = vmatprep.subr.mxu0 0.0
  %597 = vmatpush1.msra.mxu0 0.0
  %598 = vmatprep.subr.mxu0 0.0
  %599 = vmatpush1.msra.mxu0 0.0
  %600 = vmatprep.subr.mxu0 0.0
  %601 = vmatpush1.msra.mxu0 0.0
  %602 = vmatprep.subr.mxu0 0.0
  %603 = vmatpush1.msra.mxu0 0.0
  %604 = vmatprep.subr.mxu0 0.0
  %605 = vmatpush1.msra.mxu0 0.0
  %606 = vmatprep.subr.mxu0 0.0
  %607 = vmatpush1.msra.mxu0 0.0
  %608 = vmatprep.subr.mxu0 0.0
  %609 = vmatpush1.msra.mxu0 0.0
  %610 = vmatprep.subr.mxu0 0.0
  %611 = vmatpush1.msra.mxu0 0.0
  %612 = vmatprep.subr.mxu0 0.0
  %613 = vmatpush1.msra.mxu0 0.0
  %614 = vmatprep.subr.mxu0 0.0
  %615 = vmatpush1.msra.mxu0 0.0
  %616 = vmatprep.subr.mxu0 0.0
  %617 = vmatpush1.msra.mxu0 0.0
  %618 = vmatprep.subr.mxu0 0.0
  %619 = vmatpush1.msra.mxu0 0.0
  %620 = vmatprep.subr.mxu0 0.0
  %621 = vmatpush1.msra.mxu0 0.0
  %622 = vmatprep.subr.mxu0 0.0
  %623 = vmatpush1.msra.mxu0 0.0
  %624 = vmatprep.subr.mxu0 0.0
  %625 = vmatpush1.msra.mxu0 0.0
  %626 = vmatprep.subr.mxu0 0.0
  %627 = vmatpush1.msra.mxu0 0.0
  %628 = vmatprep.subr.mxu0 0.0
  %629 = vmatpush1.msra.mxu0 0.0
  %630 = vmatprep.subr.mxu0 0.0
  %631 = vmatpush1.msra.mxu0 0.0
  %632 = vmatprep.mubr.f32.mxu0 0.0
  %633 = vmatmul.mubr.f32.gmra.mrb[0].mxu0 %v563
  %v634 = vpop.f32.mrb[0].mxu0
  %v635 = vadd.f32 %v314, %v634
  %v636 = vpop.f32.mrb[0].mxu0
  %637 = vmatprep.mubr.f32.mxu0 0.0
  %638 = vmatmul.mubr.f32.gmra.mrb[0].mxu0 %v566
  %v639 = vpop.f32.mrb[0].mxu0
  %v640 = vadd.f32 %v314, %v639
  %v641 = vpop.f32.mrb[0].mxu0
  %642 = vdwg.mxu0
  %v643 = vmax.f32 %v635, 0.0
  %v644 = vmax.f32 %v640, 0.0
  %v646 = vsel %vm402, %v476, 0
  %648 = vmatprep.subr.mxu0 0.0
  %649 = vmatpush1.msra.mxu0 %v167
  %650 = vmatprep.subr.mxu0 0.0
  %651 = vmatpush1.msra.mxu0 %v168
  %652 = vmatprep.subr.mxu0 0.0
  %653 = vmatpush1.msra.mxu0 %v169
  %654 = vmatprep.subr.mxu0 0.0
  %655 = vmatpush1.msra.mxu0 %v170
  %656 = vmatprep.subr.mxu0 0.0
  %657 = vmatpush1.msra.mxu0 %v171
  %658 = vmatprep.subr.mxu0 0.0
  %659 = vmatpush1.msra.mxu0 %v172
  %660 = vmatprep.subr.mxu0 0.0
  %661 = vmatpush1.msra.mxu0 %v173
  %662 = vmatprep.subr.mxu0 0.0
  %663 = vmatpush1.msra.mxu0 %v174
  %664 = vmatprep.subr.mxu0 0.0
  %665 = vmatpush1.msra.mxu0 0.0
  %666 = vmatprep.subr.mxu0 0.0
  %667 = vmatpush1.msra.mxu0 0.0
  %668 = vmatprep.subr.mxu0 0.0
  %669 = vmatpush1.msra.mxu0 0.0
  %670 = vmatprep.subr.mxu0 0.0
  %671 = vmatpush1.msra.mxu0 0.0
  %672 = vmatprep.subr.mxu0 0.0
  %673 = vmatpush1.msra.mxu0 0.0
  %674 = vmatprep.subr.mxu0 0.0
  %675 = vmatpush1.msra.mxu0 0.0
  %676 = vmatprep.subr.mxu0 0.0
  %677 = vmatpush1.msra.mxu0 0.0
  %678 = vmatprep.subr.mxu0 0.0
  %679 = vmatpush1.msra.mxu0 0.0
  %680 = vmatprep.subr.mxu0 0.0
  %681 = vmatpush1.msra.mxu0 0.0
  %682 = vmatprep.subr.mxu0 0.0
  %683 = vmatpush1.msra.mxu0 0.0
  %684 = vmatprep.subr.mxu0 0.0
  %685 = vmatpush1.msra.mxu0 0.0
  %686 = vmatprep.subr.mxu0 0.0
  %687 = vmatpush1.msra.mxu0 0.0
  %688 = vmatprep.subr.mxu0 0.0
  %689 = vmatpush1.msra.mxu0 0.0
  %690 = vmatprep.subr.mxu0 0.0
  %691 = vmatpush1.msra.mxu0 0.0
  %692 = vmatprep.subr.mxu0 0.0
  %693 = vmatpush1.msra.mxu0 0.0
  %694 = vmatprep.subr.mxu0 0.0
  %695 = vmatpush1.msra.mxu0 0.0
  %696 = vmatprep.subr.mxu0 0.0
  %697 = vmatpush1.msra.mxu0 0.0
  %698 = vmatprep.subr.mxu0 0.0
  %699 = vmatpush1.msra.mxu0 0.0
  %700 = vmatprep.subr.mxu0 0.0
  %701 = vmatpush1.msra.mxu0 0.0
  %702 = vmatprep.subr.mxu0 0.0
  %703 = vmatpush1.msra.mxu0 0.0
  %704 = vmatprep.subr.mxu0 0.0
  %705 = vmatpush1.msra.mxu0 0.0
  %706 = vmatprep.subr.mxu0 0.0
  %707 = vmatpush1.msra.mxu0 0.0
  %708 = vmatprep.subr.mxu0 0.0
  %709 = vmatpush1.msra.mxu0 0.0
  %710 = vmatprep.subr.mxu0 0.0
  %711 = vmatpush1.msra.mxu0 0.0
  %712 = vmatprep.mubr.f32.mxu0 0.0
  %713 = vmatmul.mubr.f32.gmra.mrb[0].mxu0 %v646
  %v714 = vpop.f32.mrb[0].mxu0
  %v715 = vadd.f32 %v319, %v714
  %v716 = vpop.f32.mrb[0].mxu0
  %717 = vdwg.mxu0
  %s718 = smul.u32 4, 4
  %s719 = smul.u32 %s718, 1
  %s720 = sshll.u32 %s719, 4
  %721 = dma.done [#allocation3], %s720
  %v722 = vld [vmem:[#allocation2] sm:$0xff]
  %v723 = vld [vmem:[#allocation2 + $0x8] sm:$0xff]
  %v724 = vpack.c.bf16 %v476, %v476
  %v726 = vsel %vm327, %v722, 0
  %v729 = vsel %vm327, %v723, 0
  %vm731 = vcmask 1043456
  %v733 = vsel %vm731, %v724, 0
  %735 = vmatprep.subr.bf16.mxu0 0
  %736 = vmatpush1.bf16.msra.mxu0 %v733
  %737 = vmatprep.subr.bf16.mxu0 0
  %738 = vmatpush1.bf16.msra.mxu0 0
  %739 = vmatprep.subr.bf16.mxu0 0
  %740 = vmatpush1.bf16.msra.mxu0 0
  %741 = vmatprep.subr.bf16.mxu0 0
  %742 = vmatpush1.bf16.msra.mxu0 0
  %743 = vmatprep.subr.bf16.mxu0 0
  %744 = vmatpush1.bf16.msra.mxu0 0
  %745 = vmatprep.subr.bf16.mxu0 0
  %746 = vmatpush1.bf16.msra.mxu0 0
  %747 = vmatprep.subr.bf16.mxu0 0
  %748 = vmatpush1.bf16.msra.mxu0 0
  %749 = vmatprep.subr.bf16.mxu0 0
  %750 = vmatpush1.bf16.msra.mxu0 0
  %751 = vmatprep.subr.bf16.mxu0 0
  %752 = vmatpush1.bf16.msra.mxu0 0
  %753 = vmatprep.subr.bf16.mxu0 0
  %754 = vmatpush1.bf16.msra.mxu0 0
  %755 = vmatprep.subr.bf16.mxu0 0
  %756 = vmatpush1.bf16.msra.mxu0 0
  %757 = vmatprep.subr.bf16.mxu0 0
  %758 = vmatpush1.bf16.msra.mxu0 0
  %759 = vmatprep.subr.bf16.mxu0 0
  %760 = vmatpush1.bf16.msra.mxu0 0
  %761 = vmatprep.subr.bf16.mxu0 0
  %762 = vmatpush1.bf16.msra.mxu0 0
  %763 = vmatprep.subr.bf16.mxu0 0
  %764 = vmatpush1.bf16.msra.mxu0 0
  %765 = vmatprep.subr.bf16.mxu0 0
  %766 = vmatpush1.bf16.msra.mxu0 0
  %767 = vmatprep.mubr.bf16.mxu0 0
  %768 = vmatmul.mubr.bf16.gmra.mrb[0].mxu0 %v726
  %v769 = vpop.f32.mrb[0].mxu0
  %v770 = vadd.f32 0.0, %v769
  %v771 = vpop.f32.mrb[0].mxu0
  %v772 = vpop.f32.mrb[0].mxu0
  %v773 = vadd.f32 0.0, %v772
  %v774 = vpop.f32.mrb[0].mxu0
  %775 = vmatprep.mubr.bf16.mxu0 0
  %776 = vmatmul.mubr.bf16.gmra.mrb[0].mxu0 %v729
  %v777 = vpop.f32.mrb[0].mxu0
  %v778 = vadd.f32 0.0, %v777
  %v779 = vpop.f32.mrb[0].mxu0
  %v780 = vpop.f32.mrb[0].mxu0
  %v781 = vadd.f32 0.0, %v780
  %v782 = vpop.f32.mrb[0].mxu0
  %783 = vdwg.mxu0
  %v785 = vsel %vm402, %v778, 0
  %v788 = vsel %vm402, %v781, 0
  %790 = vmatprep.subr.mxu0 0.0
  %791 = vmatpush1.msra.mxu0 %v103
  %792 = vmatprep.subr.mxu0 0.0
  %793 = vmatpush1.msra.mxu0 %v104
  %794 = vmatprep.subr.mxu0 0.0
  %795 = vmatpush1.msra.mxu0 %v105
  %796 = vmatprep.subr.mxu0 0.0
  %797 = vmatpush1.msra.mxu0 %v106
  %798 = vmatprep.subr.mxu0 0.0
  %799 = vmatpush1.msra.mxu0 %v107
  %800 = vmatprep.subr.mxu0 0.0
  %801 = vmatpush1.msra.mxu0 %v108
  %802 = vmatprep.subr.mxu0 0.0
  %803 = vmatpush1.msra.mxu0 %v109
  %804 = vmatprep.subr.mxu0 0.0
  %805 = vmatpush1.msra.mxu0 %v110
  %806 = vmatprep.subr.mxu0 0.0
  %807 = vmatpush1.msra.mxu0 0.0
  %808 = vmatprep.subr.mxu0 0.0
  %809 = vmatpush1.msra.mxu0 0.0
  %810 = vmatprep.subr.mxu0 0.0
  %811 = vmatpush1.msra.mxu0 0.0
  %812 = vmatprep.subr.mxu0 0.0
  %813 = vmatpush1.msra.mxu0 0.0
  %814 = vmatprep.subr.mxu0 0.0
  %815 = vmatpush1.msra.mxu0 0.0
  %816 = vmatprep.subr.mxu0 0.0
  %817 = vmatpush1.msra.mxu0 0.0
  %818 = vmatprep.subr.mxu0 0.0
  %819 = vmatpush1.msra.mxu0 0.0
  %820 = vmatprep.subr.mxu0 0.0
  %821 = vmatpush1.msra.mxu0 0.0
  %822 = vmatprep.subr.mxu0 0.0
  %823 = vmatpush1.msra.mxu0 0.0
  %824 = vmatprep.subr.mxu0 0.0
  %825 = vmatpush1.msra.mxu0 0.0
  %826 = vmatprep.subr.mxu0 0.0
  %827 = vmatpush1.msra.mxu0 0.0
  %828 = vmatprep.subr.mxu0 0.0
  %829 = vmatpush1.msra.mxu0 0.0
  %830 = vmatprep.subr.mxu0 0.0
  %831 = vmatpush1.msra.mxu0 0.0
  %832 = vmatprep.subr.mxu0 0.0
  %833 = vmatpush1.msra.mxu0 0.0
  %834 = vmatprep.subr.mxu0 0.0
  %835 = vmatpush1.msra.mxu0 0.0
  %836 = vmatprep.subr.mxu0 0.0
  %837 = vmatpush1.msra.mxu0 0.0
  %838 = vmatprep.subr.mxu0 0.0
  %839 = vmatpush1.msra.mxu0 0.0
  %840 = vmatprep.subr.mxu0 0.0
  %841 = vmatpush1.msra.mxu0 0.0
  %842 = vmatprep.subr.mxu0 0.0
  %843 = vmatpush1.msra.mxu0 0.0
  %844 = vmatprep.subr.mxu0 0.0
  %845 = vmatpush1.msra.mxu0 0.0
  %846 = vmatprep.subr.mxu0 0.0
  %847 = vmatpush1.msra.mxu0 0.0
  %848 = vmatprep.subr.mxu0 0.0
  %849 = vmatpush1.msra.mxu0 0.0
  %850 = vmatprep.subr.mxu0 0.0
  %851 = vmatpush1.msra.mxu0 0.0
  %852 = vmatprep.subr.mxu0 0.0
  %853 = vmatpush1.msra.mxu0 0.0
  %854 = vmatprep.mubr.f32.mxu0 0.0
  %855 = vmatmul.mubr.f32.gmra.mrb[0].mxu0 %v785
  %v856 = vpop.f32.mrb[0].mxu0
  %v857 = vadd.f32 0.0, %v856
  %v858 = vpop.f32.mrb[0].mxu0
  %859 = vmatprep.mubr.f32.mxu0 0.0
  %860 = vmatmul.mubr.f32.gmra.mrb[0].mxu0 %v788
  %v861 = vpop.f32.mrb[0].mxu0
  %v862 = vadd.f32 0.0, %v861
  %v863 = vpop.f32.mrb[0].mxu0
  %864 = vdwg.mxu0
  %v866 = vsel %vm402, %v770, 0
  %v869 = vsel %vm402, %v773, 0
  %871 = vmatprep.subr.mxu0 0.0
  %872 = vmatpush1.msra.mxu0 %v87
  %873 = vmatprep.subr.mxu0 0.0
  %874 = vmatpush1.msra.mxu0 %v88
  %875 = vmatprep.subr.mxu0 0.0
  %876 = vmatpush1.msra.mxu0 %v89
  %877 = vmatprep.subr.mxu0 0.0
  %878 = vmatpush1.msra.mxu0 %v90
  %879 = vmatprep.subr.mxu0 0.0
  %880 = vmatpush1.msra.mxu0 %v91
  %881 = vmatprep.subr.mxu0 0.0
  %882 = vmatpush1.msra.mxu0 %v92
  %883 = vmatprep.subr.mxu0 0.0
  %884 = vmatpush1.msra.mxu0 %v93
  %885 = vmatprep.subr.mxu0 0.0
  %886 = vmatpush1.msra.mxu0 %v94
  %887 = vmatprep.subr.mxu0 0.0
  %888 = vmatpush1.msra.mxu0 0.0
  %889 = vmatprep.subr.mxu0 0.0
  %890 = vmatpush1.msra.mxu0 0.0
  %891 = vmatprep.subr.mxu0 0.0
  %892 = vmatpush1.msra.mxu0 0.0
  %893 = vmatprep.subr.mxu0 0.0
  %894 = vmatpush1.msra.mxu0 0.0
  %895 = vmatprep.subr.mxu0 0.0
  %896 = vmatpush1.msra.mxu0 0.0
  %897 = vmatprep.subr.mxu0 0.0
  %898 = vmatpush1.msra.mxu0 0.0
  %899 = vmatprep.subr.mxu0 0.0
  %900 = vmatpush1.msra.mxu0 0.0
  %901 = vmatprep.subr.mxu0 0.0
  %902 = vmatpush1.msra.mxu0 0.0
  %903 = vmatprep.subr.mxu0 0.0
  %904 = vmatpush1.msra.mxu0 0.0
  %905 = vmatprep.subr.mxu0 0.0
  %906 = vmatpush1.msra.mxu0 0.0
  %907 = vmatprep.subr.mxu0 0.0
  %908 = vmatpush1.msra.mxu0 0.0
  %909 = vmatprep.subr.mxu0 0.0
  %910 = vmatpush1.msra.mxu0 0.0
  %911 = vmatprep.subr.mxu0 0.0
  %912 = vmatpush1.msra.mxu0 0.0
  %913 = vmatprep.subr.mxu0 0.0
  %914 = vmatpush1.msra.mxu0 0.0
  %915 = vmatprep.subr.mxu0 0.0
  %916 = vmatpush1.msra.mxu0 0.0
  %917 = vmatprep.subr.mxu0 0.0
  %918 = vmatpush1.msra.mxu0 0.0
  %919 = vmatprep.subr.mxu0 0.0
  %920 = vmatpush1.msra.mxu0 0.0
  %921 = vmatprep.subr.mxu0 0.0
  %922 = vmatpush1.msra.mxu0 0.0
  %923 = vmatprep.subr.mxu0 0.0
  %924 = vmatpush1.msra.mxu0 0.0
  %925 = vmatprep.subr.mxu0 0.0
  %926 = vmatpush1.msra.mxu0 0.0
  %927 = vmatprep.subr.mxu0 0.0
  %928 = vmatpush1.msra.mxu0 0.0
  %929 = vmatprep.subr.mxu0 0.0
  %930 = vmatpush1.msra.mxu0 0.0
  %931 = vmatprep.subr.mxu0 0.0
  %932 = vmatpush1.msra.mxu0 0.0
  %933 = vmatprep.subr.mxu0 0.0
  %934 = vmatpush1.msra.mxu0 0.0
  %935 = vmatprep.mubr.f32.mxu0 0.0
  %936 = vmatmul.mubr.f32.gmra.mrb[0].mxu0 %v866
  %v937 = vpop.f32.mrb[0].mxu0
  %v938 = vadd.f32 %v857, %v937
  %v939 = vpop.f32.mrb[0].mxu0
  %940 = vmatprep.mubr.f32.mxu0 0.0
  %941 = vmatmul.mubr.f32.gmra.mrb[0].mxu0 %v869
  %v942 = vpop.f32.mrb[0].mxu0
  %v943 = vadd.f32 %v862, %v942
  %v944 = vpop.f32.mrb[0].mxu0
  %945 = vdwg.mxu0
  %v947 = vsel %vm402, %v643, 0
  %v950 = vsel %vm402, %v644, 0
  %952 = vmatprep.subr.mxu0 0.0
  %953 = vmatpush1.msra.mxu0 %v119
  %954 = vmatprep.subr.mxu0 0.0
  %955 = vmatpush1.msra.mxu0 %v120
  %956 = vmatprep.subr.mxu0 0.0
  %957 = vmatpush1.msra.mxu0 %v121
  %958 = vmatprep.subr.mxu0 0.0
  %959 = vmatpush1.msra.mxu0 %v122
  %960 = vmatprep.subr.mxu0 0.0
  %961 = vmatpush1.msra.mxu0 %v123
  %962 = vmatprep.subr.mxu0 0.0
  %963 = vmatpush1.msra.mxu0 %v124
  %964 = vmatprep.subr.mxu0 0.0
  %965 = vmatpush1.msra.mxu0 %v125
  %966 = vmatprep.subr.mxu0 0.0
  %967 = vmatpush1.msra.mxu0 %v126
  %968 = vmatprep.subr.mxu0 0.0
  %969 = vmatpush1.msra.mxu0 0.0
  %970 = vmatprep.subr.mxu0 0.0
  %971 = vmatpush1.msra.mxu0 0.0
  %972 = vmatprep.subr.mxu0 0.0
  %973 = vmatpush1.msra.mxu0 0.0
  %974 = vmatprep.subr.mxu0 0.0
  %975 = vmatpush1.msra.mxu0 0.0
  %976 = vmatprep.subr.mxu0 0.0
  %977 = vmatpush1.msra.mxu0 0.0
  %978 = vmatprep.subr.mxu0 0.0
  %979 = vmatpush1.msra.mxu0 0.0
  %980 = vmatprep.subr.mxu0 0.0
  %981 = vmatpush1.msra.mxu0 0.0
  %982 = vmatprep.subr.mxu0 0.0
  %983 = vmatpush1.msra.mxu0 0.0
  %984 = vmatprep.subr.mxu0 0.0
  %985 = vmatpush1.msra.mxu0 0.0
  %986 = vmatprep.subr.mxu0 0.0
  %987 = vmatpush1.msra.mxu0 0.0
  %988 = vmatprep.subr.mxu0 0.0
  %989 = vmatpush1.msra.mxu0 0.0
  %990 = vmatprep.subr.mxu0 0.0
  %991 = vmatpush1.msra.mxu0 0.0
  %992 = vmatprep.subr.mxu0 0.0
  %993 = vmatpush1.msra.mxu0 0.0
  %994 = vmatprep.subr.mxu0 0.0
  %995 = vmatpush1.msra.mxu0 0.0
  %996 = vmatprep.subr.mxu0 0.0
  %997 = vmatpush1.msra.mxu0 0.0
  %998 = vmatprep.subr.mxu0 0.0
  %999 = vmatpush1.msra.mxu0 0.0
  %1000 = vmatprep.subr.mxu0 0.0
  %1001 = vmatpush1.msra.mxu0 0.0
  %1002 = vmatprep.subr.mxu0 0.0
  %1003 = vmatpush1.msra.mxu0 0.0
  %1004 = vmatprep.subr.mxu0 0.0
  %1005 = vmatpush1.msra.mxu0 0.0
  %1006 = vmatprep.subr.mxu0 0.0
  %1007 = vmatpush1.msra.mxu0 0.0
  %1008 = vmatprep.subr.mxu0 0.0
  %1009 = vmatpush1.msra.mxu0 0.0
  %1010 = vmatprep.subr.mxu0 0.0
  %1011 = vmatpush1.msra.mxu0 0.0
  %1012 = vmatprep.subr.mxu0 0.0
  %1013 = vmatpush1.msra.mxu0 0.0
  %1014 = vmatprep.subr.mxu0 0.0
  %1015 = vmatpush1.msra.mxu0 0.0
  %1016 = vmatprep.mubr.f32.mxu0 0.0
  %1017 = vmatmul.mubr.f32.gmra.mrb[0].mxu0 %v947
  %v1018 = vpop.f32.mrb[0].mxu0
  %v1019 = vadd.f32 0.0, %v1018
  %v1020 = vpop.f32.mrb[0].mxu0
  %1021 = vmatprep.mubr.f32.mxu0 0.0
  %1022 = vmatmul.mubr.f32.gmra.mrb[0].mxu0 %v950
  %v1023 = vpop.f32.mrb[0].mxu0
  %v1024 = vadd.f32 0.0, %v1023
  %v1025 = vpop.f32.mrb[0].mxu0
  %1026 = vdwg.mxu0
  %v1027 = vadd.f32 %v938, %v1019
  %v1028 = vadd.f32 %v943, %v1024
  %v1029 = vadd.f32 %v1027, %v315
  %v1030 = vadd.f32 %v1028, %v315
  %1031 = vmatprep.subr.mxu0 0.0
  %1032 = vmatpush1.msra.mxu0 %v135
  %1033 = vmatprep.subr.mxu0 0.0
  %1034 = vmatpush1.msra.mxu0 %v136
  %1035 = vmatprep.subr.mxu0 0.0
  %1036 = vmatpush1.msra.mxu0 %v137
  %1037 = vmatprep.subr.mxu0 0.0
  %1038 = vmatpush1.msra.mxu0 %v138
  %1039 = vmatprep.subr.mxu0 0.0
  %1040 = vmatpush1.msra.mxu0 %v139
  %1041 = vmatprep.subr.mxu0 0.0
  %1042 = vmatpush1.msra.mxu0 %v140
  %1043 = vmatprep.subr.mxu0 0.0
  %1044 = vmatpush1.msra.mxu0 %v141
  %1045 = vmatprep.subr.mxu0 0.0
  %1046 = vmatpush1.msra.mxu0 %v142
  %1047 = vmatprep.subr.mxu0 0.0
  %1048 = vmatpush1.msra.mxu0 0.0
  %1049 = vmatprep.subr.mxu0 0.0
  %1050 = vmatpush1.msra.mxu0 0.0
  %1051 = vmatprep.subr.mxu0 0.0
  %1052 = vmatpush1.msra.mxu0 0.0
  %1053 = vmatprep.subr.mxu0 0.0
  %1054 = vmatpush1.msra.mxu0 0.0
  %1055 = vmatprep.subr.mxu0 0.0
  %1056 = vmatpush1.msra.mxu0 0.0
  %1057 = vmatprep.subr.mxu0 0.0
  %1058 = vmatpush1.msra.mxu0 0.0
  %1059 = vmatprep.subr.mxu0 0.0
  %1060 = vmatpush1.msra.mxu0 0.0
  %1061 = vmatprep.subr.mxu0 0.0
  %1062 = vmatpush1.msra.mxu0 0.0
  %1063 = vmatprep.subr.mxu0 0.0
  %1064 = vmatpush1.msra.mxu0 0.0
  %1065 = vmatprep.subr.mxu0 0.0
  %1066 = vmatpush1.msra.mxu0 0.0
  %1067 = vmatprep.subr.mxu0 0.0
  %1068 = vmatpush1.msra.mxu0 0.0
  %1069 = vmatprep.subr.mxu0 0.0
  %1070 = vmatpush1.msra.mxu0 0.0
  %1071 = vmatprep.subr.mxu0 0.0
  %1072 = vmatpush1.msra.mxu0 0.0
  %1073 = vmatprep.subr.mxu0 0.0
  %1074 = vmatpush1.msra.mxu0 0.0
  %1075 = vmatprep.subr.mxu0 0.0
  %1076 = vmatpush1.msra.mxu0 0.0
  %1077 = vmatprep.subr.mxu0 0.0
  %1078 = vmatpush1.msra.mxu0 0.0
  %1079 = vmatprep.subr.mxu0 0.0
  %1080 = vmatpush1.msra.mxu0 0.0
  %1081 = vmatprep.subr.mxu0 0.0
  %1082 = vmatpush1.msra.mxu0 0.0
  %1083 = vmatprep.subr.mxu0 0.0
  %1084 = vmatpush1.msra.mxu0 0.0
  %1085 = vmatprep.subr.mxu0 0.0
  %1086 = vmatpush1.msra.mxu0 0.0
  %1087 = vmatprep.subr.mxu0 0.0
  %1088 = vmatpush1.msra.mxu0 0.0
  %1089 = vmatprep.subr.mxu0 0.0
  %1090 = vmatpush1.msra.mxu0 0.0
  %1091 = vmatprep.subr.mxu0 0.0
  %1092 = vmatpush1.msra.mxu0 0.0
  %1093 = vmatprep.subr.mxu0 0.0
  %1094 = vmatpush1.msra.mxu0 0.0
  %1095 = vmatprep.mubr.f32.mxu0 0.0
  %1096 = vmatmul.mubr.f32.gmra.mrb[0].mxu0 %v866
  %v1097 = vpop.f32.mrb[0].mxu0
  %v1098 = vadd.f32 %v317, %v1097
  %v1099 = vpop.f32.mrb[0].mxu0
  %1100 = vmatprep.mubr.f32.mxu0 0.0
  %1101 = vmatmul.mubr.f32.gmra.mrb[0].mxu0 %v869
  %v1102 = vpop.f32.mrb[0].mxu0
  %v1103 = vadd.f32 %v317, %v1102
  %v1104 = vpop.f32.mrb[0].mxu0
  %1105 = vdwg.mxu0
  %1106 = vmatprep.subr.mxu0 0.0
  %1107 = vmatpush1.msra.mxu0 %v271
  %1108 = vmatprep.subr.mxu0 0.0
  %1109 = vmatpush1.msra.mxu0 %v272
  %1110 = vmatprep.subr.mxu0 0.0
  %1111 = vmatpush1.msra.mxu0 %v273
  %1112 = vmatprep.subr.mxu0 0.0
  %1113 = vmatpush1.msra.mxu0 %v274
  %1114 = vmatprep.subr.mxu0 0.0
  %1115 = vmatpush1.msra.mxu0 %v275
  %1116 = vmatprep.subr.mxu0 0.0
  %1117 = vmatpush1.msra.mxu0 %v276
  %1118 = vmatprep.subr.mxu0 0.0
  %1119 = vmatpush1.msra.mxu0 %v277
  %1120 = vmatprep.subr.mxu0 0.0
  %1121 = vmatpush1.msra.mxu0 %v278
  %1122 = vmatprep.subr.mxu0 0.0
  %1123 = vmatpush1.msra.mxu0 0.0
  %1124 = vmatprep.subr.mxu0 0.0
  %1125 = vmatpush1.msra.mxu0 0.0
  %1126 = vmatprep.subr.mxu0 0.0
  %1127 = vmatpush1.msra.mxu0 0.0
  %1128 = vmatprep.subr.mxu0 0.0
  %1129 = vmatpush1.msra.mxu0 0.0
  %1130 = vmatprep.subr.mxu0 0.0
  %1131 = vmatpush1.msra.mxu0 0.0
  %1132 = vmatprep.subr.mxu0 0.0
  %1133 = vmatpush1.msra.mxu0 0.0
  %1134 = vmatprep.subr.mxu0 0.0
  %1135 = vmatpush1.msra.mxu0 0.0
  %1136 = vmatprep.subr.mxu0 0.0
  %1137 = vmatpush1.msra.mxu0 0.0
  %1138 = vmatprep.subr.mxu0 0.0
  %1139 = vmatpush1.msra.mxu0 0.0
  %1140 = vmatprep.subr.mxu0 0.0
  %1141 = vmatpush1.msra.mxu0 0.0
  %1142 = vmatprep.subr.mxu0 0.0
  %1143 = vmatpush1.msra.mxu0 0.0
  %1144 = vmatprep.subr.mxu0 0.0
  %1145 = vmatpush1.msra.mxu0 0.0
  %1146 = vmatprep.subr.mxu0 0.0
  %1147 = vmatpush1.msra.mxu0 0.0
  %1148 = vmatprep.subr.mxu0 0.0
  %1149 = vmatpush1.msra.mxu0 0.0
  %1150 = vmatprep.subr.mxu0 0.0
  %1151 = vmatpush1.msra.mxu0 0.0
  %1152 = vmatprep.subr.mxu0 0.0
  %1153 = vmatpush1.msra.mxu0 0.0
  %1154 = vmatprep.subr.mxu0 0.0
  %1155 = vmatpush1.msra.mxu0 0.0
  %1156 = vmatprep.subr.mxu0 0.0
  %1157 = vmatpush1.msra.mxu0 0.0
  %1158 = vmatprep.subr.mxu0 0.0
  %1159 = vmatpush1.msra.mxu0 0.0
  %1160 = vmatprep.subr.mxu0 0.0
  %1161 = vmatpush1.msra.mxu0 0.0
  %1162 = vmatprep.subr.mxu0 0.0
  %1163 = vmatpush1.msra.mxu0 0.0
  %1164 = vmatprep.subr.mxu0 0.0
  %1165 = vmatpush1.msra.mxu0 0.0
  %1166 = vmatprep.subr.mxu0 0.0
  %1167 = vmatpush1.msra.mxu0 0.0
  %1168 = vmatprep.subr.mxu0 0.0
  %1169 = vmatpush1.msra.mxu0 0.0
  %1170 = vmatprep.mubr.f32.mxu0 0.0
  %1171 = vmatmul.mubr.f32.gmra.mrb[0].mxu0 %v866
  %v1172 = vpop.f32.mrb[0].mxu0
  %v1173 = vadd.f32 0.0, %v1172
  %v1174 = vpop.f32.mrb[0].mxu0
  %1175 = vmatprep.mubr.f32.mxu0 0.0
  %1176 = vmatmul.mubr.f32.gmra.mrb[0].mxu0 %v869
  %v1177 = vpop.f32.mrb[0].mxu0
  %v1178 = vadd.f32 0.0, %v1177
  %v1179 = vpop.f32.mrb[0].mxu0
  %1180 = vdwg.mxu0
  %1181 = vmatprep.subr.mxu0 0.0
  %1182 = vmatpush1.msra.mxu0 %v95
  %1183 = vmatprep.subr.mxu0 0.0
  %1184 = vmatpush1.msra.mxu0 %v96
  %1185 = vmatprep.subr.mxu0 0.0
  %1186 = vmatpush1.msra.mxu0 %v97
  %1187 = vmatprep.subr.mxu0 0.0
  %1188 = vmatpush1.msra.mxu0 %v98
  %1189 = vmatprep.subr.mxu0 0.0
  %1190 = vmatpush1.msra.mxu0 %v99
  %1191 = vmatprep.subr.mxu0 0.0
  %1192 = vmatpush1.msra.mxu0 %v100
  %1193 = vmatprep.subr.mxu0 0.0
  %1194 = vmatpush1.msra.mxu0 %v101
  %1195 = vmatprep.subr.mxu0 0.0
  %1196 = vmatpush1.msra.mxu0 %v102
  %1197 = vmatprep.subr.mxu0 0.0
  %1198 = vmatpush1.msra.mxu0 0.0
  %1199 = vmatprep.subr.mxu0 0.0
  %1200 = vmatpush1.msra.mxu0 0.0
  %1201 = vmatprep.subr.mxu0 0.0
  %1202 = vmatpush1.msra.mxu0 0.0
  %1203 = vmatprep.subr.mxu0 0.0
  %1204 = vmatpush1.msra.mxu0 0.0
  %1205 = vmatprep.subr.mxu0 0.0
  %1206 = vmatpush1.msra.mxu0 0.0
  %1207 = vmatprep.subr.mxu0 0.0
  %1208 = vmatpush1.msra.mxu0 0.0
  %1209 = vmatprep.subr.mxu0 0.0
  %1210 = vmatpush1.msra.mxu0 0.0
  %1211 = vmatprep.subr.mxu0 0.0
  %1212 = vmatpush1.msra.mxu0 0.0
  %1213 = vmatprep.subr.mxu0 0.0
  %1214 = vmatpush1.msra.mxu0 0.0
  %1215 = vmatprep.subr.mxu0 0.0
  %1216 = vmatpush1.msra.mxu0 0.0
  %1217 = vmatprep.subr.mxu0 0.0
  %1218 = vmatpush1.msra.mxu0 0.0
  %1219 = vmatprep.subr.mxu0 0.0
  %1220 = vmatpush1.msra.mxu0 0.0
  %1221 = vmatprep.subr.mxu0 0.0
  %1222 = vmatpush1.msra.mxu0 0.0
  %1223 = vmatprep.subr.mxu0 0.0
  %1224 = vmatpush1.msra.mxu0 0.0
  %1225 = vmatprep.subr.mxu0 0.0
  %1226 = vmatpush1.msra.mxu0 0.0
  %1227 = vmatprep.subr.mxu0 0.0
  %1228 = vmatpush1.msra.mxu0 0.0
  %1229 = vmatprep.subr.mxu0 0.0
  %1230 = vmatpush1.msra.mxu0 0.0
  %1231 = vmatprep.subr.mxu0 0.0
  %1232 = vmatpush1.msra.mxu0 0.0
  %1233 = vmatprep.subr.mxu0 0.0
  %1234 = vmatpush1.msra.mxu0 0.0
  %1235 = vmatprep.subr.mxu0 0.0
  %1236 = vmatpush1.msra.mxu0 0.0
  %1237 = vmatprep.subr.mxu0 0.0
  %1238 = vmatpush1.msra.mxu0 0.0
  %1239 = vmatprep.subr.mxu0 0.0
  %1240 = vmatpush1.msra.mxu0 0.0
  %1241 = vmatprep.subr.mxu0 0.0
  %1242 = vmatpush1.msra.mxu0 0.0
  %1243 = vmatprep.subr.mxu0 0.0
  %1244 = vmatpush1.msra.mxu0 0.0
  %1245 = vmatprep.mubr.f32.mxu0 0.0
  %1246 = vmatmul.mubr.f32.gmra.mrb[0].mxu0 %v785
  %v1247 = vpop.f32.mrb[0].mxu0
  %v1248 = vadd.f32 0.0, %v1247
  %v1249 = vpop.f32.mrb[0].mxu0
  %1250 = vmatprep.mubr.f32.mxu0 0.0
  %1251 = vmatmul.mubr.f32.gmra.mrb[0].mxu0 %v788
  %v1252 = vpop.f32.mrb[0].mxu0
  %v1253 = vadd.f32 0.0, %v1252
  %v1254 = vpop.f32.mrb[0].mxu0
  %1255 = vdwg.mxu0
  %v1256 = vadd.f32 %v1173, %v1248
  %v1257 = vadd.f32 %v1178, %v1253
  %1258 = vmatprep.subr.mxu0 0.0
  %1259 = vmatpush1.msra.mxu0 %v111
  %1260 = vmatprep.subr.mxu0 0.0
  %1261 = vmatpush1.msra.mxu0 %v112
  %1262 = vmatprep.subr.mxu0 0.0
  %1263 = vmatpush1.msra.mxu0 %v113
  %1264 = vmatprep.subr.mxu0 0.0
  %1265 = vmatpush1.msra.mxu0 %v114
  %1266 = vmatprep.subr.mxu0 0.0
  %1267 = vmatpush1.msra.mxu0 %v115
  %1268 = vmatprep.subr.mxu0 0.0
  %1269 = vmatpush1.msra.mxu0 %v116
  %1270 = vmatprep.subr.mxu0 0.0
  %1271 = vmatpush1.msra.mxu0 %v117
  %1272 = vmatprep.subr.mxu0 0.0
  %1273 = vmatpush1.msra.mxu0 %v118
  %1274 = vmatprep.subr.mxu0 0.0
  %1275 = vmatpush1.msra.mxu0 0.0
  %1276 = vmatprep.subr.mxu0 0.0
  %1277 = vmatpush1.msra.mxu0 0.0
  %1278 = vmatprep.subr.mxu0 0.0
  %1279 = vmatpush1.msra.mxu0 0.0
  %1280 = vmatprep.subr.mxu0 0.0
  %1281 = vmatpush1.msra.mxu0 0.0
  %1282 = vmatprep.subr.mxu0 0.0
  %1283 = vmatpush1.msra.mxu0 0.0
  %1284 = vmatprep.subr.mxu0 0.0
  %1285 = vmatpush1.msra.mxu0 0.0
  %1286 = vmatprep.subr.mxu0 0.0
  %1287 = vmatpush1.msra.mxu0 0.0
  %1288 = vmatprep.subr.mxu0 0.0
  %1289 = vmatpush1.msra.mxu0 0.0
  %1290 = vmatprep.subr.mxu0 0.0
  %1291 = vmatpush1.msra.mxu0 0.0
  %1292 = vmatprep.subr.mxu0 0.0
  %1293 = vmatpush1.msra.mxu0 0.0
  %1294 = vmatprep.subr.mxu0 0.0
  %1295 = vmatpush1.msra.mxu0 0.0
  %1296 = vmatprep.subr.mxu0 0.0
  %1297 = vmatpush1.msra.mxu0 0.0
  %1298 = vmatprep.subr.mxu0 0.0
  %1299 = vmatpush1.msra.mxu0 0.0
  %1300 = vmatprep.subr.mxu0 0.0
  %1301 = vmatpush1.msra.mxu0 0.0
  %1302 = vmatprep.subr.mxu0 0.0
  %1303 = vmatpush1.msra.mxu0 0.0
  %1304 = vmatprep.subr.mxu0 0.0
  %1305 = vmatpush1.msra.mxu0 0.0
  %1306 = vmatprep.subr.mxu0 0.0
  %1307 = vmatpush1.msra.mxu0 0.0
  %1308 = vmatprep.subr.mxu0 0.0
  %1309 = vmatpush1.msra.mxu0 0.0
  %1310 = vmatprep.subr.mxu0 0.0
  %1311 = vmatpush1.msra.mxu0 0.0
  %1312 = vmatprep.subr.mxu0 0.0
  %1313 = vmatpush1.msra.mxu0 0.0
  %1314 = vmatprep.subr.mxu0 0.0
  %1315 = vmatpush1.msra.mxu0 0.0
  %1316 = vmatprep.subr.mxu0 0.0
  %1317 = vmatpush1.msra.mxu0 0.0
  %1318 = vmatprep.subr.mxu0 0.0
  %1319 = vmatpush1.msra.mxu0 0.0
  %1320 = vmatprep.subr.mxu0 0.0
  %1321 = vmatpush1.msra.mxu0 0.0
  %1322 = vmatprep.mubr.f32.mxu0 0.0
  %1323 = vmatmul.mubr.f32.gmra.mrb[0].mxu0 %v947
  %v1324 = vpop.f32.mrb[0].mxu0
  %v1325 = vadd.f32 0.0, %v1324
  %v1326 = vpop.f32.mrb[0].mxu0
  %1327 = vmatprep.mubr.f32.mxu0 0.0
  %1328 = vmatmul.mubr.f32.gmra.mrb[0].mxu0 %v950
  %v1329 = vpop.f32.mrb[0].mxu0
  %v1330 = vadd.f32 0.0, %v1329
  %v1331 = vpop.f32.mrb[0].mxu0
  %1332 = vdwg.mxu0
  %v1333 = vadd.f32 %v1256, %v1325
  %v1334 = vadd.f32 %v1257, %v1330
  %v1335 = vadd.f32 %v1333, %v1029
  %v1336 = vadd.f32 %v1334, %v1030
  %v1337 = vmax.f32 %v1335, 0.0
  %v1338 = vmax.f32 %v1336, 0.0
  %v1340 = vsel %vm402, %v1337, 0
  %v1343 = vsel %vm402, %v1338, 0
  %1345 = vmatprep.subr.mxu0 0.0
  %1346 = vmatpush1.msra.mxu0 %v127
  %1347 = vmatprep.subr.mxu0 0.0
  %1348 = vmatpush1.msra.mxu0 %v128
  %1349 = vmatprep.subr.mxu0 0.0
  %1350 = vmatpush1.msra.mxu0 %v129
  %1351 = vmatprep.subr.mxu0 0.0
  %1352 = vmatpush1.msra.mxu0 %v130
  %1353 = vmatprep.subr.mxu0 0.0
  %1354 = vmatpush1.msra.mxu0 %v131
  %1355 = vmatprep.subr.mxu0 0.0
  %1356 = vmatpush1.msra.mxu0 %v132
  %1357 = vmatprep.subr.mxu0 0.0
  %1358 = vmatpush1.msra.mxu0 %v133
  %1359 = vmatprep.subr.mxu0 0.0
  %1360 = vmatpush1.msra.mxu0 %v134
  %1361 = vmatprep.subr.mxu0 0.0
  %1362 = vmatpush1.msra.mxu0 0.0
  %1363 = vmatprep.subr.mxu0 0.0
  %1364 = vmatpush1.msra.mxu0 0.0
  %1365 = vmatprep.subr.mxu0 0.0
  %1366 = vmatpush1.msra.mxu0 0.0
  %1367 = vmatprep.subr.mxu0 0.0
  %1368 = vmatpush1.msra.mxu0 0.0
  %1369 = vmatprep.subr.mxu0 0.0
  %1370 = vmatpush1.msra.mxu0 0.0
  %1371 = vmatprep.subr.mxu0 0.0
  %1372 = vmatpush1.msra.mxu0 0.0
  %1373 = vmatprep.subr.mxu0 0.0
  %1374 = vmatpush1.msra.mxu0 0.0
  %1375 = vmatprep.subr.mxu0 0.0
  %1376 = vmatpush1.msra.mxu0 0.0
  %1377 = vmatprep.subr.mxu0 0.0
  %1378 = vmatpush1.msra.mxu0 0.0
  %1379 = vmatprep.subr.mxu0 0.0
  %1380 = vmatpush1.msra.mxu0 0.0
  %1381 = vmatprep.subr.mxu0 0.0
  %1382 = vmatpush1.msra.mxu0 0.0
  %1383 = vmatprep.subr.mxu0 0.0
  %1384 = vmatpush1.msra.mxu0 0.0
  %1385 = vmatprep.subr.mxu0 0.0
  %1386 = vmatpush1.msra.mxu0 0.0
  %1387 = vmatprep.subr.mxu0 0.0
  %1388 = vmatpush1.msra.mxu0 0.0
  %1389 = vmatprep.subr.mxu0 0.0
  %1390 = vmatpush1.msra.mxu0 0.0
  %1391 = vmatprep.subr.mxu0 0.0
  %1392 = vmatpush1.msra.mxu0 0.0
  %1393 = vmatprep.subr.mxu0 0.0
  %1394 = vmatpush1.msra.mxu0 0.0
  %1395 = vmatprep.subr.mxu0 0.0
  %1396 = vmatpush1.msra.mxu0 0.0
  %1397 = vmatprep.subr.mxu0 0.0
  %1398 = vmatpush1.msra.mxu0 0.0
  %1399 = vmatprep.subr.mxu0 0.0
  %1400 = vmatpush1.msra.mxu0 0.0
  %1401 = vmatprep.subr.mxu0 0.0
  %1402 = vmatpush1.msra.mxu0 0.0
  %1403 = vmatprep.subr.mxu0 0.0
  %1404 = vmatpush1.msra.mxu0 0.0
  %1405 = vmatprep.subr.mxu0 0.0
  %1406 = vmatpush1.msra.mxu0 0.0
  %1407 = vmatprep.subr.mxu0 0.0
  %1408 = vmatpush1.msra.mxu0 0.0
  %1409 = vmatprep.mubr.f32.mxu0 0.0
  %1410 = vmatmul.mubr.f32.gmra.mrb[0].mxu0 %v1340
  %v1411 = vpop.f32.mrb[0].mxu0
  %v1412 = vadd.f32 %v316, %v1411
  %v1413 = vpop.f32.mrb[0].mxu0
  %1414 = vmatprep.mubr.f32.mxu0 0.0
  %1415 = vmatmul.mubr.f32.gmra.mrb[0].mxu0 %v1343
  %v1416 = vpop.f32.mrb[0].mxu0
  %v1417 = vadd.f32 %v316, %v1416
  %v1418 = vpop.f32.mrb[0].mxu0
  %1419 = vdwg.mxu0
  %v1420 = vmax.f32 %v1412, 0.0
  %v1421 = vmax.f32 %v1417, 0.0
  %v1423 = vsel %vm402, %v1420, 0
  %v1426 = vsel %vm402, %v1421, 0
  %1428 = vmatprep.subr.mxu0 0.0
  %1429 = vmatpush1.msra.mxu0 %v143
  %1430 = vmatprep.subr.mxu0 0.0
  %1431 = vmatpush1.msra.mxu0 %v144
  %1432 = vmatprep.subr.mxu0 0.0
  %1433 = vmatpush1.msra.mxu0 %v145
  %1434 = vmatprep.subr.mxu0 0.0
  %1435 = vmatpush1.msra.mxu0 %v146
  %1436 = vmatprep.subr.mxu0 0.0
  %1437 = vmatpush1.msra.mxu0 %v147
  %1438 = vmatprep.subr.mxu0 0.0
  %1439 = vmatpush1.msra.mxu0 %v148
  %1440 = vmatprep.subr.mxu0 0.0
  %1441 = vmatpush1.msra.mxu0 %v149
  %1442 = vmatprep.subr.mxu0 0.0
  %1443 = vmatpush1.msra.mxu0 %v150
  %1444 = vmatprep.subr.mxu0 0.0
  %1445 = vmatpush1.msra.mxu0 0.0
  %1446 = vmatprep.subr.mxu0 0.0
  %1447 = vmatpush1.msra.mxu0 0.0
  %1448 = vmatprep.subr.mxu0 0.0
  %1449 = vmatpush1.msra.mxu0 0.0
  %1450 = vmatprep.subr.mxu0 0.0
  %1451 = vmatpush1.msra.mxu0 0.0
  %1452 = vmatprep.subr.mxu0 0.0
  %1453 = vmatpush1.msra.mxu0 0.0
  %1454 = vmatprep.subr.mxu0 0.0
  %1455 = vmatpush1.msra.mxu0 0.0
  %1456 = vmatprep.subr.mxu0 0.0
  %1457 = vmatpush1.msra.mxu0 0.0
  %1458 = vmatprep.subr.mxu0 0.0
  %1459 = vmatpush1.msra.mxu0 0.0
  %1460 = vmatprep.subr.mxu0 0.0
  %1461 = vmatpush1.msra.mxu0 0.0
  %1462 = vmatprep.subr.mxu0 0.0
  %1463 = vmatpush1.msra.mxu0 0.0
  %1464 = vmatprep.subr.mxu0 0.0
  %1465 = vmatpush1.msra.mxu0 0.0
  %1466 = vmatprep.subr.mxu0 0.0
  %1467 = vmatpush1.msra.mxu0 0.0
  %1468 = vmatprep.subr.mxu0 0.0
  %1469 = vmatpush1.msra.mxu0 0.0
  %1470 = vmatprep.subr.mxu0 0.0
  %1471 = vmatpush1.msra.mxu0 0.0
  %1472 = vmatprep.subr.mxu0 0.0
  %1473 = vmatpush1.msra.mxu0 0.0
  %1474 = vmatprep.subr.mxu0 0.0
  %1475 = vmatpush1.msra.mxu0 0.0
  %1476 = vmatprep.subr.mxu0 0.0
  %1477 = vmatpush1.msra.mxu0 0.0
  %1478 = vmatprep.subr.mxu0 0.0
  %1479 = vmatpush1.msra.mxu0 0.0
  %1480 = vmatprep.subr.mxu0 0.0
  %1481 = vmatpush1.msra.mxu0 0.0
  %1482 = vmatprep.subr.mxu0 0.0
  %1483 = vmatpush1.msra.mxu0 0.0
  %1484 = vmatprep.subr.mxu0 0.0
  %1485 = vmatpush1.msra.mxu0 0.0
  %1486 = vmatprep.subr.mxu0 0.0
  %1487 = vmatpush1.msra.mxu0 0.0
  %1488 = vmatprep.subr.mxu0 0.0
  %1489 = vmatpush1.msra.mxu0 0.0
  %1490 = vmatprep.subr.mxu0 0.0
  %1491 = vmatpush1.msra.mxu0 0.0
  %1492 = vmatprep.mubr.f32.mxu0 0.0
  %1493 = vmatmul.mubr.f32.gmra.mrb[0].mxu0 %v1423
  %v1494 = vpop.f32.mrb[0].mxu0
  %v1495 = vadd.f32 0.0, %v1494
  %v1496 = vpop.f32.mrb[0].mxu0
  %1497 = vmatprep.mubr.f32.mxu0 0.0
  %1498 = vmatmul.mubr.f32.gmra.mrb[0].mxu0 %v1426
  %v1499 = vpop.f32.mrb[0].mxu0
  %v1500 = vadd.f32 0.0, %v1499
  %v1501 = vpop.f32.mrb[0].mxu0
  %1502 = vdwg.mxu0
  %1505 = vrot.lane.b32.xlu0 %v1495, 64
  %v1506 = vpop.permute.xlu0 %1505
  %1507 = vrot.lane.b32.xlu0 %v1500, 64
  %v1508 = vpop.permute.xlu0 %1507
  %v1511 = vadd.f32 %v1173, %v1506
  %v1512 = vadd.f32 %v1178, %v1508
  %1515 = vrot.lane.b32.xlu0 %v1098, 64
  %v1516 = vpop.permute.xlu0 %1515
  %1517 = vrot.lane.b32.xlu0 %v1103, 64
  %v1518 = vpop.permute.xlu0 %1517
  %v1521 = vadd.f32 %v1511, %v1516
  %v1522 = vadd.f32 %v1512, %v1518
  %v1523 = vmax.f32 %v1521, 0.0
  %v1524 = vmax.f32 %v1522, 0.0
  %1527 = vrot.lane.b32.xlu0 %v1523, 64
  %v1528 = vpop.permute.xlu0 %1527
  %1529 = vrot.lane.b32.xlu0 %v1524, 64
  %v1530 = vpop.permute.xlu0 %1529
  %v1531 = vsel %vm402, %v1528, 0
  %v1533 = vsel %vm402, %v1530, 0
  %1535 = vmatprep.subr.mxu0 0.0
  %1536 = vmatpush1.msra.mxu0 %v151
  %1537 = vmatprep.subr.mxu0 0.0
  %1538 = vmatpush1.msra.mxu0 %v152
  %1539 = vmatprep.subr.mxu0 0.0
  %1540 = vmatpush1.msra.mxu0 %v153
  %1541 = vmatprep.subr.mxu0 0.0
  %1542 = vmatpush1.msra.mxu0 %v154
  %1543 = vmatprep.subr.mxu0 0.0
  %1544 = vmatpush1.msra.mxu0 %v155
  %1545 = vmatprep.subr.mxu0 0.0
  %1546 = vmatpush1.msra.mxu0 %v156
  %1547 = vmatprep.subr.mxu0 0.0
  %1548 = vmatpush1.msra.mxu0 %v157
  %1549 = vmatprep.subr.mxu0 0.0
  %1550 = vmatpush1.msra.mxu0 %v158
  %1551 = vmatprep.subr.mxu0 0.0
  %1552 = vmatpush1.msra.mxu0 0.0
  %1553 = vmatprep.subr.mxu0 0.0
  %1554 = vmatpush1.msra.mxu0 0.0
  %1555 = vmatprep.subr.mxu0 0.0
  %1556 = vmatpush1.msra.mxu0 0.0
  %1557 = vmatprep.subr.mxu0 0.0
  %1558 = vmatpush1.msra.mxu0 0.0
  %1559 = vmatprep.subr.mxu0 0.0
  %1560 = vmatpush1.msra.mxu0 0.0
  %1561 = vmatprep.subr.mxu0 0.0
  %1562 = vmatpush1.msra.mxu0 0.0
  %1563 = vmatprep.subr.mxu0 0.0
  %1564 = vmatpush1.msra.mxu0 0.0
  %1565 = vmatprep.subr.mxu0 0.0
  %1566 = vmatpush1.msra.mxu0 0.0
  %1567 = vmatprep.subr.mxu0 0.0
  %1568 = vmatpush1.msra.mxu0 0.0
  %1569 = vmatprep.subr.mxu0 0.0
  %1570 = vmatpush1.msra.mxu0 0.0
  %1571 = vmatprep.subr.mxu0 0.0
  %1572 = vmatpush1.msra.mxu0 0.0
  %1573 = vmatprep.subr.mxu0 0.0
  %1574 = vmatpush1.msra.mxu0 0.0
  %1575 = vmatprep.subr.mxu0 0.0
  %1576 = vmatpush1.msra.mxu0 0.0
  %1577 = vmatprep.subr.mxu0 0.0
  %1578 = vmatpush1.msra.mxu0 0.0
  %1579 = vmatprep.subr.mxu0 0.0
  %1580 = vmatpush1.msra.mxu0 0.0
  %1581 = vmatprep.subr.mxu0 0.0
  %1582 = vmatpush1.msra.mxu0 0.0
  %1583 = vmatprep.subr.mxu0 0.0
  %1584 = vmatpush1.msra.mxu0 0.0
  %1585 = vmatprep.subr.mxu0 0.0
  %1586 = vmatpush1.msra.mxu0 0.0
  %1587 = vmatprep.subr.mxu0 0.0
  %1588 = vmatpush1.msra.mxu0 0.0
  %1589 = vmatprep.subr.mxu0 0.0
  %1590 = vmatpush1.msra.mxu0 0.0
  %1591 = vmatprep.subr.mxu0 0.0
  %1592 = vmatpush1.msra.mxu0 0.0
  %1593 = vmatprep.subr.mxu0 0.0
  %1594 = vmatpush1.msra.mxu0 0.0
  %1595 = vmatprep.subr.mxu0 0.0
  %1596 = vmatpush1.msra.mxu0 0.0
  %1597 = vmatprep.subr.mxu0 0.0
  %1598 = vmatpush1.msra.mxu0 0.0
  %1599 = vmatprep.mubr.f32.mxu0 0.0
  %1600 = vmatmul.mubr.f32.gmra.mrb[0].mxu0 %v1531
  %v1601 = vpop.f32.mrb[0].mxu0
  %v1602 = vadd.f32 %v318, %v1601
  %v1603 = vpop.f32.mrb[0].mxu0
  %1604 = vmatprep.mubr.f32.mxu0 0.0
  %1605 = vmatmul.mubr.f32.gmra.mrb[0].mxu0 %v1533
  %v1606 = vpop.f32.mrb[0].mxu0
  %v1607 = vadd.f32 %v318, %v1606
  %v1608 = vpop.f32.mrb[0].mxu0
  %1609 = vdwg.mxu0
  %v1610 = vmax.f32 %v1602, 0.0
  %v1611 = vmax.f32 %v1607, 0.0
  %v1612 = vpack.c.bf16 %v1611, %v1610
  %1613 = vxpose.xlu0.c.b16.start [1/8] %v723, 128
  %1614 = vxpose.xlu0.c.b16.cont [2/8] 0, 128
  %1615 = vxpose.xlu0.c.b16.cont [3/8] 0, 128
  %1616 = vxpose.xlu0.c.b16.cont [4/8] 0, 128
  %1617 = vxpose.xlu0.c.b16.cont [5/8] 0, 128
  %1618 = vxpose.xlu0.c.b16.cont [6/8] 0, 128
  %1619 = vxpose.xlu0.c.b16.cont [7/8] 0, 128
  %1620 = vxpose.xlu0.c.b16.end [8/8] 0, 128
  %v1621 = vpop.trf.xlu0
  %v1622 = vpop.trf.xlu0
  %v1623 = vpop.trf.xlu0
  %v1624 = vpop.trf.xlu0
  %v1625 = vpop.trf.xlu0
  %v1626 = vpop.trf.xlu0
  %v1627 = vpop.trf.xlu0
  %v1628 = vpop.trf.xlu0
  %vm1629 = vcmask 130048
  %v1631 = vsel %vm1629, %v1621, 0
  %1633 = vmatprep.subr.bf16.mxu0 0
  %1634 = vmatpush1.bf16.msra.mxu0 %v1612
  %1635 = vmatprep.subr.bf16.mxu0 0
  %1636 = vmatpush1.bf16.msra.mxu0 0
  %1637 = vmatprep.subr.bf16.mxu0 0
  %1638 = vmatpush1.bf16.msra.mxu0 0
  %1639 = vmatprep.subr.bf16.mxu0 0
  %1640 = vmatpush1.bf16.msra.mxu0 0
  %1641 = vmatprep.subr.bf16.mxu0 0
  %1642 = vmatpush1.bf16.msra.mxu0 0
  %1643 = vmatprep.subr.bf16.mxu0 0
  %1644 = vmatpush1.bf16.msra.mxu0 0
  %1645 = vmatprep.subr.bf16.mxu0 0
  %1646 = vmatpush1.bf16.msra.mxu0 0
  %1647 = vmatprep.subr.bf16.mxu0 0
  %1648 = vmatpush1.bf16.msra.mxu0 0
  %1649 = vmatprep.subr.bf16.mxu0 0
  %1650 = vmatpush1.bf16.msra.mxu0 0
  %1651 = vmatprep.subr.bf16.mxu0 0
  %1652 = vmatpush1.bf16.msra.mxu0 0
  %1653 = vmatprep.subr.bf16.mxu0 0
  %1654 = vmatpush1.bf16.msra.mxu0 0
  %1655 = vmatprep.subr.bf16.mxu0 0
  %1656 = vmatpush1.bf16.msra.mxu0 0
  %1657 = vmatprep.subr.bf16.mxu0 0
  %1658 = vmatpush1.bf16.msra.mxu0 0
  %1659 = vmatprep.subr.bf16.mxu0 0
  %1660 = vmatpush1.bf16.msra.mxu0 0
  %1661 = vmatprep.subr.bf16.mxu0 0
  %1662 = vmatpush1.bf16.msra.mxu0 0
  %1663 = vmatprep.subr.bf16.mxu0 0
  %1664 = vmatpush1.bf16.msra.mxu0 0
  %1665 = vmatprep.mubr.bf16.mxu0 0
  %1666 = vmatmul.mubr.bf16.gmra.mrb[0].mxu0 %v1631
  %v1667 = vpop.f32.mrb[0].mxu0
  %v1668 = vadd.f32 0.0, %v1667
  %v1669 = vpop.f32.mrb[0].mxu0
  %v1670 = vpop.f32.mrb[0].mxu0
  %v1671 = vpop.f32.mrb[0].mxu0
  %1672 = vdwg.mxu0
  %v1674 = vsel %vm402, %v1668, 0
  %1676 = vmatprep.subr.mxu0 0.0
  %1677 = vmatpush1.msra.mxu0 %v175
  %1678 = vmatprep.subr.mxu0 0.0
  %1679 = vmatpush1.msra.mxu0 %v176
  %1680 = vmatprep.subr.mxu0 0.0
  %1681 = vmatpush1.msra.mxu0 %v177
  %1682 = vmatprep.subr.mxu0 0.0
  %1683 = vmatpush1.msra.mxu0 %v178
  %1684 = vmatprep.subr.mxu0 0.0
  %1685 = vmatpush1.msra.mxu0 %v179
  %1686 = vmatprep.subr.mxu0 0.0
  %1687 = vmatpush1.msra.mxu0 %v180
  %1688 = vmatprep.subr.mxu0 0.0
  %1689 = vmatpush1.msra.mxu0 %v181
  %1690 = vmatprep.subr.mxu0 0.0
  %1691 = vmatpush1.msra.mxu0 %v182
  %1692 = vmatprep.subr.mxu0 0.0
  %1693 = vmatpush1.msra.mxu0 0.0
  %1694 = vmatprep.subr.mxu0 0.0
  %1695 = vmatpush1.msra.mxu0 0.0
  %1696 = vmatprep.subr.mxu0 0.0
  %1697 = vmatpush1.msra.mxu0 0.0
  %1698 = vmatprep.subr.mxu0 0.0
  %1699 = vmatpush1.msra.mxu0 0.0
  %1700 = vmatprep.subr.mxu0 0.0
  %1701 = vmatpush1.msra.mxu0 0.0
  %1702 = vmatprep.subr.mxu0 0.0
  %1703 = vmatpush1.msra.mxu0 0.0
  %1704 = vmatprep.subr.mxu0 0.0
  %1705 = vmatpush1.msra.mxu0 0.0
  %1706 = vmatprep.subr.mxu0 0.0
  %1707 = vmatpush1.msra.mxu0 0.0
  %1708 = vmatprep.subr.mxu0 0.0
  %1709 = vmatpush1.msra.mxu0 0.0
  %1710 = vmatprep.subr.mxu0 0.0
  %1711 = vmatpush1.msra.mxu0 0.0
  %1712 = vmatprep.subr.mxu0 0.0
  %1713 = vmatpush1.msra.mxu0 0.0
  %1714 = vmatprep.subr.mxu0 0.0
  %1715 = vmatpush1.msra.mxu0 0.0
  %1716 = vmatprep.subr.mxu0 0.0
  %1717 = vmatpush1.msra.mxu0 0.0
  %1718 = vmatprep.subr.mxu0 0.0
  %1719 = vmatpush1.msra.mxu0 0.0
  %1720 = vmatprep.subr.mxu0 0.0
  %1721 = vmatpush1.msra.mxu0 0.0
  %1722 = vmatprep.subr.mxu0 0.0
  %1723 = vmatpush1.msra.mxu0 0.0
  %1724 = vmatprep.subr.mxu0 0.0
  %1725 = vmatpush1.msra.mxu0 0.0
  %1726 = vmatprep.subr.mxu0 0.0
  %1727 = vmatpush1.msra.mxu0 0.0
  %1728 = vmatprep.subr.mxu0 0.0
  %1729 = vmatpush1.msra.mxu0 0.0
  %1730 = vmatprep.subr.mxu0 0.0
  %1731 = vmatpush1.msra.mxu0 0.0
  %1732 = vmatprep.subr.mxu0 0.0
  %1733 = vmatpush1.msra.mxu0 0.0
  %1734 = vmatprep.subr.mxu0 0.0
  %1735 = vmatpush1.msra.mxu0 0.0
  %1736 = vmatprep.subr.mxu0 0.0
  %1737 = vmatpush1.msra.mxu0 0.0
  %1738 = vmatprep.subr.mxu0 0.0
  %1739 = vmatpush1.msra.mxu0 0.0
  %1740 = vmatprep.mubr.f32.mxu0 0.0
  %1741 = vmatmul.mubr.f32.gmra.mrb[0].mxu0 %v1674
  %v1742 = vpop.f32.mrb[0].mxu0
  %v1743 = vadd.f32 0.0, %v1742
  %v1744 = vpop.f32.mrb[0].mxu0
  %1745 = vdwg.mxu0
  %1746 = vmatprep.subr.mxu0 0.0
  %1747 = vmatpush1.msra.mxu0 %v159
  %1748 = vmatprep.subr.mxu0 0.0
  %1749 = vmatpush1.msra.mxu0 %v160
  %1750 = vmatprep.subr.mxu0 0.0
  %1751 = vmatpush1.msra.mxu0 %v161
  %1752 = vmatprep.subr.mxu0 0.0
  %1753 = vmatpush1.msra.mxu0 %v162
  %1754 = vmatprep.subr.mxu0 0.0
  %1755 = vmatpush1.msra.mxu0 %v163
  %1756 = vmatprep.subr.mxu0 0.0
  %1757 = vmatpush1.msra.mxu0 %v164
  %1758 = vmatprep.subr.mxu0 0.0
  %1759 = vmatpush1.msra.mxu0 %v165
  %1760 = vmatprep.subr.mxu0 0.0
  %1761 = vmatpush1.msra.mxu0 %v166
  %1762 = vmatprep.subr.mxu0 0.0
  %1763 = vmatpush1.msra.mxu0 0.0
  %1764 = vmatprep.subr.mxu0 0.0
  %1765 = vmatpush1.msra.mxu0 0.0
  %1766 = vmatprep.subr.mxu0 0.0
  %1767 = vmatpush1.msra.mxu0 0.0
  %1768 = vmatprep.subr.mxu0 0.0
  %1769 = vmatpush1.msra.mxu0 0.0
  %1770 = vmatprep.subr.mxu0 0.0
  %1771 = vmatpush1.msra.mxu0 0.0
  %1772 = vmatprep.subr.mxu0 0.0
  %1773 = vmatpush1.msra.mxu0 0.0
  %1774 = vmatprep.subr.mxu0 0.0
  %1775 = vmatpush1.msra.mxu0 0.0
  %1776 = vmatprep.subr.mxu0 0.0
  %1777 = vmatpush1.msra.mxu0 0.0
  %1778 = vmatprep.subr.mxu0 0.0
  %1779 = vmatpush1.msra.mxu0 0.0
  %1780 = vmatprep.subr.mxu0 0.0
  %1781 = vmatpush1.msra.mxu0 0.0
  %1782 = vmatprep.subr.mxu0 0.0
  %1783 = vmatpush1.msra.mxu0 0.0
  %1784 = vmatprep.subr.mxu0 0.0
  %1785 = vmatpush1.msra.mxu0 0.0
  %1786 = vmatprep.subr.mxu0 0.0
  %1787 = vmatpush1.msra.mxu0 0.0
  %1788 = vmatprep.subr.mxu0 0.0
  %1789 = vmatpush1.msra.mxu0 0.0
  %1790 = vmatprep.subr.mxu0 0.0
  %1791 = vmatpush1.msra.mxu0 0.0
  %1792 = vmatprep.subr.mxu0 0.0
  %1793 = vmatpush1.msra.mxu0 0.0
  %1794 = vmatprep.subr.mxu0 0.0
  %1795 = vmatpush1.msra.mxu0 0.0
  %1796 = vmatprep.subr.mxu0 0.0
  %1797 = vmatpush1.msra.mxu0 0.0
  %1798 = vmatprep.subr.mxu0 0.0
  %1799 = vmatpush1.msra.mxu0 0.0
  %1800 = vmatprep.subr.mxu0 0.0
  %1801 = vmatpush1.msra.mxu0 0.0
  %1802 = vmatprep.subr.mxu0 0.0
  %1803 = vmatpush1.msra.mxu0 0.0
  %1804 = vmatprep.subr.mxu0 0.0
  %1805 = vmatpush1.msra.mxu0 0.0
  %1806 = vmatprep.subr.mxu0 0.0
  %1807 = vmatpush1.msra.mxu0 0.0
  %1808 = vmatprep.subr.mxu0 0.0
  %1809 = vmatpush1.msra.mxu0 0.0
  %1810 = vmatprep.mubr.f32.mxu0 0.0
  %1811 = vmatmul.mubr.f32.gmra.mrb[0].mxu0 %v646
  %v1812 = vpop.f32.mrb[0].mxu0
  %v1813 = vadd.f32 %v1743, %v1812
  %v1814 = vpop.f32.mrb[0].mxu0
  %1815 = vdwg.mxu0
  %v1816 = vadd.f32 %v1813, %v715
  %v1817 = vmax.f32 %v1816, 0.0
  %v1819 = vsel %vm402, %v1817, 0
  %1821 = vmatprep.subr.mxu0 0.0
  %1822 = vmatpush1.msra.mxu0 %v183
  %1823 = vmatprep.subr.mxu0 0.0
  %1824 = vmatpush1.msra.mxu0 %v184
  %1825 = vmatprep.subr.mxu0 0.0
  %1826 = vmatpush1.msra.mxu0 %v185
  %1827 = vmatprep.subr.mxu0 0.0
  %1828 = vmatpush1.msra.mxu0 %v186
  %1829 = vmatprep.subr.mxu0 0.0
  %1830 = vmatpush1.msra.mxu0 %v187
  %1831 = vmatprep.subr.mxu0 0.0
  %1832 = vmatpush1.msra.mxu0 %v188
  %1833 = vmatprep.subr.mxu0 0.0
  %1834 = vmatpush1.msra.mxu0 %v189
  %1835 = vmatprep.subr.mxu0 0.0
  %1836 = vmatpush1.msra.mxu0 %v190
  %1837 = vmatprep.subr.mxu0 0.0
  %1838 = vmatpush1.msra.mxu0 0.0
  %1839 = vmatprep.subr.mxu0 0.0
  %1840 = vmatpush1.msra.mxu0 0.0
  %1841 = vmatprep.subr.mxu0 0.0
  %1842 = vmatpush1.msra.mxu0 0.0
  %1843 = vmatprep.subr.mxu0 0.0
  %1844 = vmatpush1.msra.mxu0 0.0
  %1845 = vmatprep.subr.mxu0 0.0
  %1846 = vmatpush1.msra.mxu0 0.0
  %1847 = vmatprep.subr.mxu0 0.0
  %1848 = vmatpush1.msra.mxu0 0.0
  %1849 = vmatprep.subr.mxu0 0.0
  %1850 = vmatpush1.msra.mxu0 0.0
  %1851 = vmatprep.subr.mxu0 0.0
  %1852 = vmatpush1.msra.mxu0 0.0
  %1853 = vmatprep.subr.mxu0 0.0
  %1854 = vmatpush1.msra.mxu0 0.0
  %1855 = vmatprep.subr.mxu0 0.0
  %1856 = vmatpush1.msra.mxu0 0.0
  %1857 = vmatprep.subr.mxu0 0.0
  %1858 = vmatpush1.msra.mxu0 0.0
  %1859 = vmatprep.subr.mxu0 0.0
  %1860 = vmatpush1.msra.mxu0 0.0
  %1861 = vmatprep.subr.mxu0 0.0
  %1862 = vmatpush1.msra.mxu0 0.0
  %1863 = vmatprep.subr.mxu0 0.0
  %1864 = vmatpush1.msra.mxu0 0.0
  %1865 = vmatprep.subr.mxu0 0.0
  %1866 = vmatpush1.msra.mxu0 0.0
  %1867 = vmatprep.subr.mxu0 0.0
  %1868 = vmatpush1.msra.mxu0 0.0
  %1869 = vmatprep.subr.mxu0 0.0
  %1870 = vmatpush1.msra.mxu0 0.0
  %1871 = vmatprep.subr.mxu0 0.0
  %1872 = vmatpush1.msra.mxu0 0.0
  %1873 = vmatprep.subr.mxu0 0.0
  %1874 = vmatpush1.msra.mxu0 0.0
  %1875 = vmatprep.subr.mxu0 0.0
  %1876 = vmatpush1.msra.mxu0 0.0
  %1877 = vmatprep.subr.mxu0 0.0
  %1878 = vmatpush1.msra.mxu0 0.0
  %1879 = vmatprep.subr.mxu0 0.0
  %1880 = vmatpush1.msra.mxu0 0.0
  %1881 = vmatprep.subr.mxu0 0.0
  %1882 = vmatpush1.msra.mxu0 0.0
  %1883 = vmatprep.subr.mxu0 0.0
  %1884 = vmatpush1.msra.mxu0 0.0
  %1885 = vmatprep.mubr.f32.mxu0 0.0
  %1886 = vmatmul.mubr.f32.gmra.mrb[0].mxu0 %v1819
  %v1887 = vpop.f32.mrb[0].mxu0
  %v1888 = vadd.f32 %v320, %v1887
  %v1889 = vpop.f32.mrb[0].mxu0
  %1890 = vdwg.mxu0
  %v1891 = vmax.f32 %v1888, 0.0
  %v1892 = vpack.c.bf16 %v1891, %v1891
  %v1894 = vsel %vm731, %v1892, 0
  %1896 = vmatprep.subr.bf16.mxu0 0
  %1897 = vmatpush1.bf16.msra.mxu0 %v1894
  %1898 = vmatprep.subr.bf16.mxu0 0
  %1899 = vmatpush1.bf16.msra.mxu0 0
  %1900 = vmatprep.subr.bf16.mxu0 0
  %1901 = vmatpush1.bf16.msra.mxu0 0
  %1902 = vmatprep.subr.bf16.mxu0 0
  %1903 = vmatpush1.bf16.msra.mxu0 0
  %1904 = vmatprep.subr.bf16.mxu0 0
  %1905 = vmatpush1.bf16.msra.mxu0 0
  %1906 = vmatprep.subr.bf16.mxu0 0
  %1907 = vmatpush1.bf16.msra.mxu0 0
  %1908 = vmatprep.subr.bf16.mxu0 0
  %1909 = vmatpush1.bf16.msra.mxu0 0
  %1910 = vmatprep.subr.bf16.mxu0 0
  %1911 = vmatpush1.bf16.msra.mxu0 0
  %1912 = vmatprep.subr.bf16.mxu0 0
  %1913 = vmatpush1.bf16.msra.mxu0 0
  %1914 = vmatprep.subr.bf16.mxu0 0
  %1915 = vmatpush1.bf16.msra.mxu0 0
  %1916 = vmatprep.subr.bf16.mxu0 0
  %1917 = vmatpush1.bf16.msra.mxu0 0
  %1918 = vmatprep.subr.bf16.mxu0 0
  %1919 = vmatpush1.bf16.msra.mxu0 0
  %1920 = vmatprep.subr.bf16.mxu0 0
  %1921 = vmatpush1.bf16.msra.mxu0 0
  %1922 = vmatprep.subr.bf16.mxu0 0
  %1923 = vmatpush1.bf16.msra.mxu0 0
  %1924 = vmatprep.subr.bf16.mxu0 0
  %1925 = vmatpush1.bf16.msra.mxu0 0
  %1926 = vmatprep.subr.bf16.mxu0 0
  %1927 = vmatpush1.bf16.msra.mxu0 0
  %1928 = vmatprep.mubr.bf16.mxu0 0
  %1929 = vmatmul.mubr.bf16.gmra.mrb[0].mxu0 %v726
  %v1930 = vpop.f32.mrb[0].mxu0
  %v1931 = vadd.f32 0.0, %v1930
  %v1932 = vpop.f32.mrb[0].mxu0
  %v1933 = vpop.f32.mrb[0].mxu0
  %v1934 = vadd.f32 0.0, %v1933
  %v1935 = vpop.f32.mrb[0].mxu0
  %1936 = vmatprep.mubr.bf16.mxu0 0
  %1937 = vmatmul.mubr.bf16.gmra.mrb[0].mxu0 %v729
  %v1938 = vpop.f32.mrb[0].mxu0
  %v1939 = vadd.f32 0.0, %v1938
  %v1940 = vpop.f32.mrb[0].mxu0
  %v1941 = vpop.f32.mrb[0].mxu0
  %v1942 = vadd.f32 0.0, %v1941
  %v1943 = vpop.f32.mrb[0].mxu0
  %1944 = vdwg.mxu0
  %v1946 = vsel %vm402, %v1931, 0
  %v1949 = vsel %vm402, %v1934, 0
  %1951 = vmatprep.subr.mxu0 0.0
  %1952 = vmatpush1.msra.mxu0 %v271
  %1953 = vmatprep.subr.mxu0 0.0
  %1954 = vmatpush1.msra.mxu0 %v272
  %1955 = vmatprep.subr.mxu0 0.0
  %1956 = vmatpush1.msra.mxu0 %v273
  %1957 = vmatprep.subr.mxu0 0.0
  %1958 = vmatpush1.msra.mxu0 %v274
  %1959 = vmatprep.subr.mxu0 0.0
  %1960 = vmatpush1.msra.mxu0 %v275
  %1961 = vmatprep.subr.mxu0 0.0
  %1962 = vmatpush1.msra.mxu0 %v276
  %1963 = vmatprep.subr.mxu0 0.0
  %1964 = vmatpush1.msra.mxu0 %v277
  %1965 = vmatprep.subr.mxu0 0.0
  %1966 = vmatpush1.msra.mxu0 %v278
  %1967 = vmatprep.subr.mxu0 0.0
  %1968 = vmatpush1.msra.mxu0 0.0
  %1969 = vmatprep.subr.mxu0 0.0
  %1970 = vmatpush1.msra.mxu0 0.0
  %1971 = vmatprep.subr.mxu0 0.0
  %1972 = vmatpush1.msra.mxu0 0.0
  %1973 = vmatprep.subr.mxu0 0.0
  %1974 = vmatpush1.msra.mxu0 0.0
  %1975 = vmatprep.subr.mxu0 0.0
  %1976 = vmatpush1.msra.mxu0 0.0
  %1977 = vmatprep.subr.mxu0 0.0
  %1978 = vmatpush1.msra.mxu0 0.0
  %1979 = vmatprep.subr.mxu0 0.0
  %1980 = vmatpush1.msra.mxu0 0.0
  %1981 = vmatprep.subr.mxu0 0.0
  %1982 = vmatpush1.msra.mxu0 0.0
  %1983 = vmatprep.subr.mxu0 0.0
  %1984 = vmatpush1.msra.mxu0 0.0
  %1985 = vmatprep.subr.mxu0 0.0
  %1986 = vmatpush1.msra.mxu0 0.0
  %1987 = vmatprep.subr.mxu0 0.0
  %1988 = vmatpush1.msra.mxu0 0.0
  %1989 = vmatprep.subr.mxu0 0.0
  %1990 = vmatpush1.msra.mxu0 0.0
  %1991 = vmatprep.subr.mxu0 0.0
  %1992 = vmatpush1.msra.mxu0 0.0
  %1993 = vmatprep.subr.mxu0 0.0
  %1994 = vmatpush1.msra.mxu0 0.0
  %1995 = vmatprep.subr.mxu0 0.0
  %1996 = vmatpush1.msra.mxu0 0.0
  %1997 = vmatprep.subr.mxu0 0.0
  %1998 = vmatpush1.msra.mxu0 0.0
  %1999 = vmatprep.subr.mxu0 0.0
  %2000 = vmatpush1.msra.mxu0 0.0
  %2001 = vmatprep.subr.mxu0 0.0
  %2002 = vmatpush1.msra.mxu0 0.0
  %2003 = vmatprep.subr.mxu0 0.0
  %2004 = vmatpush1.msra.mxu0 0.0
  %2005 = vmatprep.subr.mxu0 0.0
  %2006 = vmatpush1.msra.mxu0 0.0
  %2007 = vmatprep.subr.mxu0 0.0
  %2008 = vmatpush1.msra.mxu0 0.0
  %2009 = vmatprep.subr.mxu0 0.0
  %2010 = vmatpush1.msra.mxu0 0.0
  %2011 = vmatprep.subr.mxu0 0.0
  %2012 = vmatpush1.msra.mxu0 0.0
  %2013 = vmatprep.subr.mxu0 0.0
  %2014 = vmatpush1.msra.mxu0 0.0
  %2015 = vmatprep.mubr.f32.mxu0 0.0
  %2016 = vmatmul.mubr.f32.gmra.mrb[0].mxu0 %v1946
  %v2017 = vpop.f32.mrb[0].mxu0
  %v2018 = vadd.f32 0.0, %v2017
  %v2019 = vpop.f32.mrb[0].mxu0
  %2020 = vmatprep.mubr.f32.mxu0 0.0
  %2021 = vmatmul.mubr.f32.gmra.mrb[0].mxu0 %v1949
  %v2022 = vpop.f32.mrb[0].mxu0
  %v2023 = vadd.f32 0.0, %v2022
  %v2024 = vpop.f32.mrb[0].mxu0
  %2025 = vdwg.mxu0
  %v2027 = vsel %vm402, %v1939, 0
  %v2030 = vsel %vm402, %v1942, 0
  %2032 = vmatprep.subr.mxu0 0.0
  %2033 = vmatpush1.msra.mxu0 %v95
  %2034 = vmatprep.subr.mxu0 0.0
  %2035 = vmatpush1.msra.mxu0 %v96
  %2036 = vmatprep.subr.mxu0 0.0
  %2037 = vmatpush1.msra.mxu0 %v97
  %2038 = vmatprep.subr.mxu0 0.0
  %2039 = vmatpush1.msra.mxu0 %v98
  %2040 = vmatprep.subr.mxu0 0.0
  %2041 = vmatpush1.msra.mxu0 %v99
  %2042 = vmatprep.subr.mxu0 0.0
  %2043 = vmatpush1.msra.mxu0 %v100
  %2044 = vmatprep.subr.mxu0 0.0
  %2045 = vmatpush1.msra.mxu0 %v101
  %2046 = vmatprep.subr.mxu0 0.0
  %2047 = vmatpush1.msra.mxu0 %v102
  %2048 = vmatprep.subr.mxu0 0.0
  %2049 = vmatpush1.msra.mxu0 0.0
  %2050 = vmatprep.subr.mxu0 0.0
  %2051 = vmatpush1.msra.mxu0 0.0
  %2052 = vmatprep.subr.mxu0 0.0
  %2053 = vmatpush1.msra.mxu0 0.0
  %2054 = vmatprep.subr.mxu0 0.0
  %2055 = vmatpush1.msra.mxu0 0.0
  %2056 = vmatprep.subr.mxu0 0.0
  %2057 = vmatpush1.msra.mxu0 0.0
  %2058 = vmatprep.subr.mxu0 0.0
  %2059 = vmatpush1.msra.mxu0 0.0
  %2060 = vmatprep.subr.mxu0 0.0
  %2061 = vmatpush1.msra.mxu0 0.0
  %2062 = vmatprep.subr.mxu0 0.0
  %2063 = vmatpush1.msra.mxu0 0.0
  %2064 = vmatprep.subr.mxu0 0.0
  %2065 = vmatpush1.msra.mxu0 0.0
  %2066 = vmatprep.subr.mxu0 0.0
  %2067 = vmatpush1.msra.mxu0 0.0
  %2068 = vmatprep.subr.mxu0 0.0
  %2069 = vmatpush1.msra.mxu0 0.0
  %2070 = vmatprep.subr.mxu0 0.0
  %2071 = vmatpush1.msra.mxu0 0.0
  %2072 = vmatprep.subr.mxu0 0.0
  %2073 = vmatpush1.msra.mxu0 0.0
  %2074 = vmatprep.subr.mxu0 0.0
  %2075 = vmatpush1.msra.mxu0 0.0
  %2076 = vmatprep.subr.mxu0 0.0
  %2077 = vmatpush1.msra.mxu0 0.0
  %2078 = vmatprep.subr.mxu0 0.0
  %2079 = vmatpush1.msra.mxu0 0.0
  %2080 = vmatprep.subr.mxu0 0.0
  %2081 = vmatpush1.msra.mxu0 0.0
  %2082 = vmatprep.subr.mxu0 0.0
  %2083 = vmatpush1.msra.mxu0 0.0
  %2084 = vmatprep.subr.mxu0 0.0
  %2085 = vmatpush1.msra.mxu0 0.0
  %2086 = vmatprep.subr.mxu0 0.0
  %2087 = vmatpush1.msra.mxu0 0.0
  %2088 = vmatprep.subr.mxu0 0.0
  %2089 = vmatpush1.msra.mxu0 0.0
  %2090 = vmatprep.subr.mxu0 0.0
  %2091 = vmatpush1.msra.mxu0 0.0
  %2092 = vmatprep.subr.mxu0 0.0
  %2093 = vmatpush1.msra.mxu0 0.0
  %2094 = vmatprep.subr.mxu0 0.0
  %2095 = vmatpush1.msra.mxu0 0.0
  %2096 = vmatprep.mubr.f32.mxu0 0.0
  %2097 = vmatmul.mubr.f32.gmra.mrb[0].mxu0 %v2027
  %v2098 = vpop.f32.mrb[0].mxu0
  %v2099 = vadd.f32 0.0, %v2098
  %v2100 = vpop.f32.mrb[0].mxu0
  %2101 = vmatprep.mubr.f32.mxu0 0.0
  %2102 = vmatmul.mubr.f32.gmra.mrb[0].mxu0 %v2030
  %v2103 = vpop.f32.mrb[0].mxu0
  %v2104 = vadd.f32 0.0, %v2103
  %v2105 = vpop.f32.mrb[0].mxu0
  %2106 = vdwg.mxu0
  %v2107 = vadd.f32 %v2018, %v2099
  %v2108 = vadd.f32 %v2023, %v2104
  %2109 = vmatprep.subr.mxu0 0.0
  %2110 = vmatpush1.msra.mxu0 %v111
  %2111 = vmatprep.subr.mxu0 0.0
  %2112 = vmatpush1.msra.mxu0 %v112
  %2113 = vmatprep.subr.mxu0 0.0
  %2114 = vmatpush1.msra.mxu0 %v113
  %2115 = vmatprep.subr.mxu0 0.0
  %2116 = vmatpush1.msra.mxu0 %v114
  %2117 = vmatprep.subr.mxu0 0.0
  %2118 = vmatpush1.msra.mxu0 %v115
  %2119 = vmatprep.subr.mxu0 0.0
  %2120 = vmatpush1.msra.mxu0 %v116
  %2121 = vmatprep.subr.mxu0 0.0
  %2122 = vmatpush1.msra.mxu0 %v117
  %2123 = vmatprep.subr.mxu0 0.0
  %2124 = vmatpush1.msra.mxu0 %v118
  %2125 = vmatprep.subr.mxu0 0.0
  %2126 = vmatpush1.msra.mxu0 0.0
  %2127 = vmatprep.subr.mxu0 0.0
  %2128 = vmatpush1.msra.mxu0 0.0
  %2129 = vmatprep.subr.mxu0 0.0
  %2130 = vmatpush1.msra.mxu0 0.0
  %2131 = vmatprep.subr.mxu0 0.0
  %2132 = vmatpush1.msra.mxu0 0.0
  %2133 = vmatprep.subr.mxu0 0.0
  %2134 = vmatpush1.msra.mxu0 0.0
  %2135 = vmatprep.subr.mxu0 0.0
  %2136 = vmatpush1.msra.mxu0 0.0
  %2137 = vmatprep.subr.mxu0 0.0
  %2138 = vmatpush1.msra.mxu0 0.0
  %2139 = vmatprep.subr.mxu0 0.0
  %2140 = vmatpush1.msra.mxu0 0.0
  %2141 = vmatprep.subr.mxu0 0.0
  %2142 = vmatpush1.msra.mxu0 0.0
  %2143 = vmatprep.subr.mxu0 0.0
  %2144 = vmatpush1.msra.mxu0 0.0
  %2145 = vmatprep.subr.mxu0 0.0
  %2146 = vmatpush1.msra.mxu0 0.0
  %2147 = vmatprep.subr.mxu0 0.0
  %2148 = vmatpush1.msra.mxu0 0.0
  %2149 = vmatprep.subr.mxu0 0.0
  %2150 = vmatpush1.msra.mxu0 0.0
  %2151 = vmatprep.subr.mxu0 0.0
  %2152 = vmatpush1.msra.mxu0 0.0
  %2153 = vmatprep.subr.mxu0 0.0
  %2154 = vmatpush1.msra.mxu0 0.0
  %2155 = vmatprep.subr.mxu0 0.0
  %2156 = vmatpush1.msra.mxu0 0.0
  %2157 = vmatprep.subr.mxu0 0.0
  %2158 = vmatpush1.msra.mxu0 0.0
  %2159 = vmatprep.subr.mxu0 0.0
  %2160 = vmatpush1.msra.mxu0 0.0
  %2161 = vmatprep.subr.mxu0 0.0
  %2162 = vmatpush1.msra.mxu0 0.0
  %2163 = vmatprep.subr.mxu0 0.0
  %2164 = vmatpush1.msra.mxu0 0.0
  %2165 = vmatprep.subr.mxu0 0.0
  %2166 = vmatpush1.msra.mxu0 0.0
  %2167 = vmatprep.subr.mxu0 0.0
  %2168 = vmatpush1.msra.mxu0 0.0
  %2169 = vmatprep.subr.mxu0 0.0
  %2170 = vmatpush1.msra.mxu0 0.0
  %2171 = vmatprep.subr.mxu0 0.0
  %2172 = vmatpush1.msra.mxu0 0.0
  %2173 = vmatprep.mubr.f32.mxu0 0.0
  %2174 = vmatmul.mubr.f32.gmra.mrb[0].mxu0 %v1423
  %v2175 = vpop.f32.mrb[0].mxu0
  %v2176 = vadd.f32 0.0, %v2175
  %v2177 = vpop.f32.mrb[0].mxu0
  %2178 = vmatprep.mubr.f32.mxu0 0.0
  %2179 = vmatmul.mubr.f32.gmra.mrb[0].mxu0 %v1426
  %v2180 = vpop.f32.mrb[0].mxu0
  %v2181 = vadd.f32 0.0, %v2180
  %v2182 = vpop.f32.mrb[0].mxu0
  %2183 = vdwg.mxu0
  %v2184 = vadd.f32 %v2107, %v2176
  %v2185 = vadd.f32 %v2108, %v2181
  %v2186 = vadd.f32 %v2184, %v1029
  %v2187 = vadd.f32 %v2185, %v1030
  %v2188 = vmax.f32 %v2186, 0.0
  %v2189 = vmax.f32 %v2187, 0.0
  %v2191 = vsel %vm402, %v2188, 0
  %v2194 = vsel %vm402, %v2189, 0
  %2196 = vmatprep.subr.mxu0 0.0
  %2197 = vmatpush1.msra.mxu0 %v127
  %2198 = vmatprep.subr.mxu0 0.0
  %2199 = vmatpush1.msra.mxu0 %v128
  %2200 = vmatprep.subr.mxu0 0.0
  %2201 = vmatpush1.msra.mxu0 %v129
  %2202 = vmatprep.subr.mxu0 0.0
  %2203 = vmatpush1.msra.mxu0 %v130
  %2204 = vmatprep.subr.mxu0 0.0
  %2205 = vmatpush1.msra.mxu0 %v131
  %2206 = vmatprep.subr.mxu0 0.0
  %2207 = vmatpush1.msra.mxu0 %v132
  %2208 = vmatprep.subr.mxu0 0.0
  %2209 = vmatpush1.msra.mxu0 %v133
  %2210 = vmatprep.subr.mxu0 0.0
  %2211 = vmatpush1.msra.mxu0 %v134
  %2212 = vmatprep.subr.mxu0 0.0
  %2213 = vmatpush1.msra.mxu0 0.0
  %2214 = vmatprep.subr.mxu0 0.0
  %2215 = vmatpush1.msra.mxu0 0.0
  %2216 = vmatprep.subr.mxu0 0.0
  %2217 = vmatpush1.msra.mxu0 0.0
  %2218 = vmatprep.subr.mxu0 0.0
  %2219 = vmatpush1.msra.mxu0 0.0
  %2220 = vmatprep.subr.mxu0 0.0
  %2221 = vmatpush1.msra.mxu0 0.0
  %2222 = vmatprep.subr.mxu0 0.0
  %2223 = vmatpush1.msra.mxu0 0.0
  %2224 = vmatprep.subr.mxu0 0.0
  %2225 = vmatpush1.msra.mxu0 0.0
  %2226 = vmatprep.subr.mxu0 0.0
  %2227 = vmatpush1.msra.mxu0 0.0
  %2228 = vmatprep.subr.mxu0 0.0
  %2229 = vmatpush1.msra.mxu0 0.0
  %2230 = vmatprep.subr.mxu0 0.0
  %2231 = vmatpush1.msra.mxu0 0.0
  %2232 = vmatprep.subr.mxu0 0.0
  %2233 = vmatpush1.msra.mxu0 0.0
  %2234 = vmatprep.subr.mxu0 0.0
  %2235 = vmatpush1.msra.mxu0 0.0
  %2236 = vmatprep.subr.mxu0 0.0
  %2237 = vmatpush1.msra.mxu0 0.0
  %2238 = vmatprep.subr.mxu0 0.0
  %2239 = vmatpush1.msra.mxu0 0.0
  %2240 = vmatprep.subr.mxu0 0.0
  %2241 = vmatpush1.msra.mxu0 0.0
  %2242 = vmatprep.subr.mxu0 0.0
  %2243 = vmatpush1.msra.mxu0 0.0
  %2244 = vmatprep.subr.mxu0 0.0
  %2245 = vmatpush1.msra.mxu0 0.0
  %2246 = vmatprep.subr.mxu0 0.0
  %2247 = vmatpush1.msra.mxu0 0.0
  %2248 = vmatprep.subr.mxu0 0.0
  %2249 = vmatpush1.msra.mxu0 0.0
  %2250 = vmatprep.subr.mxu0 0.0
  %2251 = vmatpush1.msra.mxu0 0.0
  %2252 = vmatprep.subr.mxu0 0.0
  %2253 = vmatpush1.msra.mxu0 0.0
  %2254 = vmatprep.subr.mxu0 0.0
  %2255 = vmatpush1.msra.mxu0 0.0
  %2256 = vmatprep.subr.mxu0 0.0
  %2257 = vmatpush1.msra.mxu0 0.0
  %2258 = vmatprep.subr.mxu0 0.0
  %2259 = vmatpush1.msra.mxu0 0.0
  %2260 = vmatprep.mubr.f32.mxu0 0.0
  %2261 = vmatmul.mubr.f32.gmra.mrb[0].mxu0 %v2191
  %v2262 = vpop.f32.mrb[0].mxu0
  %v2263 = vadd.f32 %v316, %v2262
  %v2264 = vpop.f32.mrb[0].mxu0
  %2265 = vmatprep.mubr.f32.mxu0 0.0
  %2266 = vmatmul.mubr.f32.gmra.mrb[0].mxu0 %v2194
  %v2267 = vpop.f32.mrb[0].mxu0
  %v2268 = vadd.f32 %v316, %v2267
  %v2269 = vpop.f32.mrb[0].mxu0
  %2270 = vdwg.mxu0
  %v2271 = vmax.f32 %v2263, 0.0
  %v2272 = vmax.f32 %v2268, 0.0
  %v2274 = vsel %vm402, %v2271, 0
  %v2277 = vsel %vm402, %v2272, 0
  %2279 = vmatprep.subr.mxu0 0.0
  %2280 = vmatpush1.msra.mxu0 %v143
  %2281 = vmatprep.subr.mxu0 0.0
  %2282 = vmatpush1.msra.mxu0 %v144
  %2283 = vmatprep.subr.mxu0 0.0
  %2284 = vmatpush1.msra.mxu0 %v145
  %2285 = vmatprep.subr.mxu0 0.0
  %2286 = vmatpush1.msra.mxu0 %v146
  %2287 = vmatprep.subr.mxu0 0.0
  %2288 = vmatpush1.msra.mxu0 %v147
  %2289 = vmatprep.subr.mxu0 0.0
  %2290 = vmatpush1.msra.mxu0 %v148
  %2291 = vmatprep.subr.mxu0 0.0
  %2292 = vmatpush1.msra.mxu0 %v149
  %2293 = vmatprep.subr.mxu0 0.0
  %2294 = vmatpush1.msra.mxu0 %v150
  %2295 = vmatprep.subr.mxu0 0.0
  %2296 = vmatpush1.msra.mxu0 0.0
  %2297 = vmatprep.subr.mxu0 0.0
  %2298 = vmatpush1.msra.mxu0 0.0
  %2299 = vmatprep.subr.mxu0 0.0
  %2300 = vmatpush1.msra.mxu0 0.0
  %2301 = vmatprep.subr.mxu0 0.0
  %2302 = vmatpush1.msra.mxu0 0.0
  %2303 = vmatprep.subr.mxu0 0.0
  %2304 = vmatpush1.msra.mxu0 0.0
  %2305 = vmatprep.subr.mxu0 0.0
  %2306 = vmatpush1.msra.mxu0 0.0
  %2307 = vmatprep.subr.mxu0 0.0
  %2308 = vmatpush1.msra.mxu0 0.0
  %2309 = vmatprep.subr.mxu0 0.0
  %2310 = vmatpush1.msra.mxu0 0.0
  %2311 = vmatprep.subr.mxu0 0.0
  %2312 = vmatpush1.msra.mxu0 0.0
  %2313 = vmatprep.subr.mxu0 0.0
  %2314 = vmatpush1.msra.mxu0 0.0
  %2315 = vmatprep.subr.mxu0 0.0
  %2316 = vmatpush1.msra.mxu0 0.0
  %2317 = vmatprep.subr.mxu0 0.0
  %2318 = vmatpush1.msra.mxu0 0.0
  %2319 = vmatprep.subr.mxu0 0.0
  %2320 = vmatpush1.msra.mxu0 0.0
  %2321 = vmatprep.subr.mxu0 0.0
  %2322 = vmatpush1.msra.mxu0 0.0
  %2323 = vmatprep.subr.mxu0 0.0
  %2324 = vmatpush1.msra.mxu0 0.0
  %2325 = vmatprep.subr.mxu0 0.0
  %2326 = vmatpush1.msra.mxu0 0.0
  %2327 = vmatprep.subr.mxu0 0.0
  %2328 = vmatpush1.msra.mxu0 0.0
  %2329 = vmatprep.subr.mxu0 0.0
  %2330 = vmatpush1.msra.mxu0 0.0
  %2331 = vmatprep.subr.mxu0 0.0
  %2332 = vmatpush1.msra.mxu0 0.0
  %2333 = vmatprep.subr.mxu0 0.0
  %2334 = vmatpush1.msra.mxu0 0.0
  %2335 = vmatprep.subr.mxu0 0.0
  %2336 = vmatpush1.msra.mxu0 0.0
  %2337 = vmatprep.subr.mxu0 0.0
  %2338 = vmatpush1.msra.mxu0 0.0
  %2339 = vmatprep.subr.mxu0 0.0
  %2340 = vmatpush1.msra.mxu0 0.0
  %2341 = vmatprep.subr.mxu0 0.0
  %2342 = vmatpush1.msra.mxu0 0.0
  %2343 = vmatprep.mubr.f32.mxu0 0.0
  %2344 = vmatmul.mubr.f32.gmra.mrb[0].mxu0 %v2274
  %v2345 = vpop.f32.mrb[0].mxu0
  %v2346 = vadd.f32 0.0, %v2345
  %v2347 = vpop.f32.mrb[0].mxu0
  %2348 = vmatprep.mubr.f32.mxu0 0.0
  %2349 = vmatmul.mubr.f32.gmra.mrb[0].mxu0 %v2277
  %v2350 = vpop.f32.mrb[0].mxu0
  %v2351 = vadd.f32 0.0, %v2350
  %v2352 = vpop.f32.mrb[0].mxu0
  %2353 = vdwg.mxu0
  %2356 = vrot.lane.b32.xlu0 %v2346, 64
  %v2357 = vpop.permute.xlu0 %2356
  %2358 = vrot.lane.b32.xlu0 %v2351, 64
  %v2359 = vpop.permute.xlu0 %2358
  %v2362 = vadd.f32 %v2018, %v2357
  %v2363 = vadd.f32 %v2023, %v2359
  %v2364 = vadd.f32 %v2362, %v1516
  %v2365 = vadd.f32 %v2363, %v1518
  %v2366 = vmax.f32 %v2364, 0.0
  %v2367 = vmax.f32 %v2365, 0.0
  %2370 = vrot.lane.b32.xlu0 %v2366, 64
  %v2371 = vpop.permute.xlu0 %2370
  %2372 = vrot.lane.b32.xlu0 %v2367, 64
  %v2373 = vpop.permute.xlu0 %2372
  %v2374 = vsel %vm402, %v2371, 0
  %v2376 = vsel %vm402, %v2373, 0
  %2378 = vmatprep.subr.mxu0 0.0
  %2379 = vmatpush1.msra.mxu0 %v151
  %2380 = vmatprep.subr.mxu0 0.0
  %2381 = vmatpush1.msra.mxu0 %v152
  %2382 = vmatprep.subr.mxu0 0.0
  %2383 = vmatpush1.msra.mxu0 %v153
  %2384 = vmatprep.subr.mxu0 0.0
  %2385 = vmatpush1.msra.mxu0 %v154
  %2386 = vmatprep.subr.mxu0 0.0
  %2387 = vmatpush1.msra.mxu0 %v155
  %2388 = vmatprep.subr.mxu0 0.0
  %2389 = vmatpush1.msra.mxu0 %v156
  %2390 = vmatprep.subr.mxu0 0.0
  %2391 = vmatpush1.msra.mxu0 %v157
  %2392 = vmatprep.subr.mxu0 0.0
  %2393 = vmatpush1.msra.mxu0 %v158
  %2394 = vmatprep.subr.mxu0 0.0
  %2395 = vmatpush1.msra.mxu0 0.0
  %2396 = vmatprep.subr.mxu0 0.0
  %2397 = vmatpush1.msra.mxu0 0.0
  %2398 = vmatprep.subr.mxu0 0.0
  %2399 = vmatpush1.msra.mxu0 0.0
  %2400 = vmatprep.subr.mxu0 0.0
  %2401 = vmatpush1.msra.mxu0 0.0
  %2402 = vmatprep.subr.mxu0 0.0
  %2403 = vmatpush1.msra.mxu0 0.0
  %2404 = vmatprep.subr.mxu0 0.0
  %2405 = vmatpush1.msra.mxu0 0.0
  %2406 = vmatprep.subr.mxu0 0.0
  %2407 = vmatpush1.msra.mxu0 0.0
  %2408 = vmatprep.subr.mxu0 0.0
  %2409 = vmatpush1.msra.mxu0 0.0
  %2410 = vmatprep.subr.mxu0 0.0
  %2411 = vmatpush1.msra.mxu0 0.0
  %2412 = vmatprep.subr.mxu0 0.0
  %2413 = vmatpush1.msra.mxu0 0.0
  %2414 = vmatprep.subr.mxu0 0.0
  %2415 = vmatpush1.msra.mxu0 0.0
  %2416 = vmatprep.subr.mxu0 0.0
  %2417 = vmatpush1.msra.mxu0 0.0
  %2418 = vmatprep.subr.mxu0 0.0
  %2419 = vmatpush1.msra.mxu0 0.0
  %2420 = vmatprep.subr.mxu0 0.0
  %2421 = vmatpush1.msra.mxu0 0.0
  %2422 = vmatprep.subr.mxu0 0.0
  %2423 = vmatpush1.msra.mxu0 0.0
  %2424 = vmatprep.subr.mxu0 0.0
  %2425 = vmatpush1.msra.mxu0 0.0
  %2426 = vmatprep.subr.mxu0 0.0
  %2427 = vmatpush1.msra.mxu0 0.0
  %2428 = vmatprep.subr.mxu0 0.0
  %2429 = vmatpush1.msra.mxu0 0.0
  %2430 = vmatprep.subr.mxu0 0.0
  %2431 = vmatpush1.msra.mxu0 0.0
  %2432 = vmatprep.subr.mxu0 0.0
  %2433 = vmatpush1.msra.mxu0 0.0
  %2434 = vmatprep.subr.mxu0 0.0
  %2435 = vmatpush1.msra.mxu0 0.0
  %2436 = vmatprep.subr.mxu0 0.0
  %2437 = vmatpush1.msra.mxu0 0.0
  %2438 = vmatprep.subr.mxu0 0.0
  %2439 = vmatpush1.msra.mxu0 0.0
  %2440 = vmatprep.subr.mxu0 0.0
  %2441 = vmatpush1.msra.mxu0 0.0
  %2442 = vmatprep.mubr.f32.mxu0 0.0
  %2443 = vmatmul.mubr.f32.gmra.mrb[0].mxu0 %v2374
  %v2444 = vpop.f32.mrb[0].mxu0
  %v2445 = vadd.f32 %v318, %v2444
  %v2446 = vpop.f32.mrb[0].mxu0
  %2447 = vmatprep.mubr.f32.mxu0 0.0
  %2448 = vmatmul.mubr.f32.gmra.mrb[0].mxu0 %v2376
  %v2449 = vpop.f32.mrb[0].mxu0
  %v2450 = vadd.f32 %v318, %v2449
  %v2451 = vpop.f32.mrb[0].mxu0
  %2452 = vdwg.mxu0
  %v2453 = vmax.f32 %v2445, 0.0
  %v2454 = vmax.f32 %v2450, 0.0
  %v2455 = vpack.c.bf16 %v2454, %v2453
  %2456 = vmatprep.subr.bf16.mxu0 0
  %2457 = vmatpush1.bf16.msra.mxu0 %v2455
  %2458 = vmatprep.subr.bf16.mxu0 0
  %2459 = vmatpush1.bf16.msra.mxu0 0
  %2460 = vmatprep.subr.bf16.mxu0 0
  %2461 = vmatpush1.bf16.msra.mxu0 0
  %2462 = vmatprep.subr.bf16.mxu0 0
  %2463 = vmatpush1.bf16.msra.mxu0 0
  %2464 = vmatprep.subr.bf16.mxu0 0
  %2465 = vmatpush1.bf16.msra.mxu0 0
  %2466 = vmatprep.subr.bf16.mxu0 0
  %2467 = vmatpush1.bf16.msra.mxu0 0
  %2468 = vmatprep.subr.bf16.mxu0 0
  %2469 = vmatpush1.bf16.msra.mxu0 0
  %2470 = vmatprep.subr.bf16.mxu0 0
  %2471 = vmatpush1.bf16.msra.mxu0 0
  %2472 = vmatprep.subr.bf16.mxu0 0
  %2473 = vmatpush1.bf16.msra.mxu0 0
  %2474 = vmatprep.subr.bf16.mxu0 0
  %2475 = vmatpush1.bf16.msra.mxu0 0
  %2476 = vmatprep.subr.bf16.mxu0 0
  %2477 = vmatpush1.bf16.msra.mxu0 0
  %2478 = vmatprep.subr.bf16.mxu0 0
  %2479 = vmatpush1.bf16.msra.mxu0 0
  %2480 = vmatprep.subr.bf16.mxu0 0
  %2481 = vmatpush1.bf16.msra.mxu0 0
  %2482 = vmatprep.subr.bf16.mxu0 0
  %2483 = vmatpush1.bf16.msra.mxu0 0
  %2484 = vmatprep.subr.bf16.mxu0 0
  %2485 = vmatpush1.bf16.msra.mxu0 0
  %2486 = vmatprep.subr.bf16.mxu0 0
  %2487 = vmatpush1.bf16.msra.mxu0 0
  %2488 = vmatprep.mubr.bf16.mxu0 0
  %2489 = vmatmul.mubr.bf16.gmra.mrb[0].mxu0 %v1631
  %v2490 = vpop.f32.mrb[0].mxu0
  %v2491 = vadd.f32 0.0, %v2490
  %v2492 = vpop.f32.mrb[0].mxu0
  %v2493 = vpop.f32.mrb[0].mxu0
  %v2494 = vpop.f32.mrb[0].mxu0
  %2495 = vdwg.mxu0
  %v2497 = vsel %vm402, %v2491, 0
  %2499 = vmatprep.subr.mxu0 0.0
  %2500 = vmatpush1.msra.mxu0 %v175
  %2501 = vmatprep.subr.mxu0 0.0
  %2502 = vmatpush1.msra.mxu0 %v176
  %2503 = vmatprep.subr.mxu0 0.0
  %2504 = vmatpush1.msra.mxu0 %v177
  %2505 = vmatprep.subr.mxu0 0.0
  %2506 = vmatpush1.msra.mxu0 %v178
  %2507 = vmatprep.subr.mxu0 0.0
  %2508 = vmatpush1.msra.mxu0 %v179
  %2509 = vmatprep.subr.mxu0 0.0
  %2510 = vmatpush1.msra.mxu0 %v180
  %2511 = vmatprep.subr.mxu0 0.0
  %2512 = vmatpush1.msra.mxu0 %v181
  %2513 = vmatprep.subr.mxu0 0.0
  %2514 = vmatpush1.msra.mxu0 %v182
  %2515 = vmatprep.subr.mxu0 0.0
  %2516 = vmatpush1.msra.mxu0 0.0
  %2517 = vmatprep.subr.mxu0 0.0
  %2518 = vmatpush1.msra.mxu0 0.0
  %2519 = vmatprep.subr.mxu0 0.0
  %2520 = vmatpush1.msra.mxu0 0.0
  %2521 = vmatprep.subr.mxu0 0.0
  %2522 = vmatpush1.msra.mxu0 0.0
  %2523 = vmatprep.subr.mxu0 0.0
  %2524 = vmatpush1.msra.mxu0 0.0
  %2525 = vmatprep.subr.mxu0 0.0
  %2526 = vmatpush1.msra.mxu0 0.0
  %2527 = vmatprep.subr.mxu0 0.0
  %2528 = vmatpush1.msra.mxu0 0.0
  %2529 = vmatprep.subr.mxu0 0.0
  %2530 = vmatpush1.msra.mxu0 0.0
  %2531 = vmatprep.subr.mxu0 0.0
  %2532 = vmatpush1.msra.mxu0 0.0
  %2533 = vmatprep.subr.mxu0 0.0
  %2534 = vmatpush1.msra.mxu0 0.0
  %2535 = vmatprep.subr.mxu0 0.0
  %2536 = vmatpush1.msra.mxu0 0.0
  %2537 = vmatprep.subr.mxu0 0.0
  %2538 = vmatpush1.msra.mxu0 0.0
  %2539 = vmatprep.subr.mxu0 0.0
  %2540 = vmatpush1.msra.mxu0 0.0
  %2541 = vmatprep.subr.mxu0 0.0
  %2542 = vmatpush1.msra.mxu0 0.0
  %2543 = vmatprep.subr.mxu0 0.0
  %2544 = vmatpush1.msra.mxu0 0.0
  %2545 = vmatprep.subr.mxu0 0.0
  %2546 = vmatpush1.msra.mxu0 0.0
  %2547 = vmatprep.subr.mxu0 0.0
  %2548 = vmatpush1.msra.mxu0 0.0
  %2549 = vmatprep.subr.mxu0 0.0
  %2550 = vmatpush1.msra.mxu0 0.0
  %2551 = vmatprep.subr.mxu0 0.0
  %2552 = vmatpush1.msra.mxu0 0.0
  %2553 = vmatprep.subr.mxu0 0.0
  %2554 = vmatpush1.msra.mxu0 0.0
  %2555 = vmatprep.subr.mxu0 0.0
  %2556 = vmatpush1.msra.mxu0 0.0
  %2557 = vmatprep.subr.mxu0 0.0
  %2558 = vmatpush1.msra.mxu0 0.0
  %2559 = vmatprep.subr.mxu0 0.0
  %2560 = vmatpush1.msra.mxu0 0.0
  %2561 = vmatprep.subr.mxu0 0.0
  %2562 = vmatpush1.msra.mxu0 0.0
  %2563 = vmatprep.mubr.f32.mxu0 0.0
  %2564 = vmatmul.mubr.f32.gmra.mrb[0].mxu0 %v2497
  %v2565 = vpop.f32.mrb[0].mxu0
  %v2566 = vadd.f32 0.0, %v2565
  %v2567 = vpop.f32.mrb[0].mxu0
  %2568 = vdwg.mxu0
  %v2570 = vsel %vm402, %v1891, 0
  %2572 = vmatprep.subr.mxu0 0.0
  %2573 = vmatpush1.msra.mxu0 %v159
  %2574 = vmatprep.subr.mxu0 0.0
  %2575 = vmatpush1.msra.mxu0 %v160
  %2576 = vmatprep.subr.mxu0 0.0
  %2577 = vmatpush1.msra.mxu0 %v161
  %2578 = vmatprep.subr.mxu0 0.0
  %2579 = vmatpush1.msra.mxu0 %v162
  %2580 = vmatprep.subr.mxu0 0.0
  %2581 = vmatpush1.msra.mxu0 %v163
  %2582 = vmatprep.subr.mxu0 0.0
  %2583 = vmatpush1.msra.mxu0 %v164
  %2584 = vmatprep.subr.mxu0 0.0
  %2585 = vmatpush1.msra.mxu0 %v165
  %2586 = vmatprep.subr.mxu0 0.0
  %2587 = vmatpush1.msra.mxu0 %v166
  %2588 = vmatprep.subr.mxu0 0.0
  %2589 = vmatpush1.msra.mxu0 0.0
  %2590 = vmatprep.subr.mxu0 0.0
  %2591 = vmatpush1.msra.mxu0 0.0
  %2592 = vmatprep.subr.mxu0 0.0
  %2593 = vmatpush1.msra.mxu0 0.0
  %2594 = vmatprep.subr.mxu0 0.0
  %2595 = vmatpush1.msra.mxu0 0.0
  %2596 = vmatprep.subr.mxu0 0.0
  %2597 = vmatpush1.msra.mxu0 0.0
  %2598 = vmatprep.subr.mxu0 0.0
  %2599 = vmatpush1.msra.mxu0 0.0
  %2600 = vmatprep.subr.mxu0 0.0
  %2601 = vmatpush1.msra.mxu0 0.0
  %2602 = vmatprep.subr.mxu0 0.0
  %2603 = vmatpush1.msra.mxu0 0.0
  %2604 = vmatprep.subr.mxu0 0.0
  %2605 = vmatpush1.msra.mxu0 0.0
  %2606 = vmatprep.subr.mxu0 0.0
  %2607 = vmatpush1.msra.mxu0 0.0
  %2608 = vmatprep.subr.mxu0 0.0
  %2609 = vmatpush1.msra.mxu0 0.0
  %2610 = vmatprep.subr.mxu0 0.0
  %2611 = vmatpush1.msra.mxu0 0.0
  %2612 = vmatprep.subr.mxu0 0.0
  %2613 = vmatpush1.msra.mxu0 0.0
  %2614 = vmatprep.subr.mxu0 0.0
  %2615 = vmatpush1.msra.mxu0 0.0
  %2616 = vmatprep.subr.mxu0 0.0
  %2617 = vmatpush1.msra.mxu0 0.0
  %2618 = vmatprep.subr.mxu0 0.0
  %2619 = vmatpush1.msra.mxu0 0.0
  %2620 = vmatprep.subr.mxu0 0.0
  %2621 = vmatpush1.msra.mxu0 0.0
  %2622 = vmatprep.subr.mxu0 0.0
  %2623 = vmatpush1.msra.mxu0 0.0
  %2624 = vmatprep.subr.mxu0 0.0
  %2625 = vmatpush1.msra.mxu0 0.0
  %2626 = vmatprep.subr.mxu0 0.0
  %2627 = vmatpush1.msra.mxu0 0.0
  %2628 = vmatprep.subr.mxu0 0.0
  %2629 = vmatpush1.msra.mxu0 0.0
  %2630 = vmatprep.subr.mxu0 0.0
  %2631 = vmatpush1.msra.mxu0 0.0
  %2632 = vmatprep.subr.mxu0 0.0
  %2633 = vmatpush1.msra.mxu0 0.0
  %2634 = vmatprep.subr.mxu0 0.0
  %2635 = vmatpush1.msra.mxu0 0.0
  %2636 = vmatprep.mubr.f32.mxu0 0.0
  %2637 = vmatmul.mubr.f32.gmra.mrb[0].mxu0 %v2570
  %v2638 = vpop.f32.mrb[0].mxu0
  %v2639 = vadd.f32 %v2566, %v2638
  %v2640 = vpop.f32.mrb[0].mxu0
  %2641 = vdwg.mxu0
  %v2642 = vadd.f32 %v2639, %v715
  %v2643 = vmax.f32 %v2642, 0.0
  %v2645 = vsel %vm402, %v2643, 0
  %2647 = vmatprep.subr.mxu0 0.0
  %2648 = vmatpush1.msra.mxu0 %v183
  %2649 = vmatprep.subr.mxu0 0.0
  %2650 = vmatpush1.msra.mxu0 %v184
  %2651 = vmatprep.subr.mxu0 0.0
  %2652 = vmatpush1.msra.mxu0 %v185
  %2653 = vmatprep.subr.mxu0 0.0
  %2654 = vmatpush1.msra.mxu0 %v186
  %2655 = vmatprep.subr.mxu0 0.0
  %2656 = vmatpush1.msra.mxu0 %v187
  %2657 = vmatprep.subr.mxu0 0.0
  %2658 = vmatpush1.msra.mxu0 %v188
  %2659 = vmatprep.subr.mxu0 0.0
  %2660 = vmatpush1.msra.mxu0 %v189
  %2661 = vmatprep.subr.mxu0 0.0
  %2662 = vmatpush1.msra.mxu0 %v190
  %2663 = vmatprep.subr.mxu0 0.0
  %2664 = vmatpush1.msra.mxu0 0.0
  %2665 = vmatprep.subr.mxu0 0.0
  %2666 = vmatpush1.msra.mxu0 0.0
  %2667 = vmatprep.subr.mxu0 0.0
  %2668 = vmatpush1.msra.mxu0 0.0
  %2669 = vmatprep.subr.mxu0 0.0
  %2670 = vmatpush1.msra.mxu0 0.0
  %2671 = vmatprep.subr.mxu0 0.0
  %2672 = vmatpush1.msra.mxu0 0.0
  %2673 = vmatprep.subr.mxu0 0.0
  %2674 = vmatpush1.msra.mxu0 0.0
  %2675 = vmatprep.subr.mxu0 0.0
  %2676 = vmatpush1.msra.mxu0 0.0
  %2677 = vmatprep.subr.mxu0 0.0
  %2678 = vmatpush1.msra.mxu0 0.0
  %2679 = vmatprep.subr.mxu0 0.0
  %2680 = vmatpush1.msra.mxu0 0.0
  %2681 = vmatprep.subr.mxu0 0.0
  %2682 = vmatpush1.msra.mxu0 0.0
  %2683 = vmatprep.subr.mxu0 0.0
  %2684 = vmatpush1.msra.mxu0 0.0
  %2685 = vmatprep.subr.mxu0 0.0
  %2686 = vmatpush1.msra.mxu0 0.0
  %2687 = vmatprep.subr.mxu0 0.0
  %2688 = vmatpush1.msra.mxu0 0.0
  %2689 = vmatprep.subr.mxu0 0.0
  %2690 = vmatpush1.msra.mxu0 0.0
  %2691 = vmatprep.subr.mxu0 0.0
  %2692 = vmatpush1.msra.mxu0 0.0
  %2693 = vmatprep.subr.mxu0 0.0
  %2694 = vmatpush1.msra.mxu0 0.0
  %2695 = vmatprep.subr.mxu0 0.0
  %2696 = vmatpush1.msra.mxu0 0.0
  %2697 = vmatprep.subr.mxu0 0.0
  %2698 = vmatpush1.msra.mxu0 0.0
  %2699 = vmatprep.subr.mxu0 0.0
  %2700 = vmatpush1.msra.mxu0 0.0
  %2701 = vmatprep.subr.mxu0 0.0
  %2702 = vmatpush1.msra.mxu0 0.0
  %2703 = vmatprep.subr.mxu0 0.0
  %2704 = vmatpush1.msra.mxu0 0.0
  %2705 = vmatprep.subr.mxu0 0.0
  %2706 = vmatpush1.msra.mxu0 0.0
  %2707 = vmatprep.subr.mxu0 0.0
  %2708 = vmatpush1.msra.mxu0 0.0
  %2709 = vmatprep.subr.mxu0 0.0
  %2710 = vmatpush1.msra.mxu0 0.0
  %2711 = vmatprep.mubr.f32.mxu0 0.0
  %2712 = vmatmul.mubr.f32.gmra.mrb[0].mxu0 %v2645
  %v2713 = vpop.f32.mrb[0].mxu0
  %v2714 = vadd.f32 %v320, %v2713
  %v2715 = vpop.f32.mrb[0].mxu0
  %2716 = vdwg.mxu0
  %v2717 = vmax.f32 %v2714, 0.0
  %v2718 = vpack.c.bf16 %v2717, %v2717
  %v2720 = vsel %vm731, %v2718, 0
  %2722 = vmatprep.subr.bf16.mxu0 0
  %2723 = vmatpush1.bf16.msra.mxu0 %v2720
  %2724 = vmatprep.subr.bf16.mxu0 0
  %2725 = vmatpush1.bf16.msra.mxu0 0
  %2726 = vmatprep.subr.bf16.mxu0 0
  %2727 = vmatpush1.bf16.msra.mxu0 0
  %2728 = vmatprep.subr.bf16.mxu0 0
  %2729 = vmatpush1.bf16.msra.mxu0 0
  %2730 = vmatprep.subr.bf16.mxu0 0
  %2731 = vmatpush1.bf16.msra.mxu0 0
  %2732 = vmatprep.subr.bf16.mxu0 0
  %2733 = vmatpush1.bf16.msra.mxu0 0
  %2734 = vmatprep.subr.bf16.mxu0 0
  %2735 = vmatpush1.bf16.msra.mxu0 0
  %2736 = vmatprep.subr.bf16.mxu0 0
  %2737 = vmatpush1.bf16.msra.mxu0 0
  %2738 = vmatprep.subr.bf16.mxu0 0
  %2739 = vmatpush1.bf16.msra.mxu0 0
  %2740 = vmatprep.subr.bf16.mxu0 0
  %2741 = vmatpush1.bf16.msra.mxu0 0
  %2742 = vmatprep.subr.bf16.mxu0 0
  %2743 = vmatpush1.bf16.msra.mxu0 0
  %2744 = vmatprep.subr.bf16.mxu0 0
  %2745 = vmatpush1.bf16.msra.mxu0 0
  %2746 = vmatprep.subr.bf16.mxu0 0
  %2747 = vmatpush1.bf16.msra.mxu0 0
  %2748 = vmatprep.subr.bf16.mxu0 0
  %2749 = vmatpush1.bf16.msra.mxu0 0
  %2750 = vmatprep.subr.bf16.mxu0 0
  %2751 = vmatpush1.bf16.msra.mxu0 0
  %2752 = vmatprep.subr.bf16.mxu0 0
  %2753 = vmatpush1.bf16.msra.mxu0 0
  %2754 = vmatprep.mubr.bf16.mxu0 0
  %2755 = vmatmul.mubr.bf16.gmra.mrb[0].mxu0 %v726
  %v2756 = vpop.f32.mrb[0].mxu0
  %v2757 = vadd.f32 0.0, %v2756
  %v2758 = vpop.f32.mrb[0].mxu0
  %v2759 = vpop.f32.mrb[0].mxu0
  %v2760 = vadd.f32 0.0, %v2759
  %v2761 = vpop.f32.mrb[0].mxu0
  %2762 = vmatprep.mubr.bf16.mxu0 0
  %2763 = vmatmul.mubr.bf16.gmra.mrb[0].mxu0 %v729
  %v2764 = vpop.f32.mrb[0].mxu0
  %v2765 = vadd.f32 0.0, %v2764
  %v2766 = vpop.f32.mrb[0].mxu0
  %v2767 = vpop.f32.mrb[0].mxu0
  %v2768 = vadd.f32 0.0, %v2767
  %v2769 = vpop.f32.mrb[0].mxu0
  %2770 = vdwg.mxu0
  %v2772 = vsel %vm402, %v2757, 0
  %v2775 = vsel %vm402, %v2760, 0
  %2777 = vmatprep.subr.mxu0 0.0
  %2778 = vmatpush1.msra.mxu0 %v271
  %2779 = vmatprep.subr.mxu0 0.0
  %2780 = vmatpush1.msra.mxu0 %v272
  %2781 = vmatprep.subr.mxu0 0.0
  %2782 = vmatpush1.msra.mxu0 %v273
  %2783 = vmatprep.subr.mxu0 0.0
  %2784 = vmatpush1.msra.mxu0 %v274
  %2785 = vmatprep.subr.mxu0 0.0
  %2786 = vmatpush1.msra.mxu0 %v275
  %2787 = vmatprep.subr.mxu0 0.0
  %2788 = vmatpush1.msra.mxu0 %v276
  %2789 = vmatprep.subr.mxu0 0.0
  %2790 = vmatpush1.msra.mxu0 %v277
  %2791 = vmatprep.subr.mxu0 0.0
  %2792 = vmatpush1.msra.mxu0 %v278
  %2793 = vmatprep.subr.mxu0 0.0
  %2794 = vmatpush1.msra.mxu0 0.0
  %2795 = vmatprep.subr.mxu0 0.0
  %2796 = vmatpush1.msra.mxu0 0.0
  %2797 = vmatprep.subr.mxu0 0.0
  %2798 = vmatpush1.msra.mxu0 0.0
  %2799 = vmatprep.subr.mxu0 0.0
  %2800 = vmatpush1.msra.mxu0 0.0
  %2801 = vmatprep.subr.mxu0 0.0
  %2802 = vmatpush1.msra.mxu0 0.0
  %2803 = vmatprep.subr.mxu0 0.0
  %2804 = vmatpush1.msra.mxu0 0.0
  %2805 = vmatprep.subr.mxu0 0.0
  %2806 = vmatpush1.msra.mxu0 0.0
  %2807 = vmatprep.subr.mxu0 0.0
  %2808 = vmatpush1.msra.mxu0 0.0
  %2809 = vmatprep.subr.mxu0 0.0
  %2810 = vmatpush1.msra.mxu0 0.0
  %2811 = vmatprep.subr.mxu0 0.0
  %2812 = vmatpush1.msra.mxu0 0.0
  %2813 = vmatprep.subr.mxu0 0.0
  %2814 = vmatpush1.msra.mxu0 0.0
  %2815 = vmatprep.subr.mxu0 0.0
  %2816 = vmatpush1.msra.mxu0 0.0
  %2817 = vmatprep.subr.mxu0 0.0
  %2818 = vmatpush1.msra.mxu0 0.0
  %2819 = vmatprep.subr.mxu0 0.0
  %2820 = vmatpush1.msra.mxu0 0.0
  %2821 = vmatprep.subr.mxu0 0.0
  %2822 = vmatpush1.msra.mxu0 0.0
  %2823 = vmatprep.subr.mxu0 0.0
  %2824 = vmatpush1.msra.mxu0 0.0
  %2825 = vmatprep.subr.mxu0 0.0
  %2826 = vmatpush1.msra.mxu0 0.0
  %2827 = vmatprep.subr.mxu0 0.0
  %2828 = vmatpush1.msra.mxu0 0.0
  %2829 = vmatprep.subr.mxu0 0.0
  %2830 = vmatpush1.msra.mxu0 0.0
  %2831 = vmatprep.subr.mxu0 0.0
  %2832 = vmatpush1.msra.mxu0 0.0
  %2833 = vmatprep.subr.mxu0 0.0
  %2834 = vmatpush1.msra.mxu0 0.0
  %2835 = vmatprep.subr.mxu0 0.0
  %2836 = vmatpush1.msra.mxu0 0.0
  %2837 = vmatprep.subr.mxu0 0.0
  %2838 = vmatpush1.msra.mxu0 0.0
  %2839 = vmatprep.subr.mxu0 0.0
  %2840 = vmatpush1.msra.mxu0 0.0
  %2841 = vmatprep.mubr.f32.mxu0 0.0
  %2842 = vmatmul.mubr.f32.gmra.mrb[0].mxu0 %v2772
  %v2843 = vpop.f32.mrb[0].mxu0
  %v2844 = vadd.f32 0.0, %v2843
  %v2845 = vpop.f32.mrb[0].mxu0
  %2846 = vmatprep.mubr.f32.mxu0 0.0
  %2847 = vmatmul.mubr.f32.gmra.mrb[0].mxu0 %v2775
  %v2848 = vpop.f32.mrb[0].mxu0
  %v2849 = vadd.f32 0.0, %v2848
  %v2850 = vpop.f32.mrb[0].mxu0
  %2851 = vdwg.mxu0
  %v2853 = vsel %vm402, %v2765, 0
  %v2856 = vsel %vm402, %v2768, 0
  %2858 = vmatprep.subr.mxu0 0.0
  %2859 = vmatpush1.msra.mxu0 %v95
  %2860 = vmatprep.subr.mxu0 0.0
  %2861 = vmatpush1.msra.mxu0 %v96
  %2862 = vmatprep.subr.mxu0 0.0
  %2863 = vmatpush1.msra.mxu0 %v97
  %2864 = vmatprep.subr.mxu0 0.0
  %2865 = vmatpush1.msra.mxu0 %v98
  %2866 = vmatprep.subr.mxu0 0.0
  %2867 = vmatpush1.msra.mxu0 %v99
  %2868 = vmatprep.subr.mxu0 0.0
  %2869 = vmatpush1.msra.mxu0 %v100
  %2870 = vmatprep.subr.mxu0 0.0
  %2871 = vmatpush1.msra.mxu0 %v101
  %2872 = vmatprep.subr.mxu0 0.0
  %2873 = vmatpush1.msra.mxu0 %v102
  %2874 = vmatprep.subr.mxu0 0.0
  %2875 = vmatpush1.msra.mxu0 0.0
  %2876 = vmatprep.subr.mxu0 0.0
  %2877 = vmatpush1.msra.mxu0 0.0
  %2878 = vmatprep.subr.mxu0 0.0
  %2879 = vmatpush1.msra.mxu0 0.0
  %2880 = vmatprep.subr.mxu0 0.0
  %2881 = vmatpush1.msra.mxu0 0.0
  %2882 = vmatprep.subr.mxu0 0.0
  %2883 = vmatpush1.msra.mxu0 0.0
  %2884 = vmatprep.subr.mxu0 0.0
  %2885 = vmatpush1.msra.mxu0 0.0
  %2886 = vmatprep.subr.mxu0 0.0
  %2887 = vmatpush1.msra.mxu0 0.0
  %2888 = vmatprep.subr.mxu0 0.0
  %2889 = vmatpush1.msra.mxu0 0.0
  %2890 = vmatprep.subr.mxu0 0.0
  %2891 = vmatpush1.msra.mxu0 0.0
  %2892 = vmatprep.subr.mxu0 0.0
  %2893 = vmatpush1.msra.mxu0 0.0
  %2894 = vmatprep.subr.mxu0 0.0
  %2895 = vmatpush1.msra.mxu0 0.0
  %2896 = vmatprep.subr.mxu0 0.0
  %2897 = vmatpush1.msra.mxu0 0.0
  %2898 = vmatprep.subr.mxu0 0.0
  %2899 = vmatpush1.msra.mxu0 0.0
  %2900 = vmatprep.subr.mxu0 0.0
  %2901 = vmatpush1.msra.mxu0 0.0
  %2902 = vmatprep.subr.mxu0 0.0
  %2903 = vmatpush1.msra.mxu0 0.0
  %2904 = vmatprep.subr.mxu0 0.0
  %2905 = vmatpush1.msra.mxu0 0.0
  %2906 = vmatprep.subr.mxu0 0.0
  %2907 = vmatpush1.msra.mxu0 0.0
  %2908 = vmatprep.subr.mxu0 0.0
  %2909 = vmatpush1.msra.mxu0 0.0
  %2910 = vmatprep.subr.mxu0 0.0
  %2911 = vmatpush1.msra.mxu0 0.0
  %2912 = vmatprep.subr.mxu0 0.0
  %2913 = vmatpush1.msra.mxu0 0.0
  %2914 = vmatprep.subr.mxu0 0.0
  %2915 = vmatpush1.msra.mxu0 0.0
  %2916 = vmatprep.subr.mxu0 0.0
  %2917 = vmatpush1.msra.mxu0 0.0
  %2918 = vmatprep.subr.mxu0 0.0
  %2919 = vmatpush1.msra.mxu0 0.0
  %2920 = vmatprep.subr.mxu0 0.0
  %2921 = vmatpush1.msra.mxu0 0.0
  %2922 = vmatprep.mubr.f32.mxu0 0.0
  %2923 = vmatmul.mubr.f32.gmra.mrb[0].mxu0 %v2853
  %v2924 = vpop.f32.mrb[0].mxu0
  %v2925 = vadd.f32 0.0, %v2924
  %v2926 = vpop.f32.mrb[0].mxu0
  %2927 = vmatprep.mubr.f32.mxu0 0.0
  %2928 = vmatmul.mubr.f32.gmra.mrb[0].mxu0 %v2856
  %v2929 = vpop.f32.mrb[0].mxu0
  %v2930 = vadd.f32 0.0, %v2929
  %v2931 = vpop.f32.mrb[0].mxu0
  %2932 = vdwg.mxu0
  %v2933 = vadd.f32 %v2844, %v2925
  %v2934 = vadd.f32 %v2849, %v2930
  %2935 = vmatprep.subr.mxu0 0.0
  %2936 = vmatpush1.msra.mxu0 %v111
  %2937 = vmatprep.subr.mxu0 0.0
  %2938 = vmatpush1.msra.mxu0 %v112
  %2939 = vmatprep.subr.mxu0 0.0
  %2940 = vmatpush1.msra.mxu0 %v113
  %2941 = vmatprep.subr.mxu0 0.0
  %2942 = vmatpush1.msra.mxu0 %v114
  %2943 = vmatprep.subr.mxu0 0.0
  %2944 = vmatpush1.msra.mxu0 %v115
  %2945 = vmatprep.subr.mxu0 0.0
  %2946 = vmatpush1.msra.mxu0 %v116
  %2947 = vmatprep.subr.mxu0 0.0
  %2948 = vmatpush1.msra.mxu0 %v117
  %2949 = vmatprep.subr.mxu0 0.0
  %2950 = vmatpush1.msra.mxu0 %v118
  %2951 = vmatprep.subr.mxu0 0.0
  %2952 = vmatpush1.msra.mxu0 0.0
  %2953 = vmatprep.subr.mxu0 0.0
  %2954 = vmatpush1.msra.mxu0 0.0
  %2955 = vmatprep.subr.mxu0 0.0
  %2956 = vmatpush1.msra.mxu0 0.0
  %2957 = vmatprep.subr.mxu0 0.0
  %2958 = vmatpush1.msra.mxu0 0.0
  %2959 = vmatprep.subr.mxu0 0.0
  %2960 = vmatpush1.msra.mxu0 0.0
  %2961 = vmatprep.subr.mxu0 0.0
  %2962 = vmatpush1.msra.mxu0 0.0
  %2963 = vmatprep.subr.mxu0 0.0
  %2964 = vmatpush1.msra.mxu0 0.0
  %2965 = vmatprep.subr.mxu0 0.0
  %2966 = vmatpush1.msra.mxu0 0.0
  %2967 = vmatprep.subr.mxu0 0.0
  %2968 = vmatpush1.msra.mxu0 0.0
  %2969 = vmatprep.subr.mxu0 0.0
  %2970 = vmatpush1.msra.mxu0 0.0
  %2971 = vmatprep.subr.mxu0 0.0
  %2972 = vmatpush1.msra.mxu0 0.0
  %2973 = vmatprep.subr.mxu0 0.0
  %2974 = vmatpush1.msra.mxu0 0.0
  %2975 = vmatprep.subr.mxu0 0.0
  %2976 = vmatpush1.msra.mxu0 0.0
  %2977 = vmatprep.subr.mxu0 0.0
  %2978 = vmatpush1.msra.mxu0 0.0
  %2979 = vmatprep.subr.mxu0 0.0
  %2980 = vmatpush1.msra.mxu0 0.0
  %2981 = vmatprep.subr.mxu0 0.0
  %2982 = vmatpush1.msra.mxu0 0.0
  %2983 = vmatprep.subr.mxu0 0.0
  %2984 = vmatpush1.msra.mxu0 0.0
  %2985 = vmatprep.subr.mxu0 0.0
  %2986 = vmatpush1.msra.mxu0 0.0
  %2987 = vmatprep.subr.mxu0 0.0
  %2988 = vmatpush1.msra.mxu0 0.0
  %2989 = vmatprep.subr.mxu0 0.0
  %2990 = vmatpush1.msra.mxu0 0.0
  %2991 = vmatprep.subr.mxu0 0.0
  %2992 = vmatpush1.msra.mxu0 0.0
  %2993 = vmatprep.subr.mxu0 0.0
  %2994 = vmatpush1.msra.mxu0 0.0
  %2995 = vmatprep.subr.mxu0 0.0
  %2996 = vmatpush1.msra.mxu0 0.0
  %2997 = vmatprep.subr.mxu0 0.0
  %2998 = vmatpush1.msra.mxu0 0.0
  %2999 = vmatprep.mubr.f32.mxu0 0.0
  %3000 = vmatmul.mubr.f32.gmra.mrb[0].mxu0 %v2274
  %v3001 = vpop.f32.mrb[0].mxu0
  %v3002 = vadd.f32 0.0, %v3001
  %v3003 = vpop.f32.mrb[0].mxu0
  %3004 = vmatprep.mubr.f32.mxu0 0.0
  %3005 = vmatmul.mubr.f32.gmra.mrb[0].mxu0 %v2277
  %v3006 = vpop.f32.mrb[0].mxu0
  %v3007 = vadd.f32 0.0, %v3006
  %v3008 = vpop.f32.mrb[0].mxu0
  %3009 = vdwg.mxu0
  %v3010 = vadd.f32 %v2933, %v3002
  %v3011 = vadd.f32 %v2934, %v3007
  %v3012 = vadd.f32 %v3010, %v1029
  %v3013 = vadd.f32 %v3011, %v1030
  %v3014 = vmax.f32 %v3012, 0.0
  %v3015 = vmax.f32 %v3013, 0.0
  %v3017 = vsel %vm402, %v3014, 0
  %v3020 = vsel %vm402, %v3015, 0
  %3022 = vmatprep.subr.mxu0 0.0
  %3023 = vmatpush1.msra.mxu0 %v127
  %3024 = vmatprep.subr.mxu0 0.0
  %3025 = vmatpush1.msra.mxu0 %v128
  %3026 = vmatprep.subr.mxu0 0.0
  %3027 = vmatpush1.msra.mxu0 %v129
  %3028 = vmatprep.subr.mxu0 0.0
  %3029 = vmatpush1.msra.mxu0 %v130
  %3030 = vmatprep.subr.mxu0 0.0
  %3031 = vmatpush1.msra.mxu0 %v131
  %3032 = vmatprep.subr.mxu0 0.0
  %3033 = vmatpush1.msra.mxu0 %v132
  %3034 = vmatprep.subr.mxu0 0.0
  %3035 = vmatpush1.msra.mxu0 %v133
  %3036 = vmatprep.subr.mxu0 0.0
  %3037 = vmatpush1.msra.mxu0 %v134
  %3038 = vmatprep.subr.mxu0 0.0
  %3039 = vmatpush1.msra.mxu0 0.0
  %3040 = vmatprep.subr.mxu0 0.0
  %3041 = vmatpush1.msra.mxu0 0.0
  %3042 = vmatprep.subr.mxu0 0.0
  %3043 = vmatpush1.msra.mxu0 0.0
  %3044 = vmatprep.subr.mxu0 0.0
  %3045 = vmatpush1.msra.mxu0 0.0
  %3046 = vmatprep.subr.mxu0 0.0
  %3047 = vmatpush1.msra.mxu0 0.0
  %3048 = vmatprep.subr.mxu0 0.0
  %3049 = vmatpush1.msra.mxu0 0.0
  %3050 = vmatprep.subr.mxu0 0.0
  %3051 = vmatpush1.msra.mxu0 0.0
  %3052 = vmatprep.subr.mxu0 0.0
  %3053 = vmatpush1.msra.mxu0 0.0
  %3054 = vmatprep.subr.mxu0 0.0
  %3055 = vmatpush1.msra.mxu0 0.0
  %3056 = vmatprep.subr.mxu0 0.0
  %3057 = vmatpush1.msra.mxu0 0.0
  %3058 = vmatprep.subr.mxu0 0.0
  %3059 = vmatpush1.msra.mxu0 0.0
  %3060 = vmatprep.subr.mxu0 0.0
  %3061 = vmatpush1.msra.mxu0 0.0
  %3062 = vmatprep.subr.mxu0 0.0
  %3063 = vmatpush1.msra.mxu0 0.0
  %3064 = vmatprep.subr.mxu0 0.0
  %3065 = vmatpush1.msra.mxu0 0.0
  %3066 = vmatprep.subr.mxu0 0.0
  %3067 = vmatpush1.msra.mxu0 0.0
  %3068 = vmatprep.subr.mxu0 0.0
  %3069 = vmatpush1.msra.mxu0 0.0
  %3070 = vmatprep.subr.mxu0 0.0
  %3071 = vmatpush1.msra.mxu0 0.0
  %3072 = vmatprep.subr.mxu0 0.0
  %3073 = vmatpush1.msra.mxu0 0.0
  %3074 = vmatprep.subr.mxu0 0.0
  %3075 = vmatpush1.msra.mxu0 0.0
  %3076 = vmatprep.subr.mxu0 0.0
  %3077 = vmatpush1.msra.mxu0 0.0
  %3078 = vmatprep.subr.mxu0 0.0
  %3079 = vmatpush1.msra.mxu0 0.0
  %3080 = vmatprep.subr.mxu0 0.0
  %3081 = vmatpush1.msra.mxu0 0.0
  %3082 = vmatprep.subr.mxu0 0.0
  %3083 = vmatpush1.msra.mxu0 0.0
  %3084 = vmatprep.subr.mxu0 0.0
  %3085 = vmatpush1.msra.mxu0 0.0
  %3086 = vmatprep.mubr.f32.mxu0 0.0
  %3087 = vmatmul.mubr.f32.gmra.mrb[0].mxu0 %v3017
  %v3088 = vpop.f32.mrb[0].mxu0
  %v3089 = vadd.f32 %v316, %v3088
  %v3090 = vpop.f32.mrb[0].mxu0
  %3091 = vmatprep.mubr.f32.mxu0 0.0
  %3092 = vmatmul.mubr.f32.gmra.mrb[0].mxu0 %v3020
  %v3093 = vpop.f32.mrb[0].mxu0
  %v3094 = vadd.f32 %v316, %v3093
  %v3095 = vpop.f32.mrb[0].mxu0
  %3096 = vdwg.mxu0
  %v3097 = vmax.f32 %v3089, 0.0
  %v3098 = vmax.f32 %v3094, 0.0
  %v3100 = vsel %vm402, %v3097, 0
  %v3103 = vsel %vm402, %v3098, 0
  %3105 = vmatprep.subr.mxu0 0.0
  %3106 = vmatpush1.msra.mxu0 %v143
  %3107 = vmatprep.subr.mxu0 0.0
  %3108 = vmatpush1.msra.mxu0 %v144
  %3109 = vmatprep.subr.mxu0 0.0
  %3110 = vmatpush1.msra.mxu0 %v145
  %3111 = vmatprep.subr.mxu0 0.0
  %3112 = vmatpush1.msra.mxu0 %v146
  %3113 = vmatprep.subr.mxu0 0.0
  %3114 = vmatpush1.msra.mxu0 %v147
  %3115 = vmatprep.subr.mxu0 0.0
  %3116 = vmatpush1.msra.mxu0 %v148
  %3117 = vmatprep.subr.mxu0 0.0
  %3118 = vmatpush1.msra.mxu0 %v149
  %3119 = vmatprep.subr.mxu0 0.0
  %3120 = vmatpush1.msra.mxu0 %v150
  %3121 = vmatprep.subr.mxu0 0.0
  %3122 = vmatpush1.msra.mxu0 0.0
  %3123 = vmatprep.subr.mxu0 0.0
  %3124 = vmatpush1.msra.mxu0 0.0
  %3125 = vmatprep.subr.mxu0 0.0
  %3126 = vmatpush1.msra.mxu0 0.0
  %3127 = vmatprep.subr.mxu0 0.0
  %3128 = vmatpush1.msra.mxu0 0.0
  %3129 = vmatprep.subr.mxu0 0.0
  %3130 = vmatpush1.msra.mxu0 0.0
  %3131 = vmatprep.subr.mxu0 0.0
  %3132 = vmatpush1.msra.mxu0 0.0
  %3133 = vmatprep.subr.mxu0 0.0
  %3134 = vmatpush1.msra.mxu0 0.0
  %3135 = vmatprep.subr.mxu0 0.0
  %3136 = vmatpush1.msra.mxu0 0.0
  %3137 = vmatprep.subr.mxu0 0.0
  %3138 = vmatpush1.msra.mxu0 0.0
  %3139 = vmatprep.subr.mxu0 0.0
  %3140 = vmatpush1.msra.mxu0 0.0
  %3141 = vmatprep.subr.mxu0 0.0
  %3142 = vmatpush1.msra.mxu0 0.0
  %3143 = vmatprep.subr.mxu0 0.0
  %3144 = vmatpush1.msra.mxu0 0.0
  %3145 = vmatprep.subr.mxu0 0.0
  %3146 = vmatpush1.msra.mxu0 0.0
  %3147 = vmatprep.subr.mxu0 0.0
  %3148 = vmatpush1.msra.mxu0 0.0
  %3149 = vmatprep.subr.mxu0 0.0
  %3150 = vmatpush1.msra.mxu0 0.0
  %3151 = vmatprep.subr.mxu0 0.0
  %3152 = vmatpush1.msra.mxu0 0.0
  %3153 = vmatprep.subr.mxu0 0.0
  %3154 = vmatpush1.msra.mxu0 0.0
  %3155 = vmatprep.subr.mxu0 0.0
  %3156 = vmatpush1.msra.mxu0 0.0
  %3157 = vmatprep.subr.mxu0 0.0
  %3158 = vmatpush1.msra.mxu0 0.0
  %3159 = vmatprep.subr.mxu0 0.0
  %3160 = vmatpush1.msra.mxu0 0.0
  %3161 = vmatprep.subr.mxu0 0.0
  %3162 = vmatpush1.msra.mxu0 0.0
  %3163 = vmatprep.subr.mxu0 0.0
  %3164 = vmatpush1.msra.mxu0 0.0
  %3165 = vmatprep.subr.mxu0 0.0
  %3166 = vmatpush1.msra.mxu0 0.0
  %3167 = vmatprep.subr.mxu0 0.0
  %3168 = vmatpush1.msra.mxu0 0.0
  %3169 = vmatprep.mubr.f32.mxu0 0.0
  %3170 = vmatmul.mubr.f32.gmra.mrb[0].mxu0 %v3100
  %v3171 = vpop.f32.mrb[0].mxu0
  %v3172 = vadd.f32 0.0, %v3171
  %v3173 = vpop.f32.mrb[0].mxu0
  %3174 = vmatprep.mubr.f32.mxu0 0.0
  %3175 = vmatmul.mubr.f32.gmra.mrb[0].mxu0 %v3103
  %v3176 = vpop.f32.mrb[0].mxu0
  %v3177 = vadd.f32 0.0, %v3176
  %v3178 = vpop.f32.mrb[0].mxu0
  %3179 = vdwg.mxu0
  %3182 = vrot.lane.b32.xlu0 %v3172, 64
  %v3183 = vpop.permute.xlu0 %3182
  %3184 = vrot.lane.b32.xlu0 %v3177, 64
  %v3185 = vpop.permute.xlu0 %3184
  %v3188 = vadd.f32 %v2844, %v3183
  %v3189 = vadd.f32 %v2849, %v3185
  %v3190 = vadd.f32 %v3188, %v1516
  %v3191 = vadd.f32 %v3189, %v1518
  %v3192 = vmax.f32 %v3190, 0.0
  %v3193 = vmax.f32 %v3191, 0.0
  %3196 = vrot.lane.b32.xlu0 %v3192, 64
  %v3197 = vpop.permute.xlu0 %3196
  %3198 = vrot.lane.b32.xlu0 %v3193, 64
  %v3199 = vpop.permute.xlu0 %3198
  %v3200 = vsel %vm402, %v3197, 0
  %v3202 = vsel %vm402, %v3199, 0
  %3204 = vmatprep.subr.mxu0 0.0
  %3205 = vmatpush1.msra.mxu0 %v151
  %3206 = vmatprep.subr.mxu0 0.0
  %3207 = vmatpush1.msra.mxu0 %v152
  %3208 = vmatprep.subr.mxu0 0.0
  %3209 = vmatpush1.msra.mxu0 %v153
  %3210 = vmatprep.subr.mxu0 0.0
  %3211 = vmatpush1.msra.mxu0 %v154
  %3212 = vmatprep.subr.mxu0 0.0
  %3213 = vmatpush1.msra.mxu0 %v155
  %3214 = vmatprep.subr.mxu0 0.0
  %3215 = vmatpush1.msra.mxu0 %v156
  %3216 = vmatprep.subr.mxu0 0.0
  %3217 = vmatpush1.msra.mxu0 %v157
  %3218 = vmatprep.subr.mxu0 0.0
  %3219 = vmatpush1.msra.mxu0 %v158
  %3220 = vmatprep.subr.mxu0 0.0
  %3221 = vmatpush1.msra.mxu0 0.0
  %3222 = vmatprep.subr.mxu0 0.0
  %3223 = vmatpush1.msra.mxu0 0.0
  %3224 = vmatprep.subr.mxu0 0.0
  %3225 = vmatpush1.msra.mxu0 0.0
  %3226 = vmatprep.subr.mxu0 0.0
  %3227 = vmatpush1.msra.mxu0 0.0
  %3228 = vmatprep.subr.mxu0 0.0
  %3229 = vmatpush1.msra.mxu0 0.0
  %3230 = vmatprep.subr.mxu0 0.0
  %3231 = vmatpush1.msra.mxu0 0.0
  %3232 = vmatprep.subr.mxu0 0.0
  %3233 = vmatpush1.msra.mxu0 0.0
  %3234 = vmatprep.subr.mxu0 0.0
  %3235 = vmatpush1.msra.mxu0 0.0
  %3236 = vmatprep.subr.mxu0 0.0
  %3237 = vmatpush1.msra.mxu0 0.0
  %3238 = vmatprep.subr.mxu0 0.0
  %3239 = vmatpush1.msra.mxu0 0.0
  %3240 = vmatprep.subr.mxu0 0.0
  %3241 = vmatpush1.msra.mxu0 0.0
  %3242 = vmatprep.subr.mxu0 0.0
  %3243 = vmatpush1.msra.mxu0 0.0
  %3244 = vmatprep.subr.mxu0 0.0
  %3245 = vmatpush1.msra.mxu0 0.0
  %3246 = vmatprep.subr.mxu0 0.0
  %3247 = vmatpush1.msra.mxu0 0.0
  %3248 = vmatprep.subr.mxu0 0.0
  %3249 = vmatpush1.msra.mxu0 0.0
  %3250 = vmatprep.subr.mxu0 0.0
  %3251 = vmatpush1.msra.mxu0 0.0
  %3252 = vmatprep.subr.mxu0 0.0
  %3253 = vmatpush1.msra.mxu0 0.0
  %3254 = vmatprep.subr.mxu0 0.0
  %3255 = vmatpush1.msra.mxu0 0.0
  %3256 = vmatprep.subr.mxu0 0.0
  %3257 = vmatpush1.msra.mxu0 0.0
  %3258 = vmatprep.subr.mxu0 0.0
  %3259 = vmatpush1.msra.mxu0 0.0
  %3260 = vmatprep.subr.mxu0 0.0
  %3261 = vmatpush1.msra.mxu0 0.0
  %3262 = vmatprep.subr.mxu0 0.0
  %3263 = vmatpush1.msra.mxu0 0.0
  %3264 = vmatprep.subr.mxu0 0.0
  %3265 = vmatpush1.msra.mxu0 0.0
  %3266 = vmatprep.subr.mxu0 0.0
  %3267 = vmatpush1.msra.mxu0 0.0
  %3268 = vmatprep.mubr.f32.mxu0 0.0
  %3269 = vmatmul.mubr.f32.gmra.mrb[0].mxu0 %v3200
  %v3270 = vpop.f32.mrb[0].mxu0
  %v3271 = vadd.f32 %v318, %v3270
  %v3272 = vpop.f32.mrb[0].mxu0
  %3273 = vmatprep.mubr.f32.mxu0 0.0
  %3274 = vmatmul.mubr.f32.gmra.mrb[0].mxu0 %v3202
  %v3275 = vpop.f32.mrb[0].mxu0
  %v3276 = vadd.f32 %v318, %v3275
  %v3277 = vpop.f32.mrb[0].mxu0
  %3278 = vdwg.mxu0
  %v3279 = vmax.f32 %v3271, 0.0
  %v3280 = vmax.f32 %v3276, 0.0
  %v3281 = vpack.c.bf16 %v3280, %v3279
  %3282 = vmatprep.subr.bf16.mxu0 0
  %3283 = vmatpush1.bf16.msra.mxu0 %v3281
  %3284 = vmatprep.subr.bf16.mxu0 0
  %3285 = vmatpush1.bf16.msra.mxu0 0
  %3286 = vmatprep.subr.bf16.mxu0 0
  %3287 = vmatpush1.bf16.msra.mxu0 0
  %3288 = vmatprep.subr.bf16.mxu0 0
  %3289 = vmatpush1.bf16.msra.mxu0 0
  %3290 = vmatprep.subr.bf16.mxu0 0
  %3291 = vmatpush1.bf16.msra.mxu0 0
  %3292 = vmatprep.subr.bf16.mxu0 0
  %3293 = vmatpush1.bf16.msra.mxu0 0
  %3294 = vmatprep.subr.bf16.mxu0 0
  %3295 = vmatpush1.bf16.msra.mxu0 0
  %3296 = vmatprep.subr.bf16.mxu0 0
  %3297 = vmatpush1.bf16.msra.mxu0 0
  %3298 = vmatprep.subr.bf16.mxu0 0
  %3299 = vmatpush1.bf16.msra.mxu0 0
  %3300 = vmatprep.subr.bf16.mxu0 0
  %3301 = vmatpush1.bf16.msra.mxu0 0
  %3302 = vmatprep.subr.bf16.mxu0 0
  %3303 = vmatpush1.bf16.msra.mxu0 0
  %3304 = vmatprep.subr.bf16.mxu0 0
  %3305 = vmatpush1.bf16.msra.mxu0 0
  %3306 = vmatprep.subr.bf16.mxu0 0
  %3307 = vmatpush1.bf16.msra.mxu0 0
  %3308 = vmatprep.subr.bf16.mxu0 0
  %3309 = vmatpush1.bf16.msra.mxu0 0
  %3310 = vmatprep.subr.bf16.mxu0 0
  %3311 = vmatpush1.bf16.msra.mxu0 0
  %3312 = vmatprep.subr.bf16.mxu0 0
  %3313 = vmatpush1.bf16.msra.mxu0 0
  %3314 = vmatprep.mubr.bf16.mxu0 0
  %3315 = vmatmul.mubr.bf16.gmra.mrb[0].mxu0 %v1631
  %v3316 = vpop.f32.mrb[0].mxu0
  %v3317 = vadd.f32 0.0, %v3316
  %v3318 = vpop.f32.mrb[0].mxu0
  %v3319 = vpop.f32.mrb[0].mxu0
  %v3320 = vpop.f32.mrb[0].mxu0
  %3321 = vdwg.mxu0
  %v3323 = vsel %vm402, %v3317, 0
  %3325 = vmatprep.subr.mxu0 0.0
  %3326 = vmatpush1.msra.mxu0 %v175
  %3327 = vmatprep.subr.mxu0 0.0
  %3328 = vmatpush1.msra.mxu0 %v176
  %3329 = vmatprep.subr.mxu0 0.0
  %3330 = vmatpush1.msra.mxu0 %v177
  %3331 = vmatprep.subr.mxu0 0.0
  %3332 = vmatpush1.msra.mxu0 %v178
  %3333 = vmatprep.subr.mxu0 0.0
  %3334 = vmatpush1.msra.mxu0 %v179
  %3335 = vmatprep.subr.mxu0 0.0
  %3336 = vmatpush1.msra.mxu0 %v180
  %3337 = vmatprep.subr.mxu0 0.0
  %3338 = vmatpush1.msra.mxu0 %v181
  %3339 = vmatprep.subr.mxu0 0.0
  %3340 = vmatpush1.msra.mxu0 %v182
  %3341 = vmatprep.subr.mxu0 0.0
  %3342 = vmatpush1.msra.mxu0 0.0
  %3343 = vmatprep.subr.mxu0 0.0
  %3344 = vmatpush1.msra.mxu0 0.0
  %3345 = vmatprep.subr.mxu0 0.0
  %3346 = vmatpush1.msra.mxu0 0.0
  %3347 = vmatprep.subr.mxu0 0.0
  %3348 = vmatpush1.msra.mxu0 0.0
  %3349 = vmatprep.subr.mxu0 0.0
  %3350 = vmatpush1.msra.mxu0 0.0
  %3351 = vmatprep.subr.mxu0 0.0
  %3352 = vmatpush1.msra.mxu0 0.0
  %3353 = vmatprep.subr.mxu0 0.0
  %3354 = vmatpush1.msra.mxu0 0.0
  %3355 = vmatprep.subr.mxu0 0.0
  %3356 = vmatpush1.msra.mxu0 0.0
  %3357 = vmatprep.subr.mxu0 0.0
  %3358 = vmatpush1.msra.mxu0 0.0
  %3359 = vmatprep.subr.mxu0 0.0
  %3360 = vmatpush1.msra.mxu0 0.0
  %3361 = vmatprep.subr.mxu0 0.0
  %3362 = vmatpush1.msra.mxu0 0.0
  %3363 = vmatprep.subr.mxu0 0.0
  %3364 = vmatpush1.msra.mxu0 0.0
  %3365 = vmatprep.subr.mxu0 0.0
  %3366 = vmatpush1.msra.mxu0 0.0
  %3367 = vmatprep.subr.mxu0 0.0
  %3368 = vmatpush1.msra.mxu0 0.0
  %3369 = vmatprep.subr.mxu0 0.0
  %3370 = vmatpush1.msra.mxu0 0.0
  %3371 = vmatprep.subr.mxu0 0.0
  %3372 = vmatpush1.msra.mxu0 0.0
  %3373 = vmatprep.subr.mxu0 0.0
  %3374 = vmatpush1.msra.mxu0 0.0
  %3375 = vmatprep.subr.mxu0 0.0
  %3376 = vmatpush1.msra.mxu0 0.0
  %3377 = vmatprep.subr.mxu0 0.0
  %3378 = vmatpush1.msra.mxu0 0.0
  %3379 = vmatprep.subr.mxu0 0.0
  %3380 = vmatpush1.msra.mxu0 0.0
  %3381 = vmatprep.subr.mxu0 0.0
  %3382 = vmatpush1.msra.mxu0 0.0
  %3383 = vmatprep.subr.mxu0 0.0
  %3384 = vmatpush1.msra.mxu0 0.0
  %3385 = vmatprep.subr.mxu0 0.0
  %3386 = vmatpush1.msra.mxu0 0.0
  %3387 = vmatprep.subr.mxu0 0.0
  %3388 = vmatpush1.msra.mxu0 0.0
  %3389 = vmatprep.mubr.f32.mxu0 0.0
  %3390 = vmatmul.mubr.f32.gmra.mrb[0].mxu0 %v3323
  %v3391 = vpop.f32.mrb[0].mxu0
  %v3392 = vadd.f32 0.0, %v3391
  %v3393 = vpop.f32.mrb[0].mxu0
  %3394 = vdwg.mxu0
  %v3396 = vsel %vm402, %v2717, 0
  %3398 = vmatprep.subr.mxu0 0.0
  %3399 = vmatpush1.msra.mxu0 %v159
  %3400 = vmatprep.subr.mxu0 0.0
  %3401 = vmatpush1.msra.mxu0 %v160
  %3402 = vmatprep.subr.mxu0 0.0
  %3403 = vmatpush1.msra.mxu0 %v161
  %3404 = vmatprep.subr.mxu0 0.0
  %3405 = vmatpush1.msra.mxu0 %v162
  %3406 = vmatprep.subr.mxu0 0.0
  %3407 = vmatpush1.msra.mxu0 %v163
  %3408 = vmatprep.subr.mxu0 0.0
  %3409 = vmatpush1.msra.mxu0 %v164
  %3410 = vmatprep.subr.mxu0 0.0
  %3411 = vmatpush1.msra.mxu0 %v165
  %3412 = vmatprep.subr.mxu0 0.0
  %3413 = vmatpush1.msra.mxu0 %v166
  %3414 = vmatprep.subr.mxu0 0.0
  %3415 = vmatpush1.msra.mxu0 0.0
  %3416 = vmatprep.subr.mxu0 0.0
  %3417 = vmatpush1.msra.mxu0 0.0
  %3418 = vmatprep.subr.mxu0 0.0
  %3419 = vmatpush1.msra.mxu0 0.0
  %3420 = vmatprep.subr.mxu0 0.0
  %3421 = vmatpush1.msra.mxu0 0.0
  %3422 = vmatprep.subr.mxu0 0.0
  %3423 = vmatpush1.msra.mxu0 0.0
  %3424 = vmatprep.subr.mxu0 0.0
  %3425 = vmatpush1.msra.mxu0 0.0
  %3426 = vmatprep.subr.mxu0 0.0
  %3427 = vmatpush1.msra.mxu0 0.0
  %3428 = vmatprep.subr.mxu0 0.0
  %3429 = vmatpush1.msra.mxu0 0.0
  %3430 = vmatprep.subr.mxu0 0.0
  %3431 = vmatpush1.msra.mxu0 0.0
  %3432 = vmatprep.subr.mxu0 0.0
  %3433 = vmatpush1.msra.mxu0 0.0
  %3434 = vmatprep.subr.mxu0 0.0
  %3435 = vmatpush1.msra.mxu0 0.0
  %3436 = vmatprep.subr.mxu0 0.0
  %3437 = vmatpush1.msra.mxu0 0.0
  %3438 = vmatprep.subr.mxu0 0.0
  %3439 = vmatpush1.msra.mxu0 0.0
  %3440 = vmatprep.subr.mxu0 0.0
  %3441 = vmatpush1.msra.mxu0 0.0
  %3442 = vmatprep.subr.mxu0 0.0
  %3443 = vmatpush1.msra.mxu0 0.0
  %3444 = vmatprep.subr.mxu0 0.0
  %3445 = vmatpush1.msra.mxu0 0.0
  %3446 = vmatprep.subr.mxu0 0.0
  %3447 = vmatpush1.msra.mxu0 0.0
  %3448 = vmatprep.subr.mxu0 0.0
  %3449 = vmatpush1.msra.mxu0 0.0
  %3450 = vmatprep.subr.mxu0 0.0
  %3451 = vmatpush1.msra.mxu0 0.0
  %3452 = vmatprep.subr.mxu0 0.0
  %3453 = vmatpush1.msra.mxu0 0.0
  %3454 = vmatprep.subr.mxu0 0.0
  %3455 = vmatpush1.msra.mxu0 0.0
  %3456 = vmatprep.subr.mxu0 0.0
  %3457 = vmatpush1.msra.mxu0 0.0
  %3458 = vmatprep.subr.mxu0 0.0
  %3459 = vmatpush1.msra.mxu0 0.0
  %3460 = vmatprep.subr.mxu0 0.0
  %3461 = vmatpush1.msra.mxu0 0.0
  %3462 = vmatprep.mubr.f32.mxu0 0.0
  %3463 = vmatmul.mubr.f32.gmra.mrb[0].mxu0 %v3396
  %v3464 = vpop.f32.mrb[0].mxu0
  %v3465 = vadd.f32 %v3392, %v3464
  %v3466 = vpop.f32.mrb[0].mxu0
  %3467 = vdwg.mxu0
  %v3468 = vadd.f32 %v3465, %v715
  %v3469 = vmax.f32 %v3468, 0.0
  %v3471 = vsel %vm402, %v3469, 0
  %3473 = vmatprep.subr.mxu0 0.0
  %3474 = vmatpush1.msra.mxu0 %v183
  %3475 = vmatprep.subr.mxu0 0.0
  %3476 = vmatpush1.msra.mxu0 %v184
  %3477 = vmatprep.subr.mxu0 0.0
  %3478 = vmatpush1.msra.mxu0 %v185
  %3479 = vmatprep.subr.mxu0 0.0
  %3480 = vmatpush1.msra.mxu0 %v186
  %3481 = vmatprep.subr.mxu0 0.0
  %3482 = vmatpush1.msra.mxu0 %v187
  %3483 = vmatprep.subr.mxu0 0.0
  %3484 = vmatpush1.msra.mxu0 %v188
  %3485 = vmatprep.subr.mxu0 0.0
  %3486 = vmatpush1.msra.mxu0 %v189
  %3487 = vmatprep.subr.mxu0 0.0
  %3488 = vmatpush1.msra.mxu0 %v190
  %3489 = vmatprep.subr.mxu0 0.0
  %3490 = vmatpush1.msra.mxu0 0.0
  %3491 = vmatprep.subr.mxu0 0.0
  %3492 = vmatpush1.msra.mxu0 0.0
  %3493 = vmatprep.subr.mxu0 0.0
  %3494 = vmatpush1.msra.mxu0 0.0
  %3495 = vmatprep.subr.mxu0 0.0
  %3496 = vmatpush1.msra.mxu0 0.0
  %3497 = vmatprep.subr.mxu0 0.0
  %3498 = vmatpush1.msra.mxu0 0.0
  %3499 = vmatprep.subr.mxu0 0.0
  %3500 = vmatpush1.msra.mxu0 0.0
  %3501 = vmatprep.subr.mxu0 0.0
  %3502 = vmatpush1.msra.mxu0 0.0
  %3503 = vmatprep.subr.mxu0 0.0
  %3504 = vmatpush1.msra.mxu0 0.0
  %3505 = vmatprep.subr.mxu0 0.0
  %3506 = vmatpush1.msra.mxu0 0.0
  %3507 = vmatprep.subr.mxu0 0.0
  %3508 = vmatpush1.msra.mxu0 0.0
  %3509 = vmatprep.subr.mxu0 0.0
  %3510 = vmatpush1.msra.mxu0 0.0
  %3511 = vmatprep.subr.mxu0 0.0
  %3512 = vmatpush1.msra.mxu0 0.0
  %3513 = vmatprep.subr.mxu0 0.0
  %3514 = vmatpush1.msra.mxu0 0.0
  %3515 = vmatprep.subr.mxu0 0.0
  %3516 = vmatpush1.msra.mxu0 0.0
  %3517 = vmatprep.subr.mxu0 0.0
  %3518 = vmatpush1.msra.mxu0 0.0
  %3519 = vmatprep.subr.mxu0 0.0
  %3520 = vmatpush1.msra.mxu0 0.0
  %3521 = vmatprep.subr.mxu0 0.0
  %3522 = vmatpush1.msra.mxu0 0.0
  %3523 = vmatprep.subr.mxu0 0.0
  %3524 = vmatpush1.msra.mxu0 0.0
  %3525 = vmatprep.subr.mxu0 0.0
  %3526 = vmatpush1.msra.mxu0 0.0
  %3527 = vmatprep.subr.mxu0 0.0
  %3528 = vmatpush1.msra.mxu0 0.0
  %3529 = vmatprep.subr.mxu0 0.0
  %3530 = vmatpush1.msra.mxu0 0.0
  %3531 = vmatprep.subr.mxu0 0.0
  %3532 = vmatpush1.msra.mxu0 0.0
  %3533 = vmatprep.subr.mxu0 0.0
  %3534 = vmatpush1.msra.mxu0 0.0
  %3535 = vmatprep.subr.mxu0 0.0
  %3536 = vmatpush1.msra.mxu0 0.0
  %3537 = vmatprep.mubr.f32.mxu0 0.0
  %3538 = vmatmul.mubr.f32.gmra.mrb[0].mxu0 %v3471
  %v3539 = vpop.f32.mrb[0].mxu0
  %v3540 = vadd.f32 %v320, %v3539
  %v3541 = vpop.f32.mrb[0].mxu0
  %3542 = vdwg.mxu0
  %v3543 = vmax.f32 %v3540, 0.0
  %v3544 = vpack.c.bf16 %v3543, %v3543
  %v3546 = vsel %vm731, %v3544, 0
  %3548 = vmatprep.subr.bf16.mxu0 0
  %3549 = vmatpush1.bf16.msra.mxu0 %v3546
  %3550 = vmatprep.subr.bf16.mxu0 0
  %3551 = vmatpush1.bf16.msra.mxu0 0
  %3552 = vmatprep.subr.bf16.mxu0 0
  %3553 = vmatpush1.bf16.msra.mxu0 0
  %3554 = vmatprep.subr.bf16.mxu0 0
  %3555 = vmatpush1.bf16.msra.mxu0 0
  %3556 = vmatprep.subr.bf16.mxu0 0
  %3557 = vmatpush1.bf16.msra.mxu0 0
  %3558 = vmatprep.subr.bf16.mxu0 0
  %3559 = vmatpush1.bf16.msra.mxu0 0
  %3560 = vmatprep.subr.bf16.mxu0 0
  %3561 = vmatpush1.bf16.msra.mxu0 0
  %3562 = vmatprep.subr.bf16.mxu0 0
  %3563 = vmatpush1.bf16.msra.mxu0 0
  %3564 = vmatprep.subr.bf16.mxu0 0
  %3565 = vmatpush1.bf16.msra.mxu0 0
  %3566 = vmatprep.subr.bf16.mxu0 0
  %3567 = vmatpush1.bf16.msra.mxu0 0
  %3568 = vmatprep.subr.bf16.mxu0 0
  %3569 = vmatpush1.bf16.msra.mxu0 0
  %3570 = vmatprep.subr.bf16.mxu0 0
  %3571 = vmatpush1.bf16.msra.mxu0 0
  %3572 = vmatprep.subr.bf16.mxu0 0
  %3573 = vmatpush1.bf16.msra.mxu0 0
  %3574 = vmatprep.subr.bf16.mxu0 0
  %3575 = vmatpush1.bf16.msra.mxu0 0
  %3576 = vmatprep.subr.bf16.mxu0 0
  %3577 = vmatpush1.bf16.msra.mxu0 0
  %3578 = vmatprep.subr.bf16.mxu0 0
  %3579 = vmatpush1.bf16.msra.mxu0 0
  %3580 = vmatprep.mubr.bf16.mxu0 0
  %3581 = vmatmul.mubr.bf16.gmra.mrb[0].mxu0 %v726
  %v3582 = vpop.f32.mrb[0].mxu0
  %v3583 = vadd.f32 0.0, %v3582
  %v3584 = vpop.f32.mrb[0].mxu0
  %v3585 = vpop.f32.mrb[0].mxu0
  %v3586 = vadd.f32 0.0, %v3585
  %v3587 = vpop.f32.mrb[0].mxu0
  %3588 = vmatprep.mubr.bf16.mxu0 0
  %3589 = vmatmul.mubr.bf16.gmra.mrb[0].mxu0 %v729
  %v3590 = vpop.f32.mrb[0].mxu0
  %v3591 = vadd.f32 0.0, %v3590
  %v3592 = vpop.f32.mrb[0].mxu0
  %v3593 = vpop.f32.mrb[0].mxu0
  %v3594 = vadd.f32 0.0, %v3593
  %v3595 = vpop.f32.mrb[0].mxu0
  %3596 = vdwg.mxu0
  %v3598 = vsel %vm402, %v3583, 0
  %v3601 = vsel %vm402, %v3586, 0
  %3603 = vmatprep.subr.mxu0 0.0
  %3604 = vmatpush1.msra.mxu0 %v271
  %3605 = vmatprep.subr.mxu0 0.0
  %3606 = vmatpush1.msra.mxu0 %v272
  %3607 = vmatprep.subr.mxu0 0.0
  %3608 = vmatpush1.msra.mxu0 %v273
  %3609 = vmatprep.subr.mxu0 0.0
  %3610 = vmatpush1.msra.mxu0 %v274
  %3611 = vmatprep.subr.mxu0 0.0
  %3612 = vmatpush1.msra.mxu0 %v275
  %3613 = vmatprep.subr.mxu0 0.0
  %3614 = vmatpush1.msra.mxu0 %v276
  %3615 = vmatprep.subr.mxu0 0.0
  %3616 = vmatpush1.msra.mxu0 %v277
  %3617 = vmatprep.subr.mxu0 0.0
  %3618 = vmatpush1.msra.mxu0 %v278
  %3619 = vmatprep.subr.mxu0 0.0
  %3620 = vmatpush1.msra.mxu0 0.0
  %3621 = vmatprep.subr.mxu0 0.0
  %3622 = vmatpush1.msra.mxu0 0.0
  %3623 = vmatprep.subr.mxu0 0.0
  %3624 = vmatpush1.msra.mxu0 0.0
  %3625 = vmatprep.subr.mxu0 0.0
  %3626 = vmatpush1.msra.mxu0 0.0
  %3627 = vmatprep.subr.mxu0 0.0
  %3628 = vmatpush1.msra.mxu0 0.0
  %3629 = vmatprep.subr.mxu0 0.0
  %3630 = vmatpush1.msra.mxu0 0.0
  %3631 = vmatprep.subr.mxu0 0.0
  %3632 = vmatpush1.msra.mxu0 0.0
  %3633 = vmatprep.subr.mxu0 0.0
  %3634 = vmatpush1.msra.mxu0 0.0
  %3635 = vmatprep.subr.mxu0 0.0
  %3636 = vmatpush1.msra.mxu0 0.0
  %3637 = vmatprep.subr.mxu0 0.0
  %3638 = vmatpush1.msra.mxu0 0.0
  %3639 = vmatprep.subr.mxu0 0.0
  %3640 = vmatpush1.msra.mxu0 0.0
  %3641 = vmatprep.subr.mxu0 0.0
  %3642 = vmatpush1.msra.mxu0 0.0
  %3643 = vmatprep.subr.mxu0 0.0
  %3644 = vmatpush1.msra.mxu0 0.0
  %3645 = vmatprep.subr.mxu0 0.0
  %3646 = vmatpush1.msra.mxu0 0.0
  %3647 = vmatprep.subr.mxu0 0.0
  %3648 = vmatpush1.msra.mxu0 0.0
  %3649 = vmatprep.subr.mxu0 0.0
  %3650 = vmatpush1.msra.mxu0 0.0
  %3651 = vmatprep.subr.mxu0 0.0
  %3652 = vmatpush1.msra.mxu0 0.0
  %3653 = vmatprep.subr.mxu0 0.0
  %3654 = vmatpush1.msra.mxu0 0.0
  %3655 = vmatprep.subr.mxu0 0.0
  %3656 = vmatpush1.msra.mxu0 0.0
  %3657 = vmatprep.subr.mxu0 0.0
  %3658 = vmatpush1.msra.mxu0 0.0
  %3659 = vmatprep.subr.mxu0 0.0
  %3660 = vmatpush1.msra.mxu0 0.0
  %3661 = vmatprep.subr.mxu0 0.0
  %3662 = vmatpush1.msra.mxu0 0.0
  %3663 = vmatprep.subr.mxu0 0.0
  %3664 = vmatpush1.msra.mxu0 0.0
  %3665 = vmatprep.subr.mxu0 0.0
  %3666 = vmatpush1.msra.mxu0 0.0
  %3667 = vmatprep.mubr.f32.mxu0 0.0
  %3668 = vmatmul.mubr.f32.gmra.mrb[0].mxu0 %v3598
  %v3669 = vpop.f32.mrb[0].mxu0
  %v3670 = vadd.f32 0.0, %v3669
  %v3671 = vpop.f32.mrb[0].mxu0
  %3672 = vmatprep.mubr.f32.mxu0 0.0
  %3673 = vmatmul.mubr.f32.gmra.mrb[0].mxu0 %v3601
  %v3674 = vpop.f32.mrb[0].mxu0
  %v3675 = vadd.f32 0.0, %v3674
  %v3676 = vpop.f32.mrb[0].mxu0
  %3677 = vdwg.mxu0
  %v3679 = vsel %vm402, %v3591, 0
  %v3682 = vsel %vm402, %v3594, 0
  %3684 = vmatprep.subr.mxu0 0.0
  %3685 = vmatpush1.msra.mxu0 %v95
  %3686 = vmatprep.subr.mxu0 0.0
  %3687 = vmatpush1.msra.mxu0 %v96
  %3688 = vmatprep.subr.mxu0 0.0
  %3689 = vmatpush1.msra.mxu0 %v97
  %3690 = vmatprep.subr.mxu0 0.0
  %3691 = vmatpush1.msra.mxu0 %v98
  %3692 = vmatprep.subr.mxu0 0.0
  %3693 = vmatpush1.msra.mxu0 %v99
  %3694 = vmatprep.subr.mxu0 0.0
  %3695 = vmatpush1.msra.mxu0 %v100
  %3696 = vmatprep.subr.mxu0 0.0
  %3697 = vmatpush1.msra.mxu0 %v101
  %3698 = vmatprep.subr.mxu0 0.0
  %3699 = vmatpush1.msra.mxu0 %v102
  %3700 = vmatprep.subr.mxu0 0.0
  %3701 = vmatpush1.msra.mxu0 0.0
  %3702 = vmatprep.subr.mxu0 0.0
  %3703 = vmatpush1.msra.mxu0 0.0
  %3704 = vmatprep.subr.mxu0 0.0
  %3705 = vmatpush1.msra.mxu0 0.0
  %3706 = vmatprep.subr.mxu0 0.0
  %3707 = vmatpush1.msra.mxu0 0.0
  %3708 = vmatprep.subr.mxu0 0.0
  %3709 = vmatpush1.msra.mxu0 0.0
  %3710 = vmatprep.subr.mxu0 0.0
  %3711 = vmatpush1.msra.mxu0 0.0
  %3712 = vmatprep.subr.mxu0 0.0
  %3713 = vmatpush1.msra.mxu0 0.0
  %3714 = vmatprep.subr.mxu0 0.0
  %3715 = vmatpush1.msra.mxu0 0.0
  %3716 = vmatprep.subr.mxu0 0.0
  %3717 = vmatpush1.msra.mxu0 0.0
  %3718 = vmatprep.subr.mxu0 0.0
  %3719 = vmatpush1.msra.mxu0 0.0
  %3720 = vmatprep.subr.mxu0 0.0
  %3721 = vmatpush1.msra.mxu0 0.0
  %3722 = vmatprep.subr.mxu0 0.0
  %3723 = vmatpush1.msra.mxu0 0.0
  %3724 = vmatprep.subr.mxu0 0.0
  %3725 = vmatpush1.msra.mxu0 0.0
  %3726 = vmatprep.subr.mxu0 0.0
  %3727 = vmatpush1.msra.mxu0 0.0
  %3728 = vmatprep.subr.mxu0 0.0
  %3729 = vmatpush1.msra.mxu0 0.0
  %3730 = vmatprep.subr.mxu0 0.0
  %3731 = vmatpush1.msra.mxu0 0.0
  %3732 = vmatprep.subr.mxu0 0.0
  %3733 = vmatpush1.msra.mxu0 0.0
  %3734 = vmatprep.subr.mxu0 0.0
  %3735 = vmatpush1.msra.mxu0 0.0
  %3736 = vmatprep.subr.mxu0 0.0
  %3737 = vmatpush1.msra.mxu0 0.0
  %3738 = vmatprep.subr.mxu0 0.0
  %3739 = vmatpush1.msra.mxu0 0.0
  %3740 = vmatprep.subr.mxu0 0.0
  %3741 = vmatpush1.msra.mxu0 0.0
  %3742 = vmatprep.subr.mxu0 0.0
  %3743 = vmatpush1.msra.mxu0 0.0
  %3744 = vmatprep.subr.mxu0 0.0
  %3745 = vmatpush1.msra.mxu0 0.0
  %3746 = vmatprep.subr.mxu0 0.0
  %3747 = vmatpush1.msra.mxu0 0.0
  %3748 = vmatprep.mubr.f32.mxu0 0.0
  %3749 = vmatmul.mubr.f32.gmra.mrb[0].mxu0 %v3679
  %v3750 = vpop.f32.mrb[0].mxu0
  %v3751 = vadd.f32 0.0, %v3750
  %v3752 = vpop.f32.mrb[0].mxu0
  %3753 = vmatprep.mubr.f32.mxu0 0.0
  %3754 = vmatmul.mubr.f32.gmra.mrb[0].mxu0 %v3682
  %v3755 = vpop.f32.mrb[0].mxu0
  %v3756 = vadd.f32 0.0, %v3755
  %v3757 = vpop.f32.mrb[0].mxu0
  %3758 = vdwg.mxu0
  %v3759 = vadd.f32 %v3670, %v3751
  %v3760 = vadd.f32 %v3675, %v3756
  %3761 = vmatprep.subr.mxu0 0.0
  %3762 = vmatpush1.msra.mxu0 %v111
  %3763 = vmatprep.subr.mxu0 0.0
  %3764 = vmatpush1.msra.mxu0 %v112
  %3765 = vmatprep.subr.mxu0 0.0
  %3766 = vmatpush1.msra.mxu0 %v113
  %3767 = vmatprep.subr.mxu0 0.0
  %3768 = vmatpush1.msra.mxu0 %v114
  %3769 = vmatprep.subr.mxu0 0.0
  %3770 = vmatpush1.msra.mxu0 %v115
  %3771 = vmatprep.subr.mxu0 0.0
  %3772 = vmatpush1.msra.mxu0 %v116
  %3773 = vmatprep.subr.mxu0 0.0
  %3774 = vmatpush1.msra.mxu0 %v117
  %3775 = vmatprep.subr.mxu0 0.0
  %3776 = vmatpush1.msra.mxu0 %v118
  %3777 = vmatprep.subr.mxu0 0.0
  %3778 = vmatpush1.msra.mxu0 0.0
  %3779 = vmatprep.subr.mxu0 0.0
  %3780 = vmatpush1.msra.mxu0 0.0
  %3781 = vmatprep.subr.mxu0 0.0
  %3782 = vmatpush1.msra.mxu0 0.0
  %3783 = vmatprep.subr.mxu0 0.0
  %3784 = vmatpush1.msra.mxu0 0.0
  %3785 = vmatprep.subr.mxu0 0.0
  %3786 = vmatpush1.msra.mxu0 0.0
  %3787 = vmatprep.subr.mxu0 0.0
  %3788 = vmatpush1.msra.mxu0 0.0
  %3789 = vmatprep.subr.mxu0 0.0
  %3790 = vmatpush1.msra.mxu0 0.0
  %3791 = vmatprep.subr.mxu0 0.0
  %3792 = vmatpush1.msra.mxu0 0.0
  %3793 = vmatprep.subr.mxu0 0.0
  %3794 = vmatpush1.msra.mxu0 0.0
  %3795 = vmatprep.subr.mxu0 0.0
  %3796 = vmatpush1.msra.mxu0 0.0
  %3797 = vmatprep.subr.mxu0 0.0
  %3798 = vmatpush1.msra.mxu0 0.0
  %3799 = vmatprep.subr.mxu0 0.0
  %3800 = vmatpush1.msra.mxu0 0.0
  %3801 = vmatprep.subr.mxu0 0.0
  %3802 = vmatpush1.msra.mxu0 0.0
  %3803 = vmatprep.subr.mxu0 0.0
  %3804 = vmatpush1.msra.mxu0 0.0
  %3805 = vmatprep.subr.mxu0 0.0
  %3806 = vmatpush1.msra.mxu0 0.0
  %3807 = vmatprep.subr.mxu0 0.0
  %3808 = vmatpush1.msra.mxu0 0.0
  %3809 = vmatprep.subr.mxu0 0.0
  %3810 = vmatpush1.msra.mxu0 0.0
  %3811 = vmatprep.subr.mxu0 0.0
  %3812 = vmatpush1.msra.mxu0 0.0
  %3813 = vmatprep.subr.mxu0 0.0
  %3814 = vmatpush1.msra.mxu0 0.0
  %3815 = vmatprep.subr.mxu0 0.0
  %3816 = vmatpush1.msra.mxu0 0.0
  %3817 = vmatprep.subr.mxu0 0.0
  %3818 = vmatpush1.msra.mxu0 0.0
  %3819 = vmatprep.subr.mxu0 0.0
  %3820 = vmatpush1.msra.mxu0 0.0
  %3821 = vmatprep.subr.mxu0 0.0
  %3822 = vmatpush1.msra.mxu0 0.0
  %3823 = vmatprep.subr.mxu0 0.0
  %3824 = vmatpush1.msra.mxu0 0.0
  %3825 = vmatprep.mubr.f32.mxu0 0.0
  %3826 = vmatmul.mubr.f32.gmra.mrb[0].mxu0 %v3100
  %v3827 = vpop.f32.mrb[0].mxu0
  %v3828 = vadd.f32 0.0, %v3827
  %v3829 = vpop.f32.mrb[0].mxu0
  %3830 = vmatprep.mubr.f32.mxu0 0.0
  %3831 = vmatmul.mubr.f32.gmra.mrb[0].mxu0 %v3103
  %v3832 = vpop.f32.mrb[0].mxu0
  %v3833 = vadd.f32 0.0, %v3832
  %v3834 = vpop.f32.mrb[0].mxu0
  %3835 = vdwg.mxu0
  %v3836 = vadd.f32 %v3759, %v3828
  %v3837 = vadd.f32 %v3760, %v3833
  %v3838 = vadd.f32 %v3836, %v1029
  %v3839 = vadd.f32 %v3837, %v1030
  %v3840 = vmax.f32 %v3838, 0.0
  %v3841 = vmax.f32 %v3839, 0.0
  %v3843 = vsel %vm402, %v3840, 0
  %v3846 = vsel %vm402, %v3841, 0
  %3848 = vmatprep.subr.mxu0 0.0
  %3849 = vmatpush1.msra.mxu0 %v127
  %3850 = vmatprep.subr.mxu0 0.0
  %3851 = vmatpush1.msra.mxu0 %v128
  %3852 = vmatprep.subr.mxu0 0.0
  %3853 = vmatpush1.msra.mxu0 %v129
  %3854 = vmatprep.subr.mxu0 0.0
  %3855 = vmatpush1.msra.mxu0 %v130
  %3856 = vmatprep.subr.mxu0 0.0
  %3857 = vmatpush1.msra.mxu0 %v131
  %3858 = vmatprep.subr.mxu0 0.0
  %3859 = vmatpush1.msra.mxu0 %v132
  %3860 = vmatprep.subr.mxu0 0.0
  %3861 = vmatpush1.msra.mxu0 %v133
  %3862 = vmatprep.subr.mxu0 0.0
  %3863 = vmatpush1.msra.mxu0 %v134
  %3864 = vmatprep.subr.mxu0 0.0
  %3865 = vmatpush1.msra.mxu0 0.0
  %3866 = vmatprep.subr.mxu0 0.0
  %3867 = vmatpush1.msra.mxu0 0.0
  %3868 = vmatprep.subr.mxu0 0.0
  %3869 = vmatpush1.msra.mxu0 0.0
  %3870 = vmatprep.subr.mxu0 0.0
  %3871 = vmatpush1.msra.mxu0 0.0
  %3872 = vmatprep.subr.mxu0 0.0
  %3873 = vmatpush1.msra.mxu0 0.0
  %3874 = vmatprep.subr.mxu0 0.0
  %3875 = vmatpush1.msra.mxu0 0.0
  %3876 = vmatprep.subr.mxu0 0.0
  %3877 = vmatpush1.msra.mxu0 0.0
  %3878 = vmatprep.subr.mxu0 0.0
  %3879 = vmatpush1.msra.mxu0 0.0
  %3880 = vmatprep.subr.mxu0 0.0
  %3881 = vmatpush1.msra.mxu0 0.0
  %3882 = vmatprep.subr.mxu0 0.0
  %3883 = vmatpush1.msra.mxu0 0.0
  %3884 = vmatprep.subr.mxu0 0.0
  %3885 = vmatpush1.msra.mxu0 0.0
  %3886 = vmatprep.subr.mxu0 0.0
  %3887 = vmatpush1.msra.mxu0 0.0
  %3888 = vmatprep.subr.mxu0 0.0
  %3889 = vmatpush1.msra.mxu0 0.0
  %3890 = vmatprep.subr.mxu0 0.0
  %3891 = vmatpush1.msra.mxu0 0.0
  %3892 = vmatprep.subr.mxu0 0.0
  %3893 = vmatpush1.msra.mxu0 0.0
  %3894 = vmatprep.subr.mxu0 0.0
  %3895 = vmatpush1.msra.mxu0 0.0
  %3896 = vmatprep.subr.mxu0 0.0
  %3897 = vmatpush1.msra.mxu0 0.0
  %3898 = vmatprep.subr.mxu0 0.0
  %3899 = vmatpush1.msra.mxu0 0.0
  %3900 = vmatprep.subr.mxu0 0.0
  %3901 = vmatpush1.msra.mxu0 0.0
  %3902 = vmatprep.subr.mxu0 0.0
  %3903 = vmatpush1.msra.mxu0 0.0
  %3904 = vmatprep.subr.mxu0 0.0
  %3905 = vmatpush1.msra.mxu0 0.0
  %3906 = vmatprep.subr.mxu0 0.0
  %3907 = vmatpush1.msra.mxu0 0.0
  %3908 = vmatprep.subr.mxu0 0.0
  %3909 = vmatpush1.msra.mxu0 0.0
  %3910 = vmatprep.subr.mxu0 0.0
  %3911 = vmatpush1.msra.mxu0 0.0
  %3912 = vmatprep.mubr.f32.mxu0 0.0
  %3913 = vmatmul.mubr.f32.gmra.mrb[0].mxu0 %v3843
  %v3914 = vpop.f32.mrb[0].mxu0
  %v3915 = vadd.f32 %v316, %v3914
  %v3916 = vpop.f32.mrb[0].mxu0
  %3917 = vmatprep.mubr.f32.mxu0 0.0
  %3918 = vmatmul.mubr.f32.gmra.mrb[0].mxu0 %v3846
  %v3919 = vpop.f32.mrb[0].mxu0
  %v3920 = vadd.f32 %v316, %v3919
  %v3921 = vpop.f32.mrb[0].mxu0
  %3922 = vdwg.mxu0
  %v3923 = vmax.f32 %v3915, 0.0
  %v3924 = vmax.f32 %v3920, 0.0
  %v3926 = vsel %vm402, %v3923, 0
  %v3929 = vsel %vm402, %v3924, 0
  %3931 = vmatprep.subr.mxu0 0.0
  %3932 = vmatpush1.msra.mxu0 %v143
  %3933 = vmatprep.subr.mxu0 0.0
  %3934 = vmatpush1.msra.mxu0 %v144
  %3935 = vmatprep.subr.mxu0 0.0
  %3936 = vmatpush1.msra.mxu0 %v145
  %3937 = vmatprep.subr.mxu0 0.0
  %3938 = vmatpush1.msra.mxu0 %v146
  %3939 = vmatprep.subr.mxu0 0.0
  %3940 = vmatpush1.msra.mxu0 %v147
  %3941 = vmatprep.subr.mxu0 0.0
  %3942 = vmatpush1.msra.mxu0 %v148
  %3943 = vmatprep.subr.mxu0 0.0
  %3944 = vmatpush1.msra.mxu0 %v149
  %3945 = vmatprep.subr.mxu0 0.0
  %3946 = vmatpush1.msra.mxu0 %v150
  %3947 = vmatprep.subr.mxu0 0.0
  %3948 = vmatpush1.msra.mxu0 0.0
  %3949 = vmatprep.subr.mxu0 0.0
  %3950 = vmatpush1.msra.mxu0 0.0
  %3951 = vmatprep.subr.mxu0 0.0
  %3952 = vmatpush1.msra.mxu0 0.0
  %3953 = vmatprep.subr.mxu0 0.0
  %3954 = vmatpush1.msra.mxu0 0.0
  %3955 = vmatprep.subr.mxu0 0.0
  %3956 = vmatpush1.msra.mxu0 0.0
  %3957 = vmatprep.subr.mxu0 0.0
  %3958 = vmatpush1.msra.mxu0 0.0
  %3959 = vmatprep.subr.mxu0 0.0
  %3960 = vmatpush1.msra.mxu0 0.0
  %3961 = vmatprep.subr.mxu0 0.0
  %3962 = vmatpush1.msra.mxu0 0.0
  %3963 = vmatprep.subr.mxu0 0.0
  %3964 = vmatpush1.msra.mxu0 0.0
  %3965 = vmatprep.subr.mxu0 0.0
  %3966 = vmatpush1.msra.mxu0 0.0
  %3967 = vmatprep.subr.mxu0 0.0
  %3968 = vmatpush1.msra.mxu0 0.0
  %3969 = vmatprep.subr.mxu0 0.0
  %3970 = vmatpush1.msra.mxu0 0.0
  %3971 = vmatprep.subr.mxu0 0.0
  %3972 = vmatpush1.msra.mxu0 0.0
  %3973 = vmatprep.subr.mxu0 0.0
  %3974 = vmatpush1.msra.mxu0 0.0
  %3975 = vmatprep.subr.mxu0 0.0
  %3976 = vmatpush1.msra.mxu0 0.0
  %3977 = vmatprep.subr.mxu0 0.0
  %3978 = vmatpush1.msra.mxu0 0.0
  %3979 = vmatprep.subr.mxu0 0.0
  %3980 = vmatpush1.msra.mxu0 0.0
  %3981 = vmatprep.subr.mxu0 0.0
  %3982 = vmatpush1.msra.mxu0 0.0
  %3983 = vmatprep.subr.mxu0 0.0
  %3984 = vmatpush1.msra.mxu0 0.0
  %3985 = vmatprep.subr.mxu0 0.0
  %3986 = vmatpush1.msra.mxu0 0.0
  %3987 = vmatprep.subr.mxu0 0.0
  %3988 = vmatpush1.msra.mxu0 0.0
  %3989 = vmatprep.subr.mxu0 0.0
  %3990 = vmatpush1.msra.mxu0 0.0
  %3991 = vmatprep.subr.mxu0 0.0
  %3992 = vmatpush1.msra.mxu0 0.0
  %3993 = vmatprep.subr.mxu0 0.0
  %3994 = vmatpush1.msra.mxu0 0.0
  %3995 = vmatprep.mubr.f32.mxu0 0.0
  %3996 = vmatmul.mubr.f32.gmra.mrb[0].mxu0 %v3926
  %v3997 = vpop.f32.mrb[0].mxu0
  %v3998 = vadd.f32 0.0, %v3997
  %v3999 = vpop.f32.mrb[0].mxu0
  %4000 = vmatprep.mubr.f32.mxu0 0.0
  %4001 = vmatmul.mubr.f32.gmra.mrb[0].mxu0 %v3929
  %v4002 = vpop.f32.mrb[0].mxu0
  %v4003 = vadd.f32 0.0, %v4002
  %v4004 = vpop.f32.mrb[0].mxu0
  %4005 = vdwg.mxu0
  %4008 = vrot.lane.b32.xlu0 %v3998, 64
  %v4009 = vpop.permute.xlu0 %4008
  %4010 = vrot.lane.b32.xlu0 %v4003, 64
  %v4011 = vpop.permute.xlu0 %4010
  %v4014 = vadd.f32 %v3670, %v4009
  %v4015 = vadd.f32 %v3675, %v4011
  %v4016 = vadd.f32 %v4014, %v1516
  %v4017 = vadd.f32 %v4015, %v1518
  %v4018 = vmax.f32 %v4016, 0.0
  %v4019 = vmax.f32 %v4017, 0.0
  %4022 = vrot.lane.b32.xlu0 %v4018, 64
  %v4023 = vpop.permute.xlu0 %4022
  %4024 = vrot.lane.b32.xlu0 %v4019, 64
  %v4025 = vpop.permute.xlu0 %4024
  %v4026 = vsel %vm402, %v4023, 0
  %v4028 = vsel %vm402, %v4025, 0
  %4030 = vmatprep.subr.mxu0 0.0
  %4031 = vmatpush1.msra.mxu0 %v151
  %4032 = vmatprep.subr.mxu0 0.0
  %4033 = vmatpush1.msra.mxu0 %v152
  %4034 = vmatprep.subr.mxu0 0.0
  %4035 = vmatpush1.msra.mxu0 %v153
  %4036 = vmatprep.subr.mxu0 0.0
  %4037 = vmatpush1.msra.mxu0 %v154
  %4038 = vmatprep.subr.mxu0 0.0
  %4039 = vmatpush1.msra.mxu0 %v155
  %4040 = vmatprep.subr.mxu0 0.0
  %4041 = vmatpush1.msra.mxu0 %v156
  %4042 = vmatprep.subr.mxu0 0.0
  %4043 = vmatpush1.msra.mxu0 %v157
  %4044 = vmatprep.subr.mxu0 0.0
  %4045 = vmatpush1.msra.mxu0 %v158
  %4046 = vmatprep.subr.mxu0 0.0
  %4047 = vmatpush1.msra.mxu0 0.0
  %4048 = vmatprep.subr.mxu0 0.0
  %4049 = vmatpush1.msra.mxu0 0.0
  %4050 = vmatprep.subr.mxu0 0.0
  %4051 = vmatpush1.msra.mxu0 0.0
  %4052 = vmatprep.subr.mxu0 0.0
  %4053 = vmatpush1.msra.mxu0 0.0
  %4054 = vmatprep.subr.mxu0 0.0
  %4055 = vmatpush1.msra.mxu0 0.0
  %4056 = vmatprep.subr.mxu0 0.0
  %4057 = vmatpush1.msra.mxu0 0.0
  %4058 = vmatprep.subr.mxu0 0.0
  %4059 = vmatpush1.msra.mxu0 0.0
  %4060 = vmatprep.subr.mxu0 0.0
  %4061 = vmatpush1.msra.mxu0 0.0
  %4062 = vmatprep.subr.mxu0 0.0
  %4063 = vmatpush1.msra.mxu0 0.0
  %4064 = vmatprep.subr.mxu0 0.0
  %4065 = vmatpush1.msra.mxu0 0.0
  %4066 = vmatprep.subr.mxu0 0.0
  %4067 = vmatpush1.msra.mxu0 0.0
  %4068 = vmatprep.subr.mxu0 0.0
  %4069 = vmatpush1.msra.mxu0 0.0
  %4070 = vmatprep.subr.mxu0 0.0
  %4071 = vmatpush1.msra.mxu0 0.0
  %4072 = vmatprep.subr.mxu0 0.0
  %4073 = vmatpush1.msra.mxu0 0.0
  %4074 = vmatprep.subr.mxu0 0.0
  %4075 = vmatpush1.msra.mxu0 0.0
  %4076 = vmatprep.subr.mxu0 0.0
  %4077 = vmatpush1.msra.mxu0 0.0
  %4078 = vmatprep.subr.mxu0 0.0
  %4079 = vmatpush1.msra.mxu0 0.0
  %4080 = vmatprep.subr.mxu0 0.0
  %4081 = vmatpush1.msra.mxu0 0.0
  %4082 = vmatprep.subr.mxu0 0.0
  %4083 = vmatpush1.msra.mxu0 0.0
  %4084 = vmatprep.subr.mxu0 0.0
  %4085 = vmatpush1.msra.mxu0 0.0
  %4086 = vmatprep.subr.mxu0 0.0
  %4087 = vmatpush1.msra.mxu0 0.0
  %4088 = vmatprep.subr.mxu0 0.0
  %4089 = vmatpush1.msra.mxu0 0.0
  %4090 = vmatprep.subr.mxu0 0.0
  %4091 = vmatpush1.msra.mxu0 0.0
  %4092 = vmatprep.subr.mxu0 0.0
  %4093 = vmatpush1.msra.mxu0 0.0
  %4094 = vmatprep.mubr.f32.mxu0 0.0
  %4095 = vmatmul.mubr.f32.gmra.mrb[0].mxu0 %v4026
  %v4096 = vpop.f32.mrb[0].mxu0
  %v4097 = vadd.f32 %v318, %v4096
  %v4098 = vpop.f32.mrb[0].mxu0
  %4099 = vmatprep.mubr.f32.mxu0 0.0
  %4100 = vmatmul.mubr.f32.gmra.mrb[0].mxu0 %v4028
  %v4101 = vpop.f32.mrb[0].mxu0
  %v4102 = vadd.f32 %v318, %v4101
  %v4103 = vpop.f32.mrb[0].mxu0
  %4104 = vdwg.mxu0
  %v4105 = vmax.f32 %v4097, 0.0
  %v4106 = vmax.f32 %v4102, 0.0
  %v4107 = vpack.c.bf16 %v4106, %v4105
  %4108 = vmatprep.subr.bf16.mxu0 0
  %4109 = vmatpush1.bf16.msra.mxu0 %v4107
  %4110 = vmatprep.subr.bf16.mxu0 0
  %4111 = vmatpush1.bf16.msra.mxu0 0
  %4112 = vmatprep.subr.bf16.mxu0 0
  %4113 = vmatpush1.bf16.msra.mxu0 0
  %4114 = vmatprep.subr.bf16.mxu0 0
  %4115 = vmatpush1.bf16.msra.mxu0 0
  %4116 = vmatprep.subr.bf16.mxu0 0
  %4117 = vmatpush1.bf16.msra.mxu0 0
  %4118 = vmatprep.subr.bf16.mxu0 0
  %4119 = vmatpush1.bf16.msra.mxu0 0
  %4120 = vmatprep.subr.bf16.mxu0 0
  %4121 = vmatpush1.bf16.msra.mxu0 0
  %4122 = vmatprep.subr.bf16.mxu0 0
  %4123 = vmatpush1.bf16.msra.mxu0 0
  %4124 = vmatprep.subr.bf16.mxu0 0
  %4125 = vmatpush1.bf16.msra.mxu0 0
  %4126 = vmatprep.subr.bf16.mxu0 0
  %4127 = vmatpush1.bf16.msra.mxu0 0
  %4128 = vmatprep.subr.bf16.mxu0 0
  %4129 = vmatpush1.bf16.msra.mxu0 0
  %4130 = vmatprep.subr.bf16.mxu0 0
  %4131 = vmatpush1.bf16.msra.mxu0 0
  %4132 = vmatprep.subr.bf16.mxu0 0
  %4133 = vmatpush1.bf16.msra.mxu0 0
  %4134 = vmatprep.subr.bf16.mxu0 0
  %4135 = vmatpush1.bf16.msra.mxu0 0
  %4136 = vmatprep.subr.bf16.mxu0 0
  %4137 = vmatpush1.bf16.msra.mxu0 0
  %4138 = vmatprep.subr.bf16.mxu0 0
  %4139 = vmatpush1.bf16.msra.mxu0 0
  %4140 = vmatprep.mubr.bf16.mxu0 0
  %4141 = vmatmul.mubr.bf16.gmra.mrb[0].mxu0 %v1631
  %v4142 = vpop.f32.mrb[0].mxu0
  %v4143 = vadd.f32 0.0, %v4142
  %v4144 = vpop.f32.mrb[0].mxu0
  %v4145 = vpop.f32.mrb[0].mxu0
  %v4146 = vpop.f32.mrb[0].mxu0
  %4147 = vdwg.mxu0
  %v4149 = vsel %vm402, %v4143, 0
  %4151 = vmatprep.subr.mxu0 0.0
  %4152 = vmatpush1.msra.mxu0 %v175
  %4153 = vmatprep.subr.mxu0 0.0
  %4154 = vmatpush1.msra.mxu0 %v176
  %4155 = vmatprep.subr.mxu0 0.0
  %4156 = vmatpush1.msra.mxu0 %v177
  %4157 = vmatprep.subr.mxu0 0.0
  %4158 = vmatpush1.msra.mxu0 %v178
  %4159 = vmatprep.subr.mxu0 0.0
  %4160 = vmatpush1.msra.mxu0 %v179
  %4161 = vmatprep.subr.mxu0 0.0
  %4162 = vmatpush1.msra.mxu0 %v180
  %4163 = vmatprep.subr.mxu0 0.0
  %4164 = vmatpush1.msra.mxu0 %v181
  %4165 = vmatprep.subr.mxu0 0.0
  %4166 = vmatpush1.msra.mxu0 %v182
  %4167 = vmatprep.subr.mxu0 0.0
  %4168 = vmatpush1.msra.mxu0 0.0
  %4169 = vmatprep.subr.mxu0 0.0
  %4170 = vmatpush1.msra.mxu0 0.0
  %4171 = vmatprep.subr.mxu0 0.0
  %4172 = vmatpush1.msra.mxu0 0.0
  %4173 = vmatprep.subr.mxu0 0.0
  %4174 = vmatpush1.msra.mxu0 0.0
  %4175 = vmatprep.subr.mxu0 0.0
  %4176 = vmatpush1.msra.mxu0 0.0
  %4177 = vmatprep.subr.mxu0 0.0
  %4178 = vmatpush1.msra.mxu0 0.0
  %4179 = vmatprep.subr.mxu0 0.0
  %4180 = vmatpush1.msra.mxu0 0.0
  %4181 = vmatprep.subr.mxu0 0.0
  %4182 = vmatpush1.msra.mxu0 0.0
  %4183 = vmatprep.subr.mxu0 0.0
  %4184 = vmatpush1.msra.mxu0 0.0
  %4185 = vmatprep.subr.mxu0 0.0
  %4186 = vmatpush1.msra.mxu0 0.0
  %4187 = vmatprep.subr.mxu0 0.0
  %4188 = vmatpush1.msra.mxu0 0.0
  %4189 = vmatprep.subr.mxu0 0.0
  %4190 = vmatpush1.msra.mxu0 0.0
  %4191 = vmatprep.subr.mxu0 0.0
  %4192 = vmatpush1.msra.mxu0 0.0
  %4193 = vmatprep.subr.mxu0 0.0
  %4194 = vmatpush1.msra.mxu0 0.0
  %4195 = vmatprep.subr.mxu0 0.0
  %4196 = vmatpush1.msra.mxu0 0.0
  %4197 = vmatprep.subr.mxu0 0.0
  %4198 = vmatpush1.msra.mxu0 0.0
  %4199 = vmatprep.subr.mxu0 0.0
  %4200 = vmatpush1.msra.mxu0 0.0
  %4201 = vmatprep.subr.mxu0 0.0
  %4202 = vmatpush1.msra.mxu0 0.0
  %4203 = vmatprep.subr.mxu0 0.0
  %4204 = vmatpush1.msra.mxu0 0.0
  %4205 = vmatprep.subr.mxu0 0.0
  %4206 = vmatpush1.msra.mxu0 0.0
  %4207 = vmatprep.subr.mxu0 0.0
  %4208 = vmatpush1.msra.mxu0 0.0
  %4209 = vmatprep.subr.mxu0 0.0
  %4210 = vmatpush1.msra.mxu0 0.0
  %4211 = vmatprep.subr.mxu0 0.0
  %4212 = vmatpush1.msra.mxu0 0.0
  %4213 = vmatprep.subr.mxu0 0.0
  %4214 = vmatpush1.msra.mxu0 0.0
  %4215 = vmatprep.mubr.f32.mxu0 0.0
  %4216 = vmatmul.mubr.f32.gmra.mrb[0].mxu0 %v4149
  %v4217 = vpop.f32.mrb[0].mxu0
  %v4218 = vadd.f32 0.0, %v4217
  %v4219 = vpop.f32.mrb[0].mxu0
  %4220 = vdwg.mxu0
  %v4222 = vsel %vm402, %v3543, 0
  %4224 = vmatprep.subr.mxu0 0.0
  %4225 = vmatpush1.msra.mxu0 %v159
  %4226 = vmatprep.subr.mxu0 0.0
  %4227 = vmatpush1.msra.mxu0 %v160
  %4228 = vmatprep.subr.mxu0 0.0
  %4229 = vmatpush1.msra.mxu0 %v161
  %4230 = vmatprep.subr.mxu0 0.0
  %4231 = vmatpush1.msra.mxu0 %v162
  %4232 = vmatprep.subr.mxu0 0.0
  %4233 = vmatpush1.msra.mxu0 %v163
  %4234 = vmatprep.subr.mxu0 0.0
  %4235 = vmatpush1.msra.mxu0 %v164
  %4236 = vmatprep.subr.mxu0 0.0
  %4237 = vmatpush1.msra.mxu0 %v165
  %4238 = vmatprep.subr.mxu0 0.0
  %4239 = vmatpush1.msra.mxu0 %v166
  %4240 = vmatprep.subr.mxu0 0.0
  %4241 = vmatpush1.msra.mxu0 0.0
  %4242 = vmatprep.subr.mxu0 0.0
  %4243 = vmatpush1.msra.mxu0 0.0
  %4244 = vmatprep.subr.mxu0 0.0
  %4245 = vmatpush1.msra.mxu0 0.0
  %4246 = vmatprep.subr.mxu0 0.0
  %4247 = vmatpush1.msra.mxu0 0.0
  %4248 = vmatprep.subr.mxu0 0.0
  %4249 = vmatpush1.msra.mxu0 0.0
  %4250 = vmatprep.subr.mxu0 0.0
  %4251 = vmatpush1.msra.mxu0 0.0
  %4252 = vmatprep.subr.mxu0 0.0
  %4253 = vmatpush1.msra.mxu0 0.0
  %4254 = vmatprep.subr.mxu0 0.0
  %4255 = vmatpush1.msra.mxu0 0.0
  %4256 = vmatprep.subr.mxu0 0.0
  %4257 = vmatpush1.msra.mxu0 0.0
  %4258 = vmatprep.subr.mxu0 0.0
  %4259 = vmatpush1.msra.mxu0 0.0
  %4260 = vmatprep.subr.mxu0 0.0
  %4261 = vmatpush1.msra.mxu0 0.0
  %4262 = vmatprep.subr.mxu0 0.0
  %4263 = vmatpush1.msra.mxu0 0.0
  %4264 = vmatprep.subr.mxu0 0.0
  %4265 = vmatpush1.msra.mxu0 0.0
  %4266 = vmatprep.subr.mxu0 0.0
  %4267 = vmatpush1.msra.mxu0 0.0
  %4268 = vmatprep.subr.mxu0 0.0
  %4269 = vmatpush1.msra.mxu0 0.0
  %4270 = vmatprep.subr.mxu0 0.0
  %4271 = vmatpush1.msra.mxu0 0.0
  %4272 = vmatprep.subr.mxu0 0.0
  %4273 = vmatpush1.msra.mxu0 0.0
  %4274 = vmatprep.subr.mxu0 0.0
  %4275 = vmatpush1.msra.mxu0 0.0
  %4276 = vmatprep.subr.mxu0 0.0
  %4277 = vmatpush1.msra.mxu0 0.0
  %4278 = vmatprep.subr.mxu0 0.0
  %4279 = vmatpush1.msra.mxu0 0.0
  %4280 = vmatprep.subr.mxu0 0.0
  %4281 = vmatpush1.msra.mxu0 0.0
  %4282 = vmatprep.subr.mxu0 0.0
  %4283 = vmatpush1.msra.mxu0 0.0
  %4284 = vmatprep.subr.mxu0 0.0
  %4285 = vmatpush1.msra.mxu0 0.0
  %4286 = vmatprep.subr.mxu0 0.0
  %4287 = vmatpush1.msra.mxu0 0.0
  %4288 = vmatprep.mubr.f32.mxu0 0.0
  %4289 = vmatmul.mubr.f32.gmra.mrb[0].mxu0 %v4222
  %v4290 = vpop.f32.mrb[0].mxu0
  %v4291 = vadd.f32 %v4218, %v4290
  %v4292 = vpop.f32.mrb[0].mxu0
  %4293 = vdwg.mxu0
  %v4294 = vadd.f32 %v4291, %v715
  %v4295 = vmax.f32 %v4294, 0.0
  %v4297 = vsel %vm402, %v4295, 0
  %4299 = vmatprep.subr.mxu0 0.0
  %4300 = vmatpush1.msra.mxu0 %v183
  %4301 = vmatprep.subr.mxu0 0.0
  %4302 = vmatpush1.msra.mxu0 %v184
  %4303 = vmatprep.subr.mxu0 0.0
  %4304 = vmatpush1.msra.mxu0 %v185
  %4305 = vmatprep.subr.mxu0 0.0
  %4306 = vmatpush1.msra.mxu0 %v186
  %4307 = vmatprep.subr.mxu0 0.0
  %4308 = vmatpush1.msra.mxu0 %v187
  %4309 = vmatprep.subr.mxu0 0.0
  %4310 = vmatpush1.msra.mxu0 %v188
  %4311 = vmatprep.subr.mxu0 0.0
  %4312 = vmatpush1.msra.mxu0 %v189
  %4313 = vmatprep.subr.mxu0 0.0
  %4314 = vmatpush1.msra.mxu0 %v190
  %4315 = vmatprep.subr.mxu0 0.0
  %4316 = vmatpush1.msra.mxu0 0.0
  %4317 = vmatprep.subr.mxu0 0.0
  %4318 = vmatpush1.msra.mxu0 0.0
  %4319 = vmatprep.subr.mxu0 0.0
  %4320 = vmatpush1.msra.mxu0 0.0
  %4321 = vmatprep.subr.mxu0 0.0
  %4322 = vmatpush1.msra.mxu0 0.0
  %4323 = vmatprep.subr.mxu0 0.0
  %4324 = vmatpush1.msra.mxu0 0.0
  %4325 = vmatprep.subr.mxu0 0.0
  %4326 = vmatpush1.msra.mxu0 0.0
  %4327 = vmatprep.subr.mxu0 0.0
  %4328 = vmatpush1.msra.mxu0 0.0
  %4329 = vmatprep.subr.mxu0 0.0
  %4330 = vmatpush1.msra.mxu0 0.0
  %4331 = vmatprep.subr.mxu0 0.0
  %4332 = vmatpush1.msra.mxu0 0.0
  %4333 = vmatprep.subr.mxu0 0.0
  %4334 = vmatpush1.msra.mxu0 0.0
  %4335 = vmatprep.subr.mxu0 0.0
  %4336 = vmatpush1.msra.mxu0 0.0
  %4337 = vmatprep.subr.mxu0 0.0
  %4338 = vmatpush1.msra.mxu0 0.0
  %4339 = vmatprep.subr.mxu0 0.0
  %4340 = vmatpush1.msra.mxu0 0.0
  %4341 = vmatprep.subr.mxu0 0.0
  %4342 = vmatpush1.msra.mxu0 0.0
  %4343 = vmatprep.subr.mxu0 0.0
  %4344 = vmatpush1.msra.mxu0 0.0
  %4345 = vmatprep.subr.mxu0 0.0
  %4346 = vmatpush1.msra.mxu0 0.0
  %4347 = vmatprep.subr.mxu0 0.0
  %4348 = vmatpush1.msra.mxu0 0.0
  %4349 = vmatprep.subr.mxu0 0.0
  %4350 = vmatpush1.msra.mxu0 0.0
  %4351 = vmatprep.subr.mxu0 0.0
  %4352 = vmatpush1.msra.mxu0 0.0
  %4353 = vmatprep.subr.mxu0 0.0
  %4354 = vmatpush1.msra.mxu0 0.0
  %4355 = vmatprep.subr.mxu0 0.0
  %4356 = vmatpush1.msra.mxu0 0.0
  %4357 = vmatprep.subr.mxu0 0.0
  %4358 = vmatpush1.msra.mxu0 0.0
  %4359 = vmatprep.subr.mxu0 0.0
  %4360 = vmatpush1.msra.mxu0 0.0
  %4361 = vmatprep.subr.mxu0 0.0
  %4362 = vmatpush1.msra.mxu0 0.0
  %4363 = vmatprep.mubr.f32.mxu0 0.0
  %4364 = vmatmul.mubr.f32.gmra.mrb[0].mxu0 %v4297
  %v4365 = vpop.f32.mrb[0].mxu0
  %v4366 = vadd.f32 %v320, %v4365
  %v4367 = vpop.f32.mrb[0].mxu0
  %4368 = vdwg.mxu0
  %v4369 = vmax.f32 %v4366, 0.0
  %v4370 = vpack.c.bf16 %v4369, %v4369
  %v4372 = vsel %vm731, %v4370, 0
  %4374 = vmatprep.subr.bf16.mxu0 0
  %4375 = vmatpush1.bf16.msra.mxu0 %v4372
  %4376 = vmatprep.subr.bf16.mxu0 0
  %4377 = vmatpush1.bf16.msra.mxu0 0
  %4378 = vmatprep.subr.bf16.mxu0 0
  %4379 = vmatpush1.bf16.msra.mxu0 0
  %4380 = vmatprep.subr.bf16.mxu0 0
  %4381 = vmatpush1.bf16.msra.mxu0 0
  %4382 = vmatprep.subr.bf16.mxu0 0
  %4383 = vmatpush1.bf16.msra.mxu0 0
  %4384 = vmatprep.subr.bf16.mxu0 0
  %4385 = vmatpush1.bf16.msra.mxu0 0
  %4386 = vmatprep.subr.bf16.mxu0 0
  %4387 = vmatpush1.bf16.msra.mxu0 0
  %4388 = vmatprep.subr.bf16.mxu0 0
  %4389 = vmatpush1.bf16.msra.mxu0 0
  %4390 = vmatprep.subr.bf16.mxu0 0
  %4391 = vmatpush1.bf16.msra.mxu0 0
  %4392 = vmatprep.subr.bf16.mxu0 0
  %4393 = vmatpush1.bf16.msra.mxu0 0
  %4394 = vmatprep.subr.bf16.mxu0 0
  %4395 = vmatpush1.bf16.msra.mxu0 0
  %4396 = vmatprep.subr.bf16.mxu0 0
  %4397 = vmatpush1.bf16.msra.mxu0 0
  %4398 = vmatprep.subr.bf16.mxu0 0
  %4399 = vmatpush1.bf16.msra.mxu0 0
  %4400 = vmatprep.subr.bf16.mxu0 0
  %4401 = vmatpush1.bf16.msra.mxu0 0
  %4402 = vmatprep.subr.bf16.mxu0 0
  %4403 = vmatpush1.bf16.msra.mxu0 0
  %4404 = vmatprep.subr.bf16.mxu0 0
  %4405 = vmatpush1.bf16.msra.mxu0 0
  %4406 = vmatprep.mubr.bf16.mxu0 0
  %4407 = vmatmul.mubr.bf16.gmra.mrb[0].mxu0 %v726
  %v4408 = vpop.f32.mrb[0].mxu0
  %v4409 = vadd.f32 0.0, %v4408
  %v4410 = vpop.f32.mrb[0].mxu0
  %v4411 = vpop.f32.mrb[0].mxu0
  %v4412 = vadd.f32 0.0, %v4411
  %v4413 = vpop.f32.mrb[0].mxu0
  %4414 = vmatprep.mubr.bf16.mxu0 0
  %4415 = vmatmul.mubr.bf16.gmra.mrb[0].mxu0 %v729
  %v4416 = vpop.f32.mrb[0].mxu0
  %v4417 = vadd.f32 0.0, %v4416
  %v4418 = vpop.f32.mrb[0].mxu0
  %v4419 = vpop.f32.mrb[0].mxu0
  %v4420 = vadd.f32 0.0, %v4419
  %v4421 = vpop.f32.mrb[0].mxu0
  %4422 = vdwg.mxu0
  %v4424 = vsel %vm402, %v4409, 0
  %v4427 = vsel %vm402, %v4412, 0
  %4429 = vmatprep.subr.mxu0 0.0
  %4430 = vmatpush1.msra.mxu0 %v271
  %4431 = vmatprep.subr.mxu0 0.0
  %4432 = vmatpush1.msra.mxu0 %v272
  %4433 = vmatprep.subr.mxu0 0.0
  %4434 = vmatpush1.msra.mxu0 %v273
  %4435 = vmatprep.subr.mxu0 0.0
  %4436 = vmatpush1.msra.mxu0 %v274
  %4437 = vmatprep.subr.mxu0 0.0
  %4438 = vmatpush1.msra.mxu0 %v275
  %4439 = vmatprep.subr.mxu0 0.0
  %4440 = vmatpush1.msra.mxu0 %v276
  %4441 = vmatprep.subr.mxu0 0.0
  %4442 = vmatpush1.msra.mxu0 %v277
  %4443 = vmatprep.subr.mxu0 0.0
  %4444 = vmatpush1.msra.mxu0 %v278
  %4445 = vmatprep.subr.mxu0 0.0
  %4446 = vmatpush1.msra.mxu0 0.0
  %4447 = vmatprep.subr.mxu0 0.0
  %4448 = vmatpush1.msra.mxu0 0.0
  %4449 = vmatprep.subr.mxu0 0.0
  %4450 = vmatpush1.msra.mxu0 0.0
  %4451 = vmatprep.subr.mxu0 0.0
  %4452 = vmatpush1.msra.mxu0 0.0
  %4453 = vmatprep.subr.mxu0 0.0
  %4454 = vmatpush1.msra.mxu0 0.0
  %4455 = vmatprep.subr.mxu0 0.0
  %4456 = vmatpush1.msra.mxu0 0.0
  %4457 = vmatprep.subr.mxu0 0.0
  %4458 = vmatpush1.msra.mxu0 0.0
  %4459 = vmatprep.subr.mxu0 0.0
  %4460 = vmatpush1.msra.mxu0 0.0
  %4461 = vmatprep.subr.mxu0 0.0
  %4462 = vmatpush1.msra.mxu0 0.0
  %4463 = vmatprep.subr.mxu0 0.0
  %4464 = vmatpush1.msra.mxu0 0.0
  %4465 = vmatprep.subr.mxu0 0.0
  %4466 = vmatpush1.msra.mxu0 0.0
  %4467 = vmatprep.subr.mxu0 0.0
  %4468 = vmatpush1.msra.mxu0 0.0
  %4469 = vmatprep.subr.mxu0 0.0
  %4470 = vmatpush1.msra.mxu0 0.0
  %4471 = vmatprep.subr.mxu0 0.0
  %4472 = vmatpush1.msra.mxu0 0.0
  %4473 = vmatprep.subr.mxu0 0.0
  %4474 = vmatpush1.msra.mxu0 0.0
  %4475 = vmatprep.subr.mxu0 0.0
  %4476 = vmatpush1.msra.mxu0 0.0
  %4477 = vmatprep.subr.mxu0 0.0
  %4478 = vmatpush1.msra.mxu0 0.0
  %4479 = vmatprep.subr.mxu0 0.0
  %4480 = vmatpush1.msra.mxu0 0.0
  %4481 = vmatprep.subr.mxu0 0.0
  %4482 = vmatpush1.msra.mxu0 0.0
  %4483 = vmatprep.subr.mxu0 0.0
  %4484 = vmatpush1.msra.mxu0 0.0
  %4485 = vmatprep.subr.mxu0 0.0
  %4486 = vmatpush1.msra.mxu0 0.0
  %4487 = vmatprep.subr.mxu0 0.0
  %4488 = vmatpush1.msra.mxu0 0.0
  %4489 = vmatprep.subr.mxu0 0.0
  %4490 = vmatpush1.msra.mxu0 0.0
  %4491 = vmatprep.subr.mxu0 0.0
  %4492 = vmatpush1.msra.mxu0 0.0
  %4493 = vmatprep.mubr.f32.mxu0 0.0
  %4494 = vmatmul.mubr.f32.gmra.mrb[0].mxu0 %v4424
  %v4495 = vpop.f32.mrb[0].mxu0
  %v4496 = vadd.f32 0.0, %v4495
  %v4497 = vpop.f32.mrb[0].mxu0
  %4498 = vmatprep.mubr.f32.mxu0 0.0
  %4499 = vmatmul.mubr.f32.gmra.mrb[0].mxu0 %v4427
  %v4500 = vpop.f32.mrb[0].mxu0
  %v4501 = vadd.f32 0.0, %v4500
  %v4502 = vpop.f32.mrb[0].mxu0
  %4503 = vdwg.mxu0
  %v4505 = vsel %vm402, %v4417, 0
  %v4508 = vsel %vm402, %v4420, 0
  %4510 = vmatprep.subr.mxu0 0.0
  %4511 = vmatpush1.msra.mxu0 %v95
  %4512 = vmatprep.subr.mxu0 0.0
  %4513 = vmatpush1.msra.mxu0 %v96
  %4514 = vmatprep.subr.mxu0 0.0
  %4515 = vmatpush1.msra.mxu0 %v97
  %4516 = vmatprep.subr.mxu0 0.0
  %4517 = vmatpush1.msra.mxu0 %v98
  %4518 = vmatprep.subr.mxu0 0.0
  %4519 = vmatpush1.msra.mxu0 %v99
  %4520 = vmatprep.subr.mxu0 0.0
  %4521 = vmatpush1.msra.mxu0 %v100
  %4522 = vmatprep.subr.mxu0 0.0
  %4523 = vmatpush1.msra.mxu0 %v101
  %4524 = vmatprep.subr.mxu0 0.0
  %4525 = vmatpush1.msra.mxu0 %v102
  %4526 = vmatprep.subr.mxu0 0.0
  %4527 = vmatpush1.msra.mxu0 0.0
  %4528 = vmatprep.subr.mxu0 0.0
  %4529 = vmatpush1.msra.mxu0 0.0
  %4530 = vmatprep.subr.mxu0 0.0
  %4531 = vmatpush1.msra.mxu0 0.0
  %4532 = vmatprep.subr.mxu0 0.0
  %4533 = vmatpush1.msra.mxu0 0.0
  %4534 = vmatprep.subr.mxu0 0.0
  %4535 = vmatpush1.msra.mxu0 0.0
  %4536 = vmatprep.subr.mxu0 0.0
  %4537 = vmatpush1.msra.mxu0 0.0
  %4538 = vmatprep.subr.mxu0 0.0
  %4539 = vmatpush1.msra.mxu0 0.0
  %4540 = vmatprep.subr.mxu0 0.0
  %4541 = vmatpush1.msra.mxu0 0.0
  %4542 = vmatprep.subr.mxu0 0.0
  %4543 = vmatpush1.msra.mxu0 0.0
  %4544 = vmatprep.subr.mxu0 0.0
  %4545 = vmatpush1.msra.mxu0 0.0
  %4546 = vmatprep.subr.mxu0 0.0
  %4547 = vmatpush1.msra.mxu0 0.0
  %4548 = vmatprep.subr.mxu0 0.0
  %4549 = vmatpush1.msra.mxu0 0.0
  %4550 = vmatprep.subr.mxu0 0.0
  %4551 = vmatpush1.msra.mxu0 0.0
  %4552 = vmatprep.subr.mxu0 0.0
  %4553 = vmatpush1.msra.mxu0 0.0
  %4554 = vmatprep.subr.mxu0 0.0
  %4555 = vmatpush1.msra.mxu0 0.0
  %4556 = vmatprep.subr.mxu0 0.0
  %4557 = vmatpush1.msra.mxu0 0.0
  %4558 = vmatprep.subr.mxu0 0.0
  %4559 = vmatpush1.msra.mxu0 0.0
  %4560 = vmatprep.subr.mxu0 0.0
  %4561 = vmatpush1.msra.mxu0 0.0
  %4562 = vmatprep.subr.mxu0 0.0
  %4563 = vmatpush1.msra.mxu0 0.0
  %4564 = vmatprep.subr.mxu0 0.0
  %4565 = vmatpush1.msra.mxu0 0.0
  %4566 = vmatprep.subr.mxu0 0.0
  %4567 = vmatpush1.msra.mxu0 0.0
  %4568 = vmatprep.subr.mxu0 0.0
  %4569 = vmatpush1.msra.mxu0 0.0
  %4570 = vmatprep.subr.mxu0 0.0
  %4571 = vmatpush1.msra.mxu0 0.0
  %4572 = vmatprep.subr.mxu0 0.0
  %4573 = vmatpush1.msra.mxu0 0.0
  %4574 = vmatprep.mubr.f32.mxu0 0.0
  %4575 = vmatmul.mubr.f32.gmra.mrb[0].mxu0 %v4505
  %v4576 = vpop.f32.mrb[0].mxu0
  %v4577 = vadd.f32 0.0, %v4576
  %v4578 = vpop.f32.mrb[0].mxu0
  %4579 = vmatprep.mubr.f32.mxu0 0.0
  %4580 = vmatmul.mubr.f32.gmra.mrb[0].mxu0 %v4508
  %v4581 = vpop.f32.mrb[0].mxu0
  %v4582 = vadd.f32 0.0, %v4581
  %v4583 = vpop.f32.mrb[0].mxu0
  %4584 = vdwg.mxu0
  %v4585 = vadd.f32 %v4496, %v4577
  %v4586 = vadd.f32 %v4501, %v4582
  %4587 = vmatprep.subr.mxu0 0.0
  %4588 = vmatpush1.msra.mxu0 %v111
  %4589 = vmatprep.subr.mxu0 0.0
  %4590 = vmatpush1.msra.mxu0 %v112
  %4591 = vmatprep.subr.mxu0 0.0
  %4592 = vmatpush1.msra.mxu0 %v113
  %4593 = vmatprep.subr.mxu0 0.0
  %4594 = vmatpush1.msra.mxu0 %v114
  %4595 = vmatprep.subr.mxu0 0.0
  %4596 = vmatpush1.msra.mxu0 %v115
  %4597 = vmatprep.subr.mxu0 0.0
  %4598 = vmatpush1.msra.mxu0 %v116
  %4599 = vmatprep.subr.mxu0 0.0
  %4600 = vmatpush1.msra.mxu0 %v117
  %4601 = vmatprep.subr.mxu0 0.0
  %4602 = vmatpush1.msra.mxu0 %v118
  %4603 = vmatprep.subr.mxu0 0.0
  %4604 = vmatpush1.msra.mxu0 0.0
  %4605 = vmatprep.subr.mxu0 0.0
  %4606 = vmatpush1.msra.mxu0 0.0
  %4607 = vmatprep.subr.mxu0 0.0
  %4608 = vmatpush1.msra.mxu0 0.0
  %4609 = vmatprep.subr.mxu0 0.0
  %4610 = vmatpush1.msra.mxu0 0.0
  %4611 = vmatprep.subr.mxu0 0.0
  %4612 = vmatpush1.msra.mxu0 0.0
  %4613 = vmatprep.subr.mxu0 0.0
  %4614 = vmatpush1.msra.mxu0 0.0
  %4615 = vmatprep.subr.mxu0 0.0
  %4616 = vmatpush1.msra.mxu0 0.0
  %4617 = vmatprep.subr.mxu0 0.0
  %4618 = vmatpush1.msra.mxu0 0.0
  %4619 = vmatprep.subr.mxu0 0.0
  %4620 = vmatpush1.msra.mxu0 0.0
  %4621 = vmatprep.subr.mxu0 0.0
  %4622 = vmatpush1.msra.mxu0 0.0
  %4623 = vmatprep.subr.mxu0 0.0
  %4624 = vmatpush1.msra.mxu0 0.0
  %4625 = vmatprep.subr.mxu0 0.0
  %4626 = vmatpush1.msra.mxu0 0.0
  %4627 = vmatprep.subr.mxu0 0.0
  %4628 = vmatpush1.msra.mxu0 0.0
  %4629 = vmatprep.subr.mxu0 0.0
  %4630 = vmatpush1.msra.mxu0 0.0
  %4631 = vmatprep.subr.mxu0 0.0
  %4632 = vmatpush1.msra.mxu0 0.0
  %4633 = vmatprep.subr.mxu0 0.0
  %4634 = vmatpush1.msra.mxu0 0.0
  %4635 = vmatprep.subr.mxu0 0.0
  %4636 = vmatpush1.msra.mxu0 0.0
  %4637 = vmatprep.subr.mxu0 0.0
  %4638 = vmatpush1.msra.mxu0 0.0
  %4639 = vmatprep.subr.mxu0 0.0
  %4640 = vmatpush1.msra.mxu0 0.0
  %4641 = vmatprep.subr.mxu0 0.0
  %4642 = vmatpush1.msra.mxu0 0.0
  %4643 = vmatprep.subr.mxu0 0.0
  %4644 = vmatpush1.msra.mxu0 0.0
  %4645 = vmatprep.subr.mxu0 0.0
  %4646 = vmatpush1.msra.mxu0 0.0
  %4647 = vmatprep.subr.mxu0 0.0
  %4648 = vmatpush1.msra.mxu0 0.0
  %4649 = vmatprep.subr.mxu0 0.0
  %4650 = vmatpush1.msra.mxu0 0.0
  %4651 = vmatprep.mubr.f32.mxu0 0.0
  %4652 = vmatmul.mubr.f32.gmra.mrb[0].mxu0 %v3926
  %v4653 = vpop.f32.mrb[0].mxu0
  %v4654 = vadd.f32 0.0, %v4653
  %v4655 = vpop.f32.mrb[0].mxu0
  %4656 = vmatprep.mubr.f32.mxu0 0.0
  %4657 = vmatmul.mubr.f32.gmra.mrb[0].mxu0 %v3929
  %v4658 = vpop.f32.mrb[0].mxu0
  %v4659 = vadd.f32 0.0, %v4658
  %v4660 = vpop.f32.mrb[0].mxu0
  %4661 = vdwg.mxu0
  %v4662 = vadd.f32 %v4585, %v4654
  %v4663 = vadd.f32 %v4586, %v4659
  %v4664 = vadd.f32 %v4662, %v1029
  %v4665 = vadd.f32 %v4663, %v1030
  %v4666 = vmax.f32 %v4664, 0.0
  %v4667 = vmax.f32 %v4665, 0.0
  %v4669 = vsel %vm402, %v4666, 0
  %v4672 = vsel %vm402, %v4667, 0
  %4674 = vmatprep.subr.mxu0 0.0
  %4675 = vmatpush1.msra.mxu0 %v127
  %4676 = vmatprep.subr.mxu0 0.0
  %4677 = vmatpush1.msra.mxu0 %v128
  %4678 = vmatprep.subr.mxu0 0.0
  %4679 = vmatpush1.msra.mxu0 %v129
  %4680 = vmatprep.subr.mxu0 0.0
  %4681 = vmatpush1.msra.mxu0 %v130
  %4682 = vmatprep.subr.mxu0 0.0
  %4683 = vmatpush1.msra.mxu0 %v131
  %4684 = vmatprep.subr.mxu0 0.0
  %4685 = vmatpush1.msra.mxu0 %v132
  %4686 = vmatprep.subr.mxu0 0.0
  %4687 = vmatpush1.msra.mxu0 %v133
  %4688 = vmatprep.subr.mxu0 0.0
  %4689 = vmatpush1.msra.mxu0 %v134
  %4690 = vmatprep.subr.mxu0 0.0
  %4691 = vmatpush1.msra.mxu0 0.0
  %4692 = vmatprep.subr.mxu0 0.0
  %4693 = vmatpush1.msra.mxu0 0.0
  %4694 = vmatprep.subr.mxu0 0.0
  %4695 = vmatpush1.msra.mxu0 0.0
  %4696 = vmatprep.subr.mxu0 0.0
  %4697 = vmatpush1.msra.mxu0 0.0
  %4698 = vmatprep.subr.mxu0 0.0
  %4699 = vmatpush1.msra.mxu0 0.0
  %4700 = vmatprep.subr.mxu0 0.0
  %4701 = vmatpush1.msra.mxu0 0.0
  %4702 = vmatprep.subr.mxu0 0.0
  %4703 = vmatpush1.msra.mxu0 0.0
  %4704 = vmatprep.subr.mxu0 0.0
  %4705 = vmatpush1.msra.mxu0 0.0
  %4706 = vmatprep.subr.mxu0 0.0
  %4707 = vmatpush1.msra.mxu0 0.0
  %4708 = vmatprep.subr.mxu0 0.0
  %4709 = vmatpush1.msra.mxu0 0.0
  %4710 = vmatprep.subr.mxu0 0.0
  %4711 = vmatpush1.msra.mxu0 0.0
  %4712 = vmatprep.subr.mxu0 0.0
  %4713 = vmatpush1.msra.mxu0 0.0
  %4714 = vmatprep.subr.mxu0 0.0
  %4715 = vmatpush1.msra.mxu0 0.0
  %4716 = vmatprep.subr.mxu0 0.0
  %4717 = vmatpush1.msra.mxu0 0.0
  %4718 = vmatprep.subr.mxu0 0.0
  %4719 = vmatpush1.msra.mxu0 0.0
  %4720 = vmatprep.subr.mxu0 0.0
  %4721 = vmatpush1.msra.mxu0 0.0
  %4722 = vmatprep.subr.mxu0 0.0
  %4723 = vmatpush1.msra.mxu0 0.0
  %4724 = vmatprep.subr.mxu0 0.0
  %4725 = vmatpush1.msra.mxu0 0.0
  %4726 = vmatprep.subr.mxu0 0.0
  %4727 = vmatpush1.msra.mxu0 0.0
  %4728 = vmatprep.subr.mxu0 0.0
  %4729 = vmatpush1.msra.mxu0 0.0
  %4730 = vmatprep.subr.mxu0 0.0
  %4731 = vmatpush1.msra.mxu0 0.0
  %4732 = vmatprep.subr.mxu0 0.0
  %4733 = vmatpush1.msra.mxu0 0.0
  %4734 = vmatprep.subr.mxu0 0.0
  %4735 = vmatpush1.msra.mxu0 0.0
  %4736 = vmatprep.subr.mxu0 0.0
  %4737 = vmatpush1.msra.mxu0 0.0
  %4738 = vmatprep.mubr.f32.mxu0 0.0
  %4739 = vmatmul.mubr.f32.gmra.mrb[0].mxu0 %v4669
  %v4740 = vpop.f32.mrb[0].mxu0
  %v4741 = vadd.f32 %v316, %v4740
  %v4742 = vpop.f32.mrb[0].mxu0
  %4743 = vmatprep.mubr.f32.mxu0 0.0
  %4744 = vmatmul.mubr.f32.gmra.mrb[0].mxu0 %v4672
  %v4745 = vpop.f32.mrb[0].mxu0
  %v4746 = vadd.f32 %v316, %v4745
  %v4747 = vpop.f32.mrb[0].mxu0
  %4748 = vdwg.mxu0
  %v4749 = vmax.f32 %v4741, 0.0
  %v4750 = vmax.f32 %v4746, 0.0
  %v4752 = vsel %vm402, %v4749, 0
  %v4755 = vsel %vm402, %v4750, 0
  %4757 = vmatprep.subr.mxu0 0.0
  %4758 = vmatpush1.msra.mxu0 %v143
  %4759 = vmatprep.subr.mxu0 0.0
  %4760 = vmatpush1.msra.mxu0 %v144
  %4761 = vmatprep.subr.mxu0 0.0
  %4762 = vmatpush1.msra.mxu0 %v145
  %4763 = vmatprep.subr.mxu0 0.0
  %4764 = vmatpush1.msra.mxu0 %v146
  %4765 = vmatprep.subr.mxu0 0.0
  %4766 = vmatpush1.msra.mxu0 %v147
  %4767 = vmatprep.subr.mxu0 0.0
  %4768 = vmatpush1.msra.mxu0 %v148
  %4769 = vmatprep.subr.mxu0 0.0
  %4770 = vmatpush1.msra.mxu0 %v149
  %4771 = vmatprep.subr.mxu0 0.0
  %4772 = vmatpush1.msra.mxu0 %v150
  %4773 = vmatprep.subr.mxu0 0.0
  %4774 = vmatpush1.msra.mxu0 0.0
  %4775 = vmatprep.subr.mxu0 0.0
  %4776 = vmatpush1.msra.mxu0 0.0
  %4777 = vmatprep.subr.mxu0 0.0
  %4778 = vmatpush1.msra.mxu0 0.0
  %4779 = vmatprep.subr.mxu0 0.0
  %4780 = vmatpush1.msra.mxu0 0.0
  %4781 = vmatprep.subr.mxu0 0.0
  %4782 = vmatpush1.msra.mxu0 0.0
  %4783 = vmatprep.subr.mxu0 0.0
  %4784 = vmatpush1.msra.mxu0 0.0
  %4785 = vmatprep.subr.mxu0 0.0
  %4786 = vmatpush1.msra.mxu0 0.0
  %4787 = vmatprep.subr.mxu0 0.0
  %4788 = vmatpush1.msra.mxu0 0.0
  %4789 = vmatprep.subr.mxu0 0.0
  %4790 = vmatpush1.msra.mxu0 0.0
  %4791 = vmatprep.subr.mxu0 0.0
  %4792 = vmatpush1.msra.mxu0 0.0
  %4793 = vmatprep.subr.mxu0 0.0
  %4794 = vmatpush1.msra.mxu0 0.0
  %4795 = vmatprep.subr.mxu0 0.0
  %4796 = vmatpush1.msra.mxu0 0.0
  %4797 = vmatprep.subr.mxu0 0.0
  %4798 = vmatpush1.msra.mxu0 0.0
  %4799 = vmatprep.subr.mxu0 0.0
  %4800 = vmatpush1.msra.mxu0 0.0
  %4801 = vmatprep.subr.mxu0 0.0
  %4802 = vmatpush1.msra.mxu0 0.0
  %4803 = vmatprep.subr.mxu0 0.0
  %4804 = vmatpush1.msra.mxu0 0.0
  %4805 = vmatprep.subr.mxu0 0.0
  %4806 = vmatpush1.msra.mxu0 0.0
  %4807 = vmatprep.subr.mxu0 0.0
  %4808 = vmatpush1.msra.mxu0 0.0
  %4809 = vmatprep.subr.mxu0 0.0
  %4810 = vmatpush1.msra.mxu0 0.0
  %4811 = vmatprep.subr.mxu0 0.0
  %4812 = vmatpush1.msra.mxu0 0.0
  %4813 = vmatprep.subr.mxu0 0.0
  %4814 = vmatpush1.msra.mxu0 0.0
  %4815 = vmatprep.subr.mxu0 0.0
  %4816 = vmatpush1.msra.mxu0 0.0
  %4817 = vmatprep.subr.mxu0 0.0
  %4818 = vmatpush1.msra.mxu0 0.0
  %4819 = vmatprep.subr.mxu0 0.0
  %4820 = vmatpush1.msra.mxu0 0.0
  %4821 = vmatprep.mubr.f32.mxu0 0.0
  %4822 = vmatmul.mubr.f32.gmra.mrb[0].mxu0 %v4752
  %v4823 = vpop.f32.mrb[0].mxu0
  %v4824 = vadd.f32 0.0, %v4823
  %v4825 = vpop.f32.mrb[0].mxu0
  %4826 = vmatprep.mubr.f32.mxu0 0.0
  %4827 = vmatmul.mubr.f32.gmra.mrb[0].mxu0 %v4755
  %v4828 = vpop.f32.mrb[0].mxu0
  %v4829 = vadd.f32 0.0, %v4828
  %v4830 = vpop.f32.mrb[0].mxu0
  %4831 = vdwg.mxu0
  %4834 = vrot.lane.b32.xlu0 %v4824, 64
  %v4835 = vpop.permute.xlu0 %4834
  %4836 = vrot.lane.b32.xlu0 %v4829, 64
  %v4837 = vpop.permute.xlu0 %4836
  %v4840 = vadd.f32 %v4496, %v4835
  %v4841 = vadd.f32 %v4501, %v4837
  %v4842 = vadd.f32 %v4840, %v1516
  %v4843 = vadd.f32 %v4841, %v1518
  %v4844 = vmax.f32 %v4842, 0.0
  %v4845 = vmax.f32 %v4843, 0.0
  %4848 = vrot.lane.b32.xlu0 %v4844, 64
  %v4849 = vpop.permute.xlu0 %4848
  %4850 = vrot.lane.b32.xlu0 %v4845, 64
  %v4851 = vpop.permute.xlu0 %4850
  %v4852 = vsel %vm402, %v4849, 0
  %v4854 = vsel %vm402, %v4851, 0
  %4856 = vmatprep.subr.mxu0 0.0
  %4857 = vmatpush1.msra.mxu0 %v151
  %4858 = vmatprep.subr.mxu0 0.0
  %4859 = vmatpush1.msra.mxu0 %v152
  %4860 = vmatprep.subr.mxu0 0.0
  %4861 = vmatpush1.msra.mxu0 %v153
  %4862 = vmatprep.subr.mxu0 0.0
  %4863 = vmatpush1.msra.mxu0 %v154
  %4864 = vmatprep.subr.mxu0 0.0
  %4865 = vmatpush1.msra.mxu0 %v155
  %4866 = vmatprep.subr.mxu0 0.0
  %4867 = vmatpush1.msra.mxu0 %v156
  %4868 = vmatprep.subr.mxu0 0.0
  %4869 = vmatpush1.msra.mxu0 %v157
  %4870 = vmatprep.subr.mxu0 0.0
  %4871 = vmatpush1.msra.mxu0 %v158
  %4872 = vmatprep.subr.mxu0 0.0
  %4873 = vmatpush1.msra.mxu0 0.0
  %4874 = vmatprep.subr.mxu0 0.0
  %4875 = vmatpush1.msra.mxu0 0.0
  %4876 = vmatprep.subr.mxu0 0.0
  %4877 = vmatpush1.msra.mxu0 0.0
  %4878 = vmatprep.subr.mxu0 0.0
  %4879 = vmatpush1.msra.mxu0 0.0
  %4880 = vmatprep.subr.mxu0 0.0
  %4881 = vmatpush1.msra.mxu0 0.0
  %4882 = vmatprep.subr.mxu0 0.0
  %4883 = vmatpush1.msra.mxu0 0.0
  %4884 = vmatprep.subr.mxu0 0.0
  %4885 = vmatpush1.msra.mxu0 0.0
  %4886 = vmatprep.subr.mxu0 0.0
  %4887 = vmatpush1.msra.mxu0 0.0
  %4888 = vmatprep.subr.mxu0 0.0
  %4889 = vmatpush1.msra.mxu0 0.0
  %4890 = vmatprep.subr.mxu0 0.0
  %4891 = vmatpush1.msra.mxu0 0.0
  %4892 = vmatprep.subr.mxu0 0.0
  %4893 = vmatpush1.msra.mxu0 0.0
  %4894 = vmatprep.subr.mxu0 0.0
  %4895 = vmatpush1.msra.mxu0 0.0
  %4896 = vmatprep.subr.mxu0 0.0
  %4897 = vmatpush1.msra.mxu0 0.0
  %4898 = vmatprep.subr.mxu0 0.0
  %4899 = vmatpush1.msra.mxu0 0.0
  %4900 = vmatprep.subr.mxu0 0.0
  %4901 = vmatpush1.msra.mxu0 0.0
  %4902 = vmatprep.subr.mxu0 0.0
  %4903 = vmatpush1.msra.mxu0 0.0
  %4904 = vmatprep.subr.mxu0 0.0
  %4905 = vmatpush1.msra.mxu0 0.0
  %4906 = vmatprep.subr.mxu0 0.0
  %4907 = vmatpush1.msra.mxu0 0.0
  %4908 = vmatprep.subr.mxu0 0.0
  %4909 = vmatpush1.msra.mxu0 0.0
  %4910 = vmatprep.subr.mxu0 0.0
  %4911 = vmatpush1.msra.mxu0 0.0
  %4912 = vmatprep.subr.mxu0 0.0
  %4913 = vmatpush1.msra.mxu0 0.0
  %4914 = vmatprep.subr.mxu0 0.0
  %4915 = vmatpush1.msra.mxu0 0.0
  %4916 = vmatprep.subr.mxu0 0.0
  %4917 = vmatpush1.msra.mxu0 0.0
  %4918 = vmatprep.subr.mxu0 0.0
  %4919 = vmatpush1.msra.mxu0 0.0
  %4920 = vmatprep.mubr.f32.mxu0 0.0
  %4921 = vmatmul.mubr.f32.gmra.mrb[0].mxu0 %v4852
  %v4922 = vpop.f32.mrb[0].mxu0
  %v4923 = vadd.f32 %v318, %v4922
  %v4924 = vpop.f32.mrb[0].mxu0
  %4925 = vmatprep.mubr.f32.mxu0 0.0
  %4926 = vmatmul.mubr.f32.gmra.mrb[0].mxu0 %v4854
  %v4927 = vpop.f32.mrb[0].mxu0
  %v4928 = vadd.f32 %v318, %v4927
  %v4929 = vpop.f32.mrb[0].mxu0
  %4930 = vdwg.mxu0
  %v4931 = vmax.f32 %v4923, 0.0
  %v4932 = vmax.f32 %v4928, 0.0
  %v4933 = vpack.c.bf16 %v4932, %v4931
  %4934 = vmatprep.subr.bf16.mxu0 0
  %4935 = vmatpush1.bf16.msra.mxu0 %v4933
  %4936 = vmatprep.subr.bf16.mxu0 0
  %4937 = vmatpush1.bf16.msra.mxu0 0
  %4938 = vmatprep.subr.bf16.mxu0 0
  %4939 = vmatpush1.bf16.msra.mxu0 0
  %4940 = vmatprep.subr.bf16.mxu0 0
  %4941 = vmatpush1.bf16.msra.mxu0 0
  %4942 = vmatprep.subr.bf16.mxu0 0
  %4943 = vmatpush1.bf16.msra.mxu0 0
  %4944 = vmatprep.subr.bf16.mxu0 0
  %4945 = vmatpush1.bf16.msra.mxu0 0
  %4946 = vmatprep.subr.bf16.mxu0 0
  %4947 = vmatpush1.bf16.msra.mxu0 0
  %4948 = vmatprep.subr.bf16.mxu0 0
  %4949 = vmatpush1.bf16.msra.mxu0 0
  %4950 = vmatprep.subr.bf16.mxu0 0
  %4951 = vmatpush1.bf16.msra.mxu0 0
  %4952 = vmatprep.subr.bf16.mxu0 0
  %4953 = vmatpush1.bf16.msra.mxu0 0
  %4954 = vmatprep.subr.bf16.mxu0 0
  %4955 = vmatpush1.bf16.msra.mxu0 0
  %4956 = vmatprep.subr.bf16.mxu0 0
  %4957 = vmatpush1.bf16.msra.mxu0 0
  %4958 = vmatprep.subr.bf16.mxu0 0
  %4959 = vmatpush1.bf16.msra.mxu0 0
  %4960 = vmatprep.subr.bf16.mxu0 0
  %4961 = vmatpush1.bf16.msra.mxu0 0
  %4962 = vmatprep.subr.bf16.mxu0 0
  %4963 = vmatpush1.bf16.msra.mxu0 0
  %4964 = vmatprep.subr.bf16.mxu0 0
  %4965 = vmatpush1.bf16.msra.mxu0 0
  %4966 = vmatprep.mubr.bf16.mxu0 0
  %4967 = vmatmul.mubr.bf16.gmra.mrb[0].mxu0 %v1631
  %v4968 = vpop.f32.mrb[0].mxu0
  %v4969 = vadd.f32 0.0, %v4968
  %v4970 = vpop.f32.mrb[0].mxu0
  %v4971 = vpop.f32.mrb[0].mxu0
  %v4972 = vpop.f32.mrb[0].mxu0
  %4973 = vdwg.mxu0
  %v4975 = vsel %vm402, %v4969, 0
  %4977 = vmatprep.subr.mxu0 0.0
  %4978 = vmatpush1.msra.mxu0 %v175
  %4979 = vmatprep.subr.mxu0 0.0
  %4980 = vmatpush1.msra.mxu0 %v176
  %4981 = vmatprep.subr.mxu0 0.0
  %4982 = vmatpush1.msra.mxu0 %v177
  %4983 = vmatprep.subr.mxu0 0.0
  %4984 = vmatpush1.msra.mxu0 %v178
  %4985 = vmatprep.subr.mxu0 0.0
  %4986 = vmatpush1.msra.mxu0 %v179
  %4987 = vmatprep.subr.mxu0 0.0
  %4988 = vmatpush1.msra.mxu0 %v180
  %4989 = vmatprep.subr.mxu0 0.0
  %4990 = vmatpush1.msra.mxu0 %v181
  %4991 = vmatprep.subr.mxu0 0.0
  %4992 = vmatpush1.msra.mxu0 %v182
  %4993 = vmatprep.subr.mxu0 0.0
  %4994 = vmatpush1.msra.mxu0 0.0
  %4995 = vmatprep.subr.mxu0 0.0
  %4996 = vmatpush1.msra.mxu0 0.0
  %4997 = vmatprep.subr.mxu0 0.0
  %4998 = vmatpush1.msra.mxu0 0.0
  %4999 = vmatprep.subr.mxu0 0.0
  %5000 = vmatpush1.msra.mxu0 0.0
  %5001 = vmatprep.subr.mxu0 0.0
  %5002 = vmatpush1.msra.mxu0 0.0
  %5003 = vmatprep.subr.mxu0 0.0
  %5004 = vmatpush1.msra.mxu0 0.0
  %5005 = vmatprep.subr.mxu0 0.0
  %5006 = vmatpush1.msra.mxu0 0.0
  %5007 = vmatprep.subr.mxu0 0.0
  %5008 = vmatpush1.msra.mxu0 0.0
  %5009 = vmatprep.subr.mxu0 0.0
  %5010 = vmatpush1.msra.mxu0 0.0
  %5011 = vmatprep.subr.mxu0 0.0
  %5012 = vmatpush1.msra.mxu0 0.0
  %5013 = vmatprep.subr.mxu0 0.0
  %5014 = vmatpush1.msra.mxu0 0.0
  %5015 = vmatprep.subr.mxu0 0.0
  %5016 = vmatpush1.msra.mxu0 0.0
  %5017 = vmatprep.subr.mxu0 0.0
  %5018 = vmatpush1.msra.mxu0 0.0
  %5019 = vmatprep.subr.mxu0 0.0
  %5020 = vmatpush1.msra.mxu0 0.0
  %5021 = vmatprep.subr.mxu0 0.0
  %5022 = vmatpush1.msra.mxu0 0.0
  %5023 = vmatprep.subr.mxu0 0.0
  %5024 = vmatpush1.msra.mxu0 0.0
  %5025 = vmatprep.subr.mxu0 0.0
  %5026 = vmatpush1.msra.mxu0 0.0
  %5027 = vmatprep.subr.mxu0 0.0
  %5028 = vmatpush1.msra.mxu0 0.0
  %5029 = vmatprep.subr.mxu0 0.0
  %5030 = vmatpush1.msra.mxu0 0.0
  %5031 = vmatprep.subr.mxu0 0.0
  %5032 = vmatpush1.msra.mxu0 0.0
  %5033 = vmatprep.subr.mxu0 0.0
  %5034 = vmatpush1.msra.mxu0 0.0
  %5035 = vmatprep.subr.mxu0 0.0
  %5036 = vmatpush1.msra.mxu0 0.0
  %5037 = vmatprep.subr.mxu0 0.0
  %5038 = vmatpush1.msra.mxu0 0.0
  %5039 = vmatprep.subr.mxu0 0.0
  %5040 = vmatpush1.msra.mxu0 0.0
  %5041 = vmatprep.mubr.f32.mxu0 0.0
  %5042 = vmatmul.mubr.f32.gmra.mrb[0].mxu0 %v4975
  %v5043 = vpop.f32.mrb[0].mxu0
  %v5044 = vadd.f32 0.0, %v5043
  %v5045 = vpop.f32.mrb[0].mxu0
  %5046 = vdwg.mxu0
  %v5048 = vsel %vm402, %v4369, 0
  %5050 = vmatprep.subr.mxu0 0.0
  %5051 = vmatpush1.msra.mxu0 %v159
  %5052 = vmatprep.subr.mxu0 0.0
  %5053 = vmatpush1.msra.mxu0 %v160
  %5054 = vmatprep.subr.mxu0 0.0
  %5055 = vmatpush1.msra.mxu0 %v161
  %5056 = vmatprep.subr.mxu0 0.0
  %5057 = vmatpush1.msra.mxu0 %v162
  %5058 = vmatprep.subr.mxu0 0.0
  %5059 = vmatpush1.msra.mxu0 %v163
  %5060 = vmatprep.subr.mxu0 0.0
  %5061 = vmatpush1.msra.mxu0 %v164
  %5062 = vmatprep.subr.mxu0 0.0
  %5063 = vmatpush1.msra.mxu0 %v165
  %5064 = vmatprep.subr.mxu0 0.0
  %5065 = vmatpush1.msra.mxu0 %v166
  %5066 = vmatprep.subr.mxu0 0.0
  %5067 = vmatpush1.msra.mxu0 0.0
  %5068 = vmatprep.subr.mxu0 0.0
  %5069 = vmatpush1.msra.mxu0 0.0
  %5070 = vmatprep.subr.mxu0 0.0
  %5071 = vmatpush1.msra.mxu0 0.0
  %5072 = vmatprep.subr.mxu0 0.0
  %5073 = vmatpush1.msra.mxu0 0.0
  %5074 = vmatprep.subr.mxu0 0.0
  %5075 = vmatpush1.msra.mxu0 0.0
  %5076 = vmatprep.subr.mxu0 0.0
  %5077 = vmatpush1.msra.mxu0 0.0
  %5078 = vmatprep.subr.mxu0 0.0
  %5079 = vmatpush1.msra.mxu0 0.0
  %5080 = vmatprep.subr.mxu0 0.0
  %5081 = vmatpush1.msra.mxu0 0.0
  %5082 = vmatprep.subr.mxu0 0.0
  %5083 = vmatpush1.msra.mxu0 0.0
  %5084 = vmatprep.subr.mxu0 0.0
  %5085 = vmatpush1.msra.mxu0 0.0
  %5086 = vmatprep.subr.mxu0 0.0
  %5087 = vmatpush1.msra.mxu0 0.0
  %5088 = vmatprep.subr.mxu0 0.0
  %5089 = vmatpush1.msra.mxu0 0.0
  %5090 = vmatprep.subr.mxu0 0.0
  %5091 = vmatpush1.msra.mxu0 0.0
  %5092 = vmatprep.subr.mxu0 0.0
  %5093 = vmatpush1.msra.mxu0 0.0
  %5094 = vmatprep.subr.mxu0 0.0
  %5095 = vmatpush1.msra.mxu0 0.0
  %5096 = vmatprep.subr.mxu0 0.0
  %5097 = vmatpush1.msra.mxu0 0.0
  %5098 = vmatprep.subr.mxu0 0.0
  %5099 = vmatpush1.msra.mxu0 0.0
  %5100 = vmatprep.subr.mxu0 0.0
  %5101 = vmatpush1.msra.mxu0 0.0
  %5102 = vmatprep.subr.mxu0 0.0
  %5103 = vmatpush1.msra.mxu0 0.0
  %5104 = vmatprep.subr.mxu0 0.0
  %5105 = vmatpush1.msra.mxu0 0.0
  %5106 = vmatprep.subr.mxu0 0.0
  %5107 = vmatpush1.msra.mxu0 0.0
  %5108 = vmatprep.subr.mxu0 0.0
  %5109 = vmatpush1.msra.mxu0 0.0
  %5110 = vmatprep.subr.mxu0 0.0
  %5111 = vmatpush1.msra.mxu0 0.0
  %5112 = vmatprep.subr.mxu0 0.0
  %5113 = vmatpush1.msra.mxu0 0.0
  %5114 = vmatprep.mubr.f32.mxu0 0.0
  %5115 = vmatmul.mubr.f32.gmra.mrb[0].mxu0 %v5048
  %v5116 = vpop.f32.mrb[0].mxu0
  %v5117 = vadd.f32 %v5044, %v5116
  %v5118 = vpop.f32.mrb[0].mxu0
  %5119 = vdwg.mxu0
  %v5120 = vadd.f32 %v5117, %v715
  %v5121 = vmax.f32 %v5120, 0.0
  %v5123 = vsel %vm402, %v5121, 0
  %5125 = vmatprep.subr.mxu0 0.0
  %5126 = vmatpush1.msra.mxu0 %v183
  %5127 = vmatprep.subr.mxu0 0.0
  %5128 = vmatpush1.msra.mxu0 %v184
  %5129 = vmatprep.subr.mxu0 0.0
  %5130 = vmatpush1.msra.mxu0 %v185
  %5131 = vmatprep.subr.mxu0 0.0
  %5132 = vmatpush1.msra.mxu0 %v186
  %5133 = vmatprep.subr.mxu0 0.0
  %5134 = vmatpush1.msra.mxu0 %v187
  %5135 = vmatprep.subr.mxu0 0.0
  %5136 = vmatpush1.msra.mxu0 %v188
  %5137 = vmatprep.subr.mxu0 0.0
  %5138 = vmatpush1.msra.mxu0 %v189
  %5139 = vmatprep.subr.mxu0 0.0
  %5140 = vmatpush1.msra.mxu0 %v190
  %5141 = vmatprep.subr.mxu0 0.0
  %5142 = vmatpush1.msra.mxu0 0.0
  %5143 = vmatprep.subr.mxu0 0.0
  %5144 = vmatpush1.msra.mxu0 0.0
  %5145 = vmatprep.subr.mxu0 0.0
  %5146 = vmatpush1.msra.mxu0 0.0
  %5147 = vmatprep.subr.mxu0 0.0
  %5148 = vmatpush1.msra.mxu0 0.0
  %5149 = vmatprep.subr.mxu0 0.0
  %5150 = vmatpush1.msra.mxu0 0.0
  %5151 = vmatprep.subr.mxu0 0.0
  %5152 = vmatpush1.msra.mxu0 0.0
  %5153 = vmatprep.subr.mxu0 0.0
  %5154 = vmatpush1.msra.mxu0 0.0
  %5155 = vmatprep.subr.mxu0 0.0
  %5156 = vmatpush1.msra.mxu0 0.0
  %5157 = vmatprep.subr.mxu0 0.0
  %5158 = vmatpush1.msra.mxu0 0.0
  %5159 = vmatprep.subr.mxu0 0.0
  %5160 = vmatpush1.msra.mxu0 0.0
  %5161 = vmatprep.subr.mxu0 0.0
  %5162 = vmatpush1.msra.mxu0 0.0
  %5163 = vmatprep.subr.mxu0 0.0
  %5164 = vmatpush1.msra.mxu0 0.0
  %5165 = vmatprep.subr.mxu0 0.0
  %5166 = vmatpush1.msra.mxu0 0.0
  %5167 = vmatprep.subr.mxu0 0.0
  %5168 = vmatpush1.msra.mxu0 0.0
  %5169 = vmatprep.subr.mxu0 0.0
  %5170 = vmatpush1.msra.mxu0 0.0
  %5171 = vmatprep.subr.mxu0 0.0
  %5172 = vmatpush1.msra.mxu0 0.0
  %5173 = vmatprep.subr.mxu0 0.0
  %5174 = vmatpush1.msra.mxu0 0.0
  %5175 = vmatprep.subr.mxu0 0.0
  %5176 = vmatpush1.msra.mxu0 0.0
  %5177 = vmatprep.subr.mxu0 0.0
  %5178 = vmatpush1.msra.mxu0 0.0
  %5179 = vmatprep.subr.mxu0 0.0
  %5180 = vmatpush1.msra.mxu0 0.0
  %5181 = vmatprep.subr.mxu0 0.0
  %5182 = vmatpush1.msra.mxu0 0.0
  %5183 = vmatprep.subr.mxu0 0.0
  %5184 = vmatpush1.msra.mxu0 0.0
  %5185 = vmatprep.subr.mxu0 0.0
  %5186 = vmatpush1.msra.mxu0 0.0
  %5187 = vmatprep.subr.mxu0 0.0
  %5188 = vmatpush1.msra.mxu0 0.0
  %5189 = vmatprep.mubr.f32.mxu0 0.0
  %5190 = vmatmul.mubr.f32.gmra.mrb[0].mxu0 %v5123
  %v5191 = vpop.f32.mrb[0].mxu0
  %v5192 = vadd.f32 %v320, %v5191
  %v5193 = vpop.f32.mrb[0].mxu0
  %5194 = vdwg.mxu0
  %v5195 = vmax.f32 %v5192, 0.0
  %v5196 = vpack.c.bf16 %v5195, %v5195
  %v5198 = vsel %vm731, %v5196, 0
  %5200 = vmatprep.subr.bf16.mxu0 0
  %5201 = vmatpush1.bf16.msra.mxu0 %v5198
  %5202 = vmatprep.subr.bf16.mxu0 0
  %5203 = vmatpush1.bf16.msra.mxu0 0
  %5204 = vmatprep.subr.bf16.mxu0 0
  %5205 = vmatpush1.bf16.msra.mxu0 0
  %5206 = vmatprep.subr.bf16.mxu0 0
  %5207 = vmatpush1.bf16.msra.mxu0 0
  %5208 = vmatprep.subr.bf16.mxu0 0
  %5209 = vmatpush1.bf16.msra.mxu0 0
  %5210 = vmatprep.subr.bf16.mxu0 0
  %5211 = vmatpush1.bf16.msra.mxu0 0
  %5212 = vmatprep.subr.bf16.mxu0 0
  %5213 = vmatpush1.bf16.msra.mxu0 0
  %5214 = vmatprep.subr.bf16.mxu0 0
  %5215 = vmatpush1.bf16.msra.mxu0 0
  %5216 = vmatprep.subr.bf16.mxu0 0
  %5217 = vmatpush1.bf16.msra.mxu0 0
  %5218 = vmatprep.subr.bf16.mxu0 0
  %5219 = vmatpush1.bf16.msra.mxu0 0
  %5220 = vmatprep.subr.bf16.mxu0 0
  %5221 = vmatpush1.bf16.msra.mxu0 0
  %5222 = vmatprep.subr.bf16.mxu0 0
  %5223 = vmatpush1.bf16.msra.mxu0 0
  %5224 = vmatprep.subr.bf16.mxu0 0
  %5225 = vmatpush1.bf16.msra.mxu0 0
  %5226 = vmatprep.subr.bf16.mxu0 0
  %5227 = vmatpush1.bf16.msra.mxu0 0
  %5228 = vmatprep.subr.bf16.mxu0 0
  %5229 = vmatpush1.bf16.msra.mxu0 0
  %5230 = vmatprep.subr.bf16.mxu0 0
  %5231 = vmatpush1.bf16.msra.mxu0 0
  %5232 = vmatprep.mubr.bf16.mxu0 0
  %5233 = vmatmul.mubr.bf16.gmra.mrb[0].mxu0 %v726
  %v5234 = vpop.f32.mrb[0].mxu0
  %v5235 = vadd.f32 0.0, %v5234
  %v5236 = vpop.f32.mrb[0].mxu0
  %v5237 = vpop.f32.mrb[0].mxu0
  %v5238 = vadd.f32 0.0, %v5237
  %v5239 = vpop.f32.mrb[0].mxu0
  %5240 = vmatprep.mubr.bf16.mxu0 0
  %5241 = vmatmul.mubr.bf16.gmra.mrb[0].mxu0 %v729
  %v5242 = vpop.f32.mrb[0].mxu0
  %v5243 = vadd.f32 0.0, %v5242
  %v5244 = vpop.f32.mrb[0].mxu0
  %v5245 = vpop.f32.mrb[0].mxu0
  %v5246 = vadd.f32 0.0, %v5245
  %v5247 = vpop.f32.mrb[0].mxu0
  %5248 = vdwg.mxu0
  %v5250 = vsel %vm402, %v5235, 0
  %v5253 = vsel %vm402, %v5238, 0
  %5255 = vmatprep.subr.mxu0 0.0
  %5256 = vmatpush1.msra.mxu0 %v271
  %5257 = vmatprep.subr.mxu0 0.0
  %5258 = vmatpush1.msra.mxu0 %v272
  %5259 = vmatprep.subr.mxu0 0.0
  %5260 = vmatpush1.msra.mxu0 %v273
  %5261 = vmatprep.subr.mxu0 0.0
  %5262 = vmatpush1.msra.mxu0 %v274
  %5263 = vmatprep.subr.mxu0 0.0
  %5264 = vmatpush1.msra.mxu0 %v275
  %5265 = vmatprep.subr.mxu0 0.0
  %5266 = vmatpush1.msra.mxu0 %v276
  %5267 = vmatprep.subr.mxu0 0.0
  %5268 = vmatpush1.msra.mxu0 %v277
  %5269 = vmatprep.subr.mxu0 0.0
  %5270 = vmatpush1.msra.mxu0 %v278
  %5271 = vmatprep.subr.mxu0 0.0
  %5272 = vmatpush1.msra.mxu0 0.0
  %5273 = vmatprep.subr.mxu0 0.0
  %5274 = vmatpush1.msra.mxu0 0.0
  %5275 = vmatprep.subr.mxu0 0.0
  %5276 = vmatpush1.msra.mxu0 0.0
  %5277 = vmatprep.subr.mxu0 0.0
  %5278 = vmatpush1.msra.mxu0 0.0
  %5279 = vmatprep.subr.mxu0 0.0
  %5280 = vmatpush1.msra.mxu0 0.0
  %5281 = vmatprep.subr.mxu0 0.0
  %5282 = vmatpush1.msra.mxu0 0.0
  %5283 = vmatprep.subr.mxu0 0.0
  %5284 = vmatpush1.msra.mxu0 0.0
  %5285 = vmatprep.subr.mxu0 0.0
  %5286 = vmatpush1.msra.mxu0 0.0
  %5287 = vmatprep.subr.mxu0 0.0
  %5288 = vmatpush1.msra.mxu0 0.0
  %5289 = vmatprep.subr.mxu0 0.0
  %5290 = vmatpush1.msra.mxu0 0.0
  %5291 = vmatprep.subr.mxu0 0.0
  %5292 = vmatpush1.msra.mxu0 0.0
  %5293 = vmatprep.subr.mxu0 0.0
  %5294 = vmatpush1.msra.mxu0 0.0
  %5295 = vmatprep.subr.mxu0 0.0
  %5296 = vmatpush1.msra.mxu0 0.0
  %5297 = vmatprep.subr.mxu0 0.0
  %5298 = vmatpush1.msra.mxu0 0.0
  %5299 = vmatprep.subr.mxu0 0.0
  %5300 = vmatpush1.msra.mxu0 0.0
  %5301 = vmatprep.subr.mxu0 0.0
  %5302 = vmatpush1.msra.mxu0 0.0
  %5303 = vmatprep.subr.mxu0 0.0
  %5304 = vmatpush1.msra.mxu0 0.0
  %5305 = vmatprep.subr.mxu0 0.0
  %5306 = vmatpush1.msra.mxu0 0.0
  %5307 = vmatprep.subr.mxu0 0.0
  %5308 = vmatpush1.msra.mxu0 0.0
  %5309 = vmatprep.subr.mxu0 0.0
  %5310 = vmatpush1.msra.mxu0 0.0
  %5311 = vmatprep.subr.mxu0 0.0
  %5312 = vmatpush1.msra.mxu0 0.0
  %5313 = vmatprep.subr.mxu0 0.0
  %5314 = vmatpush1.msra.mxu0 0.0
  %5315 = vmatprep.subr.mxu0 0.0
  %5316 = vmatpush1.msra.mxu0 0.0
  %5317 = vmatprep.subr.mxu0 0.0
  %5318 = vmatpush1.msra.mxu0 0.0
  %5319 = vmatprep.mubr.f32.mxu0 0.0
  %5320 = vmatmul.mubr.f32.gmra.mrb[0].mxu0 %v5250
  %v5321 = vpop.f32.mrb[0].mxu0
  %v5322 = vadd.f32 0.0, %v5321
  %v5323 = vpop.f32.mrb[0].mxu0
  %5324 = vmatprep.mubr.f32.mxu0 0.0
  %5325 = vmatmul.mubr.f32.gmra.mrb[0].mxu0 %v5253
  %v5326 = vpop.f32.mrb[0].mxu0
  %v5327 = vadd.f32 0.0, %v5326
  %v5328 = vpop.f32.mrb[0].mxu0
  %5329 = vdwg.mxu0
  %v5331 = vsel %vm402, %v5243, 0
  %v5334 = vsel %vm402, %v5246, 0
  %5336 = vmatprep.subr.mxu0 0.0
  %5337 = vmatpush1.msra.mxu0 %v95
  %5338 = vmatprep.subr.mxu0 0.0
  %5339 = vmatpush1.msra.mxu0 %v96
  %5340 = vmatprep.subr.mxu0 0.0
  %5341 = vmatpush1.msra.mxu0 %v97
  %5342 = vmatprep.subr.mxu0 0.0
  %5343 = vmatpush1.msra.mxu0 %v98
  %5344 = vmatprep.subr.mxu0 0.0
  %5345 = vmatpush1.msra.mxu0 %v99
  %5346 = vmatprep.subr.mxu0 0.0
  %5347 = vmatpush1.msra.mxu0 %v100
  %5348 = vmatprep.subr.mxu0 0.0
  %5349 = vmatpush1.msra.mxu0 %v101
  %5350 = vmatprep.subr.mxu0 0.0
  %5351 = vmatpush1.msra.mxu0 %v102
  %5352 = vmatprep.subr.mxu0 0.0
  %5353 = vmatpush1.msra.mxu0 0.0
  %5354 = vmatprep.subr.mxu0 0.0
  %5355 = vmatpush1.msra.mxu0 0.0
  %5356 = vmatprep.subr.mxu0 0.0
  %5357 = vmatpush1.msra.mxu0 0.0
  %5358 = vmatprep.subr.mxu0 0.0
  %5359 = vmatpush1.msra.mxu0 0.0
  %5360 = vmatprep.subr.mxu0 0.0
  %5361 = vmatpush1.msra.mxu0 0.0
  %5362 = vmatprep.subr.mxu0 0.0
  %5363 = vmatpush1.msra.mxu0 0.0
  %5364 = vmatprep.subr.mxu0 0.0
  %5365 = vmatpush1.msra.mxu0 0.0
  %5366 = vmatprep.subr.mxu0 0.0
  %5367 = vmatpush1.msra.mxu0 0.0
  %5368 = vmatprep.subr.mxu0 0.0
  %5369 = vmatpush1.msra.mxu0 0.0
  %5370 = vmatprep.subr.mxu0 0.0
  %5371 = vmatpush1.msra.mxu0 0.0
  %5372 = vmatprep.subr.mxu0 0.0
  %5373 = vmatpush1.msra.mxu0 0.0
  %5374 = vmatprep.subr.mxu0 0.0
  %5375 = vmatpush1.msra.mxu0 0.0
  %5376 = vmatprep.subr.mxu0 0.0
  %5377 = vmatpush1.msra.mxu0 0.0
  %5378 = vmatprep.subr.mxu0 0.0
  %5379 = vmatpush1.msra.mxu0 0.0
  %5380 = vmatprep.subr.mxu0 0.0
  %5381 = vmatpush1.msra.mxu0 0.0
  %5382 = vmatprep.subr.mxu0 0.0
  %5383 = vmatpush1.msra.mxu0 0.0
  %5384 = vmatprep.subr.mxu0 0.0
  %5385 = vmatpush1.msra.mxu0 0.0
  %5386 = vmatprep.subr.mxu0 0.0
  %5387 = vmatpush1.msra.mxu0 0.0
  %5388 = vmatprep.subr.mxu0 0.0
  %5389 = vmatpush1.msra.mxu0 0.0
  %5390 = vmatprep.subr.mxu0 0.0
  %5391 = vmatpush1.msra.mxu0 0.0
  %5392 = vmatprep.subr.mxu0 0.0
  %5393 = vmatpush1.msra.mxu0 0.0
  %5394 = vmatprep.subr.mxu0 0.0
  %5395 = vmatpush1.msra.mxu0 0.0
  %5396 = vmatprep.subr.mxu0 0.0
  %5397 = vmatpush1.msra.mxu0 0.0
  %5398 = vmatprep.subr.mxu0 0.0
  %5399 = vmatpush1.msra.mxu0 0.0
  %5400 = vmatprep.mubr.f32.mxu0 0.0
  %5401 = vmatmul.mubr.f32.gmra.mrb[0].mxu0 %v5331
  %v5402 = vpop.f32.mrb[0].mxu0
  %v5403 = vadd.f32 0.0, %v5402
  %v5404 = vpop.f32.mrb[0].mxu0
  %5405 = vmatprep.mubr.f32.mxu0 0.0
  %5406 = vmatmul.mubr.f32.gmra.mrb[0].mxu0 %v5334
  %v5407 = vpop.f32.mrb[0].mxu0
  %v5408 = vadd.f32 0.0, %v5407
  %v5409 = vpop.f32.mrb[0].mxu0
  %5410 = vdwg.mxu0
  %v5411 = vadd.f32 %v5322, %v5403
  %v5412 = vadd.f32 %v5327, %v5408
  %5413 = vmatprep.subr.mxu0 0.0
  %5414 = vmatpush1.msra.mxu0 %v111
  %5415 = vmatprep.subr.mxu0 0.0
  %5416 = vmatpush1.msra.mxu0 %v112
  %5417 = vmatprep.subr.mxu0 0.0
  %5418 = vmatpush1.msra.mxu0 %v113
  %5419 = vmatprep.subr.mxu0 0.0
  %5420 = vmatpush1.msra.mxu0 %v114
  %5421 = vmatprep.subr.mxu0 0.0
  %5422 = vmatpush1.msra.mxu0 %v115
  %5423 = vmatprep.subr.mxu0 0.0
  %5424 = vmatpush1.msra.mxu0 %v116
  %5425 = vmatprep.subr.mxu0 0.0
  %5426 = vmatpush1.msra.mxu0 %v117
  %5427 = vmatprep.subr.mxu0 0.0
  %5428 = vmatpush1.msra.mxu0 %v118
  %5429 = vmatprep.subr.mxu0 0.0
  %5430 = vmatpush1.msra.mxu0 0.0
  %5431 = vmatprep.subr.mxu0 0.0
  %5432 = vmatpush1.msra.mxu0 0.0
  %5433 = vmatprep.subr.mxu0 0.0
  %5434 = vmatpush1.msra.mxu0 0.0
  %5435 = vmatprep.subr.mxu0 0.0
  %5436 = vmatpush1.msra.mxu0 0.0
  %5437 = vmatprep.subr.mxu0 0.0
  %5438 = vmatpush1.msra.mxu0 0.0
  %5439 = vmatprep.subr.mxu0 0.0
  %5440 = vmatpush1.msra.mxu0 0.0
  %5441 = vmatprep.subr.mxu0 0.0
  %5442 = vmatpush1.msra.mxu0 0.0
  %5443 = vmatprep.subr.mxu0 0.0
  %5444 = vmatpush1.msra.mxu0 0.0
  %5445 = vmatprep.subr.mxu0 0.0
  %5446 = vmatpush1.msra.mxu0 0.0
  %5447 = vmatprep.subr.mxu0 0.0
  %5448 = vmatpush1.msra.mxu0 0.0
  %5449 = vmatprep.subr.mxu0 0.0
  %5450 = vmatpush1.msra.mxu0 0.0
  %5451 = vmatprep.subr.mxu0 0.0
  %5452 = vmatpush1.msra.mxu0 0.0
  %5453 = vmatprep.subr.mxu0 0.0
  %5454 = vmatpush1.msra.mxu0 0.0
  %5455 = vmatprep.subr.mxu0 0.0
  %5456 = vmatpush1.msra.mxu0 0.0
  %5457 = vmatprep.subr.mxu0 0.0
  %5458 = vmatpush1.msra.mxu0 0.0
  %5459 = vmatprep.subr.mxu0 0.0
  %5460 = vmatpush1.msra.mxu0 0.0
  %5461 = vmatprep.subr.mxu0 0.0
  %5462 = vmatpush1.msra.mxu0 0.0
  %5463 = vmatprep.subr.mxu0 0.0
  %5464 = vmatpush1.msra.mxu0 0.0
  %5465 = vmatprep.subr.mxu0 0.0
  %5466 = vmatpush1.msra.mxu0 0.0
  %5467 = vmatprep.subr.mxu0 0.0
  %5468 = vmatpush1.msra.mxu0 0.0
  %5469 = vmatprep.subr.mxu0 0.0
  %5470 = vmatpush1.msra.mxu0 0.0
  %5471 = vmatprep.subr.mxu0 0.0
  %5472 = vmatpush1.msra.mxu0 0.0
  %5473 = vmatprep.subr.mxu0 0.0
  %5474 = vmatpush1.msra.mxu0 0.0
  %5475 = vmatprep.subr.mxu0 0.0
  %5476 = vmatpush1.msra.mxu0 0.0
  %5477 = vmatprep.mubr.f32.mxu0 0.0
  %5478 = vmatmul.mubr.f32.gmra.mrb[0].mxu0 %v4752
  %v5479 = vpop.f32.mrb[0].mxu0
  %v5480 = vadd.f32 0.0, %v5479
  %v5481 = vpop.f32.mrb[0].mxu0
  %5482 = vmatprep.mubr.f32.mxu0 0.0
  %5483 = vmatmul.mubr.f32.gmra.mrb[0].mxu0 %v4755
  %v5484 = vpop.f32.mrb[0].mxu0
  %v5485 = vadd.f32 0.0, %v5484
  %v5486 = vpop.f32.mrb[0].mxu0
  %5487 = vdwg.mxu0
  %v5488 = vadd.f32 %v5411, %v5480
  %v5489 = vadd.f32 %v5412, %v5485
  %v5490 = vadd.f32 %v5488, %v1029
  %v5491 = vadd.f32 %v5489, %v1030
  %v5492 = vmax.f32 %v5490, 0.0
  %v5493 = vmax.f32 %v5491, 0.0
  %v5495 = vsel %vm402, %v5492, 0
  %v5498 = vsel %vm402, %v5493, 0
  %5500 = vmatprep.subr.mxu0 0.0
  %5501 = vmatpush1.msra.mxu0 %v127
  %5502 = vmatprep.subr.mxu0 0.0
  %5503 = vmatpush1.msra.mxu0 %v128
  %5504 = vmatprep.subr.mxu0 0.0
  %5505 = vmatpush1.msra.mxu0 %v129
  %5506 = vmatprep.subr.mxu0 0.0
  %5507 = vmatpush1.msra.mxu0 %v130
  %5508 = vmatprep.subr.mxu0 0.0
  %5509 = vmatpush1.msra.mxu0 %v131
  %5510 = vmatprep.subr.mxu0 0.0
  %5511 = vmatpush1.msra.mxu0 %v132
  %5512 = vmatprep.subr.mxu0 0.0
  %5513 = vmatpush1.msra.mxu0 %v133
  %5514 = vmatprep.subr.mxu0 0.0
  %5515 = vmatpush1.msra.mxu0 %v134
  %5516 = vmatprep.subr.mxu0 0.0
  %5517 = vmatpush1.msra.mxu0 0.0
  %5518 = vmatprep.subr.mxu0 0.0
  %5519 = vmatpush1.msra.mxu0 0.0
  %5520 = vmatprep.subr.mxu0 0.0
  %5521 = vmatpush1.msra.mxu0 0.0
  %5522 = vmatprep.subr.mxu0 0.0
  %5523 = vmatpush1.msra.mxu0 0.0
  %5524 = vmatprep.subr.mxu0 0.0
  %5525 = vmatpush1.msra.mxu0 0.0
  %5526 = vmatprep.subr.mxu0 0.0
  %5527 = vmatpush1.msra.mxu0 0.0
  %5528 = vmatprep.subr.mxu0 0.0
  %5529 = vmatpush1.msra.mxu0 0.0
  %5530 = vmatprep.subr.mxu0 0.0
  %5531 = vmatpush1.msra.mxu0 0.0
  %5532 = vmatprep.subr.mxu0 0.0
  %5533 = vmatpush1.msra.mxu0 0.0
  %5534 = vmatprep.subr.mxu0 0.0
  %5535 = vmatpush1.msra.mxu0 0.0
  %5536 = vmatprep.subr.mxu0 0.0
  %5537 = vmatpush1.msra.mxu0 0.0
  %5538 = vmatprep.subr.mxu0 0.0
  %5539 = vmatpush1.msra.mxu0 0.0
  %5540 = vmatprep.subr.mxu0 0.0
  %5541 = vmatpush1.msra.mxu0 0.0
  %5542 = vmatprep.subr.mxu0 0.0
  %5543 = vmatpush1.msra.mxu0 0.0
  %5544 = vmatprep.subr.mxu0 0.0
  %5545 = vmatpush1.msra.mxu0 0.0
  %5546 = vmatprep.subr.mxu0 0.0
  %5547 = vmatpush1.msra.mxu0 0.0
  %5548 = vmatprep.subr.mxu0 0.0
  %5549 = vmatpush1.msra.mxu0 0.0
  %5550 = vmatprep.subr.mxu0 0.0
  %5551 = vmatpush1.msra.mxu0 0.0
  %5552 = vmatprep.subr.mxu0 0.0
  %5553 = vmatpush1.msra.mxu0 0.0
  %5554 = vmatprep.subr.mxu0 0.0
  %5555 = vmatpush1.msra.mxu0 0.0
  %5556 = vmatprep.subr.mxu0 0.0
  %5557 = vmatpush1.msra.mxu0 0.0
  %5558 = vmatprep.subr.mxu0 0.0
  %5559 = vmatpush1.msra.mxu0 0.0
  %5560 = vmatprep.subr.mxu0 0.0
  %5561 = vmatpush1.msra.mxu0 0.0
  %5562 = vmatprep.subr.mxu0 0.0
  %5563 = vmatpush1.msra.mxu0 0.0
  %5564 = vmatprep.mubr.f32.mxu0 0.0
  %5565 = vmatmul.mubr.f32.gmra.mrb[0].mxu0 %v5495
  %v5566 = vpop.f32.mrb[0].mxu0
  %v5567 = vadd.f32 %v316, %v5566
  %v5568 = vpop.f32.mrb[0].mxu0
  %5569 = vmatprep.mubr.f32.mxu0 0.0
  %5570 = vmatmul.mubr.f32.gmra.mrb[0].mxu0 %v5498
  %v5571 = vpop.f32.mrb[0].mxu0
  %v5572 = vadd.f32 %v316, %v5571
  %v5573 = vpop.f32.mrb[0].mxu0
  %5574 = vdwg.mxu0
  %v5575 = vmax.f32 %v5567, 0.0
  %v5576 = vmax.f32 %v5572, 0.0
  %v5578 = vsel %vm402, %v5575, 0
  %v5581 = vsel %vm402, %v5576, 0
  %5583 = vmatprep.subr.mxu0 0.0
  %5584 = vmatpush1.msra.mxu0 %v143
  %5585 = vmatprep.subr.mxu0 0.0
  %5586 = vmatpush1.msra.mxu0 %v144
  %5587 = vmatprep.subr.mxu0 0.0
  %5588 = vmatpush1.msra.mxu0 %v145
  %5589 = vmatprep.subr.mxu0 0.0
  %5590 = vmatpush1.msra.mxu0 %v146
  %5591 = vmatprep.subr.mxu0 0.0
  %5592 = vmatpush1.msra.mxu0 %v147
  %5593 = vmatprep.subr.mxu0 0.0
  %5594 = vmatpush1.msra.mxu0 %v148
  %5595 = vmatprep.subr.mxu0 0.0
  %5596 = vmatpush1.msra.mxu0 %v149
  %5597 = vmatprep.subr.mxu0 0.0
  %5598 = vmatpush1.msra.mxu0 %v150
  %5599 = vmatprep.subr.mxu0 0.0
  %5600 = vmatpush1.msra.mxu0 0.0
  %5601 = vmatprep.subr.mxu0 0.0
  %5602 = vmatpush1.msra.mxu0 0.0
  %5603 = vmatprep.subr.mxu0 0.0
  %5604 = vmatpush1.msra.mxu0 0.0
  %5605 = vmatprep.subr.mxu0 0.0
  %5606 = vmatpush1.msra.mxu0 0.0
  %5607 = vmatprep.subr.mxu0 0.0
  %5608 = vmatpush1.msra.mxu0 0.0
  %5609 = vmatprep.subr.mxu0 0.0
  %5610 = vmatpush1.msra.mxu0 0.0
  %5611 = vmatprep.subr.mxu0 0.0
  %5612 = vmatpush1.msra.mxu0 0.0
  %5613 = vmatprep.subr.mxu0 0.0
  %5614 = vmatpush1.msra.mxu0 0.0
  %5615 = vmatprep.subr.mxu0 0.0
  %5616 = vmatpush1.msra.mxu0 0.0
  %5617 = vmatprep.subr.mxu0 0.0
  %5618 = vmatpush1.msra.mxu0 0.0
  %5619 = vmatprep.subr.mxu0 0.0
  %5620 = vmatpush1.msra.mxu0 0.0
  %5621 = vmatprep.subr.mxu0 0.0
  %5622 = vmatpush1.msra.mxu0 0.0
  %5623 = vmatprep.subr.mxu0 0.0
  %5624 = vmatpush1.msra.mxu0 0.0
  %5625 = vmatprep.subr.mxu0 0.0
  %5626 = vmatpush1.msra.mxu0 0.0
  %5627 = vmatprep.subr.mxu0 0.0
  %5628 = vmatpush1.msra.mxu0 0.0
  %5629 = vmatprep.subr.mxu0 0.0
  %5630 = vmatpush1.msra.mxu0 0.0
  %5631 = vmatprep.subr.mxu0 0.0
  %5632 = vmatpush1.msra.mxu0 0.0
  %5633 = vmatprep.subr.mxu0 0.0
  %5634 = vmatpush1.msra.mxu0 0.0
  %5635 = vmatprep.subr.mxu0 0.0
  %5636 = vmatpush1.msra.mxu0 0.0
  %5637 = vmatprep.subr.mxu0 0.0
  %5638 = vmatpush1.msra.mxu0 0.0
  %5639 = vmatprep.subr.mxu0 0.0
  %5640 = vmatpush1.msra.mxu0 0.0
  %5641 = vmatprep.subr.mxu0 0.0
  %5642 = vmatpush1.msra.mxu0 0.0
  %5643 = vmatprep.subr.mxu0 0.0
  %5644 = vmatpush1.msra.mxu0 0.0
  %5645 = vmatprep.subr.mxu0 0.0
  %5646 = vmatpush1.msra.mxu0 0.0
  %5647 = vmatprep.mubr.f32.mxu0 0.0
  %5648 = vmatmul.mubr.f32.gmra.mrb[0].mxu0 %v5578
  %v5649 = vpop.f32.mrb[0].mxu0
  %v5650 = vadd.f32 0.0, %v5649
  %v5651 = vpop.f32.mrb[0].mxu0
  %5652 = vmatprep.mubr.f32.mxu0 0.0
  %5653 = vmatmul.mubr.f32.gmra.mrb[0].mxu0 %v5581
  %v5654 = vpop.f32.mrb[0].mxu0
  %v5655 = vadd.f32 0.0, %v5654
  %v5656 = vpop.f32.mrb[0].mxu0
  %5657 = vdwg.mxu0
  %5660 = vrot.lane.b32.xlu0 %v5650, 64
  %v5661 = vpop.permute.xlu0 %5660
  %5662 = vrot.lane.b32.xlu0 %v5655, 64
  %v5663 = vpop.permute.xlu0 %5662
  %v5666 = vadd.f32 %v5322, %v5661
  %v5667 = vadd.f32 %v5327, %v5663
  %v5668 = vadd.f32 %v5666, %v1516
  %v5669 = vadd.f32 %v5667, %v1518
  %v5670 = vmax.f32 %v5668, 0.0
  %v5671 = vmax.f32 %v5669, 0.0
  %5674 = vrot.lane.b32.xlu0 %v5670, 64
  %v5675 = vpop.permute.xlu0 %5674
  %5676 = vrot.lane.b32.xlu0 %v5671, 64
  %v5677 = vpop.permute.xlu0 %5676
  %v5678 = vsel %vm402, %v5675, 0
  %v5680 = vsel %vm402, %v5677, 0
  %5682 = vmatprep.subr.mxu0 0.0
  %5683 = vmatpush1.msra.mxu0 %v151
  %5684 = vmatprep.subr.mxu0 0.0
  %5685 = vmatpush1.msra.mxu0 %v152
  %5686 = vmatprep.subr.mxu0 0.0
  %5687 = vmatpush1.msra.mxu0 %v153
  %5688 = vmatprep.subr.mxu0 0.0
  %5689 = vmatpush1.msra.mxu0 %v154
  %5690 = vmatprep.subr.mxu0 0.0
  %5691 = vmatpush1.msra.mxu0 %v155
  %5692 = vmatprep.subr.mxu0 0.0
  %5693 = vmatpush1.msra.mxu0 %v156
  %5694 = vmatprep.subr.mxu0 0.0
  %5695 = vmatpush1.msra.mxu0 %v157
  %5696 = vmatprep.subr.mxu0 0.0
  %5697 = vmatpush1.msra.mxu0 %v158
  %5698 = vmatprep.subr.mxu0 0.0
  %5699 = vmatpush1.msra.mxu0 0.0
  %5700 = vmatprep.subr.mxu0 0.0
  %5701 = vmatpush1.msra.mxu0 0.0
  %5702 = vmatprep.subr.mxu0 0.0
  %5703 = vmatpush1.msra.mxu0 0.0
  %5704 = vmatprep.subr.mxu0 0.0
  %5705 = vmatpush1.msra.mxu0 0.0
  %5706 = vmatprep.subr.mxu0 0.0
  %5707 = vmatpush1.msra.mxu0 0.0
  %5708 = vmatprep.subr.mxu0 0.0
  %5709 = vmatpush1.msra.mxu0 0.0
  %5710 = vmatprep.subr.mxu0 0.0
  %5711 = vmatpush1.msra.mxu0 0.0
  %5712 = vmatprep.subr.mxu0 0.0
  %5713 = vmatpush1.msra.mxu0 0.0
  %5714 = vmatprep.subr.mxu0 0.0
  %5715 = vmatpush1.msra.mxu0 0.0
  %5716 = vmatprep.subr.mxu0 0.0
  %5717 = vmatpush1.msra.mxu0 0.0
  %5718 = vmatprep.subr.mxu0 0.0
  %5719 = vmatpush1.msra.mxu0 0.0
  %5720 = vmatprep.subr.mxu0 0.0
  %5721 = vmatpush1.msra.mxu0 0.0
  %5722 = vmatprep.subr.mxu0 0.0
  %5723 = vmatpush1.msra.mxu0 0.0
  %5724 = vmatprep.subr.mxu0 0.0
  %5725 = vmatpush1.msra.mxu0 0.0
  %5726 = vmatprep.subr.mxu0 0.0
  %5727 = vmatpush1.msra.mxu0 0.0
  %5728 = vmatprep.subr.mxu0 0.0
  %5729 = vmatpush1.msra.mxu0 0.0
  %5730 = vmatprep.subr.mxu0 0.0
  %5731 = vmatpush1.msra.mxu0 0.0
  %5732 = vmatprep.subr.mxu0 0.0
  %5733 = vmatpush1.msra.mxu0 0.0
  %5734 = vmatprep.subr.mxu0 0.0
  %5735 = vmatpush1.msra.mxu0 0.0
  %5736 = vmatprep.subr.mxu0 0.0
  %5737 = vmatpush1.msra.mxu0 0.0
  %5738 = vmatprep.subr.mxu0 0.0
  %5739 = vmatpush1.msra.mxu0 0.0
  %5740 = vmatprep.subr.mxu0 0.0
  %5741 = vmatpush1.msra.mxu0 0.0
  %5742 = vmatprep.subr.mxu0 0.0
  %5743 = vmatpush1.msra.mxu0 0.0
  %5744 = vmatprep.subr.mxu0 0.0
  %5745 = vmatpush1.msra.mxu0 0.0
  %5746 = vmatprep.mubr.f32.mxu0 0.0
  %5747 = vmatmul.mubr.f32.gmra.mrb[0].mxu0 %v5678
  %v5748 = vpop.f32.mrb[0].mxu0
  %v5749 = vadd.f32 %v318, %v5748
  %v5750 = vpop.f32.mrb[0].mxu0
  %5751 = vmatprep.mubr.f32.mxu0 0.0
  %5752 = vmatmul.mubr.f32.gmra.mrb[0].mxu0 %v5680
  %v5753 = vpop.f32.mrb[0].mxu0
  %v5754 = vadd.f32 %v318, %v5753
  %v5755 = vpop.f32.mrb[0].mxu0
  %5756 = vdwg.mxu0
  %v5757 = vmax.f32 %v5749, 0.0
  %v5758 = vmax.f32 %v5754, 0.0
  %v5759 = vpack.c.bf16 %v5758, %v5757
  %5760 = vmatprep.subr.bf16.mxu0 0
  %5761 = vmatpush1.bf16.msra.mxu0 %v5759
  %5762 = vmatprep.subr.bf16.mxu0 0
  %5763 = vmatpush1.bf16.msra.mxu0 0
  %5764 = vmatprep.subr.bf16.mxu0 0
  %5765 = vmatpush1.bf16.msra.mxu0 0
  %5766 = vmatprep.subr.bf16.mxu0 0
  %5767 = vmatpush1.bf16.msra.mxu0 0
  %5768 = vmatprep.subr.bf16.mxu0 0
  %5769 = vmatpush1.bf16.msra.mxu0 0
  %5770 = vmatprep.subr.bf16.mxu0 0
  %5771 = vmatpush1.bf16.msra.mxu0 0
  %5772 = vmatprep.subr.bf16.mxu0 0
  %5773 = vmatpush1.bf16.msra.mxu0 0
  %5774 = vmatprep.subr.bf16.mxu0 0
  %5775 = vmatpush1.bf16.msra.mxu0 0
  %5776 = vmatprep.subr.bf16.mxu0 0
  %5777 = vmatpush1.bf16.msra.mxu0 0
  %5778 = vmatprep.subr.bf16.mxu0 0
  %5779 = vmatpush1.bf16.msra.mxu0 0
  %5780 = vmatprep.subr.bf16.mxu0 0
  %5781 = vmatpush1.bf16.msra.mxu0 0
  %5782 = vmatprep.subr.bf16.mxu0 0
  %5783 = vmatpush1.bf16.msra.mxu0 0
  %5784 = vmatprep.subr.bf16.mxu0 0
  %5785 = vmatpush1.bf16.msra.mxu0 0
  %5786 = vmatprep.subr.bf16.mxu0 0
  %5787 = vmatpush1.bf16.msra.mxu0 0
  %5788 = vmatprep.subr.bf16.mxu0 0
  %5789 = vmatpush1.bf16.msra.mxu0 0
  %5790 = vmatprep.subr.bf16.mxu0 0
  %5791 = vmatpush1.bf16.msra.mxu0 0
  %5792 = vmatprep.mubr.bf16.mxu0 0
  %5793 = vmatmul.mubr.bf16.gmra.mrb[0].mxu0 %v1631
  %v5794 = vpop.f32.mrb[0].mxu0
  %v5795 = vadd.f32 0.0, %v5794
  %v5796 = vpop.f32.mrb[0].mxu0
  %v5797 = vpop.f32.mrb[0].mxu0
  %v5798 = vpop.f32.mrb[0].mxu0
  %5799 = vdwg.mxu0
  %v5801 = vsel %vm402, %v5795, 0
  %5803 = vmatprep.subr.mxu0 0.0
  %5804 = vmatpush1.msra.mxu0 %v175
  %5805 = vmatprep.subr.mxu0 0.0
  %5806 = vmatpush1.msra.mxu0 %v176
  %5807 = vmatprep.subr.mxu0 0.0
  %5808 = vmatpush1.msra.mxu0 %v177
  %5809 = vmatprep.subr.mxu0 0.0
  %5810 = vmatpush1.msra.mxu0 %v178
  %5811 = vmatprep.subr.mxu0 0.0
  %5812 = vmatpush1.msra.mxu0 %v179
  %5813 = vmatprep.subr.mxu0 0.0
  %5814 = vmatpush1.msra.mxu0 %v180
  %5815 = vmatprep.subr.mxu0 0.0
  %5816 = vmatpush1.msra.mxu0 %v181
  %5817 = vmatprep.subr.mxu0 0.0
  %5818 = vmatpush1.msra.mxu0 %v182
  %5819 = vmatprep.subr.mxu0 0.0
  %5820 = vmatpush1.msra.mxu0 0.0
  %5821 = vmatprep.subr.mxu0 0.0
  %5822 = vmatpush1.msra.mxu0 0.0
  %5823 = vmatprep.subr.mxu0 0.0
  %5824 = vmatpush1.msra.mxu0 0.0
  %5825 = vmatprep.subr.mxu0 0.0
  %5826 = vmatpush1.msra.mxu0 0.0
  %5827 = vmatprep.subr.mxu0 0.0
  %5828 = vmatpush1.msra.mxu0 0.0
  %5829 = vmatprep.subr.mxu0 0.0
  %5830 = vmatpush1.msra.mxu0 0.0
  %5831 = vmatprep.subr.mxu0 0.0
  %5832 = vmatpush1.msra.mxu0 0.0
  %5833 = vmatprep.subr.mxu0 0.0
  %5834 = vmatpush1.msra.mxu0 0.0
  %5835 = vmatprep.subr.mxu0 0.0
  %5836 = vmatpush1.msra.mxu0 0.0
  %5837 = vmatprep.subr.mxu0 0.0
  %5838 = vmatpush1.msra.mxu0 0.0
  %5839 = vmatprep.subr.mxu0 0.0
  %5840 = vmatpush1.msra.mxu0 0.0
  %5841 = vmatprep.subr.mxu0 0.0
  %5842 = vmatpush1.msra.mxu0 0.0
  %5843 = vmatprep.subr.mxu0 0.0
  %5844 = vmatpush1.msra.mxu0 0.0
  %5845 = vmatprep.subr.mxu0 0.0
  %5846 = vmatpush1.msra.mxu0 0.0
  %5847 = vmatprep.subr.mxu0 0.0
  %5848 = vmatpush1.msra.mxu0 0.0
  %5849 = vmatprep.subr.mxu0 0.0
  %5850 = vmatpush1.msra.mxu0 0.0
  %5851 = vmatprep.subr.mxu0 0.0
  %5852 = vmatpush1.msra.mxu0 0.0
  %5853 = vmatprep.subr.mxu0 0.0
  %5854 = vmatpush1.msra.mxu0 0.0
  %5855 = vmatprep.subr.mxu0 0.0
  %5856 = vmatpush1.msra.mxu0 0.0
  %5857 = vmatprep.subr.mxu0 0.0
  %5858 = vmatpush1.msra.mxu0 0.0
  %5859 = vmatprep.subr.mxu0 0.0
  %5860 = vmatpush1.msra.mxu0 0.0
  %5861 = vmatprep.subr.mxu0 0.0
  %5862 = vmatpush1.msra.mxu0 0.0
  %5863 = vmatprep.subr.mxu0 0.0
  %5864 = vmatpush1.msra.mxu0 0.0
  %5865 = vmatprep.subr.mxu0 0.0
  %5866 = vmatpush1.msra.mxu0 0.0
  %5867 = vmatprep.mubr.f32.mxu0 0.0
  %5868 = vmatmul.mubr.f32.gmra.mrb[0].mxu0 %v5801
  %v5869 = vpop.f32.mrb[0].mxu0
  %v5870 = vadd.f32 0.0, %v5869
  %v5871 = vpop.f32.mrb[0].mxu0
  %5872 = vdwg.mxu0
  %v5874 = vsel %vm402, %v5195, 0
  %5876 = vmatprep.subr.mxu0 0.0
  %5877 = vmatpush1.msra.mxu0 %v159
  %5878 = vmatprep.subr.mxu0 0.0
  %5879 = vmatpush1.msra.mxu0 %v160
  %5880 = vmatprep.subr.mxu0 0.0
  %5881 = vmatpush1.msra.mxu0 %v161
  %5882 = vmatprep.subr.mxu0 0.0
  %5883 = vmatpush1.msra.mxu0 %v162
  %5884 = vmatprep.subr.mxu0 0.0
  %5885 = vmatpush1.msra.mxu0 %v163
  %5886 = vmatprep.subr.mxu0 0.0
  %5887 = vmatpush1.msra.mxu0 %v164
  %5888 = vmatprep.subr.mxu0 0.0
  %5889 = vmatpush1.msra.mxu0 %v165
  %5890 = vmatprep.subr.mxu0 0.0
  %5891 = vmatpush1.msra.mxu0 %v166
  %5892 = vmatprep.subr.mxu0 0.0
  %5893 = vmatpush1.msra.mxu0 0.0
  %5894 = vmatprep.subr.mxu0 0.0
  %5895 = vmatpush1.msra.mxu0 0.0
  %5896 = vmatprep.subr.mxu0 0.0
  %5897 = vmatpush1.msra.mxu0 0.0
  %5898 = vmatprep.subr.mxu0 0.0
  %5899 = vmatpush1.msra.mxu0 0.0
  %5900 = vmatprep.subr.mxu0 0.0
  %5901 = vmatpush1.msra.mxu0 0.0
  %5902 = vmatprep.subr.mxu0 0.0
  %5903 = vmatpush1.msra.mxu0 0.0
  %5904 = vmatprep.subr.mxu0 0.0
  %5905 = vmatpush1.msra.mxu0 0.0
  %5906 = vmatprep.subr.mxu0 0.0
  %5907 = vmatpush1.msra.mxu0 0.0
  %5908 = vmatprep.subr.mxu0 0.0
  %5909 = vmatpush1.msra.mxu0 0.0
  %5910 = vmatprep.subr.mxu0 0.0
  %5911 = vmatpush1.msra.mxu0 0.0
  %5912 = vmatprep.subr.mxu0 0.0
  %5913 = vmatpush1.msra.mxu0 0.0
  %5914 = vmatprep.subr.mxu0 0.0
  %5915 = vmatpush1.msra.mxu0 0.0
  %5916 = vmatprep.subr.mxu0 0.0
  %5917 = vmatpush1.msra.mxu0 0.0
  %5918 = vmatprep.subr.mxu0 0.0
  %5919 = vmatpush1.msra.mxu0 0.0
  %5920 = vmatprep.subr.mxu0 0.0
  %5921 = vmatpush1.msra.mxu0 0.0
  %5922 = vmatprep.subr.mxu0 0.0
  %5923 = vmatpush1.msra.mxu0 0.0
  %5924 = vmatprep.subr.mxu0 0.0
  %5925 = vmatpush1.msra.mxu0 0.0
  %5926 = vmatprep.subr.mxu0 0.0
  %5927 = vmatpush1.msra.mxu0 0.0
  %5928 = vmatprep.subr.mxu0 0.0
  %5929 = vmatpush1.msra.mxu0 0.0
  %5930 = vmatprep.subr.mxu0 0.0
  %5931 = vmatpush1.msra.mxu0 0.0
  %5932 = vmatprep.subr.mxu0 0.0
  %5933 = vmatpush1.msra.mxu0 0.0
  %5934 = vmatprep.subr.mxu0 0.0
  %5935 = vmatpush1.msra.mxu0 0.0
  %5936 = vmatprep.subr.mxu0 0.0
  %5937 = vmatpush1.msra.mxu0 0.0
  %5938 = vmatprep.subr.mxu0 0.0
  %5939 = vmatpush1.msra.mxu0 0.0
  %5940 = vmatprep.mubr.f32.mxu0 0.0
  %5941 = vmatmul.mubr.f32.gmra.mrb[0].mxu0 %v5874
  %v5942 = vpop.f32.mrb[0].mxu0
  %v5943 = vadd.f32 %v5870, %v5942
  %v5944 = vpop.f32.mrb[0].mxu0
  %5945 = vdwg.mxu0
  %v5946 = vadd.f32 %v5943, %v715
  %v5947 = vmax.f32 %v5946, 0.0
  %v5949 = vsel %vm402, %v5947, 0
  %5951 = vmatprep.subr.mxu0 0.0
  %5952 = vmatpush1.msra.mxu0 %v183
  %5953 = vmatprep.subr.mxu0 0.0
  %5954 = vmatpush1.msra.mxu0 %v184
  %5955 = vmatprep.subr.mxu0 0.0
  %5956 = vmatpush1.msra.mxu0 %v185
  %5957 = vmatprep.subr.mxu0 0.0
  %5958 = vmatpush1.msra.mxu0 %v186
  %5959 = vmatprep.subr.mxu0 0.0
  %5960 = vmatpush1.msra.mxu0 %v187
  %5961 = vmatprep.subr.mxu0 0.0
  %5962 = vmatpush1.msra.mxu0 %v188
  %5963 = vmatprep.subr.mxu0 0.0
  %5964 = vmatpush1.msra.mxu0 %v189
  %5965 = vmatprep.subr.mxu0 0.0
  %5966 = vmatpush1.msra.mxu0 %v190
  %5967 = vmatprep.subr.mxu0 0.0
  %5968 = vmatpush1.msra.mxu0 0.0
  %5969 = vmatprep.subr.mxu0 0.0
  %5970 = vmatpush1.msra.mxu0 0.0
  %5971 = vmatprep.subr.mxu0 0.0
  %5972 = vmatpush1.msra.mxu0 0.0
  %5973 = vmatprep.subr.mxu0 0.0
  %5974 = vmatpush1.msra.mxu0 0.0
  %5975 = vmatprep.subr.mxu0 0.0
  %5976 = vmatpush1.msra.mxu0 0.0
  %5977 = vmatprep.subr.mxu0 0.0
  %5978 = vmatpush1.msra.mxu0 0.0
  %5979 = vmatprep.subr.mxu0 0.0
  %5980 = vmatpush1.msra.mxu0 0.0
  %5981 = vmatprep.subr.mxu0 0.0
  %5982 = vmatpush1.msra.mxu0 0.0
  %5983 = vmatprep.subr.mxu0 0.0
  %5984 = vmatpush1.msra.mxu0 0.0
  %5985 = vmatprep.subr.mxu0 0.0
  %5986 = vmatpush1.msra.mxu0 0.0
  %5987 = vmatprep.subr.mxu0 0.0
  %5988 = vmatpush1.msra.mxu0 0.0
  %5989 = vmatprep.subr.mxu0 0.0
  %5990 = vmatpush1.msra.mxu0 0.0
  %5991 = vmatprep.subr.mxu0 0.0
  %5992 = vmatpush1.msra.mxu0 0.0
  %5993 = vmatprep.subr.mxu0 0.0
  %5994 = vmatpush1.msra.mxu0 0.0
  %5995 = vmatprep.subr.mxu0 0.0
  %5996 = vmatpush1.msra.mxu0 0.0
  %5997 = vmatprep.subr.mxu0 0.0
  %5998 = vmatpush1.msra.mxu0 0.0
  %5999 = vmatprep.subr.mxu0 0.0
  %6000 = vmatpush1.msra.mxu0 0.0
  %6001 = vmatprep.subr.mxu0 0.0
  %6002 = vmatpush1.msra.mxu0 0.0
  %6003 = vmatprep.subr.mxu0 0.0
  %6004 = vmatpush1.msra.mxu0 0.0
  %6005 = vmatprep.subr.mxu0 0.0
  %6006 = vmatpush1.msra.mxu0 0.0
  %6007 = vmatprep.subr.mxu0 0.0
  %6008 = vmatpush1.msra.mxu0 0.0
  %6009 = vmatprep.subr.mxu0 0.0
  %6010 = vmatpush1.msra.mxu0 0.0
  %6011 = vmatprep.subr.mxu0 0.0
  %6012 = vmatpush1.msra.mxu0 0.0
  %6013 = vmatprep.subr.mxu0 0.0
  %6014 = vmatpush1.msra.mxu0 0.0
  %6015 = vmatprep.mubr.f32.mxu0 0.0
  %6016 = vmatmul.mubr.f32.gmra.mrb[0].mxu0 %v5949
  %v6017 = vpop.f32.mrb[0].mxu0
  %v6018 = vadd.f32 %v320, %v6017
  %v6019 = vpop.f32.mrb[0].mxu0
  %6020 = vdwg.mxu0
  %v6021 = vmax.f32 %v6018, 0.0
  %v6022 = vpack.c.bf16 %v6021, %v6021
  %v6024 = vsel %vm731, %v6022, 0
  %6026 = vmatprep.subr.bf16.mxu0 0
  %6027 = vmatpush1.bf16.msra.mxu0 %v6024
  %6028 = vmatprep.subr.bf16.mxu0 0
  %6029 = vmatpush1.bf16.msra.mxu0 0
  %6030 = vmatprep.subr.bf16.mxu0 0
  %6031 = vmatpush1.bf16.msra.mxu0 0
  %6032 = vmatprep.subr.bf16.mxu0 0
  %6033 = vmatpush1.bf16.msra.mxu0 0
  %6034 = vmatprep.subr.bf16.mxu0 0
  %6035 = vmatpush1.bf16.msra.mxu0 0
  %6036 = vmatprep.subr.bf16.mxu0 0
  %6037 = vmatpush1.bf16.msra.mxu0 0
  %6038 = vmatprep.subr.bf16.mxu0 0
  %6039 = vmatpush1.bf16.msra.mxu0 0
  %6040 = vmatprep.subr.bf16.mxu0 0
  %6041 = vmatpush1.bf16.msra.mxu0 0
  %6042 = vmatprep.subr.bf16.mxu0 0
  %6043 = vmatpush1.bf16.msra.mxu0 0
  %6044 = vmatprep.subr.bf16.mxu0 0
  %6045 = vmatpush1.bf16.msra.mxu0 0
  %6046 = vmatprep.subr.bf16.mxu0 0
  %6047 = vmatpush1.bf16.msra.mxu0 0
  %6048 = vmatprep.subr.bf16.mxu0 0
  %6049 = vmatpush1.bf16.msra.mxu0 0
  %6050 = vmatprep.subr.bf16.mxu0 0
  %6051 = vmatpush1.bf16.msra.mxu0 0
  %6052 = vmatprep.subr.bf16.mxu0 0
  %6053 = vmatpush1.bf16.msra.mxu0 0
  %6054 = vmatprep.subr.bf16.mxu0 0
  %6055 = vmatpush1.bf16.msra.mxu0 0
  %6056 = vmatprep.subr.bf16.mxu0 0
  %6057 = vmatpush1.bf16.msra.mxu0 0
  %6058 = vmatprep.mubr.bf16.mxu0 0
  %6059 = vmatmul.mubr.bf16.gmra.mrb[0].mxu0 %v726
  %v6060 = vpop.f32.mrb[0].mxu0
  %v6061 = vadd.f32 0.0, %v6060
  %v6062 = vpop.f32.mrb[0].mxu0
  %v6063 = vpop.f32.mrb[0].mxu0
  %v6064 = vadd.f32 0.0, %v6063
  %v6065 = vpop.f32.mrb[0].mxu0
  %6066 = vmatprep.mubr.bf16.mxu0 0
  %6067 = vmatmul.mubr.bf16.gmra.mrb[0].mxu0 %v729
  %v6068 = vpop.f32.mrb[0].mxu0
  %v6069 = vadd.f32 0.0, %v6068
  %v6070 = vpop.f32.mrb[0].mxu0
  %v6071 = vpop.f32.mrb[0].mxu0
  %v6072 = vadd.f32 0.0, %v6071
  %v6073 = vpop.f32.mrb[0].mxu0
  %6074 = vdwg.mxu0
  %v6076 = vsel %vm402, %v6061, 0
  %v6079 = vsel %vm402, %v6064, 0
  %6081 = vmatprep.subr.mxu0 0.0
  %6082 = vmatpush1.msra.mxu0 %v271
  %6083 = vmatprep.subr.mxu0 0.0
  %6084 = vmatpush1.msra.mxu0 %v272
  %6085 = vmatprep.subr.mxu0 0.0
  %6086 = vmatpush1.msra.mxu0 %v273
  %6087 = vmatprep.subr.mxu0 0.0
  %6088 = vmatpush1.msra.mxu0 %v274
  %6089 = vmatprep.subr.mxu0 0.0
  %6090 = vmatpush1.msra.mxu0 %v275
  %6091 = vmatprep.subr.mxu0 0.0
  %6092 = vmatpush1.msra.mxu0 %v276
  %6093 = vmatprep.subr.mxu0 0.0
  %6094 = vmatpush1.msra.mxu0 %v277
  %6095 = vmatprep.subr.mxu0 0.0
  %6096 = vmatpush1.msra.mxu0 %v278
  %6097 = vmatprep.subr.mxu0 0.0
  %6098 = vmatpush1.msra.mxu0 0.0
  %6099 = vmatprep.subr.mxu0 0.0
  %6100 = vmatpush1.msra.mxu0 0.0
  %6101 = vmatprep.subr.mxu0 0.0
  %6102 = vmatpush1.msra.mxu0 0.0
  %6103 = vmatprep.subr.mxu0 0.0
  %6104 = vmatpush1.msra.mxu0 0.0
  %6105 = vmatprep.subr.mxu0 0.0
  %6106 = vmatpush1.msra.mxu0 0.0
  %6107 = vmatprep.subr.mxu0 0.0
  %6108 = vmatpush1.msra.mxu0 0.0
  %6109 = vmatprep.subr.mxu0 0.0
  %6110 = vmatpush1.msra.mxu0 0.0
  %6111 = vmatprep.subr.mxu0 0.0
  %6112 = vmatpush1.msra.mxu0 0.0
  %6113 = vmatprep.subr.mxu0 0.0
  %6114 = vmatpush1.msra.mxu0 0.0
  %6115 = vmatprep.subr.mxu0 0.0
  %6116 = vmatpush1.msra.mxu0 0.0
  %6117 = vmatprep.subr.mxu0 0.0
  %6118 = vmatpush1.msra.mxu0 0.0
  %6119 = vmatprep.subr.mxu0 0.0
  %6120 = vmatpush1.msra.mxu0 0.0
  %6121 = vmatprep.subr.mxu0 0.0
  %6122 = vmatpush1.msra.mxu0 0.0
  %6123 = vmatprep.subr.mxu0 0.0
  %6124 = vmatpush1.msra.mxu0 0.0
  %6125 = vmatprep.subr.mxu0 0.0
  %6126 = vmatpush1.msra.mxu0 0.0
  %6127 = vmatprep.subr.mxu0 0.0
  %6128 = vmatpush1.msra.mxu0 0.0
  %6129 = vmatprep.subr.mxu0 0.0
  %6130 = vmatpush1.msra.mxu0 0.0
  %6131 = vmatprep.subr.mxu0 0.0
  %6132 = vmatpush1.msra.mxu0 0.0
  %6133 = vmatprep.subr.mxu0 0.0
  %6134 = vmatpush1.msra.mxu0 0.0
  %6135 = vmatprep.subr.mxu0 0.0
  %6136 = vmatpush1.msra.mxu0 0.0
  %6137 = vmatprep.subr.mxu0 0.0
  %6138 = vmatpush1.msra.mxu0 0.0
  %6139 = vmatprep.subr.mxu0 0.0
  %6140 = vmatpush1.msra.mxu0 0.0
  %6141 = vmatprep.subr.mxu0 0.0
  %6142 = vmatpush1.msra.mxu0 0.0
  %6143 = vmatprep.subr.mxu0 0.0
  %6144 = vmatpush1.msra.mxu0 0.0
  %6145 = vmatprep.mubr.f32.mxu0 0.0
  %6146 = vmatmul.mubr.f32.gmra.mrb[0].mxu0 %v6076
  %v6147 = vpop.f32.mrb[0].mxu0
  %v6148 = vadd.f32 0.0, %v6147
  %v6149 = vpop.f32.mrb[0].mxu0
  %6150 = vmatprep.mubr.f32.mxu0 0.0
  %6151 = vmatmul.mubr.f32.gmra.mrb[0].mxu0 %v6079
  %v6152 = vpop.f32.mrb[0].mxu0
  %v6153 = vadd.f32 0.0, %v6152
  %v6154 = vpop.f32.mrb[0].mxu0
  %6155 = vdwg.mxu0
  %v6157 = vsel %vm402, %v6069, 0
  %v6160 = vsel %vm402, %v6072, 0
  %6162 = vmatprep.subr.mxu0 0.0
  %6163 = vmatpush1.msra.mxu0 %v95
  %6164 = vmatprep.subr.mxu0 0.0
  %6165 = vmatpush1.msra.mxu0 %v96
  %6166 = vmatprep.subr.mxu0 0.0
  %6167 = vmatpush1.msra.mxu0 %v97
  %6168 = vmatprep.subr.mxu0 0.0
  %6169 = vmatpush1.msra.mxu0 %v98
  %6170 = vmatprep.subr.mxu0 0.0
  %6171 = vmatpush1.msra.mxu0 %v99
  %6172 = vmatprep.subr.mxu0 0.0
  %6173 = vmatpush1.msra.mxu0 %v100
  %6174 = vmatprep.subr.mxu0 0.0
  %6175 = vmatpush1.msra.mxu0 %v101
  %6176 = vmatprep.subr.mxu0 0.0
  %6177 = vmatpush1.msra.mxu0 %v102
  %6178 = vmatprep.subr.mxu0 0.0
  %6179 = vmatpush1.msra.mxu0 0.0
  %6180 = vmatprep.subr.mxu0 0.0
  %6181 = vmatpush1.msra.mxu0 0.0
  %6182 = vmatprep.subr.mxu0 0.0
  %6183 = vmatpush1.msra.mxu0 0.0
  %6184 = vmatprep.subr.mxu0 0.0
  %6185 = vmatpush1.msra.mxu0 0.0
  %6186 = vmatprep.subr.mxu0 0.0
  %6187 = vmatpush1.msra.mxu0 0.0
  %6188 = vmatprep.subr.mxu0 0.0
  %6189 = vmatpush1.msra.mxu0 0.0
  %6190 = vmatprep.subr.mxu0 0.0
  %6191 = vmatpush1.msra.mxu0 0.0
  %6192 = vmatprep.subr.mxu0 0.0
  %6193 = vmatpush1.msra.mxu0 0.0
  %6194 = vmatprep.subr.mxu0 0.0
  %6195 = vmatpush1.msra.mxu0 0.0
  %6196 = vmatprep.subr.mxu0 0.0
  %6197 = vmatpush1.msra.mxu0 0.0
  %6198 = vmatprep.subr.mxu0 0.0
  %6199 = vmatpush1.msra.mxu0 0.0
  %6200 = vmatprep.subr.mxu0 0.0
  %6201 = vmatpush1.msra.mxu0 0.0
  %6202 = vmatprep.subr.mxu0 0.0
  %6203 = vmatpush1.msra.mxu0 0.0
  %6204 = vmatprep.subr.mxu0 0.0
  %6205 = vmatpush1.msra.mxu0 0.0
  %6206 = vmatprep.subr.mxu0 0.0
  %6207 = vmatpush1.msra.mxu0 0.0
  %6208 = vmatprep.subr.mxu0 0.0
  %6209 = vmatpush1.msra.mxu0 0.0
  %6210 = vmatprep.subr.mxu0 0.0
  %6211 = vmatpush1.msra.mxu0 0.0
  %6212 = vmatprep.subr.mxu0 0.0
  %6213 = vmatpush1.msra.mxu0 0.0
  %6214 = vmatprep.subr.mxu0 0.0
  %6215 = vmatpush1.msra.mxu0 0.0
  %6216 = vmatprep.subr.mxu0 0.0
  %6217 = vmatpush1.msra.mxu0 0.0
  %6218 = vmatprep.subr.mxu0 0.0
  %6219 = vmatpush1.msra.mxu0 0.0
  %6220 = vmatprep.subr.mxu0 0.0
  %6221 = vmatpush1.msra.mxu0 0.0
  %6222 = vmatprep.subr.mxu0 0.0
  %6223 = vmatpush1.msra.mxu0 0.0
  %6224 = vmatprep.subr.mxu0 0.0
  %6225 = vmatpush1.msra.mxu0 0.0
  %6226 = vmatprep.mubr.f32.mxu0 0.0
  %6227 = vmatmul.mubr.f32.gmra.mrb[0].mxu0 %v6157
  %v6228 = vpop.f32.mrb[0].mxu0
  %v6229 = vadd.f32 0.0, %v6228
  %v6230 = vpop.f32.mrb[0].mxu0
  %6231 = vmatprep.mubr.f32.mxu0 0.0
  %6232 = vmatmul.mubr.f32.gmra.mrb[0].mxu0 %v6160
  %v6233 = vpop.f32.mrb[0].mxu0
  %v6234 = vadd.f32 0.0, %v6233
  %v6235 = vpop.f32.mrb[0].mxu0
  %6236 = vdwg.mxu0
  %v6237 = vadd.f32 %v6148, %v6229
  %v6238 = vadd.f32 %v6153, %v6234
  %6239 = vmatprep.subr.mxu0 0.0
  %6240 = vmatpush1.msra.mxu0 %v111
  %6241 = vmatprep.subr.mxu0 0.0
  %6242 = vmatpush1.msra.mxu0 %v112
  %6243 = vmatprep.subr.mxu0 0.0
  %6244 = vmatpush1.msra.mxu0 %v113
  %6245 = vmatprep.subr.mxu0 0.0
  %6246 = vmatpush1.msra.mxu0 %v114
  %6247 = vmatprep.subr.mxu0 0.0
  %6248 = vmatpush1.msra.mxu0 %v115
  %6249 = vmatprep.subr.mxu0 0.0
  %6250 = vmatpush1.msra.mxu0 %v116
  %6251 = vmatprep.subr.mxu0 0.0
  %6252 = vmatpush1.msra.mxu0 %v117
  %6253 = vmatprep.subr.mxu0 0.0
  %6254 = vmatpush1.msra.mxu0 %v118
  %6255 = vmatprep.subr.mxu0 0.0
  %6256 = vmatpush1.msra.mxu0 0.0
  %6257 = vmatprep.subr.mxu0 0.0
  %6258 = vmatpush1.msra.mxu0 0.0
  %6259 = vmatprep.subr.mxu0 0.0
  %6260 = vmatpush1.msra.mxu0 0.0
  %6261 = vmatprep.subr.mxu0 0.0
  %6262 = vmatpush1.msra.mxu0 0.0
  %6263 = vmatprep.subr.mxu0 0.0
  %6264 = vmatpush1.msra.mxu0 0.0
  %6265 = vmatprep.subr.mxu0 0.0
  %6266 = vmatpush1.msra.mxu0 0.0
  %6267 = vmatprep.subr.mxu0 0.0
  %6268 = vmatpush1.msra.mxu0 0.0
  %6269 = vmatprep.subr.mxu0 0.0
  %6270 = vmatpush1.msra.mxu0 0.0
  %6271 = vmatprep.subr.mxu0 0.0
  %6272 = vmatpush1.msra.mxu0 0.0
  %6273 = vmatprep.subr.mxu0 0.0
  %6274 = vmatpush1.msra.mxu0 0.0
  %6275 = vmatprep.subr.mxu0 0.0
  %6276 = vmatpush1.msra.mxu0 0.0
  %6277 = vmatprep.subr.mxu0 0.0
  %6278 = vmatpush1.msra.mxu0 0.0
  %6279 = vmatprep.subr.mxu0 0.0
  %6280 = vmatpush1.msra.mxu0 0.0
  %6281 = vmatprep.subr.mxu0 0.0
  %6282 = vmatpush1.msra.mxu0 0.0
  %6283 = vmatprep.subr.mxu0 0.0
  %6284 = vmatpush1.msra.mxu0 0.0
  %6285 = vmatprep.subr.mxu0 0.0
  %6286 = vmatpush1.msra.mxu0 0.0
  %6287 = vmatprep.subr.mxu0 0.0
  %6288 = vmatpush1.msra.mxu0 0.0
  %6289 = vmatprep.subr.mxu0 0.0
  %6290 = vmatpush1.msra.mxu0 0.0
  %6291 = vmatprep.subr.mxu0 0.0
  %6292 = vmatpush1.msra.mxu0 0.0
  %6293 = vmatprep.subr.mxu0 0.0
  %6294 = vmatpush1.msra.mxu0 0.0
  %6295 = vmatprep.subr.mxu0 0.0
  %6296 = vmatpush1.msra.mxu0 0.0
  %6297 = vmatprep.subr.mxu0 0.0
  %6298 = vmatpush1.msra.mxu0 0.0
  %6299 = vmatprep.subr.mxu0 0.0
  %6300 = vmatpush1.msra.mxu0 0.0
  %6301 = vmatprep.subr.mxu0 0.0
  %6302 = vmatpush1.msra.mxu0 0.0
  %6303 = vmatprep.mubr.f32.mxu0 0.0
  %6304 = vmatmul.mubr.f32.gmra.mrb[0].mxu0 %v5578
  %v6305 = vpop.f32.mrb[0].mxu0
  %v6306 = vadd.f32 0.0, %v6305
  %v6307 = vpop.f32.mrb[0].mxu0
  %6308 = vmatprep.mubr.f32.mxu0 0.0
  %6309 = vmatmul.mubr.f32.gmra.mrb[0].mxu0 %v5581
  %v6310 = vpop.f32.mrb[0].mxu0
  %v6311 = vadd.f32 0.0, %v6310
  %v6312 = vpop.f32.mrb[0].mxu0
  %6313 = vdwg.mxu0
  %v6314 = vadd.f32 %v6237, %v6306
  %v6315 = vadd.f32 %v6238, %v6311
  %v6316 = vadd.f32 %v6314, %v1029
  %v6317 = vadd.f32 %v6315, %v1030
  %v6318 = vmax.f32 %v6316, 0.0
  %v6319 = vmax.f32 %v6317, 0.0
  %v6321 = vsel %vm402, %v6318, 0
  %v6324 = vsel %vm402, %v6319, 0
  %6326 = vmatprep.subr.mxu0 0.0
  %6327 = vmatpush1.msra.mxu0 %v127
  %6328 = vmatprep.subr.mxu0 0.0
  %6329 = vmatpush1.msra.mxu0 %v128
  %6330 = vmatprep.subr.mxu0 0.0
  %6331 = vmatpush1.msra.mxu0 %v129
  %6332 = vmatprep.subr.mxu0 0.0
  %6333 = vmatpush1.msra.mxu0 %v130
  %6334 = vmatprep.subr.mxu0 0.0
  %6335 = vmatpush1.msra.mxu0 %v131
  %6336 = vmatprep.subr.mxu0 0.0
  %6337 = vmatpush1.msra.mxu0 %v132
  %6338 = vmatprep.subr.mxu0 0.0
  %6339 = vmatpush1.msra.mxu0 %v133
  %6340 = vmatprep.subr.mxu0 0.0
  %6341 = vmatpush1.msra.mxu0 %v134
  %6342 = vmatprep.subr.mxu0 0.0
  %6343 = vmatpush1.msra.mxu0 0.0
  %6344 = vmatprep.subr.mxu0 0.0
  %6345 = vmatpush1.msra.mxu0 0.0
  %6346 = vmatprep.subr.mxu0 0.0
  %6347 = vmatpush1.msra.mxu0 0.0
  %6348 = vmatprep.subr.mxu0 0.0
  %6349 = vmatpush1.msra.mxu0 0.0
  %6350 = vmatprep.subr.mxu0 0.0
  %6351 = vmatpush1.msra.mxu0 0.0
  %6352 = vmatprep.subr.mxu0 0.0
  %6353 = vmatpush1.msra.mxu0 0.0
  %6354 = vmatprep.subr.mxu0 0.0
  %6355 = vmatpush1.msra.mxu0 0.0
  %6356 = vmatprep.subr.mxu0 0.0
  %6357 = vmatpush1.msra.mxu0 0.0
  %6358 = vmatprep.subr.mxu0 0.0
  %6359 = vmatpush1.msra.mxu0 0.0
  %6360 = vmatprep.subr.mxu0 0.0
  %6361 = vmatpush1.msra.mxu0 0.0
  %6362 = vmatprep.subr.mxu0 0.0
  %6363 = vmatpush1.msra.mxu0 0.0
  %6364 = vmatprep.subr.mxu0 0.0
  %6365 = vmatpush1.msra.mxu0 0.0
  %6366 = vmatprep.subr.mxu0 0.0
  %6367 = vmatpush1.msra.mxu0 0.0
  %6368 = vmatprep.subr.mxu0 0.0
  %6369 = vmatpush1.msra.mxu0 0.0
  %6370 = vmatprep.subr.mxu0 0.0
  %6371 = vmatpush1.msra.mxu0 0.0
  %6372 = vmatprep.subr.mxu0 0.0
  %6373 = vmatpush1.msra.mxu0 0.0
  %6374 = vmatprep.subr.mxu0 0.0
  %6375 = vmatpush1.msra.mxu0 0.0
  %6376 = vmatprep.subr.mxu0 0.0
  %6377 = vmatpush1.msra.mxu0 0.0
  %6378 = vmatprep.subr.mxu0 0.0
  %6379 = vmatpush1.msra.mxu0 0.0
  %6380 = vmatprep.subr.mxu0 0.0
  %6381 = vmatpush1.msra.mxu0 0.0
  %6382 = vmatprep.subr.mxu0 0.0
  %6383 = vmatpush1.msra.mxu0 0.0
  %6384 = vmatprep.subr.mxu0 0.0
  %6385 = vmatpush1.msra.mxu0 0.0
  %6386 = vmatprep.subr.mxu0 0.0
  %6387 = vmatpush1.msra.mxu0 0.0
  %6388 = vmatprep.subr.mxu0 0.0
  %6389 = vmatpush1.msra.mxu0 0.0
  %6390 = vmatprep.mubr.f32.mxu0 0.0
  %6391 = vmatmul.mubr.f32.gmra.mrb[0].mxu0 %v6321
  %v6392 = vpop.f32.mrb[0].mxu0
  %v6393 = vadd.f32 %v316, %v6392
  %v6394 = vpop.f32.mrb[0].mxu0
  %6395 = vmatprep.mubr.f32.mxu0 0.0
  %6396 = vmatmul.mubr.f32.gmra.mrb[0].mxu0 %v6324
  %v6397 = vpop.f32.mrb[0].mxu0
  %v6398 = vadd.f32 %v316, %v6397
  %v6399 = vpop.f32.mrb[0].mxu0
  %6400 = vdwg.mxu0
  %v6401 = vmax.f32 %v6393, 0.0
  %v6402 = vmax.f32 %v6398, 0.0
  %v6404 = vsel %vm402, %v6401, 0
  %v6407 = vsel %vm402, %v6402, 0
  %6409 = vmatprep.subr.mxu0 0.0
  %6410 = vmatpush1.msra.mxu0 %v143
  %6411 = vmatprep.subr.mxu0 0.0
  %6412 = vmatpush1.msra.mxu0 %v144
  %6413 = vmatprep.subr.mxu0 0.0
  %6414 = vmatpush1.msra.mxu0 %v145
  %6415 = vmatprep.subr.mxu0 0.0
  %6416 = vmatpush1.msra.mxu0 %v146
  %6417 = vmatprep.subr.mxu0 0.0
  %6418 = vmatpush1.msra.mxu0 %v147
  %6419 = vmatprep.subr.mxu0 0.0
  %6420 = vmatpush1.msra.mxu0 %v148
  %6421 = vmatprep.subr.mxu0 0.0
  %6422 = vmatpush1.msra.mxu0 %v149
  %6423 = vmatprep.subr.mxu0 0.0
  %6424 = vmatpush1.msra.mxu0 %v150
  %6425 = vmatprep.subr.mxu0 0.0
  %6426 = vmatpush1.msra.mxu0 0.0
  %6427 = vmatprep.subr.mxu0 0.0
  %6428 = vmatpush1.msra.mxu0 0.0
  %6429 = vmatprep.subr.mxu0 0.0
  %6430 = vmatpush1.msra.mxu0 0.0
  %6431 = vmatprep.subr.mxu0 0.0
  %6432 = vmatpush1.msra.mxu0 0.0
  %6433 = vmatprep.subr.mxu0 0.0
  %6434 = vmatpush1.msra.mxu0 0.0
  %6435 = vmatprep.subr.mxu0 0.0
  %6436 = vmatpush1.msra.mxu0 0.0
  %6437 = vmatprep.subr.mxu0 0.0
  %6438 = vmatpush1.msra.mxu0 0.0
  %6439 = vmatprep.subr.mxu0 0.0
  %6440 = vmatpush1.msra.mxu0 0.0
  %6441 = vmatprep.subr.mxu0 0.0
  %6442 = vmatpush1.msra.mxu0 0.0
  %6443 = vmatprep.subr.mxu0 0.0
  %6444 = vmatpush1.msra.mxu0 0.0
  %6445 = vmatprep.subr.mxu0 0.0
  %6446 = vmatpush1.msra.mxu0 0.0
  %6447 = vmatprep.subr.mxu0 0.0
  %6448 = vmatpush1.msra.mxu0 0.0
  %6449 = vmatprep.subr.mxu0 0.0
  %6450 = vmatpush1.msra.mxu0 0.0
  %6451 = vmatprep.subr.mxu0 0.0
  %6452 = vmatpush1.msra.mxu0 0.0
  %6453 = vmatprep.subr.mxu0 0.0
  %6454 = vmatpush1.msra.mxu0 0.0
  %6455 = vmatprep.subr.mxu0 0.0
  %6456 = vmatpush1.msra.mxu0 0.0
  %6457 = vmatprep.subr.mxu0 0.0
  %6458 = vmatpush1.msra.mxu0 0.0
  %6459 = vmatprep.subr.mxu0 0.0
  %6460 = vmatpush1.msra.mxu0 0.0
  %6461 = vmatprep.subr.mxu0 0.0
  %6462 = vmatpush1.msra.mxu0 0.0
  %6463 = vmatprep.subr.mxu0 0.0
  %6464 = vmatpush1.msra.mxu0 0.0
  %6465 = vmatprep.subr.mxu0 0.0
  %6466 = vmatpush1.msra.mxu0 0.0
  %6467 = vmatprep.subr.mxu0 0.0
  %6468 = vmatpush1.msra.mxu0 0.0
  %6469 = vmatprep.subr.mxu0 0.0
  %6470 = vmatpush1.msra.mxu0 0.0
  %6471 = vmatprep.subr.mxu0 0.0
  %6472 = vmatpush1.msra.mxu0 0.0
  %6473 = vmatprep.mubr.f32.mxu0 0.0
  %6474 = vmatmul.mubr.f32.gmra.mrb[0].mxu0 %v6404
  %v6475 = vpop.f32.mrb[0].mxu0
  %v6476 = vadd.f32 0.0, %v6475
  %v6477 = vpop.f32.mrb[0].mxu0
  %6478 = vmatprep.mubr.f32.mxu0 0.0
  %6479 = vmatmul.mubr.f32.gmra.mrb[0].mxu0 %v6407
  %v6480 = vpop.f32.mrb[0].mxu0
  %v6481 = vadd.f32 0.0, %v6480
  %v6482 = vpop.f32.mrb[0].mxu0
  %6483 = vdwg.mxu0
  %6486 = vrot.lane.b32.xlu0 %v6476, 64
  %v6487 = vpop.permute.xlu0 %6486
  %6488 = vrot.lane.b32.xlu0 %v6481, 64
  %v6489 = vpop.permute.xlu0 %6488
  %v6492 = vadd.f32 %v6148, %v6487
  %v6493 = vadd.f32 %v6153, %v6489
  %v6494 = vadd.f32 %v6492, %v1516
  %v6495 = vadd.f32 %v6493, %v1518
  %v6496 = vmax.f32 %v6494, 0.0
  %v6497 = vmax.f32 %v6495, 0.0
  %6500 = vrot.lane.b32.xlu0 %v6496, 64
  %v6501 = vpop.permute.xlu0 %6500
  %6502 = vrot.lane.b32.xlu0 %v6497, 64
  %v6503 = vpop.permute.xlu0 %6502
  %v6504 = vsel %vm402, %v6501, 0
  %v6506 = vsel %vm402, %v6503, 0
  %6508 = vmatprep.subr.mxu0 0.0
  %6509 = vmatpush1.msra.mxu0 %v151
  %6510 = vmatprep.subr.mxu0 0.0
  %6511 = vmatpush1.msra.mxu0 %v152
  %6512 = vmatprep.subr.mxu0 0.0
  %6513 = vmatpush1.msra.mxu0 %v153
  %6514 = vmatprep.subr.mxu0 0.0
  %6515 = vmatpush1.msra.mxu0 %v154
  %6516 = vmatprep.subr.mxu0 0.0
  %6517 = vmatpush1.msra.mxu0 %v155
  %6518 = vmatprep.subr.mxu0 0.0
  %6519 = vmatpush1.msra.mxu0 %v156
  %6520 = vmatprep.subr.mxu0 0.0
  %6521 = vmatpush1.msra.mxu0 %v157
  %6522 = vmatprep.subr.mxu0 0.0
  %6523 = vmatpush1.msra.mxu0 %v158
  %6524 = vmatprep.subr.mxu0 0.0
  %6525 = vmatpush1.msra.mxu0 0.0
  %6526 = vmatprep.subr.mxu0 0.0
  %6527 = vmatpush1.msra.mxu0 0.0
  %6528 = vmatprep.subr.mxu0 0.0
  %6529 = vmatpush1.msra.mxu0 0.0
  %6530 = vmatprep.subr.mxu0 0.0
  %6531 = vmatpush1.msra.mxu0 0.0
  %6532 = vmatprep.subr.mxu0 0.0
  %6533 = vmatpush1.msra.mxu0 0.0
  %6534 = vmatprep.subr.mxu0 0.0
  %6535 = vmatpush1.msra.mxu0 0.0
  %6536 = vmatprep.subr.mxu0 0.0
  %6537 = vmatpush1.msra.mxu0 0.0
  %6538 = vmatprep.subr.mxu0 0.0
  %6539 = vmatpush1.msra.mxu0 0.0
  %6540 = vmatprep.subr.mxu0 0.0
  %6541 = vmatpush1.msra.mxu0 0.0
  %6542 = vmatprep.subr.mxu0 0.0
  %6543 = vmatpush1.msra.mxu0 0.0
  %6544 = vmatprep.subr.mxu0 0.0
  %6545 = vmatpush1.msra.mxu0 0.0
  %6546 = vmatprep.subr.mxu0 0.0
  %6547 = vmatpush1.msra.mxu0 0.0
  %6548 = vmatprep.subr.mxu0 0.0
  %6549 = vmatpush1.msra.mxu0 0.0
  %6550 = vmatprep.subr.mxu0 0.0
  %6551 = vmatpush1.msra.mxu0 0.0
  %6552 = vmatprep.subr.mxu0 0.0
  %6553 = vmatpush1.msra.mxu0 0.0
  %6554 = vmatprep.subr.mxu0 0.0
  %6555 = vmatpush1.msra.mxu0 0.0
  %6556 = vmatprep.subr.mxu0 0.0
  %6557 = vmatpush1.msra.mxu0 0.0
  %6558 = vmatprep.subr.mxu0 0.0
  %6559 = vmatpush1.msra.mxu0 0.0
  %6560 = vmatprep.subr.mxu0 0.0
  %6561 = vmatpush1.msra.mxu0 0.0
  %6562 = vmatprep.subr.mxu0 0.0
  %6563 = vmatpush1.msra.mxu0 0.0
  %6564 = vmatprep.subr.mxu0 0.0
  %6565 = vmatpush1.msra.mxu0 0.0
  %6566 = vmatprep.subr.mxu0 0.0
  %6567 = vmatpush1.msra.mxu0 0.0
  %6568 = vmatprep.subr.mxu0 0.0
  %6569 = vmatpush1.msra.mxu0 0.0
  %6570 = vmatprep.subr.mxu0 0.0
  %6571 = vmatpush1.msra.mxu0 0.0
  %6572 = vmatprep.mubr.f32.mxu0 0.0
  %6573 = vmatmul.mubr.f32.gmra.mrb[0].mxu0 %v6504
  %v6574 = vpop.f32.mrb[0].mxu0
  %v6575 = vadd.f32 %v318, %v6574
  %v6576 = vpop.f32.mrb[0].mxu0
  %6577 = vmatprep.mubr.f32.mxu0 0.0
  %6578 = vmatmul.mubr.f32.gmra.mrb[0].mxu0 %v6506
  %v6579 = vpop.f32.mrb[0].mxu0
  %v6580 = vadd.f32 %v318, %v6579
  %v6581 = vpop.f32.mrb[0].mxu0
  %6582 = vdwg.mxu0
  %v6583 = vmax.f32 %v6575, 0.0
  %v6584 = vmax.f32 %v6580, 0.0
  %v6585 = vpack.c.bf16 %v6584, %v6583
  %6586 = vmatprep.subr.bf16.mxu0 0
  %6587 = vmatpush1.bf16.msra.mxu0 %v6585
  %6588 = vmatprep.subr.bf16.mxu0 0
  %6589 = vmatpush1.bf16.msra.mxu0 0
  %6590 = vmatprep.subr.bf16.mxu0 0
  %6591 = vmatpush1.bf16.msra.mxu0 0
  %6592 = vmatprep.subr.bf16.mxu0 0
  %6593 = vmatpush1.bf16.msra.mxu0 0
  %6594 = vmatprep.subr.bf16.mxu0 0
  %6595 = vmatpush1.bf16.msra.mxu0 0
  %6596 = vmatprep.subr.bf16.mxu0 0
  %6597 = vmatpush1.bf16.msra.mxu0 0
  %6598 = vmatprep.subr.bf16.mxu0 0
  %6599 = vmatpush1.bf16.msra.mxu0 0
  %6600 = vmatprep.subr.bf16.mxu0 0
  %6601 = vmatpush1.bf16.msra.mxu0 0
  %6602 = vmatprep.subr.bf16.mxu0 0
  %6603 = vmatpush1.bf16.msra.mxu0 0
  %6604 = vmatprep.subr.bf16.mxu0 0
  %6605 = vmatpush1.bf16.msra.mxu0 0
  %6606 = vmatprep.subr.bf16.mxu0 0
  %6607 = vmatpush1.bf16.msra.mxu0 0
  %6608 = vmatprep.subr.bf16.mxu0 0
  %6609 = vmatpush1.bf16.msra.mxu0 0
  %6610 = vmatprep.subr.bf16.mxu0 0
  %6611 = vmatpush1.bf16.msra.mxu0 0
  %6612 = vmatprep.subr.bf16.mxu0 0
  %6613 = vmatpush1.bf16.msra.mxu0 0
  %6614 = vmatprep.subr.bf16.mxu0 0
  %6615 = vmatpush1.bf16.msra.mxu0 0
  %6616 = vmatprep.subr.bf16.mxu0 0
  %6617 = vmatpush1.bf16.msra.mxu0 0
  %6618 = vmatprep.mubr.bf16.mxu0 0
  %6619 = vmatmul.mubr.bf16.gmra.mrb[0].mxu0 %v1631
  %v6620 = vpop.f32.mrb[0].mxu0
  %v6621 = vadd.f32 0.0, %v6620
  %v6622 = vpop.f32.mrb[0].mxu0
  %v6623 = vpop.f32.mrb[0].mxu0
  %v6624 = vpop.f32.mrb[0].mxu0
  %6625 = vdwg.mxu0
  %v6627 = vsel %vm402, %v6621, 0
  %6629 = vmatprep.subr.mxu0 0.0
  %6630 = vmatpush1.msra.mxu0 %v175
  %6631 = vmatprep.subr.mxu0 0.0
  %6632 = vmatpush1.msra.mxu0 %v176
  %6633 = vmatprep.subr.mxu0 0.0
  %6634 = vmatpush1.msra.mxu0 %v177
  %6635 = vmatprep.subr.mxu0 0.0
  %6636 = vmatpush1.msra.mxu0 %v178
  %6637 = vmatprep.subr.mxu0 0.0
  %6638 = vmatpush1.msra.mxu0 %v179
  %6639 = vmatprep.subr.mxu0 0.0
  %6640 = vmatpush1.msra.mxu0 %v180
  %6641 = vmatprep.subr.mxu0 0.0
  %6642 = vmatpush1.msra.mxu0 %v181
  %6643 = vmatprep.subr.mxu0 0.0
  %6644 = vmatpush1.msra.mxu0 %v182
  %6645 = vmatprep.subr.mxu0 0.0
  %6646 = vmatpush1.msra.mxu0 0.0
  %6647 = vmatprep.subr.mxu0 0.0
  %6648 = vmatpush1.msra.mxu0 0.0
  %6649 = vmatprep.subr.mxu0 0.0
  %6650 = vmatpush1.msra.mxu0 0.0
  %6651 = vmatprep.subr.mxu0 0.0
  %6652 = vmatpush1.msra.mxu0 0.0
  %6653 = vmatprep.subr.mxu0 0.0
  %6654 = vmatpush1.msra.mxu0 0.0
  %6655 = vmatprep.subr.mxu0 0.0
  %6656 = vmatpush1.msra.mxu0 0.0
  %6657 = vmatprep.subr.mxu0 0.0
  %6658 = vmatpush1.msra.mxu0 0.0
  %6659 = vmatprep.subr.mxu0 0.0
  %6660 = vmatpush1.msra.mxu0 0.0
  %6661 = vmatprep.subr.mxu0 0.0
  %6662 = vmatpush1.msra.mxu0 0.0
  %6663 = vmatprep.subr.mxu0 0.0
  %6664 = vmatpush1.msra.mxu0 0.0
  %6665 = vmatprep.subr.mxu0 0.0
  %6666 = vmatpush1.msra.mxu0 0.0
  %6667 = vmatprep.subr.mxu0 0.0
  %6668 = vmatpush1.msra.mxu0 0.0
  %6669 = vmatprep.subr.mxu0 0.0
  %6670 = vmatpush1.msra.mxu0 0.0
  %6671 = vmatprep.subr.mxu0 0.0
  %6672 = vmatpush1.msra.mxu0 0.0
  %6673 = vmatprep.subr.mxu0 0.0
  %6674 = vmatpush1.msra.mxu0 0.0
  %6675 = vmatprep.subr.mxu0 0.0
  %6676 = vmatpush1.msra.mxu0 0.0
  %6677 = vmatprep.subr.mxu0 0.0
  %6678 = vmatpush1.msra.mxu0 0.0
  %6679 = vmatprep.subr.mxu0 0.0
  %6680 = vmatpush1.msra.mxu0 0.0
  %6681 = vmatprep.subr.mxu0 0.0
  %6682 = vmatpush1.msra.mxu0 0.0
  %6683 = vmatprep.subr.mxu0 0.0
  %6684 = vmatpush1.msra.mxu0 0.0
  %6685 = vmatprep.subr.mxu0 0.0
  %6686 = vmatpush1.msra.mxu0 0.0
  %6687 = vmatprep.subr.mxu0 0.0
  %6688 = vmatpush1.msra.mxu0 0.0
  %6689 = vmatprep.subr.mxu0 0.0
  %6690 = vmatpush1.msra.mxu0 0.0
  %6691 = vmatprep.subr.mxu0 0.0
  %6692 = vmatpush1.msra.mxu0 0.0
  %6693 = vmatprep.mubr.f32.mxu0 0.0
  %6694 = vmatmul.mubr.f32.gmra.mrb[0].mxu0 %v6627
  %v6695 = vpop.f32.mrb[0].mxu0
  %v6696 = vadd.f32 0.0, %v6695
  %v6697 = vpop.f32.mrb[0].mxu0
  %6698 = vdwg.mxu0
  %v6700 = vsel %vm402, %v6021, 0
  %6702 = vmatprep.subr.mxu0 0.0
  %6703 = vmatpush1.msra.mxu0 %v159
  %6704 = vmatprep.subr.mxu0 0.0
  %6705 = vmatpush1.msra.mxu0 %v160
  %6706 = vmatprep.subr.mxu0 0.0
  %6707 = vmatpush1.msra.mxu0 %v161
  %6708 = vmatprep.subr.mxu0 0.0
  %6709 = vmatpush1.msra.mxu0 %v162
  %6710 = vmatprep.subr.mxu0 0.0
  %6711 = vmatpush1.msra.mxu0 %v163
  %6712 = vmatprep.subr.mxu0 0.0
  %6713 = vmatpush1.msra.mxu0 %v164
  %6714 = vmatprep.subr.mxu0 0.0
  %6715 = vmatpush1.msra.mxu0 %v165
  %6716 = vmatprep.subr.mxu0 0.0
  %6717 = vmatpush1.msra.mxu0 %v166
  %6718 = vmatprep.subr.mxu0 0.0
  %6719 = vmatpush1.msra.mxu0 0.0
  %6720 = vmatprep.subr.mxu0 0.0
  %6721 = vmatpush1.msra.mxu0 0.0
  %6722 = vmatprep.subr.mxu0 0.0
  %6723 = vmatpush1.msra.mxu0 0.0
  %6724 = vmatprep.subr.mxu0 0.0
  %6725 = vmatpush1.msra.mxu0 0.0
  %6726 = vmatprep.subr.mxu0 0.0
  %6727 = vmatpush1.msra.mxu0 0.0
  %6728 = vmatprep.subr.mxu0 0.0
  %6729 = vmatpush1.msra.mxu0 0.0
  %6730 = vmatprep.subr.mxu0 0.0
  %6731 = vmatpush1.msra.mxu0 0.0
  %6732 = vmatprep.subr.mxu0 0.0
  %6733 = vmatpush1.msra.mxu0 0.0
  %6734 = vmatprep.subr.mxu0 0.0
  %6735 = vmatpush1.msra.mxu0 0.0
  %6736 = vmatprep.subr.mxu0 0.0
  %6737 = vmatpush1.msra.mxu0 0.0
  %6738 = vmatprep.subr.mxu0 0.0
  %6739 = vmatpush1.msra.mxu0 0.0
  %6740 = vmatprep.subr.mxu0 0.0
  %6741 = vmatpush1.msra.mxu0 0.0
  %6742 = vmatprep.subr.mxu0 0.0
  %6743 = vmatpush1.msra.mxu0 0.0
  %6744 = vmatprep.subr.mxu0 0.0
  %6745 = vmatpush1.msra.mxu0 0.0
  %6746 = vmatprep.subr.mxu0 0.0
  %6747 = vmatpush1.msra.mxu0 0.0
  %6748 = vmatprep.subr.mxu0 0.0
  %6749 = vmatpush1.msra.mxu0 0.0
  %6750 = vmatprep.subr.mxu0 0.0
  %6751 = vmatpush1.msra.mxu0 0.0
  %6752 = vmatprep.subr.mxu0 0.0
  %6753 = vmatpush1.msra.mxu0 0.0
  %6754 = vmatprep.subr.mxu0 0.0
  %6755 = vmatpush1.msra.mxu0 0.0
  %6756 = vmatprep.subr.mxu0 0.0
  %6757 = vmatpush1.msra.mxu0 0.0
  %6758 = vmatprep.subr.mxu0 0.0
  %6759 = vmatpush1.msra.mxu0 0.0
  %6760 = vmatprep.subr.mxu0 0.0
  %6761 = vmatpush1.msra.mxu0 0.0
  %6762 = vmatprep.subr.mxu0 0.0
  %6763 = vmatpush1.msra.mxu0 0.0
  %6764 = vmatprep.subr.mxu0 0.0
  %6765 = vmatpush1.msra.mxu0 0.0
  %6766 = vmatprep.mubr.f32.mxu0 0.0
  %6767 = vmatmul.mubr.f32.gmra.mrb[0].mxu0 %v6700
  %v6768 = vpop.f32.mrb[0].mxu0
  %v6769 = vadd.f32 %v6696, %v6768
  %v6770 = vpop.f32.mrb[0].mxu0
  %6771 = vdwg.mxu0
  %v6772 = vadd.f32 %v6769, %v715
  %v6773 = vmax.f32 %v6772, 0.0
  %v6775 = vsel %vm402, %v6773, 0
  %6777 = vmatprep.subr.mxu0 0.0
  %6778 = vmatpush1.msra.mxu0 %v183
  %6779 = vmatprep.subr.mxu0 0.0
  %6780 = vmatpush1.msra.mxu0 %v184
  %6781 = vmatprep.subr.mxu0 0.0
  %6782 = vmatpush1.msra.mxu0 %v185
  %6783 = vmatprep.subr.mxu0 0.0
  %6784 = vmatpush1.msra.mxu0 %v186
  %6785 = vmatprep.subr.mxu0 0.0
  %6786 = vmatpush1.msra.mxu0 %v187
  %6787 = vmatprep.subr.mxu0 0.0
  %6788 = vmatpush1.msra.mxu0 %v188
  %6789 = vmatprep.subr.mxu0 0.0
  %6790 = vmatpush1.msra.mxu0 %v189
  %6791 = vmatprep.subr.mxu0 0.0
  %6792 = vmatpush1.msra.mxu0 %v190
  %6793 = vmatprep.subr.mxu0 0.0
  %6794 = vmatpush1.msra.mxu0 0.0
  %6795 = vmatprep.subr.mxu0 0.0
  %6796 = vmatpush1.msra.mxu0 0.0
  %6797 = vmatprep.subr.mxu0 0.0
  %6798 = vmatpush1.msra.mxu0 0.0
  %6799 = vmatprep.subr.mxu0 0.0
  %6800 = vmatpush1.msra.mxu0 0.0
  %6801 = vmatprep.subr.mxu0 0.0
  %6802 = vmatpush1.msra.mxu0 0.0
  %6803 = vmatprep.subr.mxu0 0.0
  %6804 = vmatpush1.msra.mxu0 0.0
  %6805 = vmatprep.subr.mxu0 0.0
  %6806 = vmatpush1.msra.mxu0 0.0
  %6807 = vmatprep.subr.mxu0 0.0
  %6808 = vmatpush1.msra.mxu0 0.0
  %6809 = vmatprep.subr.mxu0 0.0
  %6810 = vmatpush1.msra.mxu0 0.0
  %6811 = vmatprep.subr.mxu0 0.0
  %6812 = vmatpush1.msra.mxu0 0.0
  %6813 = vmatprep.subr.mxu0 0.0
  %6814 = vmatpush1.msra.mxu0 0.0
  %6815 = vmatprep.subr.mxu0 0.0
  %6816 = vmatpush1.msra.mxu0 0.0
  %6817 = vmatprep.subr.mxu0 0.0
  %6818 = vmatpush1.msra.mxu0 0.0
  %6819 = vmatprep.subr.mxu0 0.0
  %6820 = vmatpush1.msra.mxu0 0.0
  %6821 = vmatprep.subr.mxu0 0.0
  %6822 = vmatpush1.msra.mxu0 0.0
  %6823 = vmatprep.subr.mxu0 0.0
  %6824 = vmatpush1.msra.mxu0 0.0
  %6825 = vmatprep.subr.mxu0 0.0
  %6826 = vmatpush1.msra.mxu0 0.0
  %6827 = vmatprep.subr.mxu0 0.0
  %6828 = vmatpush1.msra.mxu0 0.0
  %6829 = vmatprep.subr.mxu0 0.0
  %6830 = vmatpush1.msra.mxu0 0.0
  %6831 = vmatprep.subr.mxu0 0.0
  %6832 = vmatpush1.msra.mxu0 0.0
  %6833 = vmatprep.subr.mxu0 0.0
  %6834 = vmatpush1.msra.mxu0 0.0
  %6835 = vmatprep.subr.mxu0 0.0
  %6836 = vmatpush1.msra.mxu0 0.0
  %6837 = vmatprep.subr.mxu0 0.0
  %6838 = vmatpush1.msra.mxu0 0.0
  %6839 = vmatprep.subr.mxu0 0.0
  %6840 = vmatpush1.msra.mxu0 0.0
  %6841 = vmatprep.mubr.f32.mxu0 0.0
  %6842 = vmatmul.mubr.f32.gmra.mrb[0].mxu0 %v6775
  %v6843 = vpop.f32.mrb[0].mxu0
  %v6844 = vadd.f32 %v320, %v6843
  %v6845 = vpop.f32.mrb[0].mxu0
  %6846 = vdwg.mxu0
  %v6847 = vmax.f32 %v6844, 0.0
  %v6849 = vlaneseq
  %v6850 = vshrl.u32 %v6849, 7
  %v6851 = vsub.s32 0, %v6850
  %v6852 = vrot.slane %v322, %v6851
  %v6853 = vlaneseq
  %v6854 = vshrl.u32 %v6853, 7
  %v6855 = vsub.s32 1, %v6854
  %v6856 = vrot.slane %v322, %v6855
  %v6860 = vsel %vm402, %v6847, 0
  %6862 = vmatprep.subr.mxu0 %v192
  %6863 = vmatpush1.msra.mxu0 %v191
  %6864 = vmatprep.subr.mxu0 %v194
  %6865 = vmatpush1.msra.mxu0 %v193
  %6866 = vmatprep.subr.mxu0 %v196
  %6867 = vmatpush1.msra.mxu0 %v195
  %6868 = vmatprep.subr.mxu0 %v198
  %6869 = vmatpush1.msra.mxu0 %v197
  %6870 = vmatprep.subr.mxu0 %v200
  %6871 = vmatpush1.msra.mxu0 %v199
  %6872 = vmatprep.subr.mxu0 %v202
  %6873 = vmatpush1.msra.mxu0 %v201
  %6874 = vmatprep.subr.mxu0 %v204
  %6875 = vmatpush1.msra.mxu0 %v203
  %6876 = vmatprep.subr.mxu0 %v206
  %6877 = vmatpush1.msra.mxu0 %v205
  %6878 = vmatprep.subr.mxu0 0.0
  %6879 = vmatpush1.msra.mxu0 0.0
  %6880 = vmatprep.subr.mxu0 0.0
  %6881 = vmatpush1.msra.mxu0 0.0
  %6882 = vmatprep.subr.mxu0 0.0
  %6883 = vmatpush1.msra.mxu0 0.0
  %6884 = vmatprep.subr.mxu0 0.0
  %6885 = vmatpush1.msra.mxu0 0.0
  %6886 = vmatprep.subr.mxu0 0.0
  %6887 = vmatpush1.msra.mxu0 0.0
  %6888 = vmatprep.subr.mxu0 0.0
  %6889 = vmatpush1.msra.mxu0 0.0
  %6890 = vmatprep.subr.mxu0 0.0
  %6891 = vmatpush1.msra.mxu0 0.0
  %6892 = vmatprep.subr.mxu0 0.0
  %6893 = vmatpush1.msra.mxu0 0.0
  %6894 = vmatprep.subr.mxu0 0.0
  %6895 = vmatpush1.msra.mxu0 0.0
  %6896 = vmatprep.subr.mxu0 0.0
  %6897 = vmatpush1.msra.mxu0 0.0
  %6898 = vmatprep.subr.mxu0 0.0
  %6899 = vmatpush1.msra.mxu0 0.0
  %6900 = vmatprep.subr.mxu0 0.0
  %6901 = vmatpush1.msra.mxu0 0.0
  %6902 = vmatprep.subr.mxu0 0.0
  %6903 = vmatpush1.msra.mxu0 0.0
  %6904 = vmatprep.subr.mxu0 0.0
  %6905 = vmatpush1.msra.mxu0 0.0
  %6906 = vmatprep.subr.mxu0 0.0
  %6907 = vmatpush1.msra.mxu0 0.0
  %6908 = vmatprep.subr.mxu0 0.0
  %6909 = vmatpush1.msra.mxu0 0.0
  %6910 = vmatprep.subr.mxu0 0.0
  %6911 = vmatpush1.msra.mxu0 0.0
  %6912 = vmatprep.subr.mxu0 0.0
  %6913 = vmatpush1.msra.mxu0 0.0
  %6914 = vmatprep.subr.mxu0 0.0
  %6915 = vmatpush1.msra.mxu0 0.0
  %6916 = vmatprep.subr.mxu0 0.0
  %6917 = vmatpush1.msra.mxu0 0.0
  %6918 = vmatprep.subr.mxu0 0.0
  %6919 = vmatpush1.msra.mxu0 0.0
  %6920 = vmatprep.subr.mxu0 0.0
  %6921 = vmatpush1.msra.mxu0 0.0
  %6922 = vmatprep.subr.mxu0 0.0
  %6923 = vmatpush1.msra.mxu0 0.0
  %6924 = vmatprep.subr.mxu0 0.0
  %6925 = vmatpush1.msra.mxu0 0.0
  %6926 = vmatprep.mubr.f32.mxu0 0.0
  %6927 = vmatmul.mubr.f32.gmra.mrb[0].mxu0 %v6860
  %v6928 = vpop.f32.mrb[0].mxu0
  %v6929 = vadd.f32 %v6852, %v6928
  %v6930 = vpop.f32.mrb[0].mxu0
  %v6931 = vadd.f32 %v6856, %v6930
  %6932 = vdwg.mxu0
  %v6933 = vmax.f32 %v6929, 0.0
  %v6934 = vmax.f32 %v6931, 0.0
  %v6936 = vlaneseq
  %v6937 = vshrl.u32 %v6936, 7
  %v6938 = vsub.s32 0, %v6937
  %v6939 = vrot.slane %v324, %v6938
  %v6940 = vlaneseq
  %v6941 = vshrl.u32 %v6940, 7
  %v6942 = vsub.s32 1, %v6941
  %v6943 = vrot.slane %v324, %v6942
  %6946 = vmatprep.subr.mxu0 %v208
  %6947 = vmatpush1.msra.mxu0 %v207
  %6948 = vmatprep.subr.mxu0 %v210
  %6949 = vmatpush1.msra.mxu0 %v209
  %6950 = vmatprep.subr.mxu0 %v212
  %6951 = vmatpush1.msra.mxu0 %v211
  %6952 = vmatprep.subr.mxu0 %v214
  %6953 = vmatpush1.msra.mxu0 %v213
  %6954 = vmatprep.subr.mxu0 %v216
  %6955 = vmatpush1.msra.mxu0 %v215
  %6956 = vmatprep.subr.mxu0 %v218
  %6957 = vmatpush1.msra.mxu0 %v217
  %6958 = vmatprep.subr.mxu0 %v220
  %6959 = vmatpush1.msra.mxu0 %v219
  %6960 = vmatprep.subr.mxu0 %v222
  %6961 = vmatpush1.msra.mxu0 %v221
  %6962 = vmatprep.subr.mxu0 %v224
  %6963 = vmatpush1.msra.mxu0 %v223
  %6964 = vmatprep.subr.mxu0 %v226
  %6965 = vmatpush1.msra.mxu0 %v225
  %6966 = vmatprep.subr.mxu0 %v228
  %6967 = vmatpush1.msra.mxu0 %v227
  %6968 = vmatprep.subr.mxu0 %v230
  %6969 = vmatpush1.msra.mxu0 %v229
  %6970 = vmatprep.subr.mxu0 %v232
  %6971 = vmatpush1.msra.mxu0 %v231
  %6972 = vmatprep.subr.mxu0 %v234
  %6973 = vmatpush1.msra.mxu0 %v233
  %6974 = vmatprep.subr.mxu0 %v236
  %6975 = vmatpush1.msra.mxu0 %v235
  %6976 = vmatprep.subr.mxu0 %v238
  %6977 = vmatpush1.msra.mxu0 %v237
  %6978 = vmatprep.subr.mxu0 %v240
  %6979 = vmatpush1.msra.mxu0 %v239
  %6980 = vmatprep.subr.mxu0 %v242
  %6981 = vmatpush1.msra.mxu0 %v241
  %6982 = vmatprep.subr.mxu0 %v244
  %6983 = vmatpush1.msra.mxu0 %v243
  %6984 = vmatprep.subr.mxu0 %v246
  %6985 = vmatpush1.msra.mxu0 %v245
  %6986 = vmatprep.subr.mxu0 %v248
  %6987 = vmatpush1.msra.mxu0 %v247
  %6988 = vmatprep.subr.mxu0 %v250
  %6989 = vmatpush1.msra.mxu0 %v249
  %6990 = vmatprep.subr.mxu0 %v252
  %6991 = vmatpush1.msra.mxu0 %v251
  %6992 = vmatprep.subr.mxu0 %v254
  %6993 = vmatpush1.msra.mxu0 %v253
  %6994 = vmatprep.subr.mxu0 %v256
  %6995 = vmatpush1.msra.mxu0 %v255
  %6996 = vmatprep.subr.mxu0 %v258
  %6997 = vmatpush1.msra.mxu0 %v257
  %6998 = vmatprep.subr.mxu0 %v260
  %6999 = vmatpush1.msra.mxu0 %v259
  %7000 = vmatprep.subr.mxu0 %v262
  %7001 = vmatpush1.msra.mxu0 %v261
  %7002 = vmatprep.subr.mxu0 %v264
  %7003 = vmatpush1.msra.mxu0 %v263
  %7004 = vmatprep.subr.mxu0 %v266
  %7005 = vmatpush1.msra.mxu0 %v265
  %7006 = vmatprep.subr.mxu0 %v268
  %7007 = vmatpush1.msra.mxu0 %v267
  %7008 = vmatprep.subr.mxu0 %v270
  %7009 = vmatpush1.msra.mxu0 %v269
  %7010 = vmatprep.mubr.f32.mxu0 %v6934
  %7011 = vmatmul.mubr.f32.gmra.mrb[0].mxu0 %v6933
  %v7012 = vpop.f32.mrb[0].mxu0
  %v7013 = vadd.f32 %v6939, %v7012
  %v7014 = vpop.f32.mrb[0].mxu0
  %v7015 = vadd.f32 %v6943, %v7014
  %7016 = vdwg.mxu0
  %v7017 = vmax.f32 %v7013, 0.0
  %v7018 = vmax.f32 %v7015, 0.0
  %7019 = vmatprep.subr.mxu0 0.0
  %7020 = vmatpush1.msra.mxu0 %v279
  %7021 = vmatprep.subr.mxu0 0.0
  %7022 = vmatpush1.msra.mxu0 %v280
  %7023 = vmatprep.subr.mxu0 0.0
  %7024 = vmatpush1.msra.mxu0 %v281
  %7025 = vmatprep.subr.mxu0 0.0
  %7026 = vmatpush1.msra.mxu0 %v282
  %7027 = vmatprep.subr.mxu0 0.0
  %7028 = vmatpush1.msra.mxu0 %v283
  %7029 = vmatprep.subr.mxu0 0.0
  %7030 = vmatpush1.msra.mxu0 %v284
  %7031 = vmatprep.subr.mxu0 0.0
  %7032 = vmatpush1.msra.mxu0 %v285
  %7033 = vmatprep.subr.mxu0 0.0
  %7034 = vmatpush1.msra.mxu0 %v286
  %7035 = vmatprep.subr.mxu0 0.0
  %7036 = vmatpush1.msra.mxu0 %v287
  %7037 = vmatprep.subr.mxu0 0.0
  %7038 = vmatpush1.msra.mxu0 %v288
  %7039 = vmatprep.subr.mxu0 0.0
  %7040 = vmatpush1.msra.mxu0 %v289
  %7041 = vmatprep.subr.mxu0 0.0
  %7042 = vmatpush1.msra.mxu0 %v290
  %7043 = vmatprep.subr.mxu0 0.0
  %7044 = vmatpush1.msra.mxu0 %v291
  %7045 = vmatprep.subr.mxu0 0.0
  %7046 = vmatpush1.msra.mxu0 %v292
  %7047 = vmatprep.subr.mxu0 0.0
  %7048 = vmatpush1.msra.mxu0 %v293
  %7049 = vmatprep.subr.mxu0 0.0
  %7050 = vmatpush1.msra.mxu0 %v294
  %7051 = vmatprep.subr.mxu0 0.0
  %7052 = vmatpush1.msra.mxu0 %v295
  %7053 = vmatprep.subr.mxu0 0.0
  %7054 = vmatpush1.msra.mxu0 %v296
  %7055 = vmatprep.subr.mxu0 0.0
  %7056 = vmatpush1.msra.mxu0 %v297
  %7057 = vmatprep.subr.mxu0 0.0
  %7058 = vmatpush1.msra.mxu0 %v298
  %7059 = vmatprep.subr.mxu0 0.0
  %7060 = vmatpush1.msra.mxu0 %v299
  %7061 = vmatprep.subr.mxu0 0.0
  %7062 = vmatpush1.msra.mxu0 %v300
  %7063 = vmatprep.subr.mxu0 0.0
  %7064 = vmatpush1.msra.mxu0 %v301
  %7065 = vmatprep.subr.mxu0 0.0
  %7066 = vmatpush1.msra.mxu0 %v302
  %7067 = vmatprep.subr.mxu0 0.0
  %7068 = vmatpush1.msra.mxu0 %v303
  %7069 = vmatprep.subr.mxu0 0.0
  %7070 = vmatpush1.msra.mxu0 %v304
  %7071 = vmatprep.subr.mxu0 0.0
  %7072 = vmatpush1.msra.mxu0 %v305
  %7073 = vmatprep.subr.mxu0 0.0
  %7074 = vmatpush1.msra.mxu0 %v306
  %7075 = vmatprep.subr.mxu0 0.0
  %7076 = vmatpush1.msra.mxu0 %v307
  %7077 = vmatprep.subr.mxu0 0.0
  %7078 = vmatpush1.msra.mxu0 %v308
  %7079 = vmatprep.subr.mxu0 0.0
  %7080 = vmatpush1.msra.mxu0 %v309
  %7081 = vmatprep.subr.mxu0 0.0
  %7082 = vmatpush1.msra.mxu0 %v310
  %7083 = vmatprep.mubr.f32.mxu0 %v7018
  %7084 = vmatmul.mubr.f32.gmra.mrb[0].mxu0 %v7017
  %v7085 = vpop.f32.mrb[0].mxu0
  %v7086 = vadd.f32 %v325, %v7085
  %v7087 = vpop.f32.mrb[0].mxu0
  %7088 = vdwg.mxu0
  %7089 = vst [vmem:[%s7] sm:$0xff] %v7086
  // Predicated region
  $region60: #{interaction_network_forward.1} parent=0 // pred_check
    _
  $region61: #{interaction_network_forward.1} parent=0 // pred_check_branch
    %7091 = sbr.rel (0) target = $region63
  $region62: #{interaction_network_forward.1} parent=0 // pred_region
    _
  $region63: #{interaction_network_forward.1} parent=0 // pred_fallthru
    _
  // Predicated region
  $region64: #{interaction_network_forward.1} parent=0 // pred_check
    _
  $region65: #{interaction_network_forward.1} parent=0 // pred_check_branch
    %7093 = sbr.rel (0) target = $region67
  $region66: #{interaction_network_forward.1} parent=0 // pred_region
    _
  $region67: #{interaction_network_forward.1} parent=0 // pred_fallthru
    _
  %7094 = vsyncmov [#allocation3]
  %s7095 = vpop.sfrf %7094
  %p7096 = scmp.eq.s32.totalorder %s7095, 0
  %p7097 = pneg %p7096
  %7099 = shalt.err (%p7097)

</llo_original>
